<compile_context>
chip_gen: v6e
topology: v6e:2x2x1
jax: 0.10.0
libtpu: 0.0.40
codegen_flags: <defaults>
</compile_context>

<pallas_src>
import math
import numpy as np
import jax
import jax.numpy as jnp
from jax import lax
from jax.experimental import pallas as pl
from jax.experimental.pallas import tpu as pltpu

_BF16 = jnp.bfloat16
_F32 = jnp.float32


# ------------------------------------------------------------------ fused kernel

def _make_fused_kernel(n_head, d_k, d_v, channels, with_attn):
    H = n_head
    Hdk = H * d_k
    Hdv = H * d_v

    def _mm(a, b):
        # bf16 MXU operands, f32 accumulation (weights `b` are already bf16).
        return jnp.dot(a.astype(_BF16), b, preferred_element_type=_F32)

    def _encoder(x, w, diag_bias, bt, L, attn_write):
        (ln_g, ln_b, wqkv, wo, fln_g, fln_b, w1, b1, w2, b2) = w
        M, D = x.shape

        # pre-LN (f32; eps=1e-5 == torch nn.LayerNorm default)
        mu = jnp.mean(x, axis=-1, keepdims=True)
        var = jnp.mean((x - mu) ** 2, axis=-1, keepdims=True)
        xn = (x - mu) * lax.rsqrt(var + 1e-5) * ln_g[...] + ln_b[...]

        # all-head Q/K/V in ONE wide MXU matmul; 1/sqrt(d_k) is pre-folded into wq.
        qkv = _mm(xn, wqkv[...])                         # (M, H*(2*d_k+d_v)) f32

        ctx_heads = []
        for h in range(H):                               # per-head score/context matmuls
            q_h = qkv[:, h * d_k:(h + 1) * d_k].reshape(bt, L, d_k).astype(_BF16)
            k_h = qkv[:, Hdk + h * d_k:Hdk + (h + 1) * d_k].reshape(bt, L, d_k).astype(_BF16)
            v_h = qkv[:, 2 * Hdk + h * d_v:2 * Hdk + (h + 1) * d_v].reshape(bt, L, d_v).astype(_BF16)

            s = jnp.einsum('bld,bmd->blm', q_h, k_h, preferred_element_type=_F32)
            s = s + diag_bias                            # additive -1e9 diagonal mask
            m = jnp.max(s, axis=-1, keepdims=True)
            e = jnp.exp(s - m)
            # NOTE: approx reciprocal (EUP slot) -> attention rows sum to ~1, not exactly 1.
            a = e * pl.reciprocal(jnp.sum(e, axis=-1, keepdims=True), approx=True)
            if attn_write is not None:
                attn_write(h, a)                         # stream out; nothing O(L^2) stays live
            ctx_heads.append(jnp.einsum('blm,bmd->bld', a.astype(_BF16), v_h,
                                        preferred_element_type=_F32))

        # all heads concatenated along lanes -> ONE output-projection matmul
        ctx = jnp.concatenate(ctx_heads, axis=-1).reshape(M, Hdv)
        x2 = _mm(ctx, wo[...]) + x                       # residual; dropout == identity

        # position-wise FFN, pre-LN (eps=1e-6, as in SAITS)
        mu2 = jnp.mean(x2, axis=-1, keepdims=True)
        var2 = jnp.mean((x2 - mu2) ** 2, axis=-1, keepdims=True)
        xn2 = (x2 - mu2) * lax.rsqrt(var2 + 1e-6) * fln_g[...] + fln_b[...]
        h1 = jnp.maximum(_mm(xn2, w1[...]) + b1[...], 0.0)
        ff = _mm(h1, w2[...]) + b2[...]
        return ff + x2

    def kernel(*refs):
        x_ref, cond_ref, dp_ref = refs[0:3]
        (init_w, init_b, cond_w, cond_b,
         convl_w, convl_b, convc_w, convc_b,
         res_w, res_b, skip_w, skip_b) = refs[3:15]
        enc1_w = refs[15:25]
        enc2_w = refs[25:35]
        if with_attn:
            res_ref, skip_ref, attn_ref = refs[35:38]
        else:
            res_ref, skip_ref = refs[35:37]

        bt, L, K = x_ref.shape
        M = bt * L
        C = channels

        # flatten the batch block so every per-position matmul has M = bt*L rows
        x = x_ref[...].reshape(M, K)                     # f32 (kept for final residual)
        cnd = cond_ref[...].reshape(M, K)                # bf16 (MXU operand only)

        # k=1 Conv1d over NCL == per-position matmul over channels in (M, C) layout.
        # The diffusion projection (incl. its bias) was precomputed for the whole batch.
        y = _mm(x, init_w[...]) + init_b[...]            # (M, C)
        y = (y.reshape(bt, L, C) + dp_ref[...]).reshape(M, C)
        cp = _mm(cnd, cond_w[...]) + cond_b[...]         # (M, C)

        # diagonal attention mask as an additive bias, built once, shared by both layers
        row = lax.broadcasted_iota(jnp.int32, (L, L), 0)
        col = lax.broadcasted_iota(jnp.int32, (L, L), 1)
        diag_bias = jnp.where(row == col, -1e9, 0.0).astype(_F32)

        if with_attn:
            def attn_w1(h, a):
                attn_ref[:, h, :, :] = 0.5 * a
            def attn_w2(h, a):
                attn_ref[:, h, :, :] = attn_ref[:, h, :, :] + 0.5 * a
        else:
            attn_w1 = attn_w2 = None

        y = _encoder(y, enc1_w, diag_bias, bt, L, attn_w1)          # (M, C)

        y = (_mm(y, convl_w[...]) + convl_b[...]
             + _mm(cp, convc_w[...]) + convc_b[...])                # (M, 2C)

        y = _encoder(y, enc2_w, diag_bias, bt, L, attn_w2)          # (M, 2C)

        # torch.chunk(y, 2, dim=1) over channels == lane split in channel-last layout
        g = jax.nn.sigmoid(y[:, :C]) * jnp.tanh(y[:, C:])           # gated output (M, C)
        residual = _mm(g, res_w[...]) + res_b[...]
        skip = _mm(g, skip_w[...]) + skip_b[...]

        res_ref[...] = ((x + residual) * math.sqrt(0.5)).reshape(bt, L, K)
        skip_ref[...] = skip.reshape(bt, L, K)

    return kernel


# ------------------------------------------------------------------ host-side weight prep

def _prep_weights(params, n_head, d_k, d_v):
    """Constant transforms done once outside the kernel: fold 1/sqrt(d_k) into wq and
    pack per-head attention weights into single wide MXU operands."""
    scale = 1.0 / math.sqrt(d_k)

    def pack_enc(p):
        def flat(w):                                     # (H, D, d) -> (D, H*d)
            return jnp.transpose(w, (1, 0, 2)).reshape(w.shape[1], -1)
        wq = (p['wq'].astype(_F32) * scale).astype(_BF16)            # fold 1/sqrt(d_k)
        wqkv = jnp.concatenate([flat(wq), flat(p['wk']), flat(p['wv'])], axis=-1)
        wo = p['wo'].reshape(n_head * d_v, -1)                       # (H*d_v, D)
        return [p['ln_g'], p['ln_b'], wqkv, wo,
                p['fln_g'], p['fln_b'], p['w1'], p['b1'], p['w2'], p['b2']]

    top = [params[k] for k in ('init_w', 'init_b', 'cond_w', 'cond_b',
                               'convl_w', 'convl_b', 'convc_w', 'convc_b',
                               'res_w', 'res_b', 'skip_w', 'skip_b')]
    return top + pack_enc(params['enc1']) + pack_enc(params['enc2'])


def _default_batch_block(B, L, target_rows=256):
    # fill the MXU M dimension (>=128 v5e / >=256 v6e,v7x) ...
    bt = min(B, max(1, target_rows // max(L, 1)))
    while B % bt:
        bt -= 1
    # ... but keep >=2 grid steps when possible so the "parallel" batch axis can span
    # both v7x TensorCores (no-op on single-core v5e/v6e).
    while bt > 1 and B // bt < 2:
        bt -= 1
        while B % bt:
            bt -= 1
    return bt


# ------------------------------------------------------------------ pallas_call wrapper

def residual_encoder_layer_forward(x, cond, diffusion_emb, params,
                                   n_head, d_k, d_v, channels,
                                   with_attn=True, batch_block=None):
    B, L, K = x.shape
    if batch_block is None:
        batch_block = _default_batch_block(B, L)
    if B % batch_block:
        raise ValueError("batch_block must divide the batch size")
    bt = batch_block

    # diffusion-embedding projection for the whole batch in ONE matmul (kept out of the
    # kernel so no grid step pays an M=1 MXU weight push); bias folded in.
    dp = (jnp.dot(diffusion_emb.astype(_BF16), params['diff_w'],
                  preferred_element_type=_F32) + params['diff_b'])[:, None, :]   # (B,1,C)

    cond_bf16 = cond.astype(_BF16)          # only ever consumed as a bf16 MXU operand
    flat_w = _prep_weights(params, n_head, d_k, d_v)

    def _const_spec(a):
        nd = a.ndim
        # NOTE(v7x, production sizes): these constant weight blocks are double-buffered by
        # default; single-buffer them (pl.Buffered(1) / one manual DMA into scratch) when
        # VMEM-tight. Irrelevant at these demo sizes.
        return pl.BlockSpec(a.shape, lambda i, _nd=nd: (0,) * _nd)

    in_specs = ([pl.BlockSpec((bt, L, K), lambda i: (i, 0, 0)),
                 pl.BlockSpec((bt, L, K), lambda i: (i, 0, 0)),
                 pl.BlockSpec((bt, 1, channels), lambda i: (i, 0, 0))]
                + [_const_spec(w) for w in flat_w])

    out_shape = [jax.ShapeDtypeStruct((B, L, K), _F32),   # (x + residual) * sqrt(0.5)
                 jax.ShapeDtypeStruct((B, L, K), _F32)]   # skip
    out_specs = [pl.BlockSpec((bt, L, K), lambda i: (i, 0, 0)),
                 pl.BlockSpec((bt, L, K), lambda i: (i, 0, 0))]
    if with_attn:
        # TODO(synk): could emit attn in bf16 (v5e HBM/store saver); kept f32 to match
        # the PyTorch module's output dtype.
        out_shape.append(jax.ShapeDtypeStruct((B, n_head, L, L), _F32))
        out_specs.append(pl.BlockSpec((bt, n_head, L, L), lambda i: (i, 0, 0, 0)))

    # NOTE(production sizing): for long sequences the attention would need a flash-style
    # inner KV loop; at these block sizes VMEM use is far below the explicit limit.
    outs = pl.pallas_call(
        _make_fused_kernel(n_head, d_k, d_v, channels, with_attn),
        grid=(B // bt,),
        in_specs=in_specs,
        out_specs=tuple(out_specs),
        out_shape=tuple(out_shape),
        compiler_params=pltpu.CompilerParams(
            dimension_semantics=("parallel",),        # batch axis -> v7x's 2 TensorCores
            vmem_limit_bytes=32 * 1024 * 1024,
        ),
    )(x, cond_bf16, dp, *flat_w)

    if with_attn:
        res, skip, attn = outs
        return res, skip, attn
    res, skip = outs
    return res, skip, None


# ------------------------------------------------------------------ parameters

def init_params(key, d_model, channels, d_inner, n_head, d_k, d_v, diff_dim):
    keys = iter(jax.random.split(key, 64))

    def w(shape):                                   # matmul weights stored in bf16
        scale = 1.0 / math.sqrt(shape[-2])
        return (scale * jax.random.normal(next(keys), shape)).astype(_BF16)

    def b(shape):                                   # biases / LN params stay f32
        return (0.02 * jax.random.normal(next(keys), shape)).astype(_F32)

    def gamma(shape):
        return (1.0 + 0.05 * jax.random.normal(next(keys), shape)).astype(_F32)

    def enc(D):
        return dict(
            ln_g=gamma((1, D)), ln_b=b((1, D)),
            wq=w((n_head, D, d_k)), wk=w((n_head, D, d_k)), wv=w((n_head, D, d_v)),
            wo=w((n_head, d_v, D)),
            fln_g=gamma((1, D)), fln_b=b((1, D)),
            w1=w((D, d_inner)), b1=b((1, d_inner)),
            w2=w((d_inner, D)), b2=b((1, D)),
        )

    C = channels
    return dict(
        init_w=w((d_model, C)), init_b=b((1, C)),
        diff_w=w((diff_dim, C)), diff_b=b((1, C)),
        cond_w=w((d_model, C)), cond_b=b((1, C)),
        convl_w=w((C, 2 * C)), convl_b=b((1, 2 * C)),
        convc_w=w((C, 2 * C)), convc_b=b((1, 2 * C)),
        res_w=w((C, d_model)), res_b=b((1, d_model)),
        skip_w=w((C, d_model)), skip_b=b((1, d_model)),
        enc1=enc(C), enc2=enc(2 * C),
    )


# ------------------------------------------------------------------ pure-JAX reference
# The reference implements the module math on the ORIGINAL per-head parameters;
# `match_kernel_precision=True` applies the same bf16 rounding at MXU-operand boundaries
# as the kernel (everything else stays f32), isolating genuine kernel bugs from the
# intentional mixed-precision choice.

def _make_mm(match_kernel_precision):
    dt = _BF16 if match_kernel_precision else _F32

    def mm(eq, a, b):
        return jnp.einsum(eq, a.astype(dt), b.astype(dt), preferred_element_type=_F32)
    return mm


def _layernorm_ref(x, g, beta, eps):
    mu = x.mean(-1, keepdims=True)
    var = ((x - mu) ** 2).mean(-1, keepdims=True)
    return (x - mu) * lax.rsqrt(var + eps) * g + beta


def _encoder_ref(x, p, d_k, mm):
    L = x.shape[1]
    xn = _layernorm_ref(x, p['ln_g'], p['ln_b'], 1e-5)
    q = mm('bld,hdk->bhlk', xn, p['wq'])
    k = mm('bld,hdk->bhlk', xn, p['wk'])
    v = mm('bld,hdk->bhlk', xn, p['wv'])
    s = mm('bhqd,bhkd->bhqk', q, k) / math.sqrt(d_k)
    eye = jnp.eye(L, dtype=bool)
    s = jnp.where(eye[None, None], -1e9, s)
    a = jax.nn.softmax(s, axis=-1)
    ctx = mm('bhqk,bhkd->bhqd', a, v)
    attn_out = mm('bhld,hdm->blm', ctx, p['wo'])
    x2 = attn_out + x
    xn2 = _layernorm_ref(x2, p['fln_g'], p['fln_b'], 1e-6)
    h1 = jax.nn.relu(mm('blc,cf->blf', xn2, p['w1']) + p['b1'])
    ff = mm('blf,fc->blc', h1, p['w2']) + p['b2']
    return ff + x2, a


def _forward_ref(x, cond, diffusion_emb, p, d_k, match_kernel_precision=True):
    mm = _make_mm(match_kernel_precision)
    dp = mm('be,ec->bc', diffusion_emb, p['diff_w']) + p['diff_b']
    y = mm('blk,kc->blc', x, p['init_w']) + p['init_b'] + dp[:, None, :]
    cp = mm('blk,kc->blc', cond, p['cond_w']) + p['cond_b']
    y, a1 = _encoder_ref(y, p['enc1'], d_k, mm)
    y = (mm('blc,cd->bld', y, p['convl_w']) + p['convl_b']
         + mm('blc,cd->bld', cp, p['convc_w']) + p['convc_b'])
    y, a2 = _encoder_ref(y, p['enc2'], d_k, mm)
    C = y.shape[-1] // 2
    g = jax.nn.sigmoid(y[..., :C]) * jnp.tanh(y[..., C:])
    residual = mm('blc,ck->blk', g, p['res_w']) + p['res_b']
    skip = mm('blc,ck->blk', g, p['skip_w']) + p['skip_b']
    return (x + residual) * math.sqrt(0.5), skip, (a1 + a2) * 0.5


# ------------------------------------------------------------------ main

if __name__ == "__main__":
    # small but TPU-friendly shapes: 2*channels = d_model = d_inner = 128 (lane-dense);
    # B=4 so the batch-block heuristic picks bt=2 and the grid still has 2 steps.
    B, L, K = 4, 16, 128          # batch, d_time (seq), d_model
    channels = 64
    d_inner = 128
    n_head, d_k, d_v = 4, 16, 16
    diff_dim = 128                # diffusion_embedding_dim

    key = jax.random.PRNGKey(0)
    kx, kc, kd, kp = jax.random.split(key, 4)
    x = jax.random.normal(kx, (B, L, K), dtype=jnp.float32)
    cond = jax.random.normal(kc, (B, L, K), dtype=jnp.float32)
    diffusion_emb = jax.random.normal(kd, (B, diff_dim), dtype=jnp.float32)

    params = init_params(kp, K, channels, d_inner, n_head, d_k, d_v, diff_dim)

    out_res, skip, attn = residual_encoder_layer_forward(
        x, cond, diffusion_emb, params, n_head, d_k, d_v, channels, with_attn=True)
    jax.block_until_ready((out_res, skip, attn))

    # verify against a pure-JAX reference applying the same bf16 MXU-operand rounding;
    # tolerance also covers the approximate-reciprocal softmax denominator.
    ref_out, ref_skip, ref_attn = _forward_ref(
        x, cond, diffusion_emb, params, d_k, match_kernel_precision=True)
    np.testing.assert_allclose(np.asarray(out_res), np.asarray(ref_out), rtol=2e-2, atol=2e-2)
    np.testing.assert_allclose(np.asarray(skip), np.asarray(ref_skip), rtol=2e-2, atol=2e-2)
    np.testing.assert_allclose(np.asarray(attn), np.asarray(ref_attn), rtol=2e-2, atol=2e-2)

    # the attention-weights writeback is optional (HBM-traffic saver when unused)
    res2, skip2, _ = residual_encoder_layer_forward(
        x, cond, diffusion_emb, params, n_head, d_k, d_v, channels, with_attn=False)
    jax.block_until_ready((res2, skip2))
    np.testing.assert_allclose(np.asarray(res2), np.asarray(out_res), rtol=1e-5, atol=1e-5)
    np.testing.assert_allclose(np.asarray(skip2), np.asarray(skip), rtol=1e-5, atol=1e-5)

    # TODO(synk): dropout layers are treated as identity (eval-mode forward).
    print("KERNEL_OK")
</pallas_src>

<mosaic_0001>
module attributes {stable_mosaic.version = 11 : i64} {
  func.func @kernel(%arg0: i32, %arg1: memref<2x16x128xf32, #tpu.memory_space<vmem>>, %arg2: memref<2x16x128xbf16, #tpu.memory_space<vmem>>, %arg3: memref<2x1x64xf32, #tpu.memory_space<vmem>>, %arg4: memref<128x64xbf16, #tpu.memory_space<vmem>>, %arg5: memref<1x64xf32, #tpu.memory_space<vmem>>, %arg6: memref<128x64xbf16, #tpu.memory_space<vmem>>, %arg7: memref<1x64xf32, #tpu.memory_space<vmem>>, %arg8: memref<64x128xbf16, #tpu.memory_space<vmem>>, %arg9: memref<1x128xf32, #tpu.memory_space<vmem>>, %arg10: memref<64x128xbf16, #tpu.memory_space<vmem>>, %arg11: memref<1x128xf32, #tpu.memory_space<vmem>>, %arg12: memref<64x128xbf16, #tpu.memory_space<vmem>>, %arg13: memref<1x128xf32, #tpu.memory_space<vmem>>, %arg14: memref<64x128xbf16, #tpu.memory_space<vmem>>, %arg15: memref<1x128xf32, #tpu.memory_space<vmem>>, %arg16: memref<1x64xf32, #tpu.memory_space<vmem>>, %arg17: memref<1x64xf32, #tpu.memory_space<vmem>>, %arg18: memref<64x192xbf16, #tpu.memory_space<vmem>>, %arg19: memref<64x64xbf16, #tpu.memory_space<vmem>>, %arg20: memref<1x64xf32, #tpu.memory_space<vmem>>, %arg21: memref<1x64xf32, #tpu.memory_space<vmem>>, %arg22: memref<64x128xbf16, #tpu.memory_space<vmem>>, %arg23: memref<1x128xf32, #tpu.memory_space<vmem>>, %arg24: memref<128x64xbf16, #tpu.memory_space<vmem>>, %arg25: memref<1x64xf32, #tpu.memory_space<vmem>>, %arg26: memref<1x128xf32, #tpu.memory_space<vmem>>, %arg27: memref<1x128xf32, #tpu.memory_space<vmem>>, %arg28: memref<128x192xbf16, #tpu.memory_space<vmem>>, %arg29: memref<64x128xbf16, #tpu.memory_space<vmem>>, %arg30: memref<1x128xf32, #tpu.memory_space<vmem>>, %arg31: memref<1x128xf32, #tpu.memory_space<vmem>>, %arg32: memref<128x128xbf16, #tpu.memory_space<vmem>>, %arg33: memref<1x128xf32, #tpu.memory_space<vmem>>, %arg34: memref<128x128xbf16, #tpu.memory_space<vmem>>, %arg35: memref<1x128xf32, #tpu.memory_space<vmem>>, %arg36: memref<2x16x128xf32, #tpu.memory_space<vmem>>, %arg37: memref<2x16x128xf32, #tpu.memory_space<vmem>>, %arg38: memref<2x4x16x16xf32, #tpu.memory_space<vmem>>) attributes {dimension_semantics = [#tpu.dimension_semantics<parallel>], iteration_bounds = array<i64: 2>, scalar_prefetch = 0 : i64, scratch_operands = 0 : i64, tpu.core_type = #tpu.core_type<tc>, window_params = [{transform_indices = @transform_0, window_bounds = array<i64: 2, 16, 128>}, {transform_indices = @transform_1, window_bounds = array<i64: 2, 16, 128>}, {transform_indices = @transform_2, window_bounds = array<i64: 2, 1, 64>}, {pipeline_mode = #tpu.pipeline_mode<synchronous>, transform_indices = @transform_3, window_bounds = array<i64: 128, 64>}, {pipeline_mode = #tpu.pipeline_mode<synchronous>, transform_indices = @transform_4, window_bounds = array<i64: 1, 64>}, {pipeline_mode = #tpu.pipeline_mode<synchronous>, transform_indices = @transform_5, window_bounds = array<i64: 128, 64>}, {pipeline_mode = #tpu.pipeline_mode<synchronous>, transform_indices = @transform_6, window_bounds = array<i64: 1, 64>}, {pipeline_mode = #tpu.pipeline_mode<synchronous>, transform_indices = @transform_7, window_bounds = array<i64: 64, 128>}, {pipeline_mode = #tpu.pipeline_mode<synchronous>, transform_indices = @transform_8, window_bounds = array<i64: 1, 128>}, {pipeline_mode = #tpu.pipeline_mode<synchronous>, transform_indices = @transform_9, window_bounds = array<i64: 64, 128>}, {pipeline_mode = #tpu.pipeline_mode<synchronous>, transform_indices = @transform_10, window_bounds = array<i64: 1, 128>}, {pipeline_mode = #tpu.pipeline_mode<synchronous>, transform_indices = @transform_11, window_bounds = array<i64: 64, 128>}, {pipeline_mode = #tpu.pipeline_mode<synchronous>, transform_indices = @transform_12, window_bounds = array<i64: 1, 128>}, {pipeline_mode = #tpu.pipeline_mode<synchronous>, transform_indices = @transform_13, window_bounds = array<i64: 64, 128>}, {pipeline_mode = #tpu.pipeline_mode<synchronous>, transform_indices = @transform_14, window_bounds = array<i64: 1, 128>}, {pipeline_mode = #tpu.pipeline_mode<synchronous>, transform_indices = @transform_15, window_bounds = array<i64: 1, 64>}, {pipeline_mode = #tpu.pipeline_mode<synchronous>, transform_indices = @transform_16, window_bounds = array<i64: 1, 64>}, {pipeline_mode = #tpu.pipeline_mode<synchronous>, transform_indices = @transform_17, window_bounds = array<i64: 64, 192>}, {pipeline_mode = #tpu.pipeline_mode<synchronous>, transform_indices = @transform_18, window_bounds = array<i64: 64, 64>}, {pipeline_mode = #tpu.pipeline_mode<synchronous>, transform_indices = @transform_19, window_bounds = array<i64: 1, 64>}, {pipeline_mode = #tpu.pipeline_mode<synchronous>, transform_indices = @transform_20, window_bounds = array<i64: 1, 64>}, {pipeline_mode = #tpu.pipeline_mode<synchronous>, transform_indices = @transform_21, window_bounds = array<i64: 64, 128>}, {pipeline_mode = #tpu.pipeline_mode<synchronous>, transform_indices = @transform_22, window_bounds = array<i64: 1, 128>}, {pipeline_mode = #tpu.pipeline_mode<synchronous>, transform_indices = @transform_23, window_bounds = array<i64: 128, 64>}, {pipeline_mode = #tpu.pipeline_mode<synchronous>, transform_indices = @transform_24, window_bounds = array<i64: 1, 64>}, {pipeline_mode = #tpu.pipeline_mode<synchronous>, transform_indices = @transform_25, window_bounds = array<i64: 1, 128>}, {pipeline_mode = #tpu.pipeline_mode<synchronous>, transform_indices = @transform_26, window_bounds = array<i64: 1, 128>}, {pipeline_mode = #tpu.pipeline_mode<synchronous>, transform_indices = @transform_27, window_bounds = array<i64: 128, 192>}, {pipeline_mode = #tpu.pipeline_mode<synchronous>, transform_indices = @transform_28, window_bounds = array<i64: 64, 128>}, {pipeline_mode = #tpu.pipeline_mode<synchronous>, transform_indices = @transform_29, window_bounds = array<i64: 1, 128>}, {pipeline_mode = #tpu.pipeline_mode<synchronous>, transform_indices = @transform_30, window_bounds = array<i64: 1, 128>}, {pipeline_mode = #tpu.pipeline_mode<synchronous>, transform_indices = @transform_31, window_bounds = array<i64: 128, 128>}, {pipeline_mode = #tpu.pipeline_mode<synchronous>, transform_indices = @transform_32, window_bounds = array<i64: 1, 128>}, {pipeline_mode = #tpu.pipeline_mode<synchronous>, transform_indices = @transform_33, window_bounds = array<i64: 128, 128>}, {pipeline_mode = #tpu.pipeline_mode<synchronous>, transform_indices = @transform_34, window_bounds = array<i64: 1, 128>}, {transform_indices = @transform_35, window_bounds = array<i64: 2, 16, 128>}, {transform_indices = @transform_36, window_bounds = array<i64: 2, 16, 128>}, {transform_indices = @transform_37, window_bounds = array<i64: 2, 4, 16, 16>}]} {
    %c0 = arith.constant 0 : index
    %c0_0 = arith.constant 0 : index
    %c0_1 = arith.constant 0 : index
    %0 = vector.load %arg1[%c0, %c0_0, %c0_1] : memref<2x16x128xf32, #tpu.memory_space<vmem>>, vector<2x16x128xf32>
    %1 = vector.shape_cast %0 : vector<2x16x128xf32> to vector<32x128xf32>
    %c0_2 = arith.constant 0 : index
    %c0_3 = arith.constant 0 : index
    %c0_4 = arith.constant 0 : index
    %2 = vector.load %arg2[%c0_2, %c0_3, %c0_4] : memref<2x16x128xbf16, #tpu.memory_space<vmem>>, vector<2x16x128xbf16>
    %3 = vector.shape_cast %2 : vector<2x16x128xbf16> to vector<32x128xbf16>
    %c0_5 = arith.constant 0 : index
    %c0_6 = arith.constant 0 : index
    %4 = vector.load %arg4[%c0_5, %c0_6] : memref<128x64xbf16, #tpu.memory_space<vmem>>, vector<128x64xbf16>
    %5 = arith.truncf %1 : vector<32x128xf32> to vector<32x128xbf16>
    %cst = arith.constant dense<0.000000e+00> : vector<32x64xf32>
    %6 = tpu.matmul %5, %4, %cst {dimension_numbers = #tpu.dot_dimension_numbers<[1], [0], [0], [1], [0, 0, 1, 1], [], []>} : vector<32x128xbf16>, vector<128x64xbf16>, vector<32x64xf32> -> vector<32x64xf32>
    %c0_7 = arith.constant 0 : index
    %c0_8 = arith.constant 0 : index
    %7 = vector.load %arg5[%c0_7, %c0_8] : memref<1x64xf32, #tpu.memory_space<vmem>>, vector<1x64xf32>
    %8 = vector.broadcast %7 : vector<1x64xf32> to vector<32x64xf32>
    %9 = arith.addf %6, %8 : vector<32x64xf32>
    %10 = vector.shape_cast %9 : vector<32x64xf32> to vector<2x16x64xf32>
    %c0_9 = arith.constant 0 : index
    %c0_10 = arith.constant 0 : index
    %c0_11 = arith.constant 0 : index
    %11 = vector.load %arg3[%c0_9, %c0_10, %c0_11] : memref<2x1x64xf32, #tpu.memory_space<vmem>>, vector<2x1x64xf32>
    %12 = vector.broadcast %11 : vector<2x1x64xf32> to vector<2x16x64xf32>
    %13 = arith.addf %10, %12 : vector<2x16x64xf32>
    %14 = vector.shape_cast %13 : vector<2x16x64xf32> to vector<32x64xf32>
    %c0_12 = arith.constant 0 : index
    %c0_13 = arith.constant 0 : index
    %15 = vector.load %arg6[%c0_12, %c0_13] : memref<128x64xbf16, #tpu.memory_space<vmem>>, vector<128x64xbf16>
    %cst_14 = arith.constant dense<0.000000e+00> : vector<32x64xf32>
    %16 = tpu.matmul %3, %15, %cst_14 {dimension_numbers = #tpu.dot_dimension_numbers<[1], [0], [0], [1], [0, 0, 1, 1], [], []>} : vector<32x128xbf16>, vector<128x64xbf16>, vector<32x64xf32> -> vector<32x64xf32>
    %c0_15 = arith.constant 0 : index
    %c0_16 = arith.constant 0 : index
    %17 = vector.load %arg7[%c0_15, %c0_16] : memref<1x64xf32, #tpu.memory_space<vmem>>, vector<1x64xf32>
    %18 = vector.broadcast %17 : vector<1x64xf32> to vector<32x64xf32>
    %19 = arith.addf %16, %18 : vector<32x64xf32>
    %20 = tpu.iota {dimensions = array<i32: 0>} : vector<16x16xi32>
    %21 = tpu.iota {dimensions = array<i32: 1>} : vector<16x16xi32>
    %22 = arith.cmpi eq, %20, %21 : vector<16x16xi32>
    %cst_17 = arith.constant -1.000000e+09 : f32
    %cst_18 = arith.constant 0.000000e+00 : f32
    %23 = vector.broadcast %cst_17 : f32 to vector<16x16xf32>
    %24 = vector.broadcast %cst_18 : f32 to vector<16x16xf32>
    %25 = arith.select %22, %23, %24 : vector<16x16xi1>, vector<16x16xf32>
    %cst_19 = arith.constant dense<0.000000e+00> : vector<32xf32>
    %26 = vector.multi_reduction <add>, %14, %cst_19 [1] : vector<32x64xf32> to vector<32xf32>
    %27 = vector.shape_cast %26 : vector<32xf32> to vector<32x1xf32>
    %cst_20 = arith.constant 6.400000e+01 : f32
    %28 = vector.broadcast %cst_20 : f32 to vector<32x1xf32>
    %29 = arith.divf %27, %28 : vector<32x1xf32>
    %30 = vector.broadcast %29 : vector<32x1xf32> to vector<32x64xf32>
    %31 = arith.subf %14, %30 : vector<32x64xf32>
    %32 = arith.mulf %31, %31 : vector<32x64xf32>
    %cst_21 = arith.constant dense<0.000000e+00> : vector<32xf32>
    %33 = vector.multi_reduction <add>, %32, %cst_21 [1] : vector<32x64xf32> to vector<32xf32>
    %34 = vector.shape_cast %33 : vector<32xf32> to vector<32x1xf32>
    %cst_22 = arith.constant 6.400000e+01 : f32
    %35 = vector.broadcast %cst_22 : f32 to vector<32x1xf32>
    %36 = arith.divf %34, %35 : vector<32x1xf32>
    %37 = vector.broadcast %29 : vector<32x1xf32> to vector<32x64xf32>
    %38 = arith.subf %14, %37 : vector<32x64xf32>
    %cst_23 = arith.constant 9.99999974E-6 : f32
    %39 = vector.broadcast %cst_23 : f32 to vector<32x1xf32>
    %40 = arith.addf %36, %39 : vector<32x1xf32>
    %41 = math.rsqrt %40 : vector<32x1xf32>
    %42 = vector.broadcast %41 : vector<32x1xf32> to vector<32x64xf32>
    %43 = arith.mulf %38, %42 : vector<32x64xf32>
    %c0_24 = arith.constant 0 : index
    %c0_25 = arith.constant 0 : index
    %44 = vector.load %arg16[%c0_24, %c0_25] : memref<1x64xf32, #tpu.memory_space<vmem>>, vector<1x64xf32>
    %45 = vector.broadcast %44 : vector<1x64xf32> to vector<32x64xf32>
    %46 = arith.mulf %43, %45 : vector<32x64xf32>
    %c0_26 = arith.constant 0 : index
    %c0_27 = arith.constant 0 : index
    %47 = vector.load %arg17[%c0_26, %c0_27] : memref<1x64xf32, #tpu.memory_space<vmem>>, vector<1x64xf32>
    %48 = vector.broadcast %47 : vector<1x64xf32> to vector<32x64xf32>
    %49 = arith.addf %46, %48 : vector<32x64xf32>
    %c0_28 = arith.constant 0 : index
    %c0_29 = arith.constant 0 : index
    %50 = vector.load %arg18[%c0_28, %c0_29] : memref<64x192xbf16, #tpu.memory_space<vmem>>, vector<64x192xbf16>
    %51 = arith.truncf %49 : vector<32x64xf32> to vector<32x64xbf16>
    %cst_30 = arith.constant dense<0.000000e+00> : vector<32x192xf32>
    %52 = tpu.matmul %51, %50, %cst_30 {dimension_numbers = #tpu.dot_dimension_numbers<[1], [0], [0], [1], [0, 0, 1, 1], [], []>} : vector<32x64xbf16>, vector<64x192xbf16>, vector<32x192xf32> -> vector<32x192xf32>
    %53 = vector.extract_strided_slice %52 {offsets = [0, 0], sizes = [32, 16], strides = [1, 1]} : vector<32x192xf32> to vector<32x16xf32>
    %54 = vector.shape_cast %53 : vector<32x16xf32> to vector<2x16x16xf32>
    %55 = arith.truncf %54 : vector<2x16x16xf32> to vector<2x16x16xbf16>
    %56 = vector.extract_strided_slice %52 {offsets = [0, 64], sizes = [32, 16], strides = [1, 1]} : vector<32x192xf32> to vector<32x16xf32>
    %57 = vector.shape_cast %56 : vector<32x16xf32> to vector<2x16x16xf32>
    %58 = arith.truncf %57 : vector<2x16x16xf32> to vector<2x16x16xbf16>
    %59 = vector.extract_strided_slice %52 {offsets = [0, 128], sizes = [32, 16], strides = [1, 1]} : vector<32x192xf32> to vector<32x16xf32>
    %60 = vector.shape_cast %59 : vector<32x16xf32> to vector<2x16x16xf32>
    %61 = arith.truncf %60 : vector<2x16x16xf32> to vector<2x16x16xbf16>
    "tpu.trace_start"() <{level = 10 : i32, message = "bld,bmd->blm"}> : () -> ()
    %cst_31 = arith.constant dense<0.000000e+00> : vector<2x16x16xf32>
    %62 = tpu.matmul %55, %58, %cst_31 {dimension_numbers = #tpu.dot_dimension_numbers<[2], [2], [1], [1], [0, 0, 0, 1, 1, 1], [0], [0]>} : vector<2x16x16xbf16>, vector<2x16x16xbf16>, vector<2x16x16xf32> -> vector<2x16x16xf32>
    "tpu.trace_stop"() : () -> ()
    %63 = vector.shape_cast %25 : vector<16x16xf32> to vector<1x16x16xf32>
    %64 = vector.broadcast %63 : vector<1x16x16xf32> to vector<2x16x16xf32>
    %65 = arith.addf %62, %64 : vector<2x16x16xf32>
    %cst_32 = arith.constant dense<0xFF800000> : vector<2x16xf32>
    %66 = vector.multi_reduction <maximumf>, %65, %cst_32 [2] : vector<2x16x16xf32> to vector<2x16xf32>
    %67 = vector.shape_cast %66 : vector<2x16xf32> to vector<2x16x1xf32>
    %68 = vector.broadcast %67 : vector<2x16x1xf32> to vector<2x16x16xf32>
    %69 = arith.subf %65, %68 : vector<2x16x16xf32>
    %70 = math.exp %69 : vector<2x16x16xf32>
    %cst_33 = arith.constant dense<0.000000e+00> : vector<2x16xf32>
    %71 = vector.multi_reduction <add>, %70, %cst_33 [2] : vector<2x16x16xf32> to vector<2x16xf32>
    %72 = vector.shape_cast %71 : vector<2x16xf32> to vector<2x16x1xf32>
    %73 = tpu.reciprocal %72 {approx = true} : vector<2x16x1xf32> -> vector<2x16x1xf32>
    %74 = vector.broadcast %73 : vector<2x16x1xf32> to vector<2x16x16xf32>
    %75 = arith.mulf %70, %74 : vector<2x16x16xf32>
    %cst_34 = arith.constant 5.000000e-01 : f32
    %76 = vector.broadcast %cst_34 : f32 to vector<2x16x16xf32>
    %77 = arith.mulf %76, %75 : vector<2x16x16xf32>
    %c0_35 = arith.constant 0 : index
    %c0_36 = arith.constant 0 : index
    %c0_37 = arith.constant 0 : index
    %c0_38 = arith.constant 0 : index
    %78 = vector.load %arg38[%c0_35, %c0_36, %c0_37, %c0_38] : memref<2x4x16x16xf32, #tpu.memory_space<vmem>>, vector<2x1x16x16xf32>
    %79 = vector.shape_cast %78 : vector<2x1x16x16xf32> to vector<2x16x16xf32>
    %80 = vector.shape_cast %77 : vector<2x16x16xf32> to vector<2x1x16x16xf32>
    tpu.vector_store %arg38[%c0_35, %c0_36, %c0_37, %c0_38], %80 {strides = array<i32>} : memref<2x4x16x16xf32, #tpu.memory_space<vmem>>, vector<2x1x16x16xf32>,
    %81 = arith.truncf %75 : vector<2x16x16xf32> to vector<2x16x16xbf16>
    "tpu.trace_start"() <{level = 10 : i32, message = "blm,bmd->bld"}> : () -> ()
    %cst_39 = arith.constant dense<0.000000e+00> : vector<2x16x16xf32>
    %82 = tpu.matmul %81, %61, %cst_39 {dimension_numbers = #tpu.dot_dimension_numbers<[2], [1], [1], [2], [0, 0, 0, 1, 1, 2], [0], [0]>} : vector<2x16x16xbf16>, vector<2x16x16xbf16>, vector<2x16x16xf32> -> vector<2x16x16xf32>
    "tpu.trace_stop"() : () -> ()
    %83 = vector.extract_strided_slice %52 {offsets = [0, 16], sizes = [32, 16], strides = [1, 1]} : vector<32x192xf32> to vector<32x16xf32>
    %84 = vector.shape_cast %83 : vector<32x16xf32> to vector<2x16x16xf32>
    %85 = arith.truncf %84 : vector<2x16x16xf32> to vector<2x16x16xbf16>
    %86 = vector.extract_strided_slice %52 {offsets = [0, 80], sizes = [32, 16], strides = [1, 1]} : vector<32x192xf32> to vector<32x16xf32>
    %87 = vector.shape_cast %86 : vector<32x16xf32> to vector<2x16x16xf32>
    %88 = arith.truncf %87 : vector<2x16x16xf32> to vector<2x16x16xbf16>
    %89 = vector.extract_strided_slice %52 {offsets = [0, 144], sizes = [32, 16], strides = [1, 1]} : vector<32x192xf32> to vector<32x16xf32>
    %90 = vector.shape_cast %89 : vector<32x16xf32> to vector<2x16x16xf32>
    %91 = arith.truncf %90 : vector<2x16x16xf32> to vector<2x16x16xbf16>
    "tpu.trace_start"() <{level = 10 : i32, message = "bld,bmd->blm"}> : () -> ()
    %cst_40 = arith.constant dense<0.000000e+00> : vector<2x16x16xf32>
    %92 = tpu.matmul %85, %88, %cst_40 {dimension_numbers = #tpu.dot_dimension_numbers<[2], [2], [1], [1], [0, 0, 0, 1, 1, 1], [0], [0]>} : vector<2x16x16xbf16>, vector<2x16x16xbf16>, vector<2x16x16xf32> -> vector<2x16x16xf32>
    "tpu.trace_stop"() : () -> ()
    %93 = vector.shape_cast %25 : vector<16x16xf32> to vector<1x16x16xf32>
    %94 = vector.broadcast %93 : vector<1x16x16xf32> to vector<2x16x16xf32>
    %95 = arith.addf %92, %94 : vector<2x16x16xf32>
    %cst_41 = arith.constant dense<0xFF800000> : vector<2x16xf32>
    %96 = vector.multi_reduction <maximumf>, %95, %cst_41 [2] : vector<2x16x16xf32> to vector<2x16xf32>
    %97 = vector.shape_cast %96 : vector<2x16xf32> to vector<2x16x1xf32>
    %98 = vector.broadcast %97 : vector<2x16x1xf32> to vector<2x16x16xf32>
    %99 = arith.subf %95, %98 : vector<2x16x16xf32>
    %100 = math.exp %99 : vector<2x16x16xf32>
    %cst_42 = arith.constant dense<0.000000e+00> : vector<2x16xf32>
    %101 = vector.multi_reduction <add>, %100, %cst_42 [2] : vector<2x16x16xf32> to vector<2x16xf32>
    %102 = vector.shape_cast %101 : vector<2x16xf32> to vector<2x16x1xf32>
    %103 = tpu.reciprocal %102 {approx = true} : vector<2x16x1xf32> -> vector<2x16x1xf32>
    %104 = vector.broadcast %103 : vector<2x16x1xf32> to vector<2x16x16xf32>
    %105 = arith.mulf %100, %104 : vector<2x16x16xf32>
    %cst_43 = arith.constant 5.000000e-01 : f32
    %106 = vector.broadcast %cst_43 : f32 to vector<2x16x16xf32>
    %107 = arith.mulf %106, %105 : vector<2x16x16xf32>
    %c0_44 = arith.constant 0 : index
    %c1 = arith.constant 1 : index
    %c0_45 = arith.constant 0 : index
    %c0_46 = arith.constant 0 : index
    %108 = vector.load %arg38[%c0_44, %c1, %c0_45, %c0_46] : memref<2x4x16x16xf32, #tpu.memory_space<vmem>>, vector<2x1x16x16xf32>
    %109 = vector.shape_cast %108 : vector<2x1x16x16xf32> to vector<2x16x16xf32>
    %110 = vector.shape_cast %107 : vector<2x16x16xf32> to vector<2x1x16x16xf32>
    tpu.vector_store %arg38[%c0_44, %c1, %c0_45, %c0_46], %110 {strides = array<i32>} : memref<2x4x16x16xf32, #tpu.memory_space<vmem>>, vector<2x1x16x16xf32>,
    %111 = arith.truncf %105 : vector<2x16x16xf32> to vector<2x16x16xbf16>
    "tpu.trace_start"() <{level = 10 : i32, message = "blm,bmd->bld"}> : () -> ()
    %cst_47 = arith.constant dense<0.000000e+00> : vector<2x16x16xf32>
    %112 = tpu.matmul %111, %91, %cst_47 {dimension_numbers = #tpu.dot_dimension_numbers<[2], [1], [1], [2], [0, 0, 0, 1, 1, 2], [0], [0]>} : vector<2x16x16xbf16>, vector<2x16x16xbf16>, vector<2x16x16xf32> -> vector<2x16x16xf32>
    "tpu.trace_stop"() : () -> ()
    %113 = vector.extract_strided_slice %52 {offsets = [0, 32], sizes = [32, 16], strides = [1, 1]} : vector<32x192xf32> to vector<32x16xf32>
    %114 = vector.shape_cast %113 : vector<32x16xf32> to vector<2x16x16xf32>
    %115 = arith.truncf %114 : vector<2x16x16xf32> to vector<2x16x16xbf16>
    %116 = vector.extract_strided_slice %52 {offsets = [0, 96], sizes = [32, 16], strides = [1, 1]} : vector<32x192xf32> to vector<32x16xf32>
    %117 = vector.shape_cast %116 : vector<32x16xf32> to vector<2x16x16xf32>
    %118 = arith.truncf %117 : vector<2x16x16xf32> to vector<2x16x16xbf16>
    %119 = vector.extract_strided_slice %52 {offsets = [0, 160], sizes = [32, 16], strides = [1, 1]} : vector<32x192xf32> to vector<32x16xf32>
    %120 = vector.shape_cast %119 : vector<32x16xf32> to vector<2x16x16xf32>
    %121 = arith.truncf %120 : vector<2x16x16xf32> to vector<2x16x16xbf16>
    "tpu.trace_start"() <{level = 10 : i32, message = "bld,bmd->blm"}> : () -> ()
    %cst_48 = arith.constant dense<0.000000e+00> : vector<2x16x16xf32>
    %122 = tpu.matmul %115, %118, %cst_48 {dimension_numbers = #tpu.dot_dimension_numbers<[2], [2], [1], [1], [0, 0, 0, 1, 1, 1], [0], [0]>} : vector<2x16x16xbf16>, vector<2x16x16xbf16>, vector<2x16x16xf32> -> vector<2x16x16xf32>
    "tpu.trace_stop"() : () -> ()
    %123 = vector.shape_cast %25 : vector<16x16xf32> to vector<1x16x16xf32>
    %124 = vector.broadcast %123 : vector<1x16x16xf32> to vector<2x16x16xf32>
    %125 = arith.addf %122, %124 : vector<2x16x16xf32>
    %cst_49 = arith.constant dense<0xFF800000> : vector<2x16xf32>
    %126 = vector.multi_reduction <maximumf>, %125, %cst_49 [2] : vector<2x16x16xf32> to vector<2x16xf32>
    %127 = vector.shape_cast %126 : vector<2x16xf32> to vector<2x16x1xf32>
    %128 = vector.broadcast %127 : vector<2x16x1xf32> to vector<2x16x16xf32>
    %129 = arith.subf %125, %128 : vector<2x16x16xf32>
    %130 = math.exp %129 : vector<2x16x16xf32>
    %cst_50 = arith.constant dense<0.000000e+00> : vector<2x16xf32>
    %131 = vector.multi_reduction <add>, %130, %cst_50 [2] : vector<2x16x16xf32> to vector<2x16xf32>
    %132 = vector.shape_cast %131 : vector<2x16xf32> to vector<2x16x1xf32>
    %133 = tpu.reciprocal %132 {approx = true} : vector<2x16x1xf32> -> vector<2x16x1xf32>
    %134 = vector.broadcast %133 : vector<2x16x1xf32> to vector<2x16x16xf32>
    %135 = arith.mulf %130, %134 : vector<2x16x16xf32>
    %cst_51 = arith.constant 5.000000e-01 : f32
    %136 = vector.broadcast %cst_51 : f32 to vector<2x16x16xf32>
    %137 = arith.mulf %136, %135 : vector<2x16x16xf32>
    %c0_52 = arith.constant 0 : index
    %c2 = arith.constant 2 : index
    %c0_53 = arith.constant 0 : index
    %c0_54 = arith.constant 0 : index
    %138 = vector.load %arg38[%c0_52, %c2, %c0_53, %c0_54] : memref<2x4x16x16xf32, #tpu.memory_space<vmem>>, vector<2x1x16x16xf32>
    %139 = vector.shape_cast %138 : vector<2x1x16x16xf32> to vector<2x16x16xf32>
    %140 = vector.shape_cast %137 : vector<2x16x16xf32> to vector<2x1x16x16xf32>
    tpu.vector_store %arg38[%c0_52, %c2, %c0_53, %c0_54], %140 {strides = array<i32>} : memref<2x4x16x16xf32, #tpu.memory_space<vmem>>, vector<2x1x16x16xf32>,
    %141 = arith.truncf %135 : vector<2x16x16xf32> to vector<2x16x16xbf16>
    "tpu.trace_start"() <{level = 10 : i32, message = "blm,bmd->bld"}> : () -> ()
    %cst_55 = arith.constant dense<0.000000e+00> : vector<2x16x16xf32>
    %142 = tpu.matmul %141, %121, %cst_55 {dimension_numbers = #tpu.dot_dimension_numbers<[2], [1], [1], [2], [0, 0, 0, 1, 1, 2], [0], [0]>} : vector<2x16x16xbf16>, vector<2x16x16xbf16>, vector<2x16x16xf32> -> vector<2x16x16xf32>
    "tpu.trace_stop"() : () -> ()
    %143 = vector.extract_strided_slice %52 {offsets = [0, 48], sizes = [32, 16], strides = [1, 1]} : vector<32x192xf32> to vector<32x16xf32>
    %144 = vector.shape_cast %143 : vector<32x16xf32> to vector<2x16x16xf32>
    %145 = arith.truncf %144 : vector<2x16x16xf32> to vector<2x16x16xbf16>
    %146 = vector.extract_strided_slice %52 {offsets = [0, 112], sizes = [32, 16], strides = [1, 1]} : vector<32x192xf32> to vector<32x16xf32>
    %147 = vector.shape_cast %146 : vector<32x16xf32> to vector<2x16x16xf32>
    %148 = arith.truncf %147 : vector<2x16x16xf32> to vector<2x16x16xbf16>
    %149 = vector.extract_strided_slice %52 {offsets = [0, 176], sizes = [32, 16], strides = [1, 1]} : vector<32x192xf32> to vector<32x16xf32>
    %150 = vector.shape_cast %149 : vector<32x16xf32> to vector<2x16x16xf32>
    %151 = arith.truncf %150 : vector<2x16x16xf32> to vector<2x16x16xbf16>
    "tpu.trace_start"() <{level = 10 : i32, message = "bld,bmd->blm"}> : () -> ()
    %cst_56 = arith.constant dense<0.000000e+00> : vector<2x16x16xf32>
    %152 = tpu.matmul %145, %148, %cst_56 {dimension_numbers = #tpu.dot_dimension_numbers<[2], [2], [1], [1], [0, 0, 0, 1, 1, 1], [0], [0]>} : vector<2x16x16xbf16>, vector<2x16x16xbf16>, vector<2x16x16xf32> -> vector<2x16x16xf32>
    "tpu.trace_stop"() : () -> ()
    %153 = vector.shape_cast %25 : vector<16x16xf32> to vector<1x16x16xf32>
    %154 = vector.broadcast %153 : vector<1x16x16xf32> to vector<2x16x16xf32>
    %155 = arith.addf %152, %154 : vector<2x16x16xf32>
    %cst_57 = arith.constant dense<0xFF800000> : vector<2x16xf32>
    %156 = vector.multi_reduction <maximumf>, %155, %cst_57 [2] : vector<2x16x16xf32> to vector<2x16xf32>
    %157 = vector.shape_cast %156 : vector<2x16xf32> to vector<2x16x1xf32>
    %158 = vector.broadcast %157 : vector<2x16x1xf32> to vector<2x16x16xf32>
    %159 = arith.subf %155, %158 : vector<2x16x16xf32>
    %160 = math.exp %159 : vector<2x16x16xf32>
    %cst_58 = arith.constant dense<0.000000e+00> : vector<2x16xf32>
    %161 = vector.multi_reduction <add>, %160, %cst_58 [2] : vector<2x16x16xf32> to vector<2x16xf32>
    %162 = vector.shape_cast %161 : vector<2x16xf32> to vector<2x16x1xf32>
    %163 = tpu.reciprocal %162 {approx = true} : vector<2x16x1xf32> -> vector<2x16x1xf32>
    %164 = vector.broadcast %163 : vector<2x16x1xf32> to vector<2x16x16xf32>
    %165 = arith.mulf %160, %164 : vector<2x16x16xf32>
    %cst_59 = arith.constant 5.000000e-01 : f32
    %166 = vector.broadcast %cst_59 : f32 to vector<2x16x16xf32>
    %167 = arith.mulf %166, %165 : vector<2x16x16xf32>
    %c0_60 = arith.constant 0 : index
    %c3 = arith.constant 3 : index
    %c0_61 = arith.constant 0 : index
    %c0_62 = arith.constant 0 : index
    %168 = vector.load %arg38[%c0_60, %c3, %c0_61, %c0_62] : memref<2x4x16x16xf32, #tpu.memory_space<vmem>>, vector<2x1x16x16xf32>
    %169 = vector.shape_cast %168 : vector<2x1x16x16xf32> to vector<2x16x16xf32>
    %170 = vector.shape_cast %167 : vector<2x16x16xf32> to vector<2x1x16x16xf32>
    tpu.vector_store %arg38[%c0_60, %c3, %c0_61, %c0_62], %170 {strides = array<i32>} : memref<2x4x16x16xf32, #tpu.memory_space<vmem>>, vector<2x1x16x16xf32>,
    %171 = arith.truncf %165 : vector<2x16x16xf32> to vector<2x16x16xbf16>
    "tpu.trace_start"() <{level = 10 : i32, message = "blm,bmd->bld"}> : () -> ()
    %cst_63 = arith.constant dense<0.000000e+00> : vector<2x16x16xf32>
    %172 = tpu.matmul %171, %151, %cst_63 {dimension_numbers = #tpu.dot_dimension_numbers<[2], [1], [1], [2], [0, 0, 0, 1, 1, 2], [0], [0]>} : vector<2x16x16xbf16>, vector<2x16x16xbf16>, vector<2x16x16xf32> -> vector<2x16x16xf32>
    "tpu.trace_stop"() : () -> ()
    %173 = tpu.concatenate %82, %112, %142, %172 in 2 : vector<2x16x16xf32>, vector<2x16x16xf32>, vector<2x16x16xf32>, vector<2x16x16xf32> -> vector<2x16x64xf32>
    %174 = vector.shape_cast %173 : vector<2x16x64xf32> to vector<32x64xf32>
    %c0_64 = arith.constant 0 : index
    %c0_65 = arith.constant 0 : index
    %175 = vector.load %arg19[%c0_64, %c0_65] : memref<64x64xbf16, #tpu.memory_space<vmem>>, vector<64x64xbf16>
    %176 = arith.truncf %174 : vector<32x64xf32> to vector<32x64xbf16>
    %cst_66 = arith.constant dense<0.000000e+00> : vector<32x64xf32>
    %177 = tpu.matmul %176, %175, %cst_66 {dimension_numbers = #tpu.dot_dimension_numbers<[1], [0], [0], [1], [0, 0, 1, 1], [], []>} : vector<32x64xbf16>, vector<64x64xbf16>, vector<32x64xf32> -> vector<32x64xf32>
    %178 = arith.addf %177, %14 : vector<32x64xf32>
    %cst_67 = arith.constant dense<0.000000e+00> : vector<32xf32>
    %179 = vector.multi_reduction <add>, %178, %cst_67 [1] : vector<32x64xf32> to vector<32xf32>
    %180 = vector.shape_cast %179 : vector<32xf32> to vector<32x1xf32>
    %cst_68 = arith.constant 6.400000e+01 : f32
    %181 = vector.broadcast %cst_68 : f32 to vector<32x1xf32>
    %182 = arith.divf %180, %181 : vector<32x1xf32>
    %183 = vector.broadcast %182 : vector<32x1xf32> to vector<32x64xf32>
    %184 = arith.subf %178, %183 : vector<32x64xf32>
    %185 = arith.mulf %184, %184 : vector<32x64xf32>
    %cst_69 = arith.constant dense<0.000000e+00> : vector<32xf32>
    %186 = vector.multi_reduction <add>, %185, %cst_69 [1] : vector<32x64xf32> to vector<32xf32>
    %187 = vector.shape_cast %186 : vector<32xf32> to vector<32x1xf32>
    %cst_70 = arith.constant 6.400000e+01 : f32
    %188 = vector.broadcast %cst_70 : f32 to vector<32x1xf32>
    %189 = arith.divf %187, %188 : vector<32x1xf32>
    %190 = vector.broadcast %182 : vector<32x1xf32> to vector<32x64xf32>
    %191 = arith.subf %178, %190 : vector<32x64xf32>
    %cst_71 = arith.constant 9.99999997E-7 : f32
    %192 = vector.broadcast %cst_71 : f32 to vector<32x1xf32>
    %193 = arith.addf %189, %192 : vector<32x1xf32>
    %194 = math.rsqrt %193 : vector<32x1xf32>
    %195 = vector.broadcast %194 : vector<32x1xf32> to vector<32x64xf32>
    %196 = arith.mulf %191, %195 : vector<32x64xf32>
    %c0_72 = arith.constant 0 : index
    %c0_73 = arith.constant 0 : index
    %197 = vector.load %arg20[%c0_72, %c0_73] : memref<1x64xf32, #tpu.memory_space<vmem>>, vector<1x64xf32>
    %198 = vector.broadcast %197 : vector<1x64xf32> to vector<32x64xf32>
    %199 = arith.mulf %196, %198 : vector<32x64xf32>
    %c0_74 = arith.constant 0 : index
    %c0_75 = arith.constant 0 : index
    %200 = vector.load %arg21[%c0_74, %c0_75] : memref<1x64xf32, #tpu.memory_space<vmem>>, vector<1x64xf32>
    %201 = vector.broadcast %200 : vector<1x64xf32> to vector<32x64xf32>
    %202 = arith.addf %199, %201 : vector<32x64xf32>
    %c0_76 = arith.constant 0 : index
    %c0_77 = arith.constant 0 : index
    %203 = vector.load %arg22[%c0_76, %c0_77] : memref<64x128xbf16, #tpu.memory_space<vmem>>, vector<64x128xbf16>
    %204 = arith.truncf %202 : vector<32x64xf32> to vector<32x64xbf16>
    %cst_78 = arith.constant dense<0.000000e+00> : vector<32x128xf32>
    %205 = tpu.matmul %204, %203, %cst_78 {dimension_numbers = #tpu.dot_dimension_numbers<[1], [0], [0], [1], [0, 0, 1, 1], [], []>} : vector<32x64xbf16>, vector<64x128xbf16>, vector<32x128xf32> -> vector<32x128xf32>
    %c0_79 = arith.constant 0 : index
    %c0_80 = arith.constant 0 : index
    %206 = vector.load %arg23[%c0_79, %c0_80] : memref<1x128xf32, #tpu.memory_space<vmem>>, vector<1x128xf32>
    %207 = vector.broadcast %206 : vector<1x128xf32> to vector<32x128xf32>
    %208 = arith.addf %205, %207 : vector<32x128xf32>
    %cst_81 = arith.constant 0.000000e+00 : f32
    %209 = vector.broadcast %cst_81 : f32 to vector<32x128xf32>
    %210 = arith.maximumf %208, %209 : vector<32x128xf32>
    %c0_82 = arith.constant 0 : index
    %c0_83 = arith.constant 0 : index
    %211 = vector.load %arg24[%c0_82, %c0_83] : memref<128x64xbf16, #tpu.memory_space<vmem>>, vector<128x64xbf16>
    %212 = arith.truncf %210 : vector<32x128xf32> to vector<32x128xbf16>
    %cst_84 = arith.constant dense<0.000000e+00> : vector<32x64xf32>
    %213 = tpu.matmul %212, %211, %cst_84 {dimension_numbers = #tpu.dot_dimension_numbers<[1], [0], [0], [1], [0, 0, 1, 1], [], []>} : vector<32x128xbf16>, vector<128x64xbf16>, vector<32x64xf32> -> vector<32x64xf32>
    %c0_85 = arith.constant 0 : index
    %c0_86 = arith.constant 0 : index
    %214 = vector.load %arg25[%c0_85, %c0_86] : memref<1x64xf32, #tpu.memory_space<vmem>>, vector<1x64xf32>
    %215 = vector.broadcast %214 : vector<1x64xf32> to vector<32x64xf32>
    %216 = arith.addf %213, %215 : vector<32x64xf32>
    %217 = arith.addf %216, %178 : vector<32x64xf32>
    %c0_87 = arith.constant 0 : index
    %c0_88 = arith.constant 0 : index
    %218 = vector.load %arg8[%c0_87, %c0_88] : memref<64x128xbf16, #tpu.memory_space<vmem>>, vector<64x128xbf16>
    %219 = arith.truncf %217 : vector<32x64xf32> to vector<32x64xbf16>
    %cst_89 = arith.constant dense<0.000000e+00> : vector<32x128xf32>
    %220 = tpu.matmul %219, %218, %cst_89 {dimension_numbers = #tpu.dot_dimension_numbers<[1], [0], [0], [1], [0, 0, 1, 1], [], []>} : vector<32x64xbf16>, vector<64x128xbf16>, vector<32x128xf32> -> vector<32x128xf32>
    %c0_90 = arith.constant 0 : index
    %c0_91 = arith.constant 0 : index
    %221 = vector.load %arg9[%c0_90, %c0_91] : memref<1x128xf32, #tpu.memory_space<vmem>>, vector<1x128xf32>
    %222 = vector.broadcast %221 : vector<1x128xf32> to vector<32x128xf32>
    %223 = arith.addf %220, %222 : vector<32x128xf32>
    %c0_92 = arith.constant 0 : index
    %c0_93 = arith.constant 0 : index
    %224 = vector.load %arg10[%c0_92, %c0_93] : memref<64x128xbf16, #tpu.memory_space<vmem>>, vector<64x128xbf16>
    %225 = arith.truncf %19 : vector<32x64xf32> to vector<32x64xbf16>
    %cst_94 = arith.constant dense<0.000000e+00> : vector<32x128xf32>
    %226 = tpu.matmul %225, %224, %cst_94 {dimension_numbers = #tpu.dot_dimension_numbers<[1], [0], [0], [1], [0, 0, 1, 1], [], []>} : vector<32x64xbf16>, vector<64x128xbf16>, vector<32x128xf32> -> vector<32x128xf32>
    %227 = arith.addf %223, %226 : vector<32x128xf32>
    %c0_95 = arith.constant 0 : index
    %c0_96 = arith.constant 0 : index
    %228 = vector.load %arg11[%c0_95, %c0_96] : memref<1x128xf32, #tpu.memory_space<vmem>>, vector<1x128xf32>
    %229 = vector.broadcast %228 : vector<1x128xf32> to vector<32x128xf32>
    %230 = arith.addf %227, %229 : vector<32x128xf32>
    %cst_97 = arith.constant dense<0.000000e+00> : vector<32xf32>
    %231 = vector.multi_reduction <add>, %230, %cst_97 [1] : vector<32x128xf32> to vector<32xf32>
    %232 = vector.shape_cast %231 : vector<32xf32> to vector<32x1xf32>
    %cst_98 = arith.constant 1.280000e+02 : f32
    %233 = vector.broadcast %cst_98 : f32 to vector<32x1xf32>
    %234 = arith.divf %232, %233 : vector<32x1xf32>
    %235 = vector.broadcast %234 : vector<32x1xf32> to vector<32x128xf32>
    %236 = arith.subf %230, %235 : vector<32x128xf32>
    %237 = arith.mulf %236, %236 : vector<32x128xf32>
    %cst_99 = arith.constant dense<0.000000e+00> : vector<32xf32>
    %238 = vector.multi_reduction <add>, %237, %cst_99 [1] : vector<32x128xf32> to vector<32xf32>
    %239 = vector.shape_cast %238 : vector<32xf32> to vector<32x1xf32>
    %cst_100 = arith.constant 1.280000e+02 : f32
    %240 = vector.broadcast %cst_100 : f32 to vector<32x1xf32>
    %241 = arith.divf %239, %240 : vector<32x1xf32>
    %242 = vector.broadcast %234 : vector<32x1xf32> to vector<32x128xf32>
    %243 = arith.subf %230, %242 : vector<32x128xf32>
    %cst_101 = arith.constant 9.99999974E-6 : f32
    %244 = vector.broadcast %cst_101 : f32 to vector<32x1xf32>
    %245 = arith.addf %241, %244 : vector<32x1xf32>
    %246 = math.rsqrt %245 : vector<32x1xf32>
    %247 = vector.broadcast %246 : vector<32x1xf32> to vector<32x128xf32>
    %248 = arith.mulf %243, %247 : vector<32x128xf32>
    %c0_102 = arith.constant 0 : index
    %c0_103 = arith.constant 0 : index
    %249 = vector.load %arg26[%c0_102, %c0_103] : memref<1x128xf32, #tpu.memory_space<vmem>>, vector<1x128xf32>
    %250 = vector.broadcast %249 : vector<1x128xf32> to vector<32x128xf32>
    %251 = arith.mulf %248, %250 : vector<32x128xf32>
    %c0_104 = arith.constant 0 : index
    %c0_105 = arith.constant 0 : index
    %252 = vector.load %arg27[%c0_104, %c0_105] : memref<1x128xf32, #tpu.memory_space<vmem>>, vector<1x128xf32>
    %253 = vector.broadcast %252 : vector<1x128xf32> to vector<32x128xf32>
    %254 = arith.addf %251, %253 : vector<32x128xf32>
    %c0_106 = arith.constant 0 : index
    %c0_107 = arith.constant 0 : index
    %255 = vector.load %arg28[%c0_106, %c0_107] : memref<128x192xbf16, #tpu.memory_space<vmem>>, vector<128x192xbf16>
    %256 = arith.truncf %254 : vector<32x128xf32> to vector<32x128xbf16>
    %cst_108 = arith.constant dense<0.000000e+00> : vector<32x192xf32>
    %257 = tpu.matmul %256, %255, %cst_108 {dimension_numbers = #tpu.dot_dimension_numbers<[1], [0], [0], [1], [0, 0, 1, 1], [], []>} : vector<32x128xbf16>, vector<128x192xbf16>, vector<32x192xf32> -> vector<32x192xf32>
    %258 = vector.extract_strided_slice %257 {offsets = [0, 0], sizes = [32, 16], strides = [1, 1]} : vector<32x192xf32> to vector<32x16xf32>
    %259 = vector.shape_cast %258 : vector<32x16xf32> to vector<2x16x16xf32>
    %260 = arith.truncf %259 : vector<2x16x16xf32> to vector<2x16x16xbf16>
    %261 = vector.extract_strided_slice %257 {offsets = [0, 64], sizes = [32, 16], strides = [1, 1]} : vector<32x192xf32> to vector<32x16xf32>
    %262 = vector.shape_cast %261 : vector<32x16xf32> to vector<2x16x16xf32>
    %263 = arith.truncf %262 : vector<2x16x16xf32> to vector<2x16x16xbf16>
    %264 = vector.extract_strided_slice %257 {offsets = [0, 128], sizes = [32, 16], strides = [1, 1]} : vector<32x192xf32> to vector<32x16xf32>
    %265 = vector.shape_cast %264 : vector<32x16xf32> to vector<2x16x16xf32>
    %266 = arith.truncf %265 : vector<2x16x16xf32> to vector<2x16x16xbf16>
    "tpu.trace_start"() <{level = 10 : i32, message = "bld,bmd->blm"}> : () -> ()
    %cst_109 = arith.constant dense<0.000000e+00> : vector<2x16x16xf32>
    %267 = tpu.matmul %260, %263, %cst_109 {dimension_numbers = #tpu.dot_dimension_numbers<[2], [2], [1], [1], [0, 0, 0, 1, 1, 1], [0], [0]>} : vector<2x16x16xbf16>, vector<2x16x16xbf16>, vector<2x16x16xf32> -> vector<2x16x16xf32>
    "tpu.trace_stop"() : () -> ()
    %268 = vector.shape_cast %25 : vector<16x16xf32> to vector<1x16x16xf32>
    %269 = vector.broadcast %268 : vector<1x16x16xf32> to vector<2x16x16xf32>
    %270 = arith.addf %267, %269 : vector<2x16x16xf32>
    %cst_110 = arith.constant dense<0xFF800000> : vector<2x16xf32>
    %271 = vector.multi_reduction <maximumf>, %270, %cst_110 [2] : vector<2x16x16xf32> to vector<2x16xf32>
    %272 = vector.shape_cast %271 : vector<2x16xf32> to vector<2x16x1xf32>
    %273 = vector.broadcast %272 : vector<2x16x1xf32> to vector<2x16x16xf32>
    %274 = arith.subf %270, %273 : vector<2x16x16xf32>
    %275 = math.exp %274 : vector<2x16x16xf32>
    %cst_111 = arith.constant dense<0.000000e+00> : vector<2x16xf32>
    %276 = vector.multi_reduction <add>, %275, %cst_111 [2] : vector<2x16x16xf32> to vector<2x16xf32>
    %277 = vector.shape_cast %276 : vector<2x16xf32> to vector<2x16x1xf32>
    %278 = tpu.reciprocal %277 {approx = true} : vector<2x16x1xf32> -> vector<2x16x1xf32>
    %279 = vector.broadcast %278 : vector<2x16x1xf32> to vector<2x16x16xf32>
    %280 = arith.mulf %275, %279 : vector<2x16x16xf32>
    %c0_112 = arith.constant 0 : index
    %c0_113 = arith.constant 0 : index
    %c0_114 = arith.constant 0 : index
    %c0_115 = arith.constant 0 : index
    %281 = vector.load %arg38[%c0_112, %c0_113, %c0_114, %c0_115] : memref<2x4x16x16xf32, #tpu.memory_space<vmem>>, vector<2x1x16x16xf32>
    %282 = vector.shape_cast %281 : vector<2x1x16x16xf32> to vector<2x16x16xf32>
    %cst_116 = arith.constant 5.000000e-01 : f32
    %283 = vector.broadcast %cst_116 : f32 to vector<2x16x16xf32>
    %284 = arith.mulf %283, %280 : vector<2x16x16xf32>
    %285 = arith.addf %282, %284 : vector<2x16x16xf32>
    %c0_117 = arith.constant 0 : index
    %c0_118 = arith.constant 0 : index
    %c0_119 = arith.constant 0 : index
    %c0_120 = arith.constant 0 : index
    %286 = vector.load %arg38[%c0_117, %c0_118, %c0_119, %c0_120] : memref<2x4x16x16xf32, #tpu.memory_space<vmem>>, vector<2x1x16x16xf32>
    %287 = vector.shape_cast %286 : vector<2x1x16x16xf32> to vector<2x16x16xf32>
    %288 = vector.shape_cast %285 : vector<2x16x16xf32> to vector<2x1x16x16xf32>
    tpu.vector_store %arg38[%c0_117, %c0_118, %c0_119, %c0_120], %288 {strides = array<i32>} : memref<2x4x16x16xf32, #tpu.memory_space<vmem>>, vector<2x1x16x16xf32>,
    %289 = arith.truncf %280 : vector<2x16x16xf32> to vector<2x16x16xbf16>
    "tpu.trace_start"() <{level = 10 : i32, message = "blm,bmd->bld"}> : () -> ()
    %cst_121 = arith.constant dense<0.000000e+00> : vector<2x16x16xf32>
    %290 = tpu.matmul %289, %266, %cst_121 {dimension_numbers = #tpu.dot_dimension_numbers<[2], [1], [1], [2], [0, 0, 0, 1, 1, 2], [0], [0]>} : vector<2x16x16xbf16>, vector<2x16x16xbf16>, vector<2x16x16xf32> -> vector<2x16x16xf32>
    "tpu.trace_stop"() : () -> ()
    %291 = vector.extract_strided_slice %257 {offsets = [0, 16], sizes = [32, 16], strides = [1, 1]} : vector<32x192xf32> to vector<32x16xf32>
    %292 = vector.shape_cast %291 : vector<32x16xf32> to vector<2x16x16xf32>
    %293 = arith.truncf %292 : vector<2x16x16xf32> to vector<2x16x16xbf16>
    %294 = vector.extract_strided_slice %257 {offsets = [0, 80], sizes = [32, 16], strides = [1, 1]} : vector<32x192xf32> to vector<32x16xf32>
    %295 = vector.shape_cast %294 : vector<32x16xf32> to vector<2x16x16xf32>
    %296 = arith.truncf %295 : vector<2x16x16xf32> to vector<2x16x16xbf16>
    %297 = vector.extract_strided_slice %257 {offsets = [0, 144], sizes = [32, 16], strides = [1, 1]} : vector<32x192xf32> to vector<32x16xf32>
    %298 = vector.shape_cast %297 : vector<32x16xf32> to vector<2x16x16xf32>
    %299 = arith.truncf %298 : vector<2x16x16xf32> to vector<2x16x16xbf16>
    "tpu.trace_start"() <{level = 10 : i32, message = "bld,bmd->blm"}> : () -> ()
    %cst_122 = arith.constant dense<0.000000e+00> : vector<2x16x16xf32>
    %300 = tpu.matmul %293, %296, %cst_122 {dimension_numbers = #tpu.dot_dimension_numbers<[2], [2], [1], [1], [0, 0, 0, 1, 1, 1], [0], [0]>} : vector<2x16x16xbf16>, vector<2x16x16xbf16>, vector<2x16x16xf32> -> vector<2x16x16xf32>
    "tpu.trace_stop"() : () -> ()
    %301 = vector.shape_cast %25 : vector<16x16xf32> to vector<1x16x16xf32>
    %302 = vector.broadcast %301 : vector<1x16x16xf32> to vector<2x16x16xf32>
    %303 = arith.addf %300, %302 : vector<2x16x16xf32>
    %cst_123 = arith.constant dense<0xFF800000> : vector<2x16xf32>
    %304 = vector.multi_reduction <maximumf>, %303, %cst_123 [2] : vector<2x16x16xf32> to vector<2x16xf32>
    %305 = vector.shape_cast %304 : vector<2x16xf32> to vector<2x16x1xf32>
    %306 = vector.broadcast %305 : vector<2x16x1xf32> to vector<2x16x16xf32>
    %307 = arith.subf %303, %306 : vector<2x16x16xf32>
    %308 = math.exp %307 : vector<2x16x16xf32>
    %cst_124 = arith.constant dense<0.000000e+00> : vector<2x16xf32>
    %309 = vector.multi_reduction <add>, %308, %cst_124 [2] : vector<2x16x16xf32> to vector<2x16xf32>
    %310 = vector.shape_cast %309 : vector<2x16xf32> to vector<2x16x1xf32>
    %311 = tpu.reciprocal %310 {approx = true} : vector<2x16x1xf32> -> vector<2x16x1xf32>
    %312 = vector.broadcast %311 : vector<2x16x1xf32> to vector<2x16x16xf32>
    %313 = arith.mulf %308, %312 : vector<2x16x16xf32>
    %c0_125 = arith.constant 0 : index
    %c1_126 = arith.constant 1 : index
    %c0_127 = arith.constant 0 : index
    %c0_128 = arith.constant 0 : index
    %314 = vector.load %arg38[%c0_125, %c1_126, %c0_127, %c0_128] : memref<2x4x16x16xf32, #tpu.memory_space<vmem>>, vector<2x1x16x16xf32>
    %315 = vector.shape_cast %314 : vector<2x1x16x16xf32> to vector<2x16x16xf32>
    %cst_129 = arith.constant 5.000000e-01 : f32
    %316 = vector.broadcast %cst_129 : f32 to vector<2x16x16xf32>
    %317 = arith.mulf %316, %313 : vector<2x16x16xf32>
    %318 = arith.addf %315, %317 : vector<2x16x16xf32>
    %c0_130 = arith.constant 0 : index
    %c1_131 = arith.constant 1 : index
    %c0_132 = arith.constant 0 : index
    %c0_133 = arith.constant 0 : index
    %319 = vector.load %arg38[%c0_130, %c1_131, %c0_132, %c0_133] : memref<2x4x16x16xf32, #tpu.memory_space<vmem>>, vector<2x1x16x16xf32>
    %320 = vector.shape_cast %319 : vector<2x1x16x16xf32> to vector<2x16x16xf32>
    %321 = vector.shape_cast %318 : vector<2x16x16xf32> to vector<2x1x16x16xf32>
    tpu.vector_store %arg38[%c0_130, %c1_131, %c0_132, %c0_133], %321 {strides = array<i32>} : memref<2x4x16x16xf32, #tpu.memory_space<vmem>>, vector<2x1x16x16xf32>,
    %322 = arith.truncf %313 : vector<2x16x16xf32> to vector<2x16x16xbf16>
    "tpu.trace_start"() <{level = 10 : i32, message = "blm,bmd->bld"}> : () -> ()
    %cst_134 = arith.constant dense<0.000000e+00> : vector<2x16x16xf32>
    %323 = tpu.matmul %322, %299, %cst_134 {dimension_numbers = #tpu.dot_dimension_numbers<[2], [1], [1], [2], [0, 0, 0, 1, 1, 2], [0], [0]>} : vector<2x16x16xbf16>, vector<2x16x16xbf16>, vector<2x16x16xf32> -> vector<2x16x16xf32>
    "tpu.trace_stop"() : () -> ()
    %324 = vector.extract_strided_slice %257 {offsets = [0, 32], sizes = [32, 16], strides = [1, 1]} : vector<32x192xf32> to vector<32x16xf32>
    %325 = vector.shape_cast %324 : vector<32x16xf32> to vector<2x16x16xf32>
    %326 = arith.truncf %325 : vector<2x16x16xf32> to vector<2x16x16xbf16>
    %327 = vector.extract_strided_slice %257 {offsets = [0, 96], sizes = [32, 16], strides = [1, 1]} : vector<32x192xf32> to vector<32x16xf32>
    %328 = vector.shape_cast %327 : vector<32x16xf32> to vector<2x16x16xf32>
    %329 = arith.truncf %328 : vector<2x16x16xf32> to vector<2x16x16xbf16>
    %330 = vector.extract_strided_slice %257 {offsets = [0, 160], sizes = [32, 16], strides = [1, 1]} : vector<32x192xf32> to vector<32x16xf32>
    %331 = vector.shape_cast %330 : vector<32x16xf32> to vector<2x16x16xf32>
    %332 = arith.truncf %331 : vector<2x16x16xf32> to vector<2x16x16xbf16>
    "tpu.trace_start"() <{level = 10 : i32, message = "bld,bmd->blm"}> : () -> ()
    %cst_135 = arith.constant dense<0.000000e+00> : vector<2x16x16xf32>
    %333 = tpu.matmul %326, %329, %cst_135 {dimension_numbers = #tpu.dot_dimension_numbers<[2], [2], [1], [1], [0, 0, 0, 1, 1, 1], [0], [0]>} : vector<2x16x16xbf16>, vector<2x16x16xbf16>, vector<2x16x16xf32> -> vector<2x16x16xf32>
    "tpu.trace_stop"() : () -> ()
    %334 = vector.shape_cast %25 : vector<16x16xf32> to vector<1x16x16xf32>
    %335 = vector.broadcast %334 : vector<1x16x16xf32> to vector<2x16x16xf32>
    %336 = arith.addf %333, %335 : vector<2x16x16xf32>
    %cst_136 = arith.constant dense<0xFF800000> : vector<2x16xf32>
    %337 = vector.multi_reduction <maximumf>, %336, %cst_136 [2] : vector<2x16x16xf32> to vector<2x16xf32>
    %338 = vector.shape_cast %337 : vector<2x16xf32> to vector<2x16x1xf32>
    %339 = vector.broadcast %338 : vector<2x16x1xf32> to vector<2x16x16xf32>
    %340 = arith.subf %336, %339 : vector<2x16x16xf32>
    %341 = math.exp %340 : vector<2x16x16xf32>
    %cst_137 = arith.constant dense<0.000000e+00> : vector<2x16xf32>
    %342 = vector.multi_reduction <add>, %341, %cst_137 [2] : vector<2x16x16xf32> to vector<2x16xf32>
    %343 = vector.shape_cast %342 : vector<2x16xf32> to vector<2x16x1xf32>
    %344 = tpu.reciprocal %343 {approx = true} : vector<2x16x1xf32> -> vector<2x16x1xf32>
    %345 = vector.broadcast %344 : vector<2x16x1xf32> to vector<2x16x16xf32>
    %346 = arith.mulf %341, %345 : vector<2x16x16xf32>
    %c0_138 = arith.constant 0 : index
    %c2_139 = arith.constant 2 : index
    %c0_140 = arith.constant 0 : index
    %c0_141 = arith.constant 0 : index
    %347 = vector.load %arg38[%c0_138, %c2_139, %c0_140, %c0_141] : memref<2x4x16x16xf32, #tpu.memory_space<vmem>>, vector<2x1x16x16xf32>
    %348 = vector.shape_cast %347 : vector<2x1x16x16xf32> to vector<2x16x16xf32>
    %cst_142 = arith.constant 5.000000e-01 : f32
    %349 = vector.broadcast %cst_142 : f32 to vector<2x16x16xf32>
    %350 = arith.mulf %349, %346 : vector<2x16x16xf32>
    %351 = arith.addf %348, %350 : vector<2x16x16xf32>
    %c0_143 = arith.constant 0 : index
    %c2_144 = arith.constant 2 : index
    %c0_145 = arith.constant 0 : index
    %c0_146 = arith.constant 0 : index
    %352 = vector.load %arg38[%c0_143, %c2_144, %c0_145, %c0_146] : memref<2x4x16x16xf32, #tpu.memory_space<vmem>>, vector<2x1x16x16xf32>
    %353 = vector.shape_cast %352 : vector<2x1x16x16xf32> to vector<2x16x16xf32>
    %354 = vector.shape_cast %351 : vector<2x16x16xf32> to vector<2x1x16x16xf32>
    tpu.vector_store %arg38[%c0_143, %c2_144, %c0_145, %c0_146], %354 {strides = array<i32>} : memref<2x4x16x16xf32, #tpu.memory_space<vmem>>, vector<2x1x16x16xf32>,
    %355 = arith.truncf %346 : vector<2x16x16xf32> to vector<2x16x16xbf16>
    "tpu.trace_start"() <{level = 10 : i32, message = "blm,bmd->bld"}> : () -> ()
    %cst_147 = arith.constant dense<0.000000e+00> : vector<2x16x16xf32>
    %356 = tpu.matmul %355, %332, %cst_147 {dimension_numbers = #tpu.dot_dimension_numbers<[2], [1], [1], [2], [0, 0, 0, 1, 1, 2], [0], [0]>} : vector<2x16x16xbf16>, vector<2x16x16xbf16>, vector<2x16x16xf32> -> vector<2x16x16xf32>
    "tpu.trace_stop"() : () -> ()
    %357 = vector.extract_strided_slice %257 {offsets = [0, 48], sizes = [32, 16], strides = [1, 1]} : vector<32x192xf32> to vector<32x16xf32>
    %358 = vector.shape_cast %357 : vector<32x16xf32> to vector<2x16x16xf32>
    %359 = arith.truncf %358 : vector<2x16x16xf32> to vector<2x16x16xbf16>
    %360 = vector.extract_strided_slice %257 {offsets = [0, 112], sizes = [32, 16], strides = [1, 1]} : vector<32x192xf32> to vector<32x16xf32>
    %361 = vector.shape_cast %360 : vector<32x16xf32> to vector<2x16x16xf32>
    %362 = arith.truncf %361 : vector<2x16x16xf32> to vector<2x16x16xbf16>
    %363 = vector.extract_strided_slice %257 {offsets = [0, 176], sizes = [32, 16], strides = [1, 1]} : vector<32x192xf32> to vector<32x16xf32>
    %364 = vector.shape_cast %363 : vector<32x16xf32> to vector<2x16x16xf32>
    %365 = arith.truncf %364 : vector<2x16x16xf32> to vector<2x16x16xbf16>
    "tpu.trace_start"() <{level = 10 : i32, message = "bld,bmd->blm"}> : () -> ()
    %cst_148 = arith.constant dense<0.000000e+00> : vector<2x16x16xf32>
    %366 = tpu.matmul %359, %362, %cst_148 {dimension_numbers = #tpu.dot_dimension_numbers<[2], [2], [1], [1], [0, 0, 0, 1, 1, 1], [0], [0]>} : vector<2x16x16xbf16>, vector<2x16x16xbf16>, vector<2x16x16xf32> -> vector<2x16x16xf32>
    "tpu.trace_stop"() : () -> ()
    %367 = vector.shape_cast %25 : vector<16x16xf32> to vector<1x16x16xf32>
    %368 = vector.broadcast %367 : vector<1x16x16xf32> to vector<2x16x16xf32>
    %369 = arith.addf %366, %368 : vector<2x16x16xf32>
    %cst_149 = arith.constant dense<0xFF800000> : vector<2x16xf32>
    %370 = vector.multi_reduction <maximumf>, %369, %cst_149 [2] : vector<2x16x16xf32> to vector<2x16xf32>
    %371 = vector.shape_cast %370 : vector<2x16xf32> to vector<2x16x1xf32>
    %372 = vector.broadcast %371 : vector<2x16x1xf32> to vector<2x16x16xf32>
    %373 = arith.subf %369, %372 : vector<2x16x16xf32>
    %374 = math.exp %373 : vector<2x16x16xf32>
    %cst_150 = arith.constant dense<0.000000e+00> : vector<2x16xf32>
    %375 = vector.multi_reduction <add>, %374, %cst_150 [2] : vector<2x16x16xf32> to vector<2x16xf32>
    %376 = vector.shape_cast %375 : vector<2x16xf32> to vector<2x16x1xf32>
    %377 = tpu.reciprocal %376 {approx = true} : vector<2x16x1xf32> -> vector<2x16x1xf32>
    %378 = vector.broadcast %377 : vector<2x16x1xf32> to vector<2x16x16xf32>
    %379 = arith.mulf %374, %378 : vector<2x16x16xf32>
    %c0_151 = arith.constant 0 : index
    %c3_152 = arith.constant 3 : index
    %c0_153 = arith.constant 0 : index
    %c0_154 = arith.constant 0 : index
    %380 = vector.load %arg38[%c0_151, %c3_152, %c0_153, %c0_154] : memref<2x4x16x16xf32, #tpu.memory_space<vmem>>, vector<2x1x16x16xf32>
    %381 = vector.shape_cast %380 : vector<2x1x16x16xf32> to vector<2x16x16xf32>
    %cst_155 = arith.constant 5.000000e-01 : f32
    %382 = vector.broadcast %cst_155 : f32 to vector<2x16x16xf32>
    %383 = arith.mulf %382, %379 : vector<2x16x16xf32>
    %384 = arith.addf %381, %383 : vector<2x16x16xf32>
    %c0_156 = arith.constant 0 : index
    %c3_157 = arith.constant 3 : index
    %c0_158 = arith.constant 0 : index
    %c0_159 = arith.constant 0 : index
    %385 = vector.load %arg38[%c0_156, %c3_157, %c0_158, %c0_159] : memref<2x4x16x16xf32, #tpu.memory_space<vmem>>, vector<2x1x16x16xf32>
    %386 = vector.shape_cast %385 : vector<2x1x16x16xf32> to vector<2x16x16xf32>
    %387 = vector.shape_cast %384 : vector<2x16x16xf32> to vector<2x1x16x16xf32>
    tpu.vector_store %arg38[%c0_156, %c3_157, %c0_158, %c0_159], %387 {strides = array<i32>} : memref<2x4x16x16xf32, #tpu.memory_space<vmem>>, vector<2x1x16x16xf32>,
    %388 = arith.truncf %379 : vector<2x16x16xf32> to vector<2x16x16xbf16>
    "tpu.trace_start"() <{level = 10 : i32, message = "blm,bmd->bld"}> : () -> ()
    %cst_160 = arith.constant dense<0.000000e+00> : vector<2x16x16xf32>
    %389 = tpu.matmul %388, %365, %cst_160 {dimension_numbers = #tpu.dot_dimension_numbers<[2], [1], [1], [2], [0, 0, 0, 1, 1, 2], [0], [0]>} : vector<2x16x16xbf16>, vector<2x16x16xbf16>, vector<2x16x16xf32> -> vector<2x16x16xf32>
    "tpu.trace_stop"() : () -> ()
    %390 = tpu.concatenate %290, %323, %356, %389 in 2 : vector<2x16x16xf32>, vector<2x16x16xf32>, vector<2x16x16xf32>, vector<2x16x16xf32> -> vector<2x16x64xf32>
    %391 = vector.shape_cast %390 : vector<2x16x64xf32> to vector<32x64xf32>
    %c0_161 = arith.constant 0 : index
    %c0_162 = arith.constant 0 : index
    %392 = vector.load %arg29[%c0_161, %c0_162] : memref<64x128xbf16, #tpu.memory_space<vmem>>, vector<64x128xbf16>
    %393 = arith.truncf %391 : vector<32x64xf32> to vector<32x64xbf16>
    %cst_163 = arith.constant dense<0.000000e+00> : vector<32x128xf32>
    %394 = tpu.matmul %393, %392, %cst_163 {dimension_numbers = #tpu.dot_dimension_numbers<[1], [0], [0], [1], [0, 0, 1, 1], [], []>} : vector<32x64xbf16>, vector<64x128xbf16>, vector<32x128xf32> -> vector<32x128xf32>
    %395 = arith.addf %394, %230 : vector<32x128xf32>
    %cst_164 = arith.constant dense<0.000000e+00> : vector<32xf32>
    %396 = vector.multi_reduction <add>, %395, %cst_164 [1] : vector<32x128xf32> to vector<32xf32>
    %397 = vector.shape_cast %396 : vector<32xf32> to vector<32x1xf32>
    %cst_165 = arith.constant 1.280000e+02 : f32
    %398 = vector.broadcast %cst_165 : f32 to vector<32x1xf32>
    %399 = arith.divf %397, %398 : vector<32x1xf32>
    %400 = vector.broadcast %399 : vector<32x1xf32> to vector<32x128xf32>
    %401 = arith.subf %395, %400 : vector<32x128xf32>
    %402 = arith.mulf %401, %401 : vector<32x128xf32>
    %cst_166 = arith.constant dense<0.000000e+00> : vector<32xf32>
    %403 = vector.multi_reduction <add>, %402, %cst_166 [1] : vector<32x128xf32> to vector<32xf32>
    %404 = vector.shape_cast %403 : vector<32xf32> to vector<32x1xf32>
    %cst_167 = arith.constant 1.280000e+02 : f32
    %405 = vector.broadcast %cst_167 : f32 to vector<32x1xf32>
    %406 = arith.divf %404, %405 : vector<32x1xf32>
    %407 = vector.broadcast %399 : vector<32x1xf32> to vector<32x128xf32>
    %408 = arith.subf %395, %407 : vector<32x128xf32>
    %cst_168 = arith.constant 9.99999997E-7 : f32
    %409 = vector.broadcast %cst_168 : f32 to vector<32x1xf32>
    %410 = arith.addf %406, %409 : vector<32x1xf32>
    %411 = math.rsqrt %410 : vector<32x1xf32>
    %412 = vector.broadcast %411 : vector<32x1xf32> to vector<32x128xf32>
    %413 = arith.mulf %408, %412 : vector<32x128xf32>
    %c0_169 = arith.constant 0 : index
    %c0_170 = arith.constant 0 : index
    %414 = vector.load %arg30[%c0_169, %c0_170] : memref<1x128xf32, #tpu.memory_space<vmem>>, vector<1x128xf32>
    %415 = vector.broadcast %414 : vector<1x128xf32> to vector<32x128xf32>
    %416 = arith.mulf %413, %415 : vector<32x128xf32>
    %c0_171 = arith.constant 0 : index
    %c0_172 = arith.constant 0 : index
    %417 = vector.load %arg31[%c0_171, %c0_172] : memref<1x128xf32, #tpu.memory_space<vmem>>, vector<1x128xf32>
    %418 = vector.broadcast %417 : vector<1x128xf32> to vector<32x128xf32>
    %419 = arith.addf %416, %418 : vector<32x128xf32>
    %c0_173 = arith.constant 0 : index
    %c0_174 = arith.constant 0 : index
    %420 = vector.load %arg32[%c0_173, %c0_174] : memref<128x128xbf16, #tpu.memory_space<vmem>>, vector<128x128xbf16>
    %421 = arith.truncf %419 : vector<32x128xf32> to vector<32x128xbf16>
    %cst_175 = arith.constant dense<0.000000e+00> : vector<32x128xf32>
    %422 = tpu.matmul %421, %420, %cst_175 {dimension_numbers = #tpu.dot_dimension_numbers<[1], [0], [0], [1], [0, 0, 1, 1], [], []>} : vector<32x128xbf16>, vector<128x128xbf16>, vector<32x128xf32> -> vector<32x128xf32>
    %c0_176 = arith.constant 0 : index
    %c0_177 = arith.constant 0 : index
    %423 = vector.load %arg33[%c0_176, %c0_177] : memref<1x128xf32, #tpu.memory_space<vmem>>, vector<1x128xf32>
    %424 = vector.broadcast %423 : vector<1x128xf32> to vector<32x128xf32>
    %425 = arith.addf %422, %424 : vector<32x128xf32>
    %cst_178 = arith.constant 0.000000e+00 : f32
    %426 = vector.broadcast %cst_178 : f32 to vector<32x128xf32>
    %427 = arith.maximumf %425, %426 : vector<32x128xf32>
    %c0_179 = arith.constant 0 : index
    %c0_180 = arith.constant 0 : index
    %428 = vector.load %arg34[%c0_179, %c0_180] : memref<128x128xbf16, #tpu.memory_space<vmem>>, vector<128x128xbf16>
    %429 = arith.truncf %427 : vector<32x128xf32> to vector<32x128xbf16>
    %cst_181 = arith.constant dense<0.000000e+00> : vector<32x128xf32>
    %430 = tpu.matmul %429, %428, %cst_181 {dimension_numbers = #tpu.dot_dimension_numbers<[1], [0], [0], [1], [0, 0, 1, 1], [], []>} : vector<32x128xbf16>, vector<128x128xbf16>, vector<32x128xf32> -> vector<32x128xf32>
    %c0_182 = arith.constant 0 : index
    %c0_183 = arith.constant 0 : index
    %431 = vector.load %arg35[%c0_182, %c0_183] : memref<1x128xf32, #tpu.memory_space<vmem>>, vector<1x128xf32>
    %432 = vector.broadcast %431 : vector<1x128xf32> to vector<32x128xf32>
    %433 = arith.addf %430, %432 : vector<32x128xf32>
    %434 = arith.addf %433, %395 : vector<32x128xf32>
    %435 = vector.extract_strided_slice %434 {offsets = [0, 0], sizes = [32, 64], strides = [1, 1]} : vector<32x128xf32> to vector<32x64xf32>
    %436 = arith.negf %435 : vector<32x64xf32>
    %437 = math.exp %436 : vector<32x64xf32>
    %cst_184 = arith.constant 1.000000e+00 : f32
    %438 = vector.broadcast %cst_184 : f32 to vector<32x64xf32>
    %439 = arith.addf %438, %437 : vector<32x64xf32>
    %440 = arith.divf %438, %439 : vector<32x64xf32>
    %441 = vector.extract_strided_slice %434 {offsets = [0, 64], sizes = [32, 64], strides = [1, 1]} : vector<32x128xf32> to vector<32x64xf32>
    %442 = math.tanh %441 : vector<32x64xf32>
    %443 = arith.mulf %440, %442 : vector<32x64xf32>
    %c0_185 = arith.constant 0 : index
    %c0_186 = arith.constant 0 : index
    %444 = vector.load %arg12[%c0_185, %c0_186] : memref<64x128xbf16, #tpu.memory_space<vmem>>, vector<64x128xbf16>
    %445 = arith.truncf %443 : vector<32x64xf32> to vector<32x64xbf16>
    %cst_187 = arith.constant dense<0.000000e+00> : vector<32x128xf32>
    %446 = tpu.matmul %445, %444, %cst_187 {dimension_numbers = #tpu.dot_dimension_numbers<[1], [0], [0], [1], [0, 0, 1, 1], [], []>} : vector<32x64xbf16>, vector<64x128xbf16>, vector<32x128xf32> -> vector<32x128xf32>
    %c0_188 = arith.constant 0 : index
    %c0_189 = arith.constant 0 : index
    %447 = vector.load %arg13[%c0_188, %c0_189] : memref<1x128xf32, #tpu.memory_space<vmem>>, vector<1x128xf32>
    %448 = vector.broadcast %447 : vector<1x128xf32> to vector<32x128xf32>
    %449 = arith.addf %446, %448 : vector<32x128xf32>
    %c0_190 = arith.constant 0 : index
    %c0_191 = arith.constant 0 : index
    %450 = vector.load %arg14[%c0_190, %c0_191] : memref<64x128xbf16, #tpu.memory_space<vmem>>, vector<64x128xbf16>
    %451 = arith.truncf %443 : vector<32x64xf32> to vector<32x64xbf16>
    %cst_192 = arith.constant dense<0.000000e+00> : vector<32x128xf32>
    %452 = tpu.matmul %451, %450, %cst_192 {dimension_numbers = #tpu.dot_dimension_numbers<[1], [0], [0], [1], [0, 0, 1, 1], [], []>} : vector<32x64xbf16>, vector<64x128xbf16>, vector<32x128xf32> -> vector<32x128xf32>
    %c0_193 = arith.constant 0 : index
    %c0_194 = arith.constant 0 : index
    %453 = vector.load %arg15[%c0_193, %c0_194] : memref<1x128xf32, #tpu.memory_space<vmem>>, vector<1x128xf32>
    %454 = vector.broadcast %453 : vector<1x128xf32> to vector<32x128xf32>
    %455 = arith.addf %452, %454 : vector<32x128xf32>
    %456 = arith.addf %1, %449 : vector<32x128xf32>
    %cst_195 = arith.constant 0.707106769 : f32
    %457 = vector.broadcast %cst_195 : f32 to vector<32x128xf32>
    %458 = arith.mulf %456, %457 : vector<32x128xf32>
    %459 = vector.shape_cast %458 : vector<32x128xf32> to vector<2x16x128xf32>
    %c0_196 = arith.constant 0 : index
    %c0_197 = arith.constant 0 : index
    %c0_198 = arith.constant 0 : index
    %460 = vector.load %arg36[%c0_196, %c0_197, %c0_198] : memref<2x16x128xf32, #tpu.memory_space<vmem>>, vector<2x16x128xf32>
    tpu.vector_store %arg36[%c0_196, %c0_197, %c0_198], %459 {strides = array<i32>} : memref<2x16x128xf32, #tpu.memory_space<vmem>>, vector<2x16x128xf32>,
    %461 = vector.shape_cast %455 : vector<32x128xf32> to vector<2x16x128xf32>
    %c0_199 = arith.constant 0 : index
    %c0_200 = arith.constant 0 : index
    %c0_201 = arith.constant 0 : index
    %462 = vector.load %arg37[%c0_199, %c0_200, %c0_201] : memref<2x16x128xf32, #tpu.memory_space<vmem>>, vector<2x16x128xf32>
    tpu.vector_store %arg37[%c0_199, %c0_200, %c0_201], %461 {strides = array<i32>} : memref<2x16x128xf32, #tpu.memory_space<vmem>>, vector<2x16x128xf32>,
    return
  }
  func.func @transform_0(%arg0: i32) -> (i32, i32, i32) {
    %c0_i32 = arith.constant 0 : i32
    %c0_i32_0 = arith.constant 0 : i32
    %c0_i32_1 = arith.constant 0 : i32
    return %arg0, %c0_i32, %c0_i32_0 : i32, i32, i32
  }
  func.func @transform_1(%arg0: i32) -> (i32, i32, i32) {
    %c0_i32 = arith.constant 0 : i32
    %c0_i32_0 = arith.constant 0 : i32
    %c0_i32_1 = arith.constant 0 : i32
    return %arg0, %c0_i32, %c0_i32_0 : i32, i32, i32
  }
  func.func @transform_2(%arg0: i32) -> (i32, i32, i32) {
    %c0_i32 = arith.constant 0 : i32
    %c0_i32_0 = arith.constant 0 : i32
    %c0_i32_1 = arith.constant 0 : i32
    return %arg0, %c0_i32, %c0_i32_0 : i32, i32, i32
  }
  func.func @transform_3(%arg0: i32) -> (i32, i32) {
    %c0_i32 = arith.constant 0 : i32
    %c0_i32_0 = arith.constant 0 : i32
    %c0_i32_1 = arith.constant 0 : i32
    return %c0_i32, %c0_i32_0 : i32, i32
  }
  func.func @transform_4(%arg0: i32) -> (i32, i32) {
    %c0_i32 = arith.constant 0 : i32
    %c0_i32_0 = arith.constant 0 : i32
    %c0_i32_1 = arith.constant 0 : i32
    return %c0_i32, %c0_i32_0 : i32, i32
  }
  func.func @transform_5(%arg0: i32) -> (i32, i32) {
    %c0_i32 = arith.constant 0 : i32
    %c0_i32_0 = arith.constant 0 : i32
    %c0_i32_1 = arith.constant 0 : i32
    return %c0_i32, %c0_i32_0 : i32, i32
  }
  func.func @transform_6(%arg0: i32) -> (i32, i32) {
    %c0_i32 = arith.constant 0 : i32
    %c0_i32_0 = arith.constant 0 : i32
    %c0_i32_1 = arith.constant 0 : i32
    return %c0_i32, %c0_i32_0 : i32, i32
  }
  func.func @transform_7(%arg0: i32) -> (i32, i32) {
    %c0_i32 = arith.constant 0 : i32
    %c0_i32_0 = arith.constant 0 : i32
    %c0_i32_1 = arith.constant 0 : i32
    return %c0_i32, %c0_i32_0 : i32, i32
  }
  func.func @transform_8(%arg0: i32) -> (i32, i32) {
    %c0_i32 = arith.constant 0 : i32
    %c0_i32_0 = arith.constant 0 : i32
    %c0_i32_1 = arith.constant 0 : i32
    return %c0_i32, %c0_i32_0 : i32, i32
  }
  func.func @transform_9(%arg0: i32) -> (i32, i32) {
    %c0_i32 = arith.constant 0 : i32
    %c0_i32_0 = arith.constant 0 : i32
    %c0_i32_1 = arith.constant 0 : i32
    return %c0_i32, %c0_i32_0 : i32, i32
  }
  func.func @transform_10(%arg0: i32) -> (i32, i32) {
    %c0_i32 = arith.constant 0 : i32
    %c0_i32_0 = arith.constant 0 : i32
    %c0_i32_1 = arith.constant 0 : i32
    return %c0_i32, %c0_i32_0 : i32, i32
  }
  func.func @transform_11(%arg0: i32) -> (i32, i32) {
    %c0_i32 = arith.constant 0 : i32
    %c0_i32_0 = arith.constant 0 : i32
    %c0_i32_1 = arith.constant 0 : i32
    return %c0_i32, %c0_i32_0 : i32, i32
  }
  func.func @transform_12(%arg0: i32) -> (i32, i32) {
    %c0_i32 = arith.constant 0 : i32
    %c0_i32_0 = arith.constant 0 : i32
    %c0_i32_1 = arith.constant 0 : i32
    return %c0_i32, %c0_i32_0 : i32, i32
  }
  func.func @transform_13(%arg0: i32) -> (i32, i32) {
    %c0_i32 = arith.constant 0 : i32
    %c0_i32_0 = arith.constant 0 : i32
    %c0_i32_1 = arith.constant 0 : i32
    return %c0_i32, %c0_i32_0 : i32, i32
  }
  func.func @transform_14(%arg0: i32) -> (i32, i32) {
    %c0_i32 = arith.constant 0 : i32
    %c0_i32_0 = arith.constant 0 : i32
    %c0_i32_1 = arith.constant 0 : i32
    return %c0_i32, %c0_i32_0 : i32, i32
  }
  func.func @transform_15(%arg0: i32) -> (i32, i32) {
    %c0_i32 = arith.constant 0 : i32
    %c0_i32_0 = arith.constant 0 : i32
    %c0_i32_1 = arith.constant 0 : i32
    return %c0_i32, %c0_i32_0 : i32, i32
  }
  func.func @transform_16(%arg0: i32) -> (i32, i32) {
    %c0_i32 = arith.constant 0 : i32
    %c0_i32_0 = arith.constant 0 : i32
    %c0_i32_1 = arith.constant 0 : i32
    return %c0_i32, %c0_i32_0 : i32, i32
  }
  func.func @transform_17(%arg0: i32) -> (i32, i32) {
    %c0_i32 = arith.constant 0 : i32
    %c0_i32_0 = arith.constant 0 : i32
    %c0_i32_1 = arith.constant 0 : i32
    return %c0_i32, %c0_i32_0 : i32, i32
  }
  func.func @transform_18(%arg0: i32) -> (i32, i32) {
    %c0_i32 = arith.constant 0 : i32
    %c0_i32_0 = arith.constant 0 : i32
    %c0_i32_1 = arith.constant 0 : i32
    return %c0_i32, %c0_i32_0 : i32, i32
  }
  func.func @transform_19(%arg0: i32) -> (i32, i32) {
    %c0_i32 = arith.constant 0 : i32
    %c0_i32_0 = arith.constant 0 : i32
    %c0_i32_1 = arith.constant 0 : i32
    return %c0_i32, %c0_i32_0 : i32, i32
  }
  func.func @transform_20(%arg0: i32) -> (i32, i32) {
    %c0_i32 = arith.constant 0 : i32
    %c0_i32_0 = arith.constant 0 : i32
    %c0_i32_1 = arith.constant 0 : i32
    return %c0_i32, %c0_i32_0 : i32, i32
  }
  func.func @transform_21(%arg0: i32) -> (i32, i32) {
    %c0_i32 = arith.constant 0 : i32
    %c0_i32_0 = arith.constant 0 : i32
    %c0_i32_1 = arith.constant 0 : i32
    return %c0_i32, %c0_i32_0 : i32, i32
  }
  func.func @transform_22(%arg0: i32) -> (i32, i32) {
    %c0_i32 = arith.constant 0 : i32
    %c0_i32_0 = arith.constant 0 : i32
    %c0_i32_1 = arith.constant 0 : i32
    return %c0_i32, %c0_i32_0 : i32, i32
  }
  func.func @transform_23(%arg0: i32) -> (i32, i32) {
    %c0_i32 = arith.constant 0 : i32
    %c0_i32_0 = arith.constant 0 : i32
    %c0_i32_1 = arith.constant 0 : i32
    return %c0_i32, %c0_i32_0 : i32, i32
  }
  func.func @transform_24(%arg0: i32) -> (i32, i32) {
    %c0_i32 = arith.constant 0 : i32
    %c0_i32_0 = arith.constant 0 : i32
    %c0_i32_1 = arith.constant 0 : i32
    return %c0_i32, %c0_i32_0 : i32, i32
  }
  func.func @transform_25(%arg0: i32) -> (i32, i32) {
    %c0_i32 = arith.constant 0 : i32
    %c0_i32_0 = arith.constant 0 : i32
    %c0_i32_1 = arith.constant 0 : i32
    return %c0_i32, %c0_i32_0 : i32, i32
  }
  func.func @transform_26(%arg0: i32) -> (i32, i32) {
    %c0_i32 = arith.constant 0 : i32
    %c0_i32_0 = arith.constant 0 : i32
    %c0_i32_1 = arith.constant 0 : i32
    return %c0_i32, %c0_i32_0 : i32, i32
  }
  func.func @transform_27(%arg0: i32) -> (i32, i32) {
    %c0_i32 = arith.constant 0 : i32
    %c0_i32_0 = arith.constant 0 : i32
    %c0_i32_1 = arith.constant 0 : i32
    return %c0_i32, %c0_i32_0 : i32, i32
  }
  func.func @transform_28(%arg0: i32) -> (i32, i32) {
    %c0_i32 = arith.constant 0 : i32
    %c0_i32_0 = arith.constant 0 : i32
    %c0_i32_1 = arith.constant 0 : i32
    return %c0_i32, %c0_i32_0 : i32, i32
  }
  func.func @transform_29(%arg0: i32) -> (i32, i32) {
    %c0_i32 = arith.constant 0 : i32
    %c0_i32_0 = arith.constant 0 : i32
    %c0_i32_1 = arith.constant 0 : i32
    return %c0_i32, %c0_i32_0 : i32, i32
  }
  func.func @transform_30(%arg0: i32) -> (i32, i32) {
    %c0_i32 = arith.constant 0 : i32
    %c0_i32_0 = arith.constant 0 : i32
    %c0_i32_1 = arith.constant 0 : i32
    return %c0_i32, %c0_i32_0 : i32, i32
  }
  func.func @transform_31(%arg0: i32) -> (i32, i32) {
    %c0_i32 = arith.constant 0 : i32
    %c0_i32_0 = arith.constant 0 : i32
    %c0_i32_1 = arith.constant 0 : i32
    return %c0_i32, %c0_i32_0 : i32, i32
  }
  func.func @transform_32(%arg0: i32) -> (i32, i32) {
    %c0_i32 = arith.constant 0 : i32
    %c0_i32_0 = arith.constant 0 : i32
    %c0_i32_1 = arith.constant 0 : i32
    return %c0_i32, %c0_i32_0 : i32, i32
  }
  func.func @transform_33(%arg0: i32) -> (i32, i32) {
    %c0_i32 = arith.constant 0 : i32
    %c0_i32_0 = arith.constant 0 : i32
    %c0_i32_1 = arith.constant 0 : i32
    return %c0_i32, %c0_i32_0 : i32, i32
  }
  func.func @transform_34(%arg0: i32) -> (i32, i32) {
    %c0_i32 = arith.constant 0 : i32
    %c0_i32_0 = arith.constant 0 : i32
    %c0_i32_1 = arith.constant 0 : i32
    return %c0_i32, %c0_i32_0 : i32, i32
  }
  func.func @transform_35(%arg0: i32) -> (i32, i32, i32) {
    %c0_i32 = arith.constant 0 : i32
    %c0_i32_0 = arith.constant 0 : i32
    %c0_i32_1 = arith.constant 0 : i32
    return %arg0, %c0_i32, %c0_i32_0 : i32, i32, i32
  }
  func.func @transform_36(%arg0: i32) -> (i32, i32, i32) {
    %c0_i32 = arith.constant 0 : i32
    %c0_i32_0 = arith.constant 0 : i32
    %c0_i32_1 = arith.constant 0 : i32
    return %arg0, %c0_i32, %c0_i32_0 : i32, i32, i32
  }
  func.func @transform_37(%arg0: i32) -> (i32, i32, i32, i32) {
    %c0_i32 = arith.constant 0 : i32
    %c0_i32_0 = arith.constant 0 : i32
    %c0_i32_1 = arith.constant 0 : i32
    %c0_i32_2 = arith.constant 0 : i32
    return %arg0, %c0_i32, %c0_i32_0, %c0_i32_1 : i32, i32, i32, i32
  }
}

</mosaic_0001>

<llo_original>
// kernel: tpu_custom_call.1
$region0: #{tpu_custom_call.1}
  #allocation0 [shape = 'u32[]', space=smem, size = 0x4, offset = 0x4, fixed_abs, tag = 'smem constant byte address 0x4 - core index']
  #allocation1 [shape = 'u32[144,128]{1,0:T(1,128)}', space=vmem, size = 0x12000, scoped, tag = 'internal scratch']
  %s0 = inlined_call_operand.smem [shape: u32[38], index: -1, kind: input, shape index: {}]
  %s1 = sld [smem:[%s0]]
  %s2 = scalar_lea.smem %s0, 1
  %s3 = sld [smem:[%s2]]
  %s4 = scalar_lea.smem %s0, 2
  %s5 = sld [smem:[%s4]]
  %s6 = scalar_lea.smem %s0, 3
  %s7 = sld [smem:[%s6]]
  %s8 = scalar_lea.smem %s0, 4
  %s9 = sld [smem:[%s8]]
  %s10 = scalar_lea.smem %s0, 5
  %s11 = sld [smem:[%s10]]
  %s12 = scalar_lea.smem %s0, 6
  %s13 = sld [smem:[%s12]]
  %s14 = scalar_lea.smem %s0, 7
  %s15 = sld [smem:[%s14]]
  %s16 = scalar_lea.smem %s0, 8
  %s17 = sld [smem:[%s16]]
  %s18 = scalar_lea.smem %s0, 9
  %s19 = sld [smem:[%s18]]
  %s20 = scalar_lea.smem %s0, 10
  %s21 = sld [smem:[%s20]]
  %s22 = scalar_lea.smem %s0, 11
  %s23 = sld [smem:[%s22]]
  %s24 = scalar_lea.smem %s0, 12
  %s25 = sld [smem:[%s24]]
  %s26 = scalar_lea.smem %s0, 13
  %s27 = sld [smem:[%s26]]
  %s28 = scalar_lea.smem %s0, 14
  %s29 = sld [smem:[%s28]]
  %s30 = scalar_lea.smem %s0, 15
  %s31 = sld [smem:[%s30]]
  %s32 = scalar_lea.smem %s0, 16
  %s33 = sld [smem:[%s32]]
  %s34 = scalar_lea.smem %s0, 17
  %s35 = sld [smem:[%s34]]
  %s36 = scalar_lea.smem %s0, 18
  %s37 = sld [smem:[%s36]]
  %s38 = scalar_lea.smem %s0, 19
  %s39 = sld [smem:[%s38]]
  %s40 = scalar_lea.smem %s0, 20
  %s41 = sld [smem:[%s40]]
  %s42 = scalar_lea.smem %s0, 21
  %s43 = sld [smem:[%s42]]
  %s44 = scalar_lea.smem %s0, 22
  %s45 = sld [smem:[%s44]]
  %s46 = scalar_lea.smem %s0, 23
  %s47 = sld [smem:[%s46]]
  %s48 = scalar_lea.smem %s0, 24
  %s49 = sld [smem:[%s48]]
  %s50 = scalar_lea.smem %s0, 25
  %s51 = sld [smem:[%s50]]
  %s52 = scalar_lea.smem %s0, 26
  %s53 = sld [smem:[%s52]]
  %s54 = scalar_lea.smem %s0, 27
  %s55 = sld [smem:[%s54]]
  %s56 = scalar_lea.smem %s0, 28
  %s57 = sld [smem:[%s56]]
  %s58 = scalar_lea.smem %s0, 29
  %s59 = sld [smem:[%s58]]
  %s60 = scalar_lea.smem %s0, 30
  %s61 = sld [smem:[%s60]]
  %s62 = scalar_lea.smem %s0, 31
  %s63 = sld [smem:[%s62]]
  %s64 = scalar_lea.smem %s0, 32
  %s65 = sld [smem:[%s64]]
  %s66 = scalar_lea.smem %s0, 33
  %s67 = sld [smem:[%s66]]
  %s68 = scalar_lea.smem %s0, 34
  %s69 = sld [smem:[%s68]]
  %s70 = scalar_lea.smem %s0, 35
  %s71 = sld [smem:[%s70]]
  %s72 = scalar_lea.smem %s0, 36
  %s73 = sld [smem:[%s72]]
  %s74 = scalar_lea.smem %s0, 37
  %s75 = sld [smem:[%s74]]
  %76 = xla_tuple %s71, %s73, %s75
  %s77 = sld [smem:[#allocation0]]
  $region245: #{tpu_custom_call.1} parent=0
    _
  %s79 = ssub.s32 1, %s77
  %s80 = scalar_select 0, %s79, %s77
  $region1: #{tpu_custom_call.1} parent=0
    #allocation2 [shape = 'u8[2048]{0}', space=vmem, size = 0x800, scoped, tag = 'input window, operand 2']
    #allocation3 [shape = 's32[2]{0}', space=sflag, size = 0x8, scoped, tag = 'scoped memory for tpu_custom_call.1']
    #allocation4 [shape = 's32[2]{0}', space=sflag, size = 0x8, scoped, tag = 'scoped memory for tpu_custom_call.1']
    #allocation5 [shape = 'u8[512]{0}', space=vmem, size = 0x400, scoped, tag = 'input window, operand 4, single buffered']
    #allocation6 [shape = 's32[1]{0}', space=sflag, size = 0x4, scoped, tag = 'scoped memory for tpu_custom_call.1']
    #allocation7 [shape = 'u8[512]{0}', space=vmem, size = 0x400, scoped, tag = 'input window, operand 6, single buffered']
    #allocation8 [shape = 'u8[512]{0}', space=vmem, size = 0x400, scoped, tag = 'input window, operand 8, single buffered']
    #allocation9 [shape = 's32[1]{0}', space=sflag, size = 0x4, scoped, tag = 'scoped memory for tpu_custom_call.1']
    #allocation10 [shape = 'u8[512]{0}', space=vmem, size = 0x400, scoped, tag = 'input window, operand 10, single buffered']
    #allocation11 [shape = 'u8[16384]{0}', space=vmem, size = 0x4000, scoped, tag = 'input window, operand 11, single buffered']
    #allocation12 [shape = 's32[1]{0}', space=sflag, size = 0x4, scoped, tag = 'scoped memory for tpu_custom_call.1']
    #allocation13 [shape = 'u8[512]{0}', space=vmem, size = 0x400, scoped, tag = 'input window, operand 12, single buffered']
    #allocation14 [shape = 'u8[16384]{0}', space=vmem, size = 0x4000, scoped, tag = 'input window, operand 13, single buffered']
    #allocation15 [shape = 's32[1]{0}', space=sflag, size = 0x4, scoped, tag = 'scoped memory for tpu_custom_call.1']
    #allocation16 [shape = 'u8[512]{0}', space=vmem, size = 0x400, scoped, tag = 'input window, operand 14, single buffered']
    #allocation17 [shape = 'u8[512]{0}', space=vmem, size = 0x400, scoped, tag = 'input window, operand 15, single buffered']
    #allocation18 [shape = 's32[1]{0}', space=sflag, size = 0x4, scoped, tag = 'scoped memory for tpu_custom_call.1']
    #allocation19 [shape = 'u8[512]{0}', space=vmem, size = 0x400, scoped, tag = 'input window, operand 16, single buffered']
    #allocation20 [shape = 'u8[512]{0}', space=vmem, size = 0x400, scoped, tag = 'input window, operand 19, single buffered']
    #allocation21 [shape = 's32[1]{0}', space=sflag, size = 0x4, scoped, tag = 'scoped memory for tpu_custom_call.1']
    #allocation22 [shape = 'u8[16384]{0}', space=vmem, size = 0x4000, scoped, tag = 'input window, operand 21, single buffered']
    #allocation23 [shape = 'u8[16384]{0}', space=vmem, size = 0x4000, scoped, tag = 'input window, operand 28, single buffered']
    #allocation24 [shape = 's32[1]{0}', space=sflag, size = 0x4, scoped, tag = 'scoped memory for tpu_custom_call.1']
    #allocation25 [shape = 'u8[32768]{0}', space=vmem, size = 0x8000, scoped, tag = 'output window, operand 0']
    #allocation26 [shape = 'u8[32768]{0}', space=vmem, size = 0x8000, scoped, tag = 'output window, operand 1']
    #allocation27 [shape = 's32[2]{0}', space=sflag, size = 0x8, scoped, tag = 'scoped memory for tpu_custom_call.1']
    #allocation28 [shape = 'u8[131072]{0}', space=vmem, size = 0x20000, scoped, tag = 'output window, operand 2']
    %81 = vsyncpa [#allocation3], 0
    %s82 = scalar_lea.sflag [#allocation3], 1
    %83 = vsyncpa %s82, 0
    %84 = vsyncpa [#allocation6], 0
    %85 = vsyncpa [#allocation9], 0
    %86 = vsyncpa [#allocation12], 0
    %87 = vsyncpa [#allocation15], 0
    %88 = vsyncpa [#allocation18], 0
    %89 = vsyncpa [#allocation21], 0
    %90 = vsyncpa [#allocation24], 0
    %91 = vsyncpa [#allocation4], 0
    %s92 = scalar_lea.sflag [#allocation4], 1
    %93 = vsyncpa %s92, 0
    %94 = vsyncpa [#allocation27], 0
    %s95 = scalar_lea.sflag [#allocation27], 1
    %96 = vsyncpa %s95, 0
    loop: start=0, step=1, limit=4
    $region2: #{tpu_custom_call.1} parent=1 // loop_pre_header
      _
    $region3: #{tpu_custom_call.1} parent=1 // loop_header
      %s98 = sphi 0, %s102
      %p99 = scmp.ge.s32.totalorder %s98, 4
      %s108 = sphi 0, %s110
      %s111 = sphi 0, %s108
      %s112 = sphi 0, %s111
      %s128 = sphi 0, %s112
      %s134 = sphi 0, %s136
      %s137 = sphi 0, %s134
      %s138 = sphi 0, %s137
      %s154 = sphi 0, %s138
      %s160 = sphi 0, %s162
      %s163 = sphi 0, %s160
      %s164 = sphi 0, %s163
      %s180 = sphi 0, %s164
      %s184 = sphi 0, %s184
      %s186 = sphi 0, %s184
      %s187 = sphi 0, %s186
      %s201 = sphi 0, %s187
      %s205 = sphi 0, %s205
      %s207 = sphi 0, %s205
      %s208 = sphi 0, %s207
      %s222 = sphi 0, %s208
      %s226 = sphi 0, %s226
      %s228 = sphi 0, %s226
      %s229 = sphi 0, %s228
      %s243 = sphi 0, %s229
      %s247 = sphi 0, %s247
      %s249 = sphi 0, %s247
      %s250 = sphi 0, %s249
      %s264 = sphi 0, %s250
      %s268 = sphi 0, %s268
      %s270 = sphi 0, %s268
      %s271 = sphi 0, %s270
      %s285 = sphi 0, %s271
      %s289 = sphi 0, %s289
      %s291 = sphi 0, %s289
      %s292 = sphi 0, %s291
      %s306 = sphi 0, %s292
      %s310 = sphi 0, %s310
      %s312 = sphi 0, %s310
      %s313 = sphi 0, %s312
      %s327 = sphi 0, %s313
      %s331 = sphi 0, %s331
      %s333 = sphi 0, %s331
      %s334 = sphi 0, %s333
      %s348 = sphi 0, %s334
      %s352 = sphi 0, %s352
      %s354 = sphi 0, %s352
      %s355 = sphi 0, %s354
      %s369 = sphi 0, %s355
      %s373 = sphi 0, %s373
      %s375 = sphi 0, %s373
      %s376 = sphi 0, %s375
      %s390 = sphi 0, %s376
      %s394 = sphi 0, %s394
      %s396 = sphi 0, %s394
      %s397 = sphi 0, %s396
      %s411 = sphi 0, %s397
      %s415 = sphi 0, %s415
      %s417 = sphi 0, %s415
      %s418 = sphi 0, %s417
      %s432 = sphi 0, %s418
      %s436 = sphi 0, %s436
      %s438 = sphi 0, %s436
      %s439 = sphi 0, %s438
      %s453 = sphi 0, %s439
      %s457 = sphi 0, %s457
      %s459 = sphi 0, %s457
      %s460 = sphi 0, %s459
      %s474 = sphi 0, %s460
      %s478 = sphi 0, %s478
      %s480 = sphi 0, %s478
      %s481 = sphi 0, %s480
      %s495 = sphi 0, %s481
      %s499 = sphi 0, %s499
      %s501 = sphi 0, %s499
      %s502 = sphi 0, %s501
      %s516 = sphi 0, %s502
      %s520 = sphi 0, %s520
      %s522 = sphi 0, %s520
      %s523 = sphi 0, %s522
      %s537 = sphi 0, %s523
      %s541 = sphi 0, %s541
      %s543 = sphi 0, %s541
      %s544 = sphi 0, %s543
      %s558 = sphi 0, %s544
      %s562 = sphi 0, %s562
      %s564 = sphi 0, %s562
      %s565 = sphi 0, %s564
      %s579 = sphi 0, %s565
      %s583 = sphi 0, %s583
      %s585 = sphi 0, %s583
      %s586 = sphi 0, %s585
      %s600 = sphi 0, %s586
      %s604 = sphi 0, %s604
      %s606 = sphi 0, %s604
      %s607 = sphi 0, %s606
      %s621 = sphi 0, %s607
      %s625 = sphi 0, %s625
      %s627 = sphi 0, %s625
      %s628 = sphi 0, %s627
      %s642 = sphi 0, %s628
      %s646 = sphi 0, %s646
      %s648 = sphi 0, %s646
      %s649 = sphi 0, %s648
      %s663 = sphi 0, %s649
      %s667 = sphi 0, %s667
      %s669 = sphi 0, %s667
      %s670 = sphi 0, %s669
      %s684 = sphi 0, %s670
      %s688 = sphi 0, %s688
      %s690 = sphi 0, %s688
      %s691 = sphi 0, %s690
      %s705 = sphi 0, %s691
      %s709 = sphi 0, %s709
      %s711 = sphi 0, %s709
      %s712 = sphi 0, %s711
      %s726 = sphi 0, %s712
      %s730 = sphi 0, %s730
      %s732 = sphi 0, %s730
      %s733 = sphi 0, %s732
      %s747 = sphi 0, %s733
      %s751 = sphi 0, %s751
      %s753 = sphi 0, %s751
      %s754 = sphi 0, %s753
      %s768 = sphi 0, %s754
      %s772 = sphi 0, %s772
      %s774 = sphi 0, %s772
      %s775 = sphi 0, %s774
      %s789 = sphi 0, %s775
      %s793 = sphi 0, %s793
      %s795 = sphi 0, %s793
      %s796 = sphi 0, %s795
      %s810 = sphi 0, %s796
      %s814 = sphi 0, %s814
      %s816 = sphi 0, %s814
      %s817 = sphi 0, %s816
      %s831 = sphi 0, %s817
      %s835 = sphi 0, %s835
      %s837 = sphi 0, %s835
      %s838 = sphi 0, %s837
      %s852 = sphi 0, %s838
      %s858 = sphi 0, %s860
      %s861 = sphi 0, %s858
      %s862 = sphi 0, %s861
      %s878 = sphi 0, %s862
      %s884 = sphi 0, %s886
      %s887 = sphi 0, %s884
      %s888 = sphi 0, %s887
      %s904 = sphi 0, %s888
      %s910 = sphi 0, %s912
      %s913 = sphi 0, %s910
      %s914 = sphi 0, %s913
      %s930 = sphi 0, %s914
    $region4: #{tpu_custom_call.1} parent=1 // loop_header_branch
      %101 = sbr.rel (%p99) target = $region8
    $region5: #{tpu_custom_call.1} parent=1 // loop_body
      %s103 = ssub.s32 %s98, 1
      %s104 = ssub.s32 %s98, 2
      %s105 = sadd.s32 %s98, 1
      %s106 = ssub.s32 %s98, %s105
      %p107 = scmp.eq.s32.totalorder %s106, 0
      %s109 = sadd.s32 %s108, 1
      %s110 = scalar_select %p107, %s108, %s109
      %p113 = pneg %p107
      %p114 = scmp.eq.s32.totalorder %s98, 1
      %p115 = por %p113, %p114
      %p116 = scmp.ne.s32.totalorder %s108, %s111
      %p117 = scmp.eq.s32.totalorder %s98, 0
      %p118 = por %p116, %p117
      %p119 = scmp.ne.s32.totalorder %s108, %s111
      %p120 = scmp.eq.s32.totalorder %s103, 1
      %p121 = por %p119, %p120
      %p122 = scmp.ne.s32.totalorder %s111, %s112
      %p123 = scmp.eq.s32.totalorder %s103, 0
      %p124 = por %p122, %p123
      %p125 = scmp.ne.s32.totalorder %s111, %s112
      %p126 = scmp.eq.s32.totalorder %s104, 1
      %p127 = por %p125, %p126
      %p129 = scmp.ne.s32.totalorder %s112, %s128
      %p130 = scmp.eq.s32.totalorder %s104, 0
      %p131 = por %p129, %p130
      %s132 = ssub.s32 %s98, %s105
      %p133 = scmp.eq.s32.totalorder %s132, 0
      %s135 = sadd.s32 %s134, 1
      %s136 = scalar_select %p133, %s134, %s135
      %p139 = pneg %p133
      %p140 = scmp.eq.s32.totalorder %s98, 1
      %p141 = por %p139, %p140
      %p142 = scmp.ne.s32.totalorder %s134, %s137
      %p143 = scmp.eq.s32.totalorder %s98, 0
      %p144 = por %p142, %p143
      %p145 = scmp.ne.s32.totalorder %s134, %s137
      %p146 = scmp.eq.s32.totalorder %s103, 1
      %p147 = por %p145, %p146
      %p148 = scmp.ne.s32.totalorder %s137, %s138
      %p149 = scmp.eq.s32.totalorder %s103, 0
      %p150 = por %p148, %p149
      %p151 = scmp.ne.s32.totalorder %s137, %s138
      %p152 = scmp.eq.s32.totalorder %s104, 1
      %p153 = por %p151, %p152
      %p155 = scmp.ne.s32.totalorder %s138, %s154
      %p156 = scmp.eq.s32.totalorder %s104, 0
      %p157 = por %p155, %p156
      %s158 = ssub.s32 %s98, %s105
      %p159 = scmp.eq.s32.totalorder %s158, 0
      %s161 = sadd.s32 %s160, 1
      %s162 = scalar_select %p159, %s160, %s161
      %p165 = pneg %p159
      %p166 = scmp.eq.s32.totalorder %s98, 1
      %p167 = por %p165, %p166
      %p168 = scmp.ne.s32.totalorder %s160, %s163
      %p169 = scmp.eq.s32.totalorder %s98, 0
      %p170 = por %p168, %p169
      %p171 = scmp.ne.s32.totalorder %s160, %s163
      %p172 = scmp.eq.s32.totalorder %s103, 1
      %p173 = por %p171, %p172
      %p174 = scmp.ne.s32.totalorder %s163, %s164
      %p175 = scmp.eq.s32.totalorder %s103, 0
      %p176 = por %p174, %p175
      %p177 = scmp.ne.s32.totalorder %s163, %s164
      %p178 = scmp.eq.s32.totalorder %s104, 1
      %p179 = por %p177, %p178
      %p181 = scmp.ne.s32.totalorder %s164, %s180
      %p182 = scmp.eq.s32.totalorder %s104, 0
      %p183 = por %p181, %p182
      %s185 = sadd.s32 %s184, 1
      %p188 = scmp.eq.s32.totalorder %s98, 1
      %p189 = scmp.ne.s32.totalorder %s184, %s186
      %p190 = scmp.eq.s32.totalorder %s98, 0
      %p191 = por %p189, %p190
      %p192 = scmp.ne.s32.totalorder %s184, %s186
      %p193 = scmp.eq.s32.totalorder %s103, 1
      %p194 = por %p192, %p193
      %p195 = scmp.ne.s32.totalorder %s186, %s187
      %p196 = scmp.eq.s32.totalorder %s103, 0
      %p197 = por %p195, %p196
      %p198 = scmp.ne.s32.totalorder %s186, %s187
      %p199 = scmp.eq.s32.totalorder %s104, 1
      %p200 = por %p198, %p199
      %p202 = scmp.ne.s32.totalorder %s187, %s201
      %p203 = scmp.eq.s32.totalorder %s104, 0
      %p204 = por %p202, %p203
      %s206 = sadd.s32 %s205, 1
      %p209 = scmp.eq.s32.totalorder %s98, 1
      %p210 = scmp.ne.s32.totalorder %s205, %s207
      %p211 = scmp.eq.s32.totalorder %s98, 0
      %p212 = por %p210, %p211
      %p213 = scmp.ne.s32.totalorder %s205, %s207
      %p214 = scmp.eq.s32.totalorder %s103, 1
      %p215 = por %p213, %p214
      %p216 = scmp.ne.s32.totalorder %s207, %s208
      %p217 = scmp.eq.s32.totalorder %s103, 0
      %p218 = por %p216, %p217
      %p219 = scmp.ne.s32.totalorder %s207, %s208
      %p220 = scmp.eq.s32.totalorder %s104, 1
      %p221 = por %p219, %p220
      %p223 = scmp.ne.s32.totalorder %s208, %s222
      %p224 = scmp.eq.s32.totalorder %s104, 0
      %p225 = por %p223, %p224
      %s227 = sadd.s32 %s226, 1
      %p230 = scmp.eq.s32.totalorder %s98, 1
      %p231 = scmp.ne.s32.totalorder %s226, %s228
      %p232 = scmp.eq.s32.totalorder %s98, 0
      %p233 = por %p231, %p232
      %p234 = scmp.ne.s32.totalorder %s226, %s228
      %p235 = scmp.eq.s32.totalorder %s103, 1
      %p236 = por %p234, %p235
      %p237 = scmp.ne.s32.totalorder %s228, %s229
      %p238 = scmp.eq.s32.totalorder %s103, 0
      %p239 = por %p237, %p238
      %p240 = scmp.ne.s32.totalorder %s228, %s229
      %p241 = scmp.eq.s32.totalorder %s104, 1
      %p242 = por %p240, %p241
      %p244 = scmp.ne.s32.totalorder %s229, %s243
      %p245 = scmp.eq.s32.totalorder %s104, 0
      %p246 = por %p244, %p245
      %s248 = sadd.s32 %s247, 1
      %p251 = scmp.eq.s32.totalorder %s98, 1
      %p252 = scmp.ne.s32.totalorder %s247, %s249
      %p253 = scmp.eq.s32.totalorder %s98, 0
      %p254 = por %p252, %p253
      %p255 = scmp.ne.s32.totalorder %s247, %s249
      %p256 = scmp.eq.s32.totalorder %s103, 1
      %p257 = por %p255, %p256
      %p258 = scmp.ne.s32.totalorder %s249, %s250
      %p259 = scmp.eq.s32.totalorder %s103, 0
      %p260 = por %p258, %p259
      %p261 = scmp.ne.s32.totalorder %s249, %s250
      %p262 = scmp.eq.s32.totalorder %s104, 1
      %p263 = por %p261, %p262
      %p265 = scmp.ne.s32.totalorder %s250, %s264
      %p266 = scmp.eq.s32.totalorder %s104, 0
      %p267 = por %p265, %p266
      %s269 = sadd.s32 %s268, 1
      %p272 = scmp.eq.s32.totalorder %s98, 1
      %p273 = scmp.ne.s32.totalorder %s268, %s270
      %p274 = scmp.eq.s32.totalorder %s98, 0
      %p275 = por %p273, %p274
      %p276 = scmp.ne.s32.totalorder %s268, %s270
      %p277 = scmp.eq.s32.totalorder %s103, 1
      %p278 = por %p276, %p277
      %p279 = scmp.ne.s32.totalorder %s270, %s271
      %p280 = scmp.eq.s32.totalorder %s103, 0
      %p281 = por %p279, %p280
      %p282 = scmp.ne.s32.totalorder %s270, %s271
      %p283 = scmp.eq.s32.totalorder %s104, 1
      %p284 = por %p282, %p283
      %p286 = scmp.ne.s32.totalorder %s271, %s285
      %p287 = scmp.eq.s32.totalorder %s104, 0
      %p288 = por %p286, %p287
      %s290 = sadd.s32 %s289, 1
      %p293 = scmp.eq.s32.totalorder %s98, 1
      %p294 = scmp.ne.s32.totalorder %s289, %s291
      %p295 = scmp.eq.s32.totalorder %s98, 0
      %p296 = por %p294, %p295
      %p297 = scmp.ne.s32.totalorder %s289, %s291
      %p298 = scmp.eq.s32.totalorder %s103, 1
      %p299 = por %p297, %p298
      %p300 = scmp.ne.s32.totalorder %s291, %s292
      %p301 = scmp.eq.s32.totalorder %s103, 0
      %p302 = por %p300, %p301
      %p303 = scmp.ne.s32.totalorder %s291, %s292
      %p304 = scmp.eq.s32.totalorder %s104, 1
      %p305 = por %p303, %p304
      %p307 = scmp.ne.s32.totalorder %s292, %s306
      %p308 = scmp.eq.s32.totalorder %s104, 0
      %p309 = por %p307, %p308
      %s311 = sadd.s32 %s310, 1
      %p314 = scmp.eq.s32.totalorder %s98, 1
      %p315 = scmp.ne.s32.totalorder %s310, %s312
      %p316 = scmp.eq.s32.totalorder %s98, 0
      %p317 = por %p315, %p316
      %p318 = scmp.ne.s32.totalorder %s310, %s312
      %p319 = scmp.eq.s32.totalorder %s103, 1
      %p320 = por %p318, %p319
      %p321 = scmp.ne.s32.totalorder %s312, %s313
      %p322 = scmp.eq.s32.totalorder %s103, 0
      %p323 = por %p321, %p322
      %p324 = scmp.ne.s32.totalorder %s312, %s313
      %p325 = scmp.eq.s32.totalorder %s104, 1
      %p326 = por %p324, %p325
      %p328 = scmp.ne.s32.totalorder %s313, %s327
      %p329 = scmp.eq.s32.totalorder %s104, 0
      %p330 = por %p328, %p329
      %s332 = sadd.s32 %s331, 1
      %p335 = scmp.eq.s32.totalorder %s98, 1
      %p336 = scmp.ne.s32.totalorder %s331, %s333
      %p337 = scmp.eq.s32.totalorder %s98, 0
      %p338 = por %p336, %p337
      %p339 = scmp.ne.s32.totalorder %s331, %s333
      %p340 = scmp.eq.s32.totalorder %s103, 1
      %p341 = por %p339, %p340
      %p342 = scmp.ne.s32.totalorder %s333, %s334
      %p343 = scmp.eq.s32.totalorder %s103, 0
      %p344 = por %p342, %p343
      %p345 = scmp.ne.s32.totalorder %s333, %s334
      %p346 = scmp.eq.s32.totalorder %s104, 1
      %p347 = por %p345, %p346
      %p349 = scmp.ne.s32.totalorder %s334, %s348
      %p350 = scmp.eq.s32.totalorder %s104, 0
      %p351 = por %p349, %p350
      %s353 = sadd.s32 %s352, 1
      %p356 = scmp.eq.s32.totalorder %s98, 1
      %p357 = scmp.ne.s32.totalorder %s352, %s354
      %p358 = scmp.eq.s32.totalorder %s98, 0
      %p359 = por %p357, %p358
      %p360 = scmp.ne.s32.totalorder %s352, %s354
      %p361 = scmp.eq.s32.totalorder %s103, 1
      %p362 = por %p360, %p361
      %p363 = scmp.ne.s32.totalorder %s354, %s355
      %p364 = scmp.eq.s32.totalorder %s103, 0
      %p365 = por %p363, %p364
      %p366 = scmp.ne.s32.totalorder %s354, %s355
      %p367 = scmp.eq.s32.totalorder %s104, 1
      %p368 = por %p366, %p367
      %p370 = scmp.ne.s32.totalorder %s355, %s369
      %p371 = scmp.eq.s32.totalorder %s104, 0
      %p372 = por %p370, %p371
      %s374 = sadd.s32 %s373, 1
      %p377 = scmp.eq.s32.totalorder %s98, 1
      %p378 = scmp.ne.s32.totalorder %s373, %s375
      %p379 = scmp.eq.s32.totalorder %s98, 0
      %p380 = por %p378, %p379
      %p381 = scmp.ne.s32.totalorder %s373, %s375
      %p382 = scmp.eq.s32.totalorder %s103, 1
      %p383 = por %p381, %p382
      %p384 = scmp.ne.s32.totalorder %s375, %s376
      %p385 = scmp.eq.s32.totalorder %s103, 0
      %p386 = por %p384, %p385
      %p387 = scmp.ne.s32.totalorder %s375, %s376
      %p388 = scmp.eq.s32.totalorder %s104, 1
      %p389 = por %p387, %p388
      %p391 = scmp.ne.s32.totalorder %s376, %s390
      %p392 = scmp.eq.s32.totalorder %s104, 0
      %p393 = por %p391, %p392
      %s395 = sadd.s32 %s394, 1
      %p398 = scmp.eq.s32.totalorder %s98, 1
      %p399 = scmp.ne.s32.totalorder %s394, %s396
      %p400 = scmp.eq.s32.totalorder %s98, 0
      %p401 = por %p399, %p400
      %p402 = scmp.ne.s32.totalorder %s394, %s396
      %p403 = scmp.eq.s32.totalorder %s103, 1
      %p404 = por %p402, %p403
      %p405 = scmp.ne.s32.totalorder %s396, %s397
      %p406 = scmp.eq.s32.totalorder %s103, 0
      %p407 = por %p405, %p406
      %p408 = scmp.ne.s32.totalorder %s396, %s397
      %p409 = scmp.eq.s32.totalorder %s104, 1
      %p410 = por %p408, %p409
      %p412 = scmp.ne.s32.totalorder %s397, %s411
      %p413 = scmp.eq.s32.totalorder %s104, 0
      %p414 = por %p412, %p413
      %s416 = sadd.s32 %s415, 1
      %p419 = scmp.eq.s32.totalorder %s98, 1
      %p420 = scmp.ne.s32.totalorder %s415, %s417
      %p421 = scmp.eq.s32.totalorder %s98, 0
      %p422 = por %p420, %p421
      %p423 = scmp.ne.s32.totalorder %s415, %s417
      %p424 = scmp.eq.s32.totalorder %s103, 1
      %p425 = por %p423, %p424
      %p426 = scmp.ne.s32.totalorder %s417, %s418
      %p427 = scmp.eq.s32.totalorder %s103, 0
      %p428 = por %p426, %p427
      %p429 = scmp.ne.s32.totalorder %s417, %s418
      %p430 = scmp.eq.s32.totalorder %s104, 1
      %p431 = por %p429, %p430
      %p433 = scmp.ne.s32.totalorder %s418, %s432
      %p434 = scmp.eq.s32.totalorder %s104, 0
      %p435 = por %p433, %p434
      %s437 = sadd.s32 %s436, 1
      %p440 = scmp.eq.s32.totalorder %s98, 1
      %p441 = scmp.ne.s32.totalorder %s436, %s438
      %p442 = scmp.eq.s32.totalorder %s98, 0
      %p443 = por %p441, %p442
      %p444 = scmp.ne.s32.totalorder %s436, %s438
      %p445 = scmp.eq.s32.totalorder %s103, 1
      %p446 = por %p444, %p445
      %p447 = scmp.ne.s32.totalorder %s438, %s439
      %p448 = scmp.eq.s32.totalorder %s103, 0
      %p449 = por %p447, %p448
      %p450 = scmp.ne.s32.totalorder %s438, %s439
      %p451 = scmp.eq.s32.totalorder %s104, 1
      %p452 = por %p450, %p451
      %p454 = scmp.ne.s32.totalorder %s439, %s453
      %p455 = scmp.eq.s32.totalorder %s104, 0
      %p456 = por %p454, %p455
      %s458 = sadd.s32 %s457, 1
      %p461 = scmp.eq.s32.totalorder %s98, 1
      %p462 = scmp.ne.s32.totalorder %s457, %s459
      %p463 = scmp.eq.s32.totalorder %s98, 0
      %p464 = por %p462, %p463
      %p465 = scmp.ne.s32.totalorder %s457, %s459
      %p466 = scmp.eq.s32.totalorder %s103, 1
      %p467 = por %p465, %p466
      %p468 = scmp.ne.s32.totalorder %s459, %s460
      %p469 = scmp.eq.s32.totalorder %s103, 0
      %p470 = por %p468, %p469
      %p471 = scmp.ne.s32.totalorder %s459, %s460
      %p472 = scmp.eq.s32.totalorder %s104, 1
      %p473 = por %p471, %p472
      %p475 = scmp.ne.s32.totalorder %s460, %s474
      %p476 = scmp.eq.s32.totalorder %s104, 0
      %p477 = por %p475, %p476
      %s479 = sadd.s32 %s478, 1
      %p482 = scmp.eq.s32.totalorder %s98, 1
      %p483 = scmp.ne.s32.totalorder %s478, %s480
      %p484 = scmp.eq.s32.totalorder %s98, 0
      %p485 = por %p483, %p484
      %p486 = scmp.ne.s32.totalorder %s478, %s480
      %p487 = scmp.eq.s32.totalorder %s103, 1
      %p488 = por %p486, %p487
      %p489 = scmp.ne.s32.totalorder %s480, %s481
      %p490 = scmp.eq.s32.totalorder %s103, 0
      %p491 = por %p489, %p490
      %p492 = scmp.ne.s32.totalorder %s480, %s481
      %p493 = scmp.eq.s32.totalorder %s104, 1
      %p494 = por %p492, %p493
      %p496 = scmp.ne.s32.totalorder %s481, %s495
      %p497 = scmp.eq.s32.totalorder %s104, 0
      %p498 = por %p496, %p497
      %s500 = sadd.s32 %s499, 1
      %p503 = scmp.eq.s32.totalorder %s98, 1
      %p504 = scmp.ne.s32.totalorder %s499, %s501
      %p505 = scmp.eq.s32.totalorder %s98, 0
      %p506 = por %p504, %p505
      %p507 = scmp.ne.s32.totalorder %s499, %s501
      %p508 = scmp.eq.s32.totalorder %s103, 1
      %p509 = por %p507, %p508
      %p510 = scmp.ne.s32.totalorder %s501, %s502
      %p511 = scmp.eq.s32.totalorder %s103, 0
      %p512 = por %p510, %p511
      %p513 = scmp.ne.s32.totalorder %s501, %s502
      %p514 = scmp.eq.s32.totalorder %s104, 1
      %p515 = por %p513, %p514
      %p517 = scmp.ne.s32.totalorder %s502, %s516
      %p518 = scmp.eq.s32.totalorder %s104, 0
      %p519 = por %p517, %p518
      %s521 = sadd.s32 %s520, 1
      %p524 = scmp.eq.s32.totalorder %s98, 1
      %p525 = scmp.ne.s32.totalorder %s520, %s522
      %p526 = scmp.eq.s32.totalorder %s98, 0
      %p527 = por %p525, %p526
      %p528 = scmp.ne.s32.totalorder %s520, %s522
      %p529 = scmp.eq.s32.totalorder %s103, 1
      %p530 = por %p528, %p529
      %p531 = scmp.ne.s32.totalorder %s522, %s523
      %p532 = scmp.eq.s32.totalorder %s103, 0
      %p533 = por %p531, %p532
      %p534 = scmp.ne.s32.totalorder %s522, %s523
      %p535 = scmp.eq.s32.totalorder %s104, 1
      %p536 = por %p534, %p535
      %p538 = scmp.ne.s32.totalorder %s523, %s537
      %p539 = scmp.eq.s32.totalorder %s104, 0
      %p540 = por %p538, %p539
      %s542 = sadd.s32 %s541, 1
      %p545 = scmp.eq.s32.totalorder %s98, 1
      %p546 = scmp.ne.s32.totalorder %s541, %s543
      %p547 = scmp.eq.s32.totalorder %s98, 0
      %p548 = por %p546, %p547
      %p549 = scmp.ne.s32.totalorder %s541, %s543
      %p550 = scmp.eq.s32.totalorder %s103, 1
      %p551 = por %p549, %p550
      %p552 = scmp.ne.s32.totalorder %s543, %s544
      %p553 = scmp.eq.s32.totalorder %s103, 0
      %p554 = por %p552, %p553
      %p555 = scmp.ne.s32.totalorder %s543, %s544
      %p556 = scmp.eq.s32.totalorder %s104, 1
      %p557 = por %p555, %p556
      %p559 = scmp.ne.s32.totalorder %s544, %s558
      %p560 = scmp.eq.s32.totalorder %s104, 0
      %p561 = por %p559, %p560
      %s563 = sadd.s32 %s562, 1
      %p566 = scmp.eq.s32.totalorder %s98, 1
      %p567 = scmp.ne.s32.totalorder %s562, %s564
      %p568 = scmp.eq.s32.totalorder %s98, 0
      %p569 = por %p567, %p568
      %p570 = scmp.ne.s32.totalorder %s562, %s564
      %p571 = scmp.eq.s32.totalorder %s103, 1
      %p572 = por %p570, %p571
      %p573 = scmp.ne.s32.totalorder %s564, %s565
      %p574 = scmp.eq.s32.totalorder %s103, 0
      %p575 = por %p573, %p574
      %p576 = scmp.ne.s32.totalorder %s564, %s565
      %p577 = scmp.eq.s32.totalorder %s104, 1
      %p578 = por %p576, %p577
      %p580 = scmp.ne.s32.totalorder %s565, %s579
      %p581 = scmp.eq.s32.totalorder %s104, 0
      %p582 = por %p580, %p581
      %s584 = sadd.s32 %s583, 1
      %p587 = scmp.eq.s32.totalorder %s98, 1
      %p588 = scmp.ne.s32.totalorder %s583, %s585
      %p589 = scmp.eq.s32.totalorder %s98, 0
      %p590 = por %p588, %p589
      %p591 = scmp.ne.s32.totalorder %s583, %s585
      %p592 = scmp.eq.s32.totalorder %s103, 1
      %p593 = por %p591, %p592
      %p594 = scmp.ne.s32.totalorder %s585, %s586
      %p595 = scmp.eq.s32.totalorder %s103, 0
      %p596 = por %p594, %p595
      %p597 = scmp.ne.s32.totalorder %s585, %s586
      %p598 = scmp.eq.s32.totalorder %s104, 1
      %p599 = por %p597, %p598
      %p601 = scmp.ne.s32.totalorder %s586, %s600
      %p602 = scmp.eq.s32.totalorder %s104, 0
      %p603 = por %p601, %p602
      %s605 = sadd.s32 %s604, 1
      %p608 = scmp.eq.s32.totalorder %s98, 1
      %p609 = scmp.ne.s32.totalorder %s604, %s606
      %p610 = scmp.eq.s32.totalorder %s98, 0
      %p611 = por %p609, %p610
      %p612 = scmp.ne.s32.totalorder %s604, %s606
      %p613 = scmp.eq.s32.totalorder %s103, 1
      %p614 = por %p612, %p613
      %p615 = scmp.ne.s32.totalorder %s606, %s607
      %p616 = scmp.eq.s32.totalorder %s103, 0
      %p617 = por %p615, %p616
      %p618 = scmp.ne.s32.totalorder %s606, %s607
      %p619 = scmp.eq.s32.totalorder %s104, 1
      %p620 = por %p618, %p619
      %p622 = scmp.ne.s32.totalorder %s607, %s621
      %p623 = scmp.eq.s32.totalorder %s104, 0
      %p624 = por %p622, %p623
      %s626 = sadd.s32 %s625, 1
      %p629 = scmp.eq.s32.totalorder %s98, 1
      %p630 = scmp.ne.s32.totalorder %s625, %s627
      %p631 = scmp.eq.s32.totalorder %s98, 0
      %p632 = por %p630, %p631
      %p633 = scmp.ne.s32.totalorder %s625, %s627
      %p634 = scmp.eq.s32.totalorder %s103, 1
      %p635 = por %p633, %p634
      %p636 = scmp.ne.s32.totalorder %s627, %s628
      %p637 = scmp.eq.s32.totalorder %s103, 0
      %p638 = por %p636, %p637
      %p639 = scmp.ne.s32.totalorder %s627, %s628
      %p640 = scmp.eq.s32.totalorder %s104, 1
      %p641 = por %p639, %p640
      %p643 = scmp.ne.s32.totalorder %s628, %s642
      %p644 = scmp.eq.s32.totalorder %s104, 0
      %p645 = por %p643, %p644
      %s647 = sadd.s32 %s646, 1
      %p650 = scmp.eq.s32.totalorder %s98, 1
      %p651 = scmp.ne.s32.totalorder %s646, %s648
      %p652 = scmp.eq.s32.totalorder %s98, 0
      %p653 = por %p651, %p652
      %p654 = scmp.ne.s32.totalorder %s646, %s648
      %p655 = scmp.eq.s32.totalorder %s103, 1
      %p656 = por %p654, %p655
      %p657 = scmp.ne.s32.totalorder %s648, %s649
      %p658 = scmp.eq.s32.totalorder %s103, 0
      %p659 = por %p657, %p658
      %p660 = scmp.ne.s32.totalorder %s648, %s649
      %p661 = scmp.eq.s32.totalorder %s104, 1
      %p662 = por %p660, %p661
      %p664 = scmp.ne.s32.totalorder %s649, %s663
      %p665 = scmp.eq.s32.totalorder %s104, 0
      %p666 = por %p664, %p665
      %s668 = sadd.s32 %s667, 1
      %p671 = scmp.eq.s32.totalorder %s98, 1
      %p672 = scmp.ne.s32.totalorder %s667, %s669
      %p673 = scmp.eq.s32.totalorder %s98, 0
      %p674 = por %p672, %p673
      %p675 = scmp.ne.s32.totalorder %s667, %s669
      %p676 = scmp.eq.s32.totalorder %s103, 1
      %p677 = por %p675, %p676
      %p678 = scmp.ne.s32.totalorder %s669, %s670
      %p679 = scmp.eq.s32.totalorder %s103, 0
      %p680 = por %p678, %p679
      %p681 = scmp.ne.s32.totalorder %s669, %s670
      %p682 = scmp.eq.s32.totalorder %s104, 1
      %p683 = por %p681, %p682
      %p685 = scmp.ne.s32.totalorder %s670, %s684
      %p686 = scmp.eq.s32.totalorder %s104, 0
      %p687 = por %p685, %p686
      %s689 = sadd.s32 %s688, 1
      %p692 = scmp.eq.s32.totalorder %s98, 1
      %p693 = scmp.ne.s32.totalorder %s688, %s690
      %p694 = scmp.eq.s32.totalorder %s98, 0
      %p695 = por %p693, %p694
      %p696 = scmp.ne.s32.totalorder %s688, %s690
      %p697 = scmp.eq.s32.totalorder %s103, 1
      %p698 = por %p696, %p697
      %p699 = scmp.ne.s32.totalorder %s690, %s691
      %p700 = scmp.eq.s32.totalorder %s103, 0
      %p701 = por %p699, %p700
      %p702 = scmp.ne.s32.totalorder %s690, %s691
      %p703 = scmp.eq.s32.totalorder %s104, 1
      %p704 = por %p702, %p703
      %p706 = scmp.ne.s32.totalorder %s691, %s705
      %p707 = scmp.eq.s32.totalorder %s104, 0
      %p708 = por %p706, %p707
      %s710 = sadd.s32 %s709, 1
      %p713 = scmp.eq.s32.totalorder %s98, 1
      %p714 = scmp.ne.s32.totalorder %s709, %s711
      %p715 = scmp.eq.s32.totalorder %s98, 0
      %p716 = por %p714, %p715
      %p717 = scmp.ne.s32.totalorder %s709, %s711
      %p718 = scmp.eq.s32.totalorder %s103, 1
      %p719 = por %p717, %p718
      %p720 = scmp.ne.s32.totalorder %s711, %s712
      %p721 = scmp.eq.s32.totalorder %s103, 0
      %p722 = por %p720, %p721
      %p723 = scmp.ne.s32.totalorder %s711, %s712
      %p724 = scmp.eq.s32.totalorder %s104, 1
      %p725 = por %p723, %p724
      %p727 = scmp.ne.s32.totalorder %s712, %s726
      %p728 = scmp.eq.s32.totalorder %s104, 0
      %p729 = por %p727, %p728
      %s731 = sadd.s32 %s730, 1
      %p734 = scmp.eq.s32.totalorder %s98, 1
      %p735 = scmp.ne.s32.totalorder %s730, %s732
      %p736 = scmp.eq.s32.totalorder %s98, 0
      %p737 = por %p735, %p736
      %p738 = scmp.ne.s32.totalorder %s730, %s732
      %p739 = scmp.eq.s32.totalorder %s103, 1
      %p740 = por %p738, %p739
      %p741 = scmp.ne.s32.totalorder %s732, %s733
      %p742 = scmp.eq.s32.totalorder %s103, 0
      %p743 = por %p741, %p742
      %p744 = scmp.ne.s32.totalorder %s732, %s733
      %p745 = scmp.eq.s32.totalorder %s104, 1
      %p746 = por %p744, %p745
      %p748 = scmp.ne.s32.totalorder %s733, %s747
      %p749 = scmp.eq.s32.totalorder %s104, 0
      %p750 = por %p748, %p749
      %s752 = sadd.s32 %s751, 1
      %p755 = scmp.eq.s32.totalorder %s98, 1
      %p756 = scmp.ne.s32.totalorder %s751, %s753
      %p757 = scmp.eq.s32.totalorder %s98, 0
      %p758 = por %p756, %p757
      %p759 = scmp.ne.s32.totalorder %s751, %s753
      %p760 = scmp.eq.s32.totalorder %s103, 1
      %p761 = por %p759, %p760
      %p762 = scmp.ne.s32.totalorder %s753, %s754
      %p763 = scmp.eq.s32.totalorder %s103, 0
      %p764 = por %p762, %p763
      %p765 = scmp.ne.s32.totalorder %s753, %s754
      %p766 = scmp.eq.s32.totalorder %s104, 1
      %p767 = por %p765, %p766
      %p769 = scmp.ne.s32.totalorder %s754, %s768
      %p770 = scmp.eq.s32.totalorder %s104, 0
      %p771 = por %p769, %p770
      %s773 = sadd.s32 %s772, 1
      %p776 = scmp.eq.s32.totalorder %s98, 1
      %p777 = scmp.ne.s32.totalorder %s772, %s774
      %p778 = scmp.eq.s32.totalorder %s98, 0
      %p779 = por %p777, %p778
      %p780 = scmp.ne.s32.totalorder %s772, %s774
      %p781 = scmp.eq.s32.totalorder %s103, 1
      %p782 = por %p780, %p781
      %p783 = scmp.ne.s32.totalorder %s774, %s775
      %p784 = scmp.eq.s32.totalorder %s103, 0
      %p785 = por %p783, %p784
      %p786 = scmp.ne.s32.totalorder %s774, %s775
      %p787 = scmp.eq.s32.totalorder %s104, 1
      %p788 = por %p786, %p787
      %p790 = scmp.ne.s32.totalorder %s775, %s789
      %p791 = scmp.eq.s32.totalorder %s104, 0
      %p792 = por %p790, %p791
      %s794 = sadd.s32 %s793, 1
      %p797 = scmp.eq.s32.totalorder %s98, 1
      %p798 = scmp.ne.s32.totalorder %s793, %s795
      %p799 = scmp.eq.s32.totalorder %s98, 0
      %p800 = por %p798, %p799
      %p801 = scmp.ne.s32.totalorder %s793, %s795
      %p802 = scmp.eq.s32.totalorder %s103, 1
      %p803 = por %p801, %p802
      %p804 = scmp.ne.s32.totalorder %s795, %s796
      %p805 = scmp.eq.s32.totalorder %s103, 0
      %p806 = por %p804, %p805
      %p807 = scmp.ne.s32.totalorder %s795, %s796
      %p808 = scmp.eq.s32.totalorder %s104, 1
      %p809 = por %p807, %p808
      %p811 = scmp.ne.s32.totalorder %s796, %s810
      %p812 = scmp.eq.s32.totalorder %s104, 0
      %p813 = por %p811, %p812
      %s815 = sadd.s32 %s814, 1
      %p818 = scmp.eq.s32.totalorder %s98, 1
      %p819 = scmp.ne.s32.totalorder %s814, %s816
      %p820 = scmp.eq.s32.totalorder %s98, 0
      %p821 = por %p819, %p820
      %p822 = scmp.ne.s32.totalorder %s814, %s816
      %p823 = scmp.eq.s32.totalorder %s103, 1
      %p824 = por %p822, %p823
      %p825 = scmp.ne.s32.totalorder %s816, %s817
      %p826 = scmp.eq.s32.totalorder %s103, 0
      %p827 = por %p825, %p826
      %p828 = scmp.ne.s32.totalorder %s816, %s817
      %p829 = scmp.eq.s32.totalorder %s104, 1
      %p830 = por %p828, %p829
      %p832 = scmp.ne.s32.totalorder %s817, %s831
      %p833 = scmp.eq.s32.totalorder %s104, 0
      %p834 = por %p832, %p833
      %s836 = sadd.s32 %s835, 1
      %p839 = scmp.eq.s32.totalorder %s98, 1
      %p840 = scmp.ne.s32.totalorder %s835, %s837
      %p841 = scmp.eq.s32.totalorder %s98, 0
      %p842 = por %p840, %p841
      %p843 = scmp.ne.s32.totalorder %s835, %s837
      %p844 = scmp.eq.s32.totalorder %s103, 1
      %p845 = por %p843, %p844
      %p846 = scmp.ne.s32.totalorder %s837, %s838
      %p847 = scmp.eq.s32.totalorder %s103, 0
      %p848 = por %p846, %p847
      %p849 = scmp.ne.s32.totalorder %s837, %s838
      %p850 = scmp.eq.s32.totalorder %s104, 1
      %p851 = por %p849, %p850
      %p853 = scmp.ne.s32.totalorder %s838, %s852
      %p854 = scmp.eq.s32.totalorder %s104, 0
      %p855 = por %p853, %p854
      %s856 = ssub.s32 %s98, %s105
      %p857 = scmp.eq.s32.totalorder %s856, 0
      %s859 = sadd.s32 %s858, 1
      %s860 = scalar_select %p857, %s858, %s859
      %p863 = pneg %p857
      %p864 = scmp.eq.s32.totalorder %s98, 1
      %p865 = por %p863, %p864
      %p866 = scmp.ne.s32.totalorder %s858, %s861
      %p867 = scmp.eq.s32.totalorder %s98, 0
      %p868 = por %p866, %p867
      %p869 = scmp.ne.s32.totalorder %s858, %s861
      %p870 = scmp.eq.s32.totalorder %s103, 1
      %p871 = por %p869, %p870
      %p872 = scmp.ne.s32.totalorder %s861, %s862
      %p873 = scmp.eq.s32.totalorder %s103, 0
      %p874 = por %p872, %p873
      %p875 = scmp.ne.s32.totalorder %s861, %s862
      %p876 = scmp.eq.s32.totalorder %s104, 1
      %p877 = por %p875, %p876
      %p879 = scmp.ne.s32.totalorder %s862, %s878
      %p880 = scmp.eq.s32.totalorder %s104, 0
      %p881 = por %p879, %p880
      %s882 = ssub.s32 %s98, %s105
      %p883 = scmp.eq.s32.totalorder %s882, 0
      %s885 = sadd.s32 %s884, 1
      %s886 = scalar_select %p883, %s884, %s885
      %p889 = pneg %p883
      %p890 = scmp.eq.s32.totalorder %s98, 1
      %p891 = por %p889, %p890
      %p892 = scmp.ne.s32.totalorder %s884, %s887
      %p893 = scmp.eq.s32.totalorder %s98, 0
      %p894 = por %p892, %p893
      %p895 = scmp.ne.s32.totalorder %s884, %s887
      %p896 = scmp.eq.s32.totalorder %s103, 1
      %p897 = por %p895, %p896
      %p898 = scmp.ne.s32.totalorder %s887, %s888
      %p899 = scmp.eq.s32.totalorder %s103, 0
      %p900 = por %p898, %p899
      %p901 = scmp.ne.s32.totalorder %s887, %s888
      %p902 = scmp.eq.s32.totalorder %s104, 1
      %p903 = por %p901, %p902
      %p905 = scmp.ne.s32.totalorder %s888, %s904
      %p906 = scmp.eq.s32.totalorder %s104, 0
      %p907 = por %p905, %p906
      %s908 = ssub.s32 %s98, %s105
      %p909 = scmp.eq.s32.totalorder %s908, 0
      %s911 = sadd.s32 %s910, 1
      %s912 = scalar_select %p909, %s910, %s911
      %p915 = pneg %p909
      %p916 = scmp.eq.s32.totalorder %s98, 1
      %p917 = por %p915, %p916
      %p918 = scmp.ne.s32.totalorder %s910, %s913
      %p919 = scmp.eq.s32.totalorder %s98, 0
      %p920 = por %p918, %p919
      %p921 = scmp.ne.s32.totalorder %s910, %s913
      %p922 = scmp.eq.s32.totalorder %s103, 1
      %p923 = por %p921, %p922
      %p924 = scmp.ne.s32.totalorder %s913, %s914
      %p925 = scmp.eq.s32.totalorder %s103, 0
      %p926 = por %p924, %p925
      %p927 = scmp.ne.s32.totalorder %s913, %s914
      %p928 = scmp.eq.s32.totalorder %s104, 1
      %p929 = por %p927, %p928
      %p931 = scmp.ne.s32.totalorder %s914, %s930
      %p932 = scmp.eq.s32.totalorder %s104, 0
      %p933 = por %p931, %p932
      %p934 = scmp.le.s32.totalorder 1, %s98
      %p935 = scmp.lt.s32.totalorder %s98, 3
      %p936 = pnand %p934, %p935
      %p937 = pneg %p936
      // Predicated region
      $region9: #{tpu_custom_call.1} parent=5 // pred_check
        _
      $region10: #{tpu_custom_call.1} parent=5 // pred_check_branch
        %939 = sbr.rel (%p936) target = $region12
      $region11: #{tpu_custom_call.1} parent=5 // pred_region
        %s940 = ssub.s32 %s98, 1
        // Predicated region
        $region13: #{tpu_custom_call.1} parent=11 // pred_check
          %p941 = pneg %p197
        $region14: #{tpu_custom_call.1} parent=11 // pred_check_branch
          %943 = sbr.rel (%p941) target = $region16
        $region15: #{tpu_custom_call.1} parent=11 // pred_region
          _
        $region16: #{tpu_custom_call.1} parent=11 // pred_fallthru
          _
        // Predicated region
        $region17: #{tpu_custom_call.1} parent=11 // pred_check
          %p944 = pneg %p218
        $region18: #{tpu_custom_call.1} parent=11 // pred_check_branch
          %946 = sbr.rel (%p944) target = $region20
        $region19: #{tpu_custom_call.1} parent=11 // pred_region
          %s948 = ssub.s32 16, 16
          %949 = vsyncadd [#allocation6], %s948
          %s951 = sshll.u32 [#allocation5], 4
          %s952 = int_to_ptr.vmem [resolvable:$true] %s951
          %954 = dma.hbm_to_vmem [thread:$0]  %s9, 16, %s952, [#allocation6]
        $region20: #{tpu_custom_call.1} parent=11 // pred_fallthru
          _
        // Predicated region
        $region21: #{tpu_custom_call.1} parent=11 // pred_check
          %p955 = pneg %p239
        $region22: #{tpu_custom_call.1} parent=11 // pred_check_branch
          %957 = sbr.rel (%p955) target = $region24
        $region23: #{tpu_custom_call.1} parent=11 // pred_region
          _
        $region24: #{tpu_custom_call.1} parent=11 // pred_fallthru
          _
        // Predicated region
        $region25: #{tpu_custom_call.1} parent=11 // pred_check
          %p958 = pneg %p260
        $region26: #{tpu_custom_call.1} parent=11 // pred_check_branch
          %960 = sbr.rel (%p958) target = $region28
        $region27: #{tpu_custom_call.1} parent=11 // pred_region
          %s962 = ssub.s32 16, 16
          %963 = vsyncadd [#allocation6], %s962
          %s965 = sshll.u32 [#allocation7], 4
          %s966 = int_to_ptr.vmem [resolvable:$true] %s965
          %968 = dma.hbm_to_vmem [thread:$0]  %s13, 16, %s966, [#allocation6]
        $region28: #{tpu_custom_call.1} parent=11 // pred_fallthru
          _
        // Predicated region
        $region29: #{tpu_custom_call.1} parent=11 // pred_check
          %p969 = pneg %p281
        $region30: #{tpu_custom_call.1} parent=11 // pred_check_branch
          %971 = sbr.rel (%p969) target = $region32
        $region31: #{tpu_custom_call.1} parent=11 // pred_region
          _
        $region32: #{tpu_custom_call.1} parent=11 // pred_fallthru
          _
        // Predicated region
        $region33: #{tpu_custom_call.1} parent=11 // pred_check
          %p972 = pneg %p302
        $region34: #{tpu_custom_call.1} parent=11 // pred_check_branch
          %974 = sbr.rel (%p972) target = $region36
        $region35: #{tpu_custom_call.1} parent=11 // pred_region
          %s976 = ssub.s32 16, 16
          %977 = vsyncadd [#allocation9], %s976
          %s979 = sshll.u32 [#allocation8], 4
          %s980 = int_to_ptr.vmem [resolvable:$true] %s979
          %982 = dma.hbm_to_vmem [thread:$0]  %s17, 16, %s980, [#allocation9]
        $region36: #{tpu_custom_call.1} parent=11 // pred_fallthru
          _
        // Predicated region
        $region37: #{tpu_custom_call.1} parent=11 // pred_check
          %p983 = pneg %p323
        $region38: #{tpu_custom_call.1} parent=11 // pred_check_branch
          %985 = sbr.rel (%p983) target = $region40
        $region39: #{tpu_custom_call.1} parent=11 // pred_region
          _
        $region40: #{tpu_custom_call.1} parent=11 // pred_fallthru
          _
        // Predicated region
        $region41: #{tpu_custom_call.1} parent=11 // pred_check
          %p986 = pneg %p344
        $region42: #{tpu_custom_call.1} parent=11 // pred_check_branch
          %988 = sbr.rel (%p986) target = $region44
        $region43: #{tpu_custom_call.1} parent=11 // pred_region
          %s990 = ssub.s32 16, 16
          %991 = vsyncadd [#allocation9], %s990
          %s993 = sshll.u32 [#allocation10], 4
          %s994 = int_to_ptr.vmem [resolvable:$true] %s993
          %996 = dma.hbm_to_vmem [thread:$0]  %s21, 16, %s994, [#allocation9]
        $region44: #{tpu_custom_call.1} parent=11 // pred_fallthru
          _
        // Predicated region
        $region45: #{tpu_custom_call.1} parent=11 // pred_check
          %p997 = pneg %p365
        $region46: #{tpu_custom_call.1} parent=11 // pred_check_branch
          %999 = sbr.rel (%p997) target = $region48
        $region47: #{tpu_custom_call.1} parent=11 // pred_region
          %s1001 = ssub.s32 512, 512
          %1002 = vsyncadd [#allocation12], %s1001
          %s1003 = sshll.u32 [#allocation11], 4
          %s1004 = int_to_ptr.vmem [resolvable:$true] %s1003
          %1009 = dma.hbm_to_vmem [thread:$0]  %s23, 512, %s1004, [#allocation12], 64, 64, 4
        $region48: #{tpu_custom_call.1} parent=11 // pred_fallthru
          _
        // Predicated region
        $region49: #{tpu_custom_call.1} parent=11 // pred_check
          %p1010 = pneg %p386
        $region50: #{tpu_custom_call.1} parent=11 // pred_check_branch
          %1012 = sbr.rel (%p1010) target = $region52
        $region51: #{tpu_custom_call.1} parent=11 // pred_region
          %s1014 = ssub.s32 16, 16
          %1015 = vsyncadd [#allocation12], %s1014
          %s1017 = sshll.u32 [#allocation13], 4
          %s1018 = int_to_ptr.vmem [resolvable:$true] %s1017
          %1020 = dma.hbm_to_vmem [thread:$0]  %s25, 16, %s1018, [#allocation12]
        $region52: #{tpu_custom_call.1} parent=11 // pred_fallthru
          _
        // Predicated region
        $region53: #{tpu_custom_call.1} parent=11 // pred_check
          %p1021 = pneg %p407
        $region54: #{tpu_custom_call.1} parent=11 // pred_check_branch
          %1023 = sbr.rel (%p1021) target = $region56
        $region55: #{tpu_custom_call.1} parent=11 // pred_region
          %s1025 = ssub.s32 512, 512
          %1026 = vsyncadd [#allocation15], %s1025
          %s1027 = sshll.u32 [#allocation14], 4
          %s1028 = int_to_ptr.vmem [resolvable:$true] %s1027
          %1033 = dma.hbm_to_vmem [thread:$0]  %s27, 512, %s1028, [#allocation15], 64, 64, 4
        $region56: #{tpu_custom_call.1} parent=11 // pred_fallthru
          _
        // Predicated region
        $region57: #{tpu_custom_call.1} parent=11 // pred_check
          %p1034 = pneg %p428
        $region58: #{tpu_custom_call.1} parent=11 // pred_check_branch
          %1036 = sbr.rel (%p1034) target = $region60
        $region59: #{tpu_custom_call.1} parent=11 // pred_region
          %s1038 = ssub.s32 16, 16
          %1039 = vsyncadd [#allocation15], %s1038
          %s1041 = sshll.u32 [#allocation16], 4
          %s1042 = int_to_ptr.vmem [resolvable:$true] %s1041
          %1044 = dma.hbm_to_vmem [thread:$0]  %s29, 16, %s1042, [#allocation15]
        $region60: #{tpu_custom_call.1} parent=11 // pred_fallthru
          _
        // Predicated region
        $region61: #{tpu_custom_call.1} parent=11 // pred_check
          %p1045 = pneg %p449
        $region62: #{tpu_custom_call.1} parent=11 // pred_check_branch
          %1047 = sbr.rel (%p1045) target = $region64
        $region63: #{tpu_custom_call.1} parent=11 // pred_region
          %s1049 = ssub.s32 16, 16
          %1050 = vsyncadd [#allocation18], %s1049
          %s1052 = sshll.u32 [#allocation17], 4
          %s1053 = int_to_ptr.vmem [resolvable:$true] %s1052
          %1055 = dma.hbm_to_vmem [thread:$0]  %s31, 16, %s1053, [#allocation18]
        $region64: #{tpu_custom_call.1} parent=11 // pred_fallthru
          _
        // Predicated region
        $region65: #{tpu_custom_call.1} parent=11 // pred_check
          %p1056 = pneg %p470
        $region66: #{tpu_custom_call.1} parent=11 // pred_check_branch
          %1058 = sbr.rel (%p1056) target = $region68
        $region67: #{tpu_custom_call.1} parent=11 // pred_region
          %s1060 = ssub.s32 16, 16
          %1061 = vsyncadd [#allocation18], %s1060
          %s1063 = sshll.u32 [#allocation19], 4
          %s1064 = int_to_ptr.vmem [resolvable:$true] %s1063
          %1066 = dma.hbm_to_vmem [thread:$0]  %s33, 16, %s1064, [#allocation18]
        $region68: #{tpu_custom_call.1} parent=11 // pred_fallthru
          _
        // Predicated region
        $region69: #{tpu_custom_call.1} parent=11 // pred_check
          %p1067 = pneg %p491
        $region70: #{tpu_custom_call.1} parent=11 // pred_check_branch
          %1069 = sbr.rel (%p1067) target = $region72
        $region71: #{tpu_custom_call.1} parent=11 // pred_region
          _
        $region72: #{tpu_custom_call.1} parent=11 // pred_fallthru
          _
        // Predicated region
        $region73: #{tpu_custom_call.1} parent=11 // pred_check
          %p1070 = pneg %p512
        $region74: #{tpu_custom_call.1} parent=11 // pred_check_branch
          %1072 = sbr.rel (%p1070) target = $region76
        $region75: #{tpu_custom_call.1} parent=11 // pred_region
          _
        $region76: #{tpu_custom_call.1} parent=11 // pred_fallthru
          _
        // Predicated region
        $region77: #{tpu_custom_call.1} parent=11 // pred_check
          %p1073 = pneg %p533
        $region78: #{tpu_custom_call.1} parent=11 // pred_check_branch
          %1075 = sbr.rel (%p1073) target = $region80
        $region79: #{tpu_custom_call.1} parent=11 // pred_region
          %s1077 = ssub.s32 16, 16
          %1078 = vsyncadd [#allocation21], %s1077
          %s1080 = sshll.u32 [#allocation20], 4
          %s1081 = int_to_ptr.vmem [resolvable:$true] %s1080
          %1083 = dma.hbm_to_vmem [thread:$0]  %s39, 16, %s1081, [#allocation21]
        $region80: #{tpu_custom_call.1} parent=11 // pred_fallthru
          _
        // Predicated region
        $region81: #{tpu_custom_call.1} parent=11 // pred_check
          %p1084 = pneg %p554
        $region82: #{tpu_custom_call.1} parent=11 // pred_check_branch
          %1086 = sbr.rel (%p1084) target = $region84
        $region83: #{tpu_custom_call.1} parent=11 // pred_region
          _
        $region84: #{tpu_custom_call.1} parent=11 // pred_fallthru
          _
        // Predicated region
        $region85: #{tpu_custom_call.1} parent=11 // pred_check
          %p1087 = pneg %p575
        $region86: #{tpu_custom_call.1} parent=11 // pred_check_branch
          %1089 = sbr.rel (%p1087) target = $region88
        $region87: #{tpu_custom_call.1} parent=11 // pred_region
          %s1091 = ssub.s32 512, 512
          %1092 = vsyncadd [#allocation21], %s1091
          %s1093 = sshll.u32 [#allocation22], 4
          %s1094 = int_to_ptr.vmem [resolvable:$true] %s1093
          %1099 = dma.hbm_to_vmem [thread:$0]  %s43, 512, %s1094, [#allocation21], 64, 64, 4
        $region88: #{tpu_custom_call.1} parent=11 // pred_fallthru
          _
        // Predicated region
        $region89: #{tpu_custom_call.1} parent=11 // pred_check
          %p1100 = pneg %p596
        $region90: #{tpu_custom_call.1} parent=11 // pred_check_branch
          %1102 = sbr.rel (%p1100) target = $region92
        $region91: #{tpu_custom_call.1} parent=11 // pred_region
          _
        $region92: #{tpu_custom_call.1} parent=11 // pred_fallthru
          _
        // Predicated region
        $region93: #{tpu_custom_call.1} parent=11 // pred_check
          %p1103 = pneg %p617
        $region94: #{tpu_custom_call.1} parent=11 // pred_check_branch
          %1105 = sbr.rel (%p1103) target = $region96
        $region95: #{tpu_custom_call.1} parent=11 // pred_region
          _
        $region96: #{tpu_custom_call.1} parent=11 // pred_fallthru
          _
        // Predicated region
        $region97: #{tpu_custom_call.1} parent=11 // pred_check
          %p1106 = pneg %p638
        $region98: #{tpu_custom_call.1} parent=11 // pred_check_branch
          %1108 = sbr.rel (%p1106) target = $region100
        $region99: #{tpu_custom_call.1} parent=11 // pred_region
          _
        $region100: #{tpu_custom_call.1} parent=11 // pred_fallthru
          _
        // Predicated region
        $region101: #{tpu_custom_call.1} parent=11 // pred_check
          %p1109 = pneg %p659
        $region102: #{tpu_custom_call.1} parent=11 // pred_check_branch
          %1111 = sbr.rel (%p1109) target = $region104
        $region103: #{tpu_custom_call.1} parent=11 // pred_region
          _
        $region104: #{tpu_custom_call.1} parent=11 // pred_fallthru
          _
        // Predicated region
        $region105: #{tpu_custom_call.1} parent=11 // pred_check
          %p1112 = pneg %p680
        $region106: #{tpu_custom_call.1} parent=11 // pred_check_branch
          %1114 = sbr.rel (%p1112) target = $region108
        $region107: #{tpu_custom_call.1} parent=11 // pred_region
          _
        $region108: #{tpu_custom_call.1} parent=11 // pred_fallthru
          _
        // Predicated region
        $region109: #{tpu_custom_call.1} parent=11 // pred_check
          %p1115 = pneg %p701
        $region110: #{tpu_custom_call.1} parent=11 // pred_check_branch
          %1117 = sbr.rel (%p1115) target = $region112
        $region111: #{tpu_custom_call.1} parent=11 // pred_region
          _
        $region112: #{tpu_custom_call.1} parent=11 // pred_fallthru
          _
        // Predicated region
        $region113: #{tpu_custom_call.1} parent=11 // pred_check
          %p1118 = pneg %p722
        $region114: #{tpu_custom_call.1} parent=11 // pred_check_branch
          %1120 = sbr.rel (%p1118) target = $region116
        $region115: #{tpu_custom_call.1} parent=11 // pred_region
          %s1122 = ssub.s32 512, 512
          %1123 = vsyncadd [#allocation24], %s1122
          %s1124 = sshll.u32 [#allocation23], 4
          %s1125 = int_to_ptr.vmem [resolvable:$true] %s1124
          %1130 = dma.hbm_to_vmem [thread:$0]  %s57, 512, %s1125, [#allocation24], 64, 64, 4
        $region116: #{tpu_custom_call.1} parent=11 // pred_fallthru
          _
        // Predicated region
        $region117: #{tpu_custom_call.1} parent=11 // pred_check
          %p1131 = pneg %p743
        $region118: #{tpu_custom_call.1} parent=11 // pred_check_branch
          %1133 = sbr.rel (%p1131) target = $region120
        $region119: #{tpu_custom_call.1} parent=11 // pred_region
          _
        $region120: #{tpu_custom_call.1} parent=11 // pred_fallthru
          _
        // Predicated region
        $region121: #{tpu_custom_call.1} parent=11 // pred_check
          %p1134 = pneg %p764
        $region122: #{tpu_custom_call.1} parent=11 // pred_check_branch
          %1136 = sbr.rel (%p1134) target = $region124
        $region123: #{tpu_custom_call.1} parent=11 // pred_region
          _
        $region124: #{tpu_custom_call.1} parent=11 // pred_fallthru
          _
        // Predicated region
        $region125: #{tpu_custom_call.1} parent=11 // pred_check
          %p1137 = pneg %p785
        $region126: #{tpu_custom_call.1} parent=11 // pred_check_branch
          %1139 = sbr.rel (%p1137) target = $region128
        $region127: #{tpu_custom_call.1} parent=11 // pred_region
          _
        $region128: #{tpu_custom_call.1} parent=11 // pred_fallthru
          _
        // Predicated region
        $region129: #{tpu_custom_call.1} parent=11 // pred_check
          %p1140 = pneg %p806
        $region130: #{tpu_custom_call.1} parent=11 // pred_check_branch
          %1142 = sbr.rel (%p1140) target = $region132
        $region131: #{tpu_custom_call.1} parent=11 // pred_region
          _
        $region132: #{tpu_custom_call.1} parent=11 // pred_fallthru
          _
        // Predicated region
        $region133: #{tpu_custom_call.1} parent=11 // pred_check
          %p1143 = pneg %p827
        $region134: #{tpu_custom_call.1} parent=11 // pred_check_branch
          %1145 = sbr.rel (%p1143) target = $region136
        $region135: #{tpu_custom_call.1} parent=11 // pred_region
          _
        $region136: #{tpu_custom_call.1} parent=11 // pred_fallthru
          _
        // Predicated region
        $region137: #{tpu_custom_call.1} parent=11 // pred_check
          %p1146 = pneg %p848
        $region138: #{tpu_custom_call.1} parent=11 // pred_check_branch
          %1148 = sbr.rel (%p1146) target = $region140
        $region139: #{tpu_custom_call.1} parent=11 // pred_region
          _
        $region140: #{tpu_custom_call.1} parent=11 // pred_fallthru
          _
      $region12: #{tpu_custom_call.1} parent=5 // pred_fallthru
        _
      %p1149 = scmp.lt.s32.totalorder %s98, 2
      // Predicated region
      $region141: #{tpu_custom_call.1} parent=5 // pred_check
        %p1150 = pneg %p1149
      $region142: #{tpu_custom_call.1} parent=5 // pred_check_branch
        %1152 = sbr.rel (%p1150) target = $region144
      $region143: #{tpu_custom_call.1} parent=5 // pred_region
        // Predicated region
        $region145: #{tpu_custom_call.1} parent=143 // pred_check
          %p1153 = pneg %p118
        $region146: #{tpu_custom_call.1} parent=143 // pred_check_branch
          %1155 = sbr.rel (%p1153) target = $region148
        $region147: #{tpu_custom_call.1} parent=143 // pred_region
          %s1156 = smul.u32 2, %s98
          %p1157 = scmp.lt.s32.totalorder %s1156, 3
          %s1158 = scalar_select %p1157, %s1156, 3
          %s1159 = smul.addr %s1158, 2
          %s1160 = smul.addr %s1159, 8
          %s1161 = scalar_lea.vmem %s1, %s1160
          %s1162 = smul.u32 2, %s98
        $region148: #{tpu_custom_call.1} parent=143 // pred_fallthru
          _
        // Predicated region
        $region149: #{tpu_custom_call.1} parent=143 // pred_check
          %p1163 = pneg %p144
        $region150: #{tpu_custom_call.1} parent=143 // pred_check_branch
          %1165 = sbr.rel (%p1163) target = $region152
        $region151: #{tpu_custom_call.1} parent=143 // pred_region
          %s1166 = smul.u32 2, %s98
          %p1167 = scmp.lt.s32.totalorder %s1166, 3
          %s1168 = scalar_select %p1167, %s1166, 3
          %s1169 = smul.addr %s1168, 2
          %s1170 = smul.addr %s1169, 4
          %s1171 = scalar_lea.vmem %s3, %s1170
          %s1172 = smul.u32 2, %s98
        $region152: #{tpu_custom_call.1} parent=143 // pred_fallthru
          _
        // Predicated region
        $region153: #{tpu_custom_call.1} parent=143 // pred_check
          %p1173 = pneg %p170
        $region154: #{tpu_custom_call.1} parent=143 // pred_check_branch
          %1175 = sbr.rel (%p1173) target = $region156
        $region155: #{tpu_custom_call.1} parent=143 // pred_region
          %s1176 = sand.u32 %s160, 1
          %s1177 = scalar_lea.sflag [#allocation3], %s1176
          %s1178 = sand.u32 %s160, 1
          %s1179 = smul.addr %s1178, 2
          %s1180 = scalar_lea.vmem [#allocation2], %s1179
          %s1181 = smul.u32 2, %s98
          %s1183 = ssub.s32 32, 32
          %1184 = vsyncadd %s1177, %s1183
          %s1185 = smul.addr %s1181, 16
          %s1186 = scalar_lea.hbm %s5, %s1185
          %s1187 = sshll.u32 %s1180, 4
          %s1188 = int_to_ptr.vmem [resolvable:$true] %s1187
          %1193 = dma.hbm_to_vmem [thread:$0]  %s1186, 32, %s1188, %s1177, 16, 16, 1
        $region156: #{tpu_custom_call.1} parent=143 // pred_fallthru
          _
      $region144: #{tpu_custom_call.1} parent=5 // pred_fallthru
        _
      %p1194 = scmp.le.s32.totalorder 1, %s98
      %p1195 = scmp.lt.s32.totalorder %s98, 3
      %p1196 = pnand %p1194, %p1195
      %p1197 = pneg %p1196
      // Predicated region
      $region157: #{tpu_custom_call.1} parent=5 // pred_check
        _
      $region158: #{tpu_custom_call.1} parent=5 // pred_check_branch
        %1199 = sbr.rel (%p1196) target = $region160
      $region159: #{tpu_custom_call.1} parent=5 // pred_region
        %s1200 = ssub.s32 %s98, 1
        %s1201 = sand.u32 %s163, 1
        %s1202 = scalar_lea.sflag [#allocation3], %s1201
        %s1203 = sand.u32 %s163, 1
        %s1204 = smul.addr %s1203, 2
        %s1205 = scalar_lea.vmem [#allocation2], %s1204
        // Predicated region
        $region161: #{tpu_custom_call.1} parent=159 // pred_check
          %p1206 = pneg %p176
        $region162: #{tpu_custom_call.1} parent=159 // pred_check_branch
          %1208 = sbr.rel (%p1206) target = $region164
        $region163: #{tpu_custom_call.1} parent=159 // pred_region
          %1209 = dma.done %s1202, 32
        $region164: #{tpu_custom_call.1} parent=159 // pred_fallthru
          _
        // Predicated region
        $region165: #{tpu_custom_call.1} parent=159 // pred_check
          %p1210 = pneg %p218
        $region166: #{tpu_custom_call.1} parent=159 // pred_check_branch
          %1212 = sbr.rel (%p1210) target = $region168
        $region167: #{tpu_custom_call.1} parent=159 // pred_region
          %1213 = dma.done [#allocation6], 16
        $region168: #{tpu_custom_call.1} parent=159 // pred_fallthru
          _
        // Predicated region
        $region169: #{tpu_custom_call.1} parent=159 // pred_check
          %p1214 = pneg %p260
        $region170: #{tpu_custom_call.1} parent=159 // pred_check_branch
          %1216 = sbr.rel (%p1214) target = $region172
        $region171: #{tpu_custom_call.1} parent=159 // pred_region
          %1217 = dma.done [#allocation6], 16
        $region172: #{tpu_custom_call.1} parent=159 // pred_fallthru
          _
        // Predicated region
        $region173: #{tpu_custom_call.1} parent=159 // pred_check
          %p1218 = pneg %p302
        $region174: #{tpu_custom_call.1} parent=159 // pred_check_branch
          %1220 = sbr.rel (%p1218) target = $region176
        $region175: #{tpu_custom_call.1} parent=159 // pred_region
          %1221 = dma.done [#allocation9], 16
        $region176: #{tpu_custom_call.1} parent=159 // pred_fallthru
          _
        // Predicated region
        $region177: #{tpu_custom_call.1} parent=159 // pred_check
          %p1222 = pneg %p344
        $region178: #{tpu_custom_call.1} parent=159 // pred_check_branch
          %1224 = sbr.rel (%p1222) target = $region180
        $region179: #{tpu_custom_call.1} parent=159 // pred_region
          %1225 = dma.done [#allocation9], 16
        $region180: #{tpu_custom_call.1} parent=159 // pred_fallthru
          _
        // Predicated region
        $region181: #{tpu_custom_call.1} parent=159 // pred_check
          %p1226 = pneg %p365
        $region182: #{tpu_custom_call.1} parent=159 // pred_check_branch
          %1228 = sbr.rel (%p1226) target = $region184
        $region183: #{tpu_custom_call.1} parent=159 // pred_region
          %1229 = dma.done [#allocation12], 512
        $region184: #{tpu_custom_call.1} parent=159 // pred_fallthru
          _
        // Predicated region
        $region185: #{tpu_custom_call.1} parent=159 // pred_check
          %p1230 = pneg %p386
        $region186: #{tpu_custom_call.1} parent=159 // pred_check_branch
          %1232 = sbr.rel (%p1230) target = $region188
        $region187: #{tpu_custom_call.1} parent=159 // pred_region
          %1233 = dma.done [#allocation12], 16
        $region188: #{tpu_custom_call.1} parent=159 // pred_fallthru
          _
        // Predicated region
        $region189: #{tpu_custom_call.1} parent=159 // pred_check
          %p1234 = pneg %p407
        $region190: #{tpu_custom_call.1} parent=159 // pred_check_branch
          %1236 = sbr.rel (%p1234) target = $region192
        $region191: #{tpu_custom_call.1} parent=159 // pred_region
          %1237 = dma.done [#allocation15], 512
        $region192: #{tpu_custom_call.1} parent=159 // pred_fallthru
          _
        // Predicated region
        $region193: #{tpu_custom_call.1} parent=159 // pred_check
          %p1238 = pneg %p428
        $region194: #{tpu_custom_call.1} parent=159 // pred_check_branch
          %1240 = sbr.rel (%p1238) target = $region196
        $region195: #{tpu_custom_call.1} parent=159 // pred_region
          %1241 = dma.done [#allocation15], 16
        $region196: #{tpu_custom_call.1} parent=159 // pred_fallthru
          _
        // Predicated region
        $region197: #{tpu_custom_call.1} parent=159 // pred_check
          %p1242 = pneg %p449
        $region198: #{tpu_custom_call.1} parent=159 // pred_check_branch
          %1244 = sbr.rel (%p1242) target = $region200
        $region199: #{tpu_custom_call.1} parent=159 // pred_region
          %1245 = dma.done [#allocation18], 16
        $region200: #{tpu_custom_call.1} parent=159 // pred_fallthru
          _
        // Predicated region
        $region201: #{tpu_custom_call.1} parent=159 // pred_check
          %p1246 = pneg %p470
        $region202: #{tpu_custom_call.1} parent=159 // pred_check_branch
          %1248 = sbr.rel (%p1246) target = $region204
        $region203: #{tpu_custom_call.1} parent=159 // pred_region
          %1249 = dma.done [#allocation18], 16
        $region204: #{tpu_custom_call.1} parent=159 // pred_fallthru
          _
        // Predicated region
        $region205: #{tpu_custom_call.1} parent=159 // pred_check
          %p1250 = pneg %p533
        $region206: #{tpu_custom_call.1} parent=159 // pred_check_branch
          %1252 = sbr.rel (%p1250) target = $region208
        $region207: #{tpu_custom_call.1} parent=159 // pred_region
          %1253 = dma.done [#allocation21], 16
        $region208: #{tpu_custom_call.1} parent=159 // pred_fallthru
          _
        // Predicated region
        $region209: #{tpu_custom_call.1} parent=159 // pred_check
          %p1254 = pneg %p575
        $region210: #{tpu_custom_call.1} parent=159 // pred_check_branch
          %1256 = sbr.rel (%p1254) target = $region212
        $region211: #{tpu_custom_call.1} parent=159 // pred_region
          %1257 = dma.done [#allocation21], 512
        $region212: #{tpu_custom_call.1} parent=159 // pred_fallthru
          _
        // Predicated region
        $region213: #{tpu_custom_call.1} parent=159 // pred_check
          %p1258 = pneg %p722
        $region214: #{tpu_custom_call.1} parent=159 // pred_check_branch
          %1260 = sbr.rel (%p1258) target = $region216
        $region215: #{tpu_custom_call.1} parent=159 // pred_region
          %1261 = dma.done [#allocation24], 512
        $region216: #{tpu_custom_call.1} parent=159 // pred_fallthru
          _
        %s1262 = smul.u32 2, %s103
        %p1263 = scmp.lt.s32.totalorder %s1262, 3
        %s1264 = scalar_select %p1263, %s1262, 3
        %s1265 = smul.addr %s1264, 2
        %s1266 = smul.addr %s1265, 8
        %s1267 = scalar_lea.vmem %s1, %s1266
        %p1268 = pneg %p124
        %p1269 = pneg %p121
        %s1270 = smul.u32 2, %s103
        %p1271 = scmp.lt.s32.totalorder %s1270, 3
        %s1272 = scalar_select %p1271, %s1270, 3
        %s1273 = smul.addr %s1272, 2
        %s1274 = smul.addr %s1273, 4
        %s1275 = scalar_lea.vmem %s3, %s1274
        %p1276 = pneg %p150
        %p1277 = pneg %p147
        %s1278 = sand.u32 %s163, 1
        %s1279 = scalar_lea.sflag [#allocation3], %s1278
        %s1280 = sand.u32 %s163, 1
        %s1281 = smul.addr %s1280, 2
        %s1282 = scalar_lea.vmem [#allocation2], %s1281
        %p1283 = pneg %p176
        %p1284 = pneg %p173
        %p1285 = pneg %p197
        %p1286 = pneg %p194
        %p1287 = pneg %p218
        %p1288 = pneg %p215
        %p1289 = pneg %p239
        %p1290 = pneg %p236
        %p1291 = pneg %p260
        %p1292 = pneg %p257
        %p1293 = pneg %p281
        %p1294 = pneg %p278
        %p1295 = pneg %p302
        %p1296 = pneg %p299
        %p1297 = pneg %p323
        %p1298 = pneg %p320
        %p1299 = pneg %p344
        %p1300 = pneg %p341
        %p1301 = pneg %p365
        %p1302 = pneg %p362
        %p1303 = pneg %p386
        %p1304 = pneg %p383
        %p1305 = pneg %p407
        %p1306 = pneg %p404
        %p1307 = pneg %p428
        %p1308 = pneg %p425
        %p1309 = pneg %p449
        %p1310 = pneg %p446
        %p1311 = pneg %p470
        %p1312 = pneg %p467
        %p1313 = pneg %p491
        %p1314 = pneg %p488
        %p1315 = pneg %p512
        %p1316 = pneg %p509
        %p1317 = pneg %p533
        %p1318 = pneg %p530
        %p1319 = pneg %p554
        %p1320 = pneg %p551
        %p1321 = pneg %p575
        %p1322 = pneg %p572
        %p1323 = pneg %p596
        %p1324 = pneg %p593
        %p1325 = pneg %p617
        %p1326 = pneg %p614
        %p1327 = pneg %p638
        %p1328 = pneg %p635
        %p1329 = pneg %p659
        %p1330 = pneg %p656
        %p1331 = pneg %p680
        %p1332 = pneg %p677
        %p1333 = pneg %p701
        %p1334 = pneg %p698
        %p1335 = pneg %p722
        %p1336 = pneg %p719
        %p1337 = pneg %p743
        %p1338 = pneg %p740
        %p1339 = pneg %p764
        %p1340 = pneg %p761
        %p1341 = pneg %p785
        %p1342 = pneg %p782
        %p1343 = pneg %p806
        %p1344 = pneg %p803
        %p1345 = pneg %p827
        %p1346 = pneg %p824
        %p1347 = pneg %p848
        %p1348 = pneg %p845
        %p1349 = pneg %p874
        %p1350 = pneg %p871
        %s1351 = sand.u32 %s861, 1
        %s1352 = scalar_lea.sflag [#allocation4], %s1351
        %s1353 = sand.u32 %s861, 1
        %s1354 = smul.addr %s1353, 32
        %s1355 = scalar_lea.vmem [#allocation25], %s1354
        %p1356 = pneg %p900
        %p1357 = pneg %p897
        %s1358 = sand.u32 %s103, 1
        %s1359 = scalar_lea.sflag [#allocation27], %s1358
        %s1360 = sand.u32 %s887, 1
        %s1361 = smul.addr %s1360, 32
        %s1362 = scalar_lea.vmem [#allocation26], %s1361
        %p1363 = pneg %p926
        %p1364 = pneg %p923
        %s1365 = sand.u32 %s103, 1
        %s1366 = scalar_lea.sflag [#allocation27], %s1365
        %s1367 = sand.u32 %s913, 1
        %s1368 = smul.addr %s1367, 128
        %s1369 = scalar_lea.vmem [#allocation28], %s1368
        %s1370 = smul.u32 2, %s103
        %p1371 = scmp.lt.s32.totalorder %s1370, 3
        %s1372 = scalar_select %p1371, %s1370, 3
        %s1373 = smul.addr %s1372, 2
        %s1374 = smul.addr %s1373, 8
        %s1375 = scalar_lea.vmem %s1, %s1374
        %s1376 = smul.u32 2, %s103
        %s1377 = smul.u32 2, %s103
        %p1378 = scmp.lt.s32.totalorder %s1377, 3
        %s1379 = scalar_select %p1378, %s1377, 3
        %s1380 = smul.addr %s1379, 2
        %s1381 = smul.addr %s1380, 4
        %s1382 = scalar_lea.vmem %s3, %s1381
        %s1383 = smul.u32 2, %s103
        %s1384 = smul.u32 2, %s103
        %s1385 = smul.u32 2, %s103
        %s1386 = smul.u32 2, %s103
        %s1387 = smul.u32 2, %s103
        %v1389 = vld [vmem:[%s1375] sm:$0xff]
        %v1390 = vld [vmem:[%s1375 + $0x8] sm:$0xff]
        %v1391 = vld [vmem:[%s1375 + $0x10] sm:$0xff]
        %v1392 = vld [vmem:[%s1375 + $0x18] sm:$0xff]
        %v1393 = vld [vmem:[%s1382] sm:$0xf]
        %v1394 = vld [vmem:[%s1382 + $0x4] sm:$0xf]
        %v1395 = vld [vmem:[%s1382 + $0x8] sm:$0xf]
        %v1396 = vld [vmem:[%s1382 + $0xc] sm:$0xf]
        %v1397 = vld [vmem:[%s7] sm:$0xf]
        %v1398 = vld [vmem:[%s7 + $0x4] sm:$0xf]
        %v1399 = vld [vmem:[%s7 + $0x8] sm:$0xf]
        %v1400 = vld [vmem:[%s7 + $0xc] sm:$0xf]
        %v1401 = vld [vmem:[%s7 + $0x10] sm:$0xf]
        %v1402 = vld [vmem:[%s7 + $0x14] sm:$0xf]
        %v1403 = vld [vmem:[%s7 + $0x18] sm:$0xf]
        %v1404 = vld [vmem:[%s7 + $0x1c] sm:$0xf]
        %v1405 = vld [vmem:[%s7 + $0x20] sm:$0xf]
        %v1406 = vld [vmem:[%s7 + $0x24] sm:$0xf]
        %v1407 = vld [vmem:[%s7 + $0x28] sm:$0xf]
        %v1408 = vld [vmem:[%s7 + $0x2c] sm:$0xf]
        %v1409 = vld [vmem:[%s7 + $0x30] sm:$0xf]
        %v1410 = vld [vmem:[%s7 + $0x34] sm:$0xf]
        %v1411 = vld [vmem:[%s7 + $0x38] sm:$0xf]
        %v1412 = vld [vmem:[%s7 + $0x3c] sm:$0xf]
        %v1413 = vpack.c.bf16 %v1390, %v1389
        %v1414 = vpack.c.bf16 %v1392, %v1391
        %v1415 = vld [vmem:[#allocation5] sm:$0x1]
        %v1417 = vlaneseq
        %v1418 = vshrl.u32 %v1417, 7
        %v1419 = vsub.s32 0, %v1418
        %v1420 = vrot.slane %v1415, %v1419
        %v1438 = vunpack.c.l.b16 %v1397
        %v1439 = vunpack.c.l.b16 %v1398
        %v1440 = vunpack.c.l.b16 %v1399
        %v1441 = vunpack.c.l.b16 %v1400
        %v1442 = vunpack.c.l.b16 %v1401
        %v1443 = vunpack.c.l.b16 %v1402
        %v1444 = vunpack.c.l.b16 %v1403
        %v1445 = vunpack.c.l.b16 %v1404
        %v1446 = vunpack.c.l.b16 %v1405
        %v1447 = vunpack.c.l.b16 %v1406
        %v1448 = vunpack.c.l.b16 %v1407
        %v1449 = vunpack.c.l.b16 %v1408
        %v1450 = vunpack.c.l.b16 %v1409
        %v1451 = vunpack.c.l.b16 %v1410
        %v1452 = vunpack.c.l.b16 %v1411
        %v1453 = vunpack.c.l.b16 %v1412
        %v1454 = vpack.c.b16 %v1439, %v1438
        %v1455 = vpack.c.b16 %v1441, %v1440
        %v1456 = vpack.c.b16 %v1443, %v1442
        %v1457 = vpack.c.b16 %v1445, %v1444
        %v1458 = vpack.c.b16 %v1447, %v1446
        %v1459 = vpack.c.b16 %v1449, %v1448
        %v1460 = vpack.c.b16 %v1451, %v1450
        %v1461 = vpack.c.b16 %v1453, %v1452
        %1470 = vmatprep.subr.bf16.mxu0 0
        %1471 = vmatpush1.bf16.msra.mxu0 %v1461
        %1472 = vmatprep.subr.bf16.mxu0 0
        %1473 = vmatpush1.bf16.msra.mxu0 %v1460
        %1474 = vmatprep.subr.bf16.mxu0 0
        %1475 = vmatpush1.bf16.msra.mxu0 %v1459
        %1476 = vmatprep.subr.bf16.mxu0 0
        %1477 = vmatpush1.bf16.msra.mxu0 %v1458
        %1478 = vmatprep.subr.bf16.mxu0 0
        %1479 = vmatpush1.bf16.msra.mxu0 %v1457
        %1480 = vmatprep.subr.bf16.mxu0 0
        %1481 = vmatpush1.bf16.msra.mxu0 %v1456
        %1482 = vmatprep.subr.bf16.mxu0 0
        %1483 = vmatpush1.bf16.msra.mxu0 %v1455
        %1484 = vmatprep.subr.bf16.mxu0 0
        %1485 = vmatpush1.bf16.msra.mxu0 %v1454
        %1486 = vmatprep.subr.bf16.mxu0 0
        %1487 = vmatpush2.bf16.msra.mxu0 0
        %1488 = vmatprep.subr.bf16.mxu0 0
        %1489 = vmatpush2.bf16.msra.mxu0 0
        %1490 = vmatprep.subr.bf16.mxu0 0
        %1491 = vmatpush2.bf16.msra.mxu0 0
        %1492 = vmatprep.subr.bf16.mxu0 0
        %1493 = vmatpush2.bf16.msra.mxu0 0
        %1494 = vmatprep.subr.bf16.mxu0 0
        %1495 = vmatpush2.bf16.msra.mxu0 0
        %1496 = vmatprep.subr.bf16.mxu0 0
        %1497 = vmatpush2.bf16.msra.mxu0 0
        %1498 = vmatprep.subr.bf16.mxu0 0
        %1499 = vmatpush2.bf16.msra.mxu0 0
        %1500 = vmatprep.subr.bf16.mxu0 0
        %1501 = vmatpush2.bf16.msra.mxu0 0
        %1502 = vmatprep.mubr.bf16.mxu0 0
        %1503 = vmatmul.mubr.bf16.gmra.mxu0 %v1413
        %v1504 = vpop.f32.mrf.mxu0
        %v1505 = vadd.f32 %v1420, %v1504
        %v1506 = vpop.f32.mrf.mxu0
        %v1507 = vpop.f32.mrf.mxu0
        %v1508 = vadd.f32 %v1420, %v1507
        %v1509 = vpop.f32.mrf.mxu0
        %1510 = vmatprep.mubr.bf16.mxu0 0
        %1511 = vmatmul.mubr.bf16.gmra.mxu0 %v1414
        %v1512 = vpop.f32.mrf.mxu0
        %v1513 = vadd.f32 %v1420, %v1512
        %v1514 = vpop.f32.mrf.mxu0
        %v1515 = vpop.f32.mrf.mxu0
        %v1516 = vadd.f32 %v1420, %v1515
        %v1517 = vpop.f32.mrf.mxu0
        %1518 = vdwg.mxu0
        %v1519 = vld [vmem:[%s1205] sm:$0x1]
        %v1520 = vld [vmem:[%s1205 + $0x1] sm:$0x1]
        %v1523 = vlaneseq
        %v1524 = vshrl.u32 %v1523, 7
        %v1525 = vsub.s32 0, %v1524
        %v1526 = vrot.slane %v1519, %v1525
        %v1527 = vlaneseq
        %v1528 = vshrl.u32 %v1527, 7
        %v1529 = vsub.s32 0, %v1528
        %v1530 = vrot.slane %v1520, %v1529
        %v1533 = vadd.f32 %v1505, %v1526
        %v1534 = vadd.f32 %v1508, %v1526
        %v1535 = vadd.f32 %v1513, %v1530
        %v1536 = vadd.f32 %v1516, %v1530
        %v1537 = vld [vmem:[%s11] sm:$0xf]
        %v1538 = vld [vmem:[%s11 + $0x4] sm:$0xf]
        %v1539 = vld [vmem:[%s11 + $0x8] sm:$0xf]
        %v1540 = vld [vmem:[%s11 + $0xc] sm:$0xf]
        %v1541 = vld [vmem:[%s11 + $0x10] sm:$0xf]
        %v1542 = vld [vmem:[%s11 + $0x14] sm:$0xf]
        %v1543 = vld [vmem:[%s11 + $0x18] sm:$0xf]
        %v1544 = vld [vmem:[%s11 + $0x1c] sm:$0xf]
        %v1545 = vld [vmem:[%s11 + $0x20] sm:$0xf]
        %v1546 = vld [vmem:[%s11 + $0x24] sm:$0xf]
        %v1547 = vld [vmem:[%s11 + $0x28] sm:$0xf]
        %v1548 = vld [vmem:[%s11 + $0x2c] sm:$0xf]
        %v1549 = vld [vmem:[%s11 + $0x30] sm:$0xf]
        %v1550 = vld [vmem:[%s11 + $0x34] sm:$0xf]
        %v1551 = vld [vmem:[%s11 + $0x38] sm:$0xf]
        %v1552 = vld [vmem:[%s11 + $0x3c] sm:$0xf]
        %v1553 = vld [vmem:[#allocation7] sm:$0x1]
        %v1555 = vlaneseq
        %v1556 = vshrl.u32 %v1555, 7
        %v1557 = vsub.s32 0, %v1556
        %v1558 = vrot.slane %v1553, %v1557
        %v1564 = vunpack.c.l.b16 %v1393
        %v1565 = vunpack.c.l.b16 %v1394
        %v1566 = vunpack.c.l.b16 %v1395
        %v1567 = vunpack.c.l.b16 %v1396
        %v1568 = vpack.c.b16 %v1565, %v1564
        %v1569 = vpack.c.b16 %v1567, %v1566
        %v1588 = vunpack.c.l.b16 %v1537
        %v1589 = vunpack.c.l.b16 %v1538
        %v1590 = vunpack.c.l.b16 %v1539
        %v1591 = vunpack.c.l.b16 %v1540
        %v1592 = vunpack.c.l.b16 %v1541
        %v1593 = vunpack.c.l.b16 %v1542
        %v1594 = vunpack.c.l.b16 %v1543
        %v1595 = vunpack.c.l.b16 %v1544
        %v1596 = vunpack.c.l.b16 %v1545
        %v1597 = vunpack.c.l.b16 %v1546
        %v1598 = vunpack.c.l.b16 %v1547
        %v1599 = vunpack.c.l.b16 %v1548
        %v1600 = vunpack.c.l.b16 %v1549
        %v1601 = vunpack.c.l.b16 %v1550
        %v1602 = vunpack.c.l.b16 %v1551
        %v1603 = vunpack.c.l.b16 %v1552
        %v1604 = vpack.c.b16 %v1589, %v1588
        %v1605 = vpack.c.b16 %v1591, %v1590
        %v1606 = vpack.c.b16 %v1593, %v1592
        %v1607 = vpack.c.b16 %v1595, %v1594
        %v1608 = vpack.c.b16 %v1597, %v1596
        %v1609 = vpack.c.b16 %v1599, %v1598
        %v1610 = vpack.c.b16 %v1601, %v1600
        %v1611 = vpack.c.b16 %v1603, %v1602
        %1620 = vmatprep.subr.bf16.mxu0 0
        %1621 = vmatpush1.bf16.msra.mxu0 %v1611
        %1622 = vmatprep.subr.bf16.mxu0 0
        %1623 = vmatpush1.bf16.msra.mxu0 %v1610
        %1624 = vmatprep.subr.bf16.mxu0 0
        %1625 = vmatpush1.bf16.msra.mxu0 %v1609
        %1626 = vmatprep.subr.bf16.mxu0 0
        %1627 = vmatpush1.bf16.msra.mxu0 %v1608
        %1628 = vmatprep.subr.bf16.mxu0 0
        %1629 = vmatpush1.bf16.msra.mxu0 %v1607
        %1630 = vmatprep.subr.bf16.mxu0 0
        %1631 = vmatpush1.bf16.msra.mxu0 %v1606
        %1632 = vmatprep.subr.bf16.mxu0 0
        %1633 = vmatpush1.bf16.msra.mxu0 %v1605
        %1634 = vmatprep.subr.bf16.mxu0 0
        %1635 = vmatpush1.bf16.msra.mxu0 %v1604
        %1636 = vmatprep.subr.bf16.mxu0 0
        %1637 = vmatpush2.bf16.msra.mxu0 0
        %1638 = vmatprep.subr.bf16.mxu0 0
        %1639 = vmatpush2.bf16.msra.mxu0 0
        %1640 = vmatprep.subr.bf16.mxu0 0
        %1641 = vmatpush2.bf16.msra.mxu0 0
        %1642 = vmatprep.subr.bf16.mxu0 0
        %1643 = vmatpush2.bf16.msra.mxu0 0
        %1644 = vmatprep.subr.bf16.mxu0 0
        %1645 = vmatpush2.bf16.msra.mxu0 0
        %1646 = vmatprep.subr.bf16.mxu0 0
        %1647 = vmatpush2.bf16.msra.mxu0 0
        %1648 = vmatprep.subr.bf16.mxu0 0
        %1649 = vmatpush2.bf16.msra.mxu0 0
        %1650 = vmatprep.subr.bf16.mxu0 0
        %1651 = vmatpush2.bf16.msra.mxu0 0
        %1652 = vmatprep.mubr.bf16.mxu0 0
        %1653 = vmatmul.mubr.bf16.gmra.mxu0 %v1568
        %v1654 = vpop.f32.mrf.mxu0
        %v1655 = vadd.f32 %v1558, %v1654
        %v1656 = vpop.f32.mrf.mxu0
        %v1657 = vpop.f32.mrf.mxu0
        %v1658 = vadd.f32 %v1558, %v1657
        %v1659 = vpop.f32.mrf.mxu0
        %1660 = vmatprep.mubr.bf16.mxu0 0
        %1661 = vmatmul.mubr.bf16.gmra.mxu0 %v1569
        %v1662 = vpop.f32.mrf.mxu0
        %v1663 = vadd.f32 %v1558, %v1662
        %v1664 = vpop.f32.mrf.mxu0
        %v1665 = vpop.f32.mrf.mxu0
        %v1666 = vadd.f32 %v1558, %v1665
        %v1667 = vpop.f32.mrf.mxu0
        %1668 = vdwg.mxu0
        %v1669 = vlaneseq
        %v1670 = vshrl.u32 %v1669, 7
        %v1671 = vadd.s32 %v1670, 8
        %v1672 = vlaneseq
        %v1673 = vand.u32 %v1672, 127
        %vm1674 = vcmp.eq.s32.totalorder %v1670, %v1673
        %vm1675 = vcmp.eq.s32.totalorder %v1671, %v1673
        %v1676 = vsel %vm1674, -1e+09, 0.0
        %v1677 = vsel %vm1675, -1e+09, 0.0
        %vm1678 = vcmask 523264
        %v1679 = vsel %vm1678, %v1533, 0.0
        %1680 = vadd.xlane.f32.xlu0 %v1679
        %v1681 = vpop.xlane.xlu0 %1680
        %v1682 = vsel %vm1678, %v1534, 0.0
        %1683 = vadd.xlane.f32.xlu0 %v1682
        %v1684 = vpop.xlane.xlu0 %1683
        %v1685 = vsel %vm1678, %v1535, 0.0
        %1686 = vadd.xlane.f32.xlu0 %v1685
        %v1687 = vpop.xlane.xlu0 %1686
        %v1688 = vsel %vm1678, %v1536, 0.0
        %1689 = vadd.xlane.f32.xlu0 %v1688
        %v1690 = vpop.xlane.xlu0 %1689
        %v1691 = vrcp.pop 64.0
        %v1692 = vmul.f32 %v1681, %v1691
        %v1693 = vmul.f32 %v1684, %v1691
        %v1694 = vmul.f32 %v1687, %v1691
        %v1695 = vmul.f32 %v1690, %v1691
        %v1696 = vsub.f32 %v1533, %v1692
        %v1697 = vsub.f32 %v1534, %v1693
        %v1698 = vsub.f32 %v1535, %v1694
        %v1699 = vsub.f32 %v1536, %v1695
        %v1700 = vmul.f32 %v1696, %v1696
        %v1701 = vmul.f32 %v1697, %v1697
        %v1702 = vmul.f32 %v1698, %v1698
        %v1703 = vmul.f32 %v1699, %v1699
        %v1704 = vsel %vm1678, %v1700, 0.0
        %1705 = vadd.xlane.f32.xlu0 %v1704
        %v1706 = vpop.xlane.xlu0 %1705
        %v1707 = vsel %vm1678, %v1701, 0.0
        %1708 = vadd.xlane.f32.xlu0 %v1707
        %v1709 = vpop.xlane.xlu0 %1708
        %v1710 = vsel %vm1678, %v1702, 0.0
        %1711 = vadd.xlane.f32.xlu0 %v1710
        %v1712 = vpop.xlane.xlu0 %1711
        %v1713 = vsel %vm1678, %v1703, 0.0
        %1714 = vadd.xlane.f32.xlu0 %v1713
        %v1715 = vpop.xlane.xlu0 %1714
        %v1716 = vmul.f32 %v1706, %v1691
        %v1717 = vmul.f32 %v1709, %v1691
        %v1718 = vmul.f32 %v1712, %v1691
        %v1719 = vmul.f32 %v1715, %v1691
        %v1720 = vadd.f32 %v1716, 1e-05
        %v1721 = vadd.f32 %v1717, 1e-05
        %v1722 = vadd.f32 %v1718, 1e-05
        %v1723 = vadd.f32 %v1719, 1e-05
        %v1724 = vrsqrt.pop %v1720
        %v1725 = vrsqrt.pop %v1721
        %v1726 = vrsqrt.pop %v1722
        %v1727 = vrsqrt.pop %v1723
        %v1728 = vmul.f32 %v1696, %v1724
        %v1729 = vmul.f32 %v1697, %v1725
        %v1730 = vmul.f32 %v1698, %v1726
        %v1731 = vmul.f32 %v1699, %v1727
        %v1732 = vld [vmem:[#allocation17] sm:$0x1]
        %v1734 = vlaneseq
        %v1735 = vshrl.u32 %v1734, 7
        %v1736 = vsub.s32 0, %v1735
        %v1737 = vrot.slane %v1732, %v1736
        %v1739 = vmul.f32 %v1728, %v1737
        %v1740 = vmul.f32 %v1729, %v1737
        %v1741 = vmul.f32 %v1730, %v1737
        %v1742 = vmul.f32 %v1731, %v1737
        %v1743 = vld [vmem:[#allocation19] sm:$0x1]
        %v1745 = vlaneseq
        %v1746 = vshrl.u32 %v1745, 7
        %v1747 = vsub.s32 0, %v1746
        %v1748 = vrot.slane %v1743, %v1747
        %v1750 = vadd.f32 %v1739, %v1748
        %v1751 = vadd.f32 %v1740, %v1748
        %v1752 = vadd.f32 %v1741, %v1748
        %v1753 = vadd.f32 %v1742, %v1748
        %v1754 = vld [vmem:[%s35] sm:$0xff]
        %v1755 = vld [vmem:[%s35 + $0x8] sm:$0xff]
        %v1756 = vld [vmem:[%s35 + $0x10] sm:$0xff]
        %v1757 = vld [vmem:[%s35 + $0x18] sm:$0xff]
        %v1758 = vld [vmem:[%s35 + $0x20] sm:$0xff]
        %v1759 = vld [vmem:[%s35 + $0x28] sm:$0xff]
        %v1760 = vld [vmem:[%s35 + $0x30] sm:$0xff]
        %v1761 = vld [vmem:[%s35 + $0x38] sm:$0xff]
        %v1762 = vpack.c.bf16 %v1751, %v1750
        %v1763 = vpack.c.bf16 %v1753, %v1752
        %v1772 = vunpack.c.l.b16 %v1754
        %v1773 = vunpack.c.h.b16 %v1754
        %v1774 = vunpack.c.l.b16 %v1755
        %v1775 = vunpack.c.h.b16 %v1755
        %v1776 = vunpack.c.l.b16 %v1756
        %v1777 = vunpack.c.h.b16 %v1756
        %v1778 = vunpack.c.l.b16 %v1757
        %v1779 = vunpack.c.h.b16 %v1757
        %v1780 = vunpack.c.l.b16 %v1758
        %v1781 = vunpack.c.h.b16 %v1758
        %v1782 = vunpack.c.l.b16 %v1759
        %v1783 = vunpack.c.h.b16 %v1759
        %v1784 = vunpack.c.l.b16 %v1760
        %v1785 = vunpack.c.h.b16 %v1760
        %v1786 = vunpack.c.l.b16 %v1761
        %v1787 = vunpack.c.h.b16 %v1761
        %v1788 = vpack.c.b16 %v1774, %v1772
        %v1789 = vpack.c.b16 %v1775, %v1773
        %v1790 = vpack.c.b16 %v1778, %v1776
        %v1791 = vpack.c.b16 %v1779, %v1777
        %v1792 = vpack.c.b16 %v1782, %v1780
        %v1793 = vpack.c.b16 %v1783, %v1781
        %v1794 = vpack.c.b16 %v1786, %v1784
        %v1795 = vpack.c.b16 %v1787, %v1785
        %v1805 = vsel %vm1678, %v1762, 0
        %v1808 = vsel %vm1678, %v1763, 0
        %1810 = vmatprep.subr.bf16.mxu0 0
        %1811 = vmatpush1.bf16.msra.mxu0 0
        %1812 = vmatprep.subr.bf16.mxu0 0
        %1813 = vmatpush1.bf16.msra.mxu0 0
        %1814 = vmatprep.subr.bf16.mxu0 0
        %1815 = vmatpush1.bf16.msra.mxu0 0
        %1816 = vmatprep.subr.bf16.mxu0 0
        %1817 = vmatpush1.bf16.msra.mxu0 0
        %1818 = vmatprep.subr.bf16.mxu0 %v1795
        %1819 = vmatpush1.bf16.msra.mxu0 %v1794
        %1820 = vmatprep.subr.bf16.mxu0 %v1793
        %1821 = vmatpush1.bf16.msra.mxu0 %v1792
        %1822 = vmatprep.subr.bf16.mxu0 %v1791
        %1823 = vmatpush1.bf16.msra.mxu0 %v1790
        %1824 = vmatprep.subr.bf16.mxu0 %v1789
        %1825 = vmatpush1.bf16.msra.mxu0 %v1788
        %1826 = vmatprep.subr.bf16.mxu0 0
        %1827 = vmatpush2.bf16.msra.mxu0 0
        %1828 = vmatprep.subr.bf16.mxu0 0
        %1829 = vmatpush2.bf16.msra.mxu0 0
        %1830 = vmatprep.subr.bf16.mxu0 0
        %1831 = vmatpush2.bf16.msra.mxu0 0
        %1832 = vmatprep.subr.bf16.mxu0 0
        %1833 = vmatpush2.bf16.msra.mxu0 0
        %1834 = vmatprep.subr.bf16.mxu0 0
        %1835 = vmatpush2.bf16.msra.mxu0 0
        %1836 = vmatprep.subr.bf16.mxu0 0
        %1837 = vmatpush2.bf16.msra.mxu0 0
        %1838 = vmatprep.subr.bf16.mxu0 0
        %1839 = vmatpush2.bf16.msra.mxu0 0
        %1840 = vmatprep.subr.bf16.mxu0 0
        %1841 = vmatpush2.bf16.msra.mxu0 0
        %1842 = vmatprep.mubr.bf16.mxu0 0
        %1843 = vmatmul.mubr.bf16.gmra.mxu0 %v1805
        %v1844 = vpop.f32.mrf.mxu0
        %v1845 = vadd.f32 0.0, %v1844
        %v1846 = vpop.f32.mrf.mxu0
        %v1847 = vadd.f32 0.0, %v1846
        %v1848 = vpop.f32.mrf.mxu0
        %v1849 = vadd.f32 0.0, %v1848
        %v1850 = vpop.f32.mrf.mxu0
        %v1851 = vadd.f32 0.0, %v1850
        %1852 = vmatprep.mubr.bf16.mxu0 0
        %1853 = vmatmul.mubr.bf16.gmra.mxu0 %v1808
        %v1854 = vpop.f32.mrf.mxu0
        %v1855 = vadd.f32 0.0, %v1854
        %v1856 = vpop.f32.mrf.mxu0
        %v1857 = vadd.f32 0.0, %v1856
        %v1858 = vpop.f32.mrf.mxu0
        %v1859 = vadd.f32 0.0, %v1858
        %v1860 = vpop.f32.mrf.mxu0
        %v1861 = vadd.f32 0.0, %v1860
        %1862 = vdwg.mxu0
        %v1863 = vpack.c.bf16 %v1849, %v1845
        %v1864 = vpack.c.bf16 %v1859, %v1855
        %v1865 = vpack.c.bf16 %v1851, %v1847
        %v1866 = vpack.c.bf16 %v1861, %v1857
        %1868 = vrot.lane.b32.xlu0 %v1863, 64
        %v1869 = vpop.permute.xlu0 %1868
        %vm1870 = vcmask 130048
        %v1872 = vsel %vm1870, %v1863, 0
        %v1875 = vsel %vm1870, %v1869, 0
        %1877 = vmatprep.subr.bf16.mxu0 0
        %1878 = vmatpush1.bf16.xpose.msra.mxu0 0
        %1879 = vmatprep.subr.bf16.mxu0 0
        %1880 = vmatpush1.bf16.xpose.msra.mxu0 0
        %1881 = vmatprep.subr.bf16.mxu0 0
        %1882 = vmatpush1.bf16.xpose.msra.mxu0 0
        %1883 = vmatprep.subr.bf16.mxu0 0
        %1884 = vmatpush1.bf16.xpose.msra.mxu0 0
        %1885 = vmatprep.subr.bf16.mxu0 0
        %1886 = vmatpush1.bf16.xpose.msra.mxu0 0
        %1887 = vmatprep.subr.bf16.mxu0 0
        %1888 = vmatpush1.bf16.xpose.msra.mxu0 0
        %1889 = vmatprep.subr.bf16.mxu0 0
        %1890 = vmatpush1.bf16.xpose.msra.mxu0 0
        %1891 = vmatprep.subr.bf16.mxu0 0
        %1892 = vmatpush1.bf16.xpose.msra.mxu0 %v1875
        %1893 = vmatprep.subr.bf16.mxu0 0
        %1894 = vmatpush2.bf16.xpose.msra.mxu0 0
        %1895 = vmatprep.subr.bf16.mxu0 0
        %1896 = vmatpush2.bf16.xpose.msra.mxu0 0
        %1897 = vmatprep.subr.bf16.mxu0 0
        %1898 = vmatpush2.bf16.xpose.msra.mxu0 0
        %1899 = vmatprep.subr.bf16.mxu0 0
        %1900 = vmatpush2.bf16.xpose.msra.mxu0 0
        %1901 = vmatprep.subr.bf16.mxu0 0
        %1902 = vmatpush2.bf16.xpose.msra.mxu0 0
        %1903 = vmatprep.subr.bf16.mxu0 0
        %1904 = vmatpush2.bf16.xpose.msra.mxu0 0
        %1905 = vmatprep.subr.bf16.mxu0 0
        %1906 = vmatpush2.bf16.xpose.msra.mxu0 0
        %1907 = vmatprep.subr.bf16.mxu0 0
        %1908 = vmatpush2.bf16.xpose.msra.mxu0 0
        %1909 = vmatprep.mubr.bf16.mxu0 0
        %1910 = vmatmul.mubr.bf16.gmra.mxu0 %v1872
        %v1911 = vpop.f32.mrf.mxu0
        %v1912 = vadd.f32 %v1676, %v1911
        %v1913 = vpop.f32.mrf.mxu0
        %v1914 = vpop.f32.mrf.mxu0
        %v1915 = vadd.f32 %v1677, %v1914
        %v1916 = vpop.f32.mrf.mxu0
        %1917 = vdwg.mxu0
        %1919 = vrot.lane.b32.xlu0 %v1864, 64
        %v1920 = vpop.permute.xlu0 %1919
        %v1922 = vsel %vm1870, %v1864, 0
        %v1925 = vsel %vm1870, %v1920, 0
        %1927 = vmatprep.subr.bf16.mxu0 0
        %1928 = vmatpush1.bf16.xpose.msra.mxu0 0
        %1929 = vmatprep.subr.bf16.mxu0 0
        %1930 = vmatpush1.bf16.xpose.msra.mxu0 0
        %1931 = vmatprep.subr.bf16.mxu0 0
        %1932 = vmatpush1.bf16.xpose.msra.mxu0 0
        %1933 = vmatprep.subr.bf16.mxu0 0
        %1934 = vmatpush1.bf16.xpose.msra.mxu0 0
        %1935 = vmatprep.subr.bf16.mxu0 0
        %1936 = vmatpush1.bf16.xpose.msra.mxu0 0
        %1937 = vmatprep.subr.bf16.mxu0 0
        %1938 = vmatpush1.bf16.xpose.msra.mxu0 0
        %1939 = vmatprep.subr.bf16.mxu0 0
        %1940 = vmatpush1.bf16.xpose.msra.mxu0 0
        %1941 = vmatprep.subr.bf16.mxu0 0
        %1942 = vmatpush1.bf16.xpose.msra.mxu0 %v1925
        %1943 = vmatprep.subr.bf16.mxu0 0
        %1944 = vmatpush2.bf16.xpose.msra.mxu0 0
        %1945 = vmatprep.subr.bf16.mxu0 0
        %1946 = vmatpush2.bf16.xpose.msra.mxu0 0
        %1947 = vmatprep.subr.bf16.mxu0 0
        %1948 = vmatpush2.bf16.xpose.msra.mxu0 0
        %1949 = vmatprep.subr.bf16.mxu0 0
        %1950 = vmatpush2.bf16.xpose.msra.mxu0 0
        %1951 = vmatprep.subr.bf16.mxu0 0
        %1952 = vmatpush2.bf16.xpose.msra.mxu0 0
        %1953 = vmatprep.subr.bf16.mxu0 0
        %1954 = vmatpush2.bf16.xpose.msra.mxu0 0
        %1955 = vmatprep.subr.bf16.mxu0 0
        %1956 = vmatpush2.bf16.xpose.msra.mxu0 0
        %1957 = vmatprep.subr.bf16.mxu0 0
        %1958 = vmatpush2.bf16.xpose.msra.mxu0 0
        %1959 = vmatprep.mubr.bf16.mxu0 0
        %1960 = vmatmul.mubr.bf16.gmra.mxu0 %v1922
        %v1961 = vpop.f32.mrf.mxu0
        %v1962 = vadd.f32 %v1676, %v1961
        %v1963 = vpop.f32.mrf.mxu0
        %v1964 = vpop.f32.mrf.mxu0
        %v1965 = vadd.f32 %v1677, %v1964
        %v1966 = vpop.f32.mrf.mxu0
        %1967 = vdwg.mxu0
        %v1968 = vsel %vm1870, %v1912, -inf
        %1969 = vmax.xlane.f32.xlu0 %v1968
        %v1970 = vpop.xlane.xlu0 %1969
        %v1971 = vsel %vm1870, %v1915, -inf
        %1972 = vmax.xlane.f32.xlu0 %v1971
        %v1973 = vpop.xlane.xlu0 %1972
        %v1974 = vsel %vm1870, %v1962, -inf
        %1975 = vmax.xlane.f32.xlu0 %v1974
        %v1976 = vpop.xlane.xlu0 %1975
        %v1977 = vsel %vm1870, %v1965, -inf
        %1978 = vmax.xlane.f32.xlu0 %v1977
        %v1979 = vpop.xlane.xlu0 %1978
        %v1980 = vsub.f32 %v1912, %v1970
        %v1981 = vsub.f32 %v1915, %v1973
        %v1982 = vsub.f32 %v1962, %v1976
        %v1983 = vsub.f32 %v1965, %v1979
        %v1984 = vmul.f32 %v1980, 1.442695
        %v1985 = vpow.pop %v1984
        %v1986 = vmul.f32 %v1981, 1.442695
        %v1987 = vpow.pop %v1986
        %v1988 = vmul.f32 %v1982, 1.442695
        %v1989 = vpow.pop %v1988
        %v1990 = vmul.f32 %v1983, 1.442695
        %v1991 = vpow.pop %v1990
        %v1992 = vsel %vm1870, %v1985, 0.0
        %1993 = vadd.xlane.f32.xlu0 %v1992
        %v1994 = vpop.xlane.xlu0 %1993
        %v1995 = vsel %vm1870, %v1987, 0.0
        %1996 = vadd.xlane.f32.xlu0 %v1995
        %v1997 = vpop.xlane.xlu0 %1996
        %v1998 = vsel %vm1870, %v1989, 0.0
        %1999 = vadd.xlane.f32.xlu0 %v1998
        %v2000 = vpop.xlane.xlu0 %1999
        %v2001 = vsel %vm1870, %v1991, 0.0
        %2002 = vadd.xlane.f32.xlu0 %v2001
        %v2003 = vpop.xlane.xlu0 %2002
        %v2004 = vrcp.pop %v1994
        %v2005 = vrcp.pop %v1997
        %v2006 = vrcp.pop %v2000
        %v2007 = vrcp.pop %v2003
        %v2008 = vmul.f32 %v1985, %v2004
        %v2009 = vmul.f32 %v1987, %v2005
        %v2010 = vmul.f32 %v1989, %v2006
        %v2011 = vmul.f32 %v1991, %v2007
        %v2012 = vmul.f32 %v2008, 0.5
        %v2013 = vmul.f32 %v2009, 0.5
        %v2014 = vmul.f32 %v2010, 0.5
        %v2015 = vmul.f32 %v2011, 0.5
        %2016 = vst.msk [vmem:[%s1369] sm:$0xff] %vm1870, %v2012
        %2017 = vst.msk [vmem:[%s1369 + $0x8] sm:$0xff] %vm1870, %v2013
        %2018 = vst.msk [vmem:[%s1369 + $0x40] sm:$0xff] %vm1870, %v2014
        %2019 = vst.msk [vmem:[%s1369 + $0x48] sm:$0xff] %vm1870, %v2015
        %v2020 = vpack.c.bf16 %v2009, %v2008
        %v2021 = vpack.c.bf16 %v2011, %v2010
        %v2023 = vsel %vm1870, %v2020, 0
        %2025 = vmatprep.subr.bf16.mxu0 0
        %2026 = vmatpush1.bf16.msra.mxu0 0
        %2027 = vmatprep.subr.bf16.mxu0 0
        %2028 = vmatpush1.bf16.msra.mxu0 0
        %2029 = vmatprep.subr.bf16.mxu0 0
        %2030 = vmatpush1.bf16.msra.mxu0 0
        %2031 = vmatprep.subr.bf16.mxu0 0
        %2032 = vmatpush1.bf16.msra.mxu0 0
        %2033 = vmatprep.subr.bf16.mxu0 0
        %2034 = vmatpush1.bf16.msra.mxu0 0
        %2035 = vmatprep.subr.bf16.mxu0 0
        %2036 = vmatpush1.bf16.msra.mxu0 0
        %2037 = vmatprep.subr.bf16.mxu0 0
        %2038 = vmatpush1.bf16.msra.mxu0 0
        %2039 = vmatprep.subr.bf16.mxu0 0
        %2040 = vmatpush1.bf16.msra.mxu0 %v1865
        %2041 = vmatprep.subr.bf16.mxu0 0
        %2042 = vmatpush2.bf16.msra.mxu0 0
        %2043 = vmatprep.subr.bf16.mxu0 0
        %2044 = vmatpush2.bf16.msra.mxu0 0
        %2045 = vmatprep.subr.bf16.mxu0 0
        %2046 = vmatpush2.bf16.msra.mxu0 0
        %2047 = vmatprep.subr.bf16.mxu0 0
        %2048 = vmatpush2.bf16.msra.mxu0 0
        %2049 = vmatprep.subr.bf16.mxu0 0
        %2050 = vmatpush2.bf16.msra.mxu0 0
        %2051 = vmatprep.subr.bf16.mxu0 0
        %2052 = vmatpush2.bf16.msra.mxu0 0
        %2053 = vmatprep.subr.bf16.mxu0 0
        %2054 = vmatpush2.bf16.msra.mxu0 0
        %2055 = vmatprep.subr.bf16.mxu0 0
        %2056 = vmatpush2.bf16.msra.mxu0 0
        %2057 = vmatprep.mubr.bf16.mxu0 0
        %2058 = vmatmul.mubr.bf16.gmra.mxu0 %v2023
        %v2059 = vpop.f32.mrf.mxu0
        %v2060 = vadd.f32 0.0, %v2059
        %v2061 = vpop.f32.mrf.mxu0
        %v2062 = vpop.f32.mrf.mxu0
        %v2063 = vadd.f32 0.0, %v2062
        %v2064 = vpop.f32.mrf.mxu0
        %2065 = vdwg.mxu0
        %v2067 = vsel %vm1870, %v2021, 0
        %2069 = vmatprep.subr.bf16.mxu0 0
        %2070 = vmatpush1.bf16.msra.mxu0 0
        %2071 = vmatprep.subr.bf16.mxu0 0
        %2072 = vmatpush1.bf16.msra.mxu0 0
        %2073 = vmatprep.subr.bf16.mxu0 0
        %2074 = vmatpush1.bf16.msra.mxu0 0
        %2075 = vmatprep.subr.bf16.mxu0 0
        %2076 = vmatpush1.bf16.msra.mxu0 0
        %2077 = vmatprep.subr.bf16.mxu0 0
        %2078 = vmatpush1.bf16.msra.mxu0 0
        %2079 = vmatprep.subr.bf16.mxu0 0
        %2080 = vmatpush1.bf16.msra.mxu0 0
        %2081 = vmatprep.subr.bf16.mxu0 0
        %2082 = vmatpush1.bf16.msra.mxu0 0
        %2083 = vmatprep.subr.bf16.mxu0 0
        %2084 = vmatpush1.bf16.msra.mxu0 %v1866
        %2085 = vmatprep.subr.bf16.mxu0 0
        %2086 = vmatpush2.bf16.msra.mxu0 0
        %2087 = vmatprep.subr.bf16.mxu0 0
        %2088 = vmatpush2.bf16.msra.mxu0 0
        %2089 = vmatprep.subr.bf16.mxu0 0
        %2090 = vmatpush2.bf16.msra.mxu0 0
        %2091 = vmatprep.subr.bf16.mxu0 0
        %2092 = vmatpush2.bf16.msra.mxu0 0
        %2093 = vmatprep.subr.bf16.mxu0 0
        %2094 = vmatpush2.bf16.msra.mxu0 0
        %2095 = vmatprep.subr.bf16.mxu0 0
        %2096 = vmatpush2.bf16.msra.mxu0 0
        %2097 = vmatprep.subr.bf16.mxu0 0
        %2098 = vmatpush2.bf16.msra.mxu0 0
        %2099 = vmatprep.subr.bf16.mxu0 0
        %2100 = vmatpush2.bf16.msra.mxu0 0
        %2101 = vmatprep.mubr.bf16.mxu0 0
        %2102 = vmatmul.mubr.bf16.gmra.mxu0 %v2067
        %v2103 = vpop.f32.mrf.mxu0
        %v2104 = vadd.f32 0.0, %v2103
        %v2105 = vpop.f32.mrf.mxu0
        %v2106 = vpop.f32.mrf.mxu0
        %v2107 = vadd.f32 0.0, %v2106
        %v2108 = vpop.f32.mrf.mxu0
        %2109 = vdwg.mxu0
        %2110 = vrot.lane.b32.xlu0 %v1863, 112
        %v2111 = vpop.permute.xlu0 %2110
        %2112 = vrot.lane.b32.xlu0 %v1863, 48
        %v2113 = vpop.permute.xlu0 %2112
        %v2115 = vsel %vm1870, %v2111, 0
        %v2118 = vsel %vm1870, %v2113, 0
        %2120 = vmatprep.subr.bf16.mxu0 0
        %2121 = vmatpush1.bf16.xpose.msra.mxu0 0
        %2122 = vmatprep.subr.bf16.mxu0 0
        %2123 = vmatpush1.bf16.xpose.msra.mxu0 0
        %2124 = vmatprep.subr.bf16.mxu0 0
        %2125 = vmatpush1.bf16.xpose.msra.mxu0 0
        %2126 = vmatprep.subr.bf16.mxu0 0
        %2127 = vmatpush1.bf16.xpose.msra.mxu0 0
        %2128 = vmatprep.subr.bf16.mxu0 0
        %2129 = vmatpush1.bf16.xpose.msra.mxu0 0
        %2130 = vmatprep.subr.bf16.mxu0 0
        %2131 = vmatpush1.bf16.xpose.msra.mxu0 0
        %2132 = vmatprep.subr.bf16.mxu0 0
        %2133 = vmatpush1.bf16.xpose.msra.mxu0 0
        %2134 = vmatprep.subr.bf16.mxu0 0
        %2135 = vmatpush1.bf16.xpose.msra.mxu0 %v2118
        %2136 = vmatprep.subr.bf16.mxu0 0
        %2137 = vmatpush2.bf16.xpose.msra.mxu0 0
        %2138 = vmatprep.subr.bf16.mxu0 0
        %2139 = vmatpush2.bf16.xpose.msra.mxu0 0
        %2140 = vmatprep.subr.bf16.mxu0 0
        %2141 = vmatpush2.bf16.xpose.msra.mxu0 0
        %2142 = vmatprep.subr.bf16.mxu0 0
        %2143 = vmatpush2.bf16.xpose.msra.mxu0 0
        %2144 = vmatprep.subr.bf16.mxu0 0
        %2145 = vmatpush2.bf16.xpose.msra.mxu0 0
        %2146 = vmatprep.subr.bf16.mxu0 0
        %2147 = vmatpush2.bf16.xpose.msra.mxu0 0
        %2148 = vmatprep.subr.bf16.mxu0 0
        %2149 = vmatpush2.bf16.xpose.msra.mxu0 0
        %2150 = vmatprep.subr.bf16.mxu0 0
        %2151 = vmatpush2.bf16.xpose.msra.mxu0 0
        %2152 = vmatprep.mubr.bf16.mxu0 0
        %2153 = vmatmul.mubr.bf16.gmra.mxu0 %v2115
        %v2154 = vpop.f32.mrf.mxu0
        %v2155 = vadd.f32 %v1676, %v2154
        %v2156 = vpop.f32.mrf.mxu0
        %v2157 = vpop.f32.mrf.mxu0
        %v2158 = vadd.f32 %v1677, %v2157
        %v2159 = vpop.f32.mrf.mxu0
        %2160 = vdwg.mxu0
        %2161 = vrot.lane.b32.xlu0 %v1864, 112
        %v2162 = vpop.permute.xlu0 %2161
        %2163 = vrot.lane.b32.xlu0 %v1864, 48
        %v2164 = vpop.permute.xlu0 %2163
        %v2166 = vsel %vm1870, %v2162, 0
        %v2169 = vsel %vm1870, %v2164, 0
        %2171 = vmatprep.subr.bf16.mxu0 0
        %2172 = vmatpush1.bf16.xpose.msra.mxu0 0
        %2173 = vmatprep.subr.bf16.mxu0 0
        %2174 = vmatpush1.bf16.xpose.msra.mxu0 0
        %2175 = vmatprep.subr.bf16.mxu0 0
        %2176 = vmatpush1.bf16.xpose.msra.mxu0 0
        %2177 = vmatprep.subr.bf16.mxu0 0
        %2178 = vmatpush1.bf16.xpose.msra.mxu0 0
        %2179 = vmatprep.subr.bf16.mxu0 0
        %2180 = vmatpush1.bf16.xpose.msra.mxu0 0
        %2181 = vmatprep.subr.bf16.mxu0 0
        %2182 = vmatpush1.bf16.xpose.msra.mxu0 0
        %2183 = vmatprep.subr.bf16.mxu0 0
        %2184 = vmatpush1.bf16.xpose.msra.mxu0 0
        %2185 = vmatprep.subr.bf16.mxu0 0
        %2186 = vmatpush1.bf16.xpose.msra.mxu0 %v2169
        %2187 = vmatprep.subr.bf16.mxu0 0
        %2188 = vmatpush2.bf16.xpose.msra.mxu0 0
        %2189 = vmatprep.subr.bf16.mxu0 0
        %2190 = vmatpush2.bf16.xpose.msra.mxu0 0
        %2191 = vmatprep.subr.bf16.mxu0 0
        %2192 = vmatpush2.bf16.xpose.msra.mxu0 0
        %2193 = vmatprep.subr.bf16.mxu0 0
        %2194 = vmatpush2.bf16.xpose.msra.mxu0 0
        %2195 = vmatprep.subr.bf16.mxu0 0
        %2196 = vmatpush2.bf16.xpose.msra.mxu0 0
        %2197 = vmatprep.subr.bf16.mxu0 0
        %2198 = vmatpush2.bf16.xpose.msra.mxu0 0
        %2199 = vmatprep.subr.bf16.mxu0 0
        %2200 = vmatpush2.bf16.xpose.msra.mxu0 0
        %2201 = vmatprep.subr.bf16.mxu0 0
        %2202 = vmatpush2.bf16.xpose.msra.mxu0 0
        %2203 = vmatprep.mubr.bf16.mxu0 0
        %2204 = vmatmul.mubr.bf16.gmra.mxu0 %v2166
        %v2205 = vpop.f32.mrf.mxu0
        %v2206 = vadd.f32 %v1676, %v2205
        %v2207 = vpop.f32.mrf.mxu0
        %v2208 = vpop.f32.mrf.mxu0
        %v2209 = vadd.f32 %v1677, %v2208
        %v2210 = vpop.f32.mrf.mxu0
        %2211 = vdwg.mxu0
        %v2212 = vsel %vm1870, %v2155, -inf
        %2213 = vmax.xlane.f32.xlu0 %v2212
        %v2214 = vpop.xlane.xlu0 %2213
        %v2215 = vsel %vm1870, %v2158, -inf
        %2216 = vmax.xlane.f32.xlu0 %v2215
        %v2217 = vpop.xlane.xlu0 %2216
        %v2218 = vsel %vm1870, %v2206, -inf
        %2219 = vmax.xlane.f32.xlu0 %v2218
        %v2220 = vpop.xlane.xlu0 %2219
        %v2221 = vsel %vm1870, %v2209, -inf
        %2222 = vmax.xlane.f32.xlu0 %v2221
        %v2223 = vpop.xlane.xlu0 %2222
        %v2224 = vsub.f32 %v2155, %v2214
        %v2225 = vsub.f32 %v2158, %v2217
        %v2226 = vsub.f32 %v2206, %v2220
        %v2227 = vsub.f32 %v2209, %v2223
        %v2228 = vmul.f32 %v2224, 1.442695
        %v2229 = vpow.pop %v2228
        %v2230 = vmul.f32 %v2225, 1.442695
        %v2231 = vpow.pop %v2230
        %v2232 = vmul.f32 %v2226, 1.442695
        %v2233 = vpow.pop %v2232
        %v2234 = vmul.f32 %v2227, 1.442695
        %v2235 = vpow.pop %v2234
        %v2236 = vsel %vm1870, %v2229, 0.0
        %2237 = vadd.xlane.f32.xlu0 %v2236
        %v2238 = vpop.xlane.xlu0 %2237
        %v2239 = vsel %vm1870, %v2231, 0.0
        %2240 = vadd.xlane.f32.xlu0 %v2239
        %v2241 = vpop.xlane.xlu0 %2240
        %v2242 = vsel %vm1870, %v2233, 0.0
        %2243 = vadd.xlane.f32.xlu0 %v2242
        %v2244 = vpop.xlane.xlu0 %2243
        %v2245 = vsel %vm1870, %v2235, 0.0
        %2246 = vadd.xlane.f32.xlu0 %v2245
        %v2247 = vpop.xlane.xlu0 %2246
        %v2248 = vrcp.pop %v2238
        %v2249 = vrcp.pop %v2241
        %v2250 = vrcp.pop %v2244
        %v2251 = vrcp.pop %v2247
        %v2252 = vmul.f32 %v2229, %v2248
        %v2253 = vmul.f32 %v2231, %v2249
        %v2254 = vmul.f32 %v2233, %v2250
        %v2255 = vmul.f32 %v2235, %v2251
        %v2256 = vmul.f32 %v2252, 0.5
        %v2257 = vmul.f32 %v2253, 0.5
        %v2258 = vmul.f32 %v2254, 0.5
        %v2259 = vmul.f32 %v2255, 0.5
        %s2260 = scalar_lea.vmem %s1369, 16 [#allocation28]
        %2261 = vst.msk [vmem:[%s2260] sm:$0xff] %vm1870, %v2256
        %2262 = vst.msk [vmem:[%s2260 + $0x8] sm:$0xff] %vm1870, %v2257
        %2263 = vst.msk [vmem:[%s2260 + $0x40] sm:$0xff] %vm1870, %v2258
        %2264 = vst.msk [vmem:[%s2260 + $0x48] sm:$0xff] %vm1870, %v2259
        %v2265 = vpack.c.bf16 %v2253, %v2252
        %v2266 = vpack.c.bf16 %v2255, %v2254
        %2268 = vrot.lane.b32.xlu0 %v1865, 112
        %v2269 = vpop.permute.xlu0 %2268
        %v2272 = vsel %vm1870, %v2265, 0
        %2274 = vmatprep.subr.bf16.mxu0 0
        %2275 = vmatpush1.bf16.msra.mxu0 0
        %2276 = vmatprep.subr.bf16.mxu0 0
        %2277 = vmatpush1.bf16.msra.mxu0 0
        %2278 = vmatprep.subr.bf16.mxu0 0
        %2279 = vmatpush1.bf16.msra.mxu0 0
        %2280 = vmatprep.subr.bf16.mxu0 0
        %2281 = vmatpush1.bf16.msra.mxu0 0
        %2282 = vmatprep.subr.bf16.mxu0 0
        %2283 = vmatpush1.bf16.msra.mxu0 0
        %2284 = vmatprep.subr.bf16.mxu0 0
        %2285 = vmatpush1.bf16.msra.mxu0 0
        %2286 = vmatprep.subr.bf16.mxu0 0
        %2287 = vmatpush1.bf16.msra.mxu0 0
        %2288 = vmatprep.subr.bf16.mxu0 0
        %2289 = vmatpush1.bf16.msra.mxu0 %v2269
        %2290 = vmatprep.subr.bf16.mxu0 0
        %2291 = vmatpush2.bf16.msra.mxu0 0
        %2292 = vmatprep.subr.bf16.mxu0 0
        %2293 = vmatpush2.bf16.msra.mxu0 0
        %2294 = vmatprep.subr.bf16.mxu0 0
        %2295 = vmatpush2.bf16.msra.mxu0 0
        %2296 = vmatprep.subr.bf16.mxu0 0
        %2297 = vmatpush2.bf16.msra.mxu0 0
        %2298 = vmatprep.subr.bf16.mxu0 0
        %2299 = vmatpush2.bf16.msra.mxu0 0
        %2300 = vmatprep.subr.bf16.mxu0 0
        %2301 = vmatpush2.bf16.msra.mxu0 0
        %2302 = vmatprep.subr.bf16.mxu0 0
        %2303 = vmatpush2.bf16.msra.mxu0 0
        %2304 = vmatprep.subr.bf16.mxu0 0
        %2305 = vmatpush2.bf16.msra.mxu0 0
        %2306 = vmatprep.mubr.bf16.mxu0 0
        %2307 = vmatmul.mubr.bf16.gmra.mxu0 %v2272
        %v2308 = vpop.f32.mrf.mxu0
        %v2309 = vadd.f32 0.0, %v2308
        %v2310 = vpop.f32.mrf.mxu0
        %v2311 = vpop.f32.mrf.mxu0
        %v2312 = vadd.f32 0.0, %v2311
        %v2313 = vpop.f32.mrf.mxu0
        %2314 = vdwg.mxu0
        %2316 = vrot.lane.b32.xlu0 %v1866, 112
        %v2317 = vpop.permute.xlu0 %2316
        %v2320 = vsel %vm1870, %v2266, 0
        %2322 = vmatprep.subr.bf16.mxu0 0
        %2323 = vmatpush1.bf16.msra.mxu0 0
        %2324 = vmatprep.subr.bf16.mxu0 0
        %2325 = vmatpush1.bf16.msra.mxu0 0
        %2326 = vmatprep.subr.bf16.mxu0 0
        %2327 = vmatpush1.bf16.msra.mxu0 0
        %2328 = vmatprep.subr.bf16.mxu0 0
        %2329 = vmatpush1.bf16.msra.mxu0 0
        %2330 = vmatprep.subr.bf16.mxu0 0
        %2331 = vmatpush1.bf16.msra.mxu0 0
        %2332 = vmatprep.subr.bf16.mxu0 0
        %2333 = vmatpush1.bf16.msra.mxu0 0
        %2334 = vmatprep.subr.bf16.mxu0 0
        %2335 = vmatpush1.bf16.msra.mxu0 0
        %2336 = vmatprep.subr.bf16.mxu0 0
        %2337 = vmatpush1.bf16.msra.mxu0 %v2317
        %2338 = vmatprep.subr.bf16.mxu0 0
        %2339 = vmatpush2.bf16.msra.mxu0 0
        %2340 = vmatprep.subr.bf16.mxu0 0
        %2341 = vmatpush2.bf16.msra.mxu0 0
        %2342 = vmatprep.subr.bf16.mxu0 0
        %2343 = vmatpush2.bf16.msra.mxu0 0
        %2344 = vmatprep.subr.bf16.mxu0 0
        %2345 = vmatpush2.bf16.msra.mxu0 0
        %2346 = vmatprep.subr.bf16.mxu0 0
        %2347 = vmatpush2.bf16.msra.mxu0 0
        %2348 = vmatprep.subr.bf16.mxu0 0
        %2349 = vmatpush2.bf16.msra.mxu0 0
        %2350 = vmatprep.subr.bf16.mxu0 0
        %2351 = vmatpush2.bf16.msra.mxu0 0
        %2352 = vmatprep.subr.bf16.mxu0 0
        %2353 = vmatpush2.bf16.msra.mxu0 0
        %2354 = vmatprep.mubr.bf16.mxu0 0
        %2355 = vmatmul.mubr.bf16.gmra.mxu0 %v2320
        %v2356 = vpop.f32.mrf.mxu0
        %v2357 = vadd.f32 0.0, %v2356
        %v2358 = vpop.f32.mrf.mxu0
        %v2359 = vpop.f32.mrf.mxu0
        %v2360 = vadd.f32 0.0, %v2359
        %v2361 = vpop.f32.mrf.mxu0
        %2362 = vdwg.mxu0
        %2363 = vrot.lane.b32.xlu0 %v1863, 96
        %v2364 = vpop.permute.xlu0 %2363
        %2365 = vrot.lane.b32.xlu0 %v1863, 32
        %v2366 = vpop.permute.xlu0 %2365
        %v2368 = vsel %vm1870, %v2364, 0
        %v2371 = vsel %vm1870, %v2366, 0
        %2373 = vmatprep.subr.bf16.mxu0 0
        %2374 = vmatpush1.bf16.xpose.msra.mxu0 0
        %2375 = vmatprep.subr.bf16.mxu0 0
        %2376 = vmatpush1.bf16.xpose.msra.mxu0 0
        %2377 = vmatprep.subr.bf16.mxu0 0
        %2378 = vmatpush1.bf16.xpose.msra.mxu0 0
        %2379 = vmatprep.subr.bf16.mxu0 0
        %2380 = vmatpush1.bf16.xpose.msra.mxu0 0
        %2381 = vmatprep.subr.bf16.mxu0 0
        %2382 = vmatpush1.bf16.xpose.msra.mxu0 0
        %2383 = vmatprep.subr.bf16.mxu0 0
        %2384 = vmatpush1.bf16.xpose.msra.mxu0 0
        %2385 = vmatprep.subr.bf16.mxu0 0
        %2386 = vmatpush1.bf16.xpose.msra.mxu0 0
        %2387 = vmatprep.subr.bf16.mxu0 0
        %2388 = vmatpush1.bf16.xpose.msra.mxu0 %v2371
        %2389 = vmatprep.subr.bf16.mxu0 0
        %2390 = vmatpush2.bf16.xpose.msra.mxu0 0
        %2391 = vmatprep.subr.bf16.mxu0 0
        %2392 = vmatpush2.bf16.xpose.msra.mxu0 0
        %2393 = vmatprep.subr.bf16.mxu0 0
        %2394 = vmatpush2.bf16.xpose.msra.mxu0 0
        %2395 = vmatprep.subr.bf16.mxu0 0
        %2396 = vmatpush2.bf16.xpose.msra.mxu0 0
        %2397 = vmatprep.subr.bf16.mxu0 0
        %2398 = vmatpush2.bf16.xpose.msra.mxu0 0
        %2399 = vmatprep.subr.bf16.mxu0 0
        %2400 = vmatpush2.bf16.xpose.msra.mxu0 0
        %2401 = vmatprep.subr.bf16.mxu0 0
        %2402 = vmatpush2.bf16.xpose.msra.mxu0 0
        %2403 = vmatprep.subr.bf16.mxu0 0
        %2404 = vmatpush2.bf16.xpose.msra.mxu0 0
        %2405 = vmatprep.mubr.bf16.mxu0 0
        %2406 = vmatmul.mubr.bf16.gmra.mxu0 %v2368
        %v2407 = vpop.f32.mrf.mxu0
        %v2408 = vadd.f32 %v1676, %v2407
        %v2409 = vpop.f32.mrf.mxu0
        %v2410 = vpop.f32.mrf.mxu0
        %v2411 = vadd.f32 %v1677, %v2410
        %v2412 = vpop.f32.mrf.mxu0
        %2413 = vdwg.mxu0
        %2414 = vrot.lane.b32.xlu0 %v1864, 96
        %v2415 = vpop.permute.xlu0 %2414
        %2416 = vrot.lane.b32.xlu0 %v1864, 32
        %v2417 = vpop.permute.xlu0 %2416
        %v2419 = vsel %vm1870, %v2415, 0
        %v2422 = vsel %vm1870, %v2417, 0
        %2424 = vmatprep.subr.bf16.mxu0 0
        %2425 = vmatpush1.bf16.xpose.msra.mxu0 0
        %2426 = vmatprep.subr.bf16.mxu0 0
        %2427 = vmatpush1.bf16.xpose.msra.mxu0 0
        %2428 = vmatprep.subr.bf16.mxu0 0
        %2429 = vmatpush1.bf16.xpose.msra.mxu0 0
        %2430 = vmatprep.subr.bf16.mxu0 0
        %2431 = vmatpush1.bf16.xpose.msra.mxu0 0
        %2432 = vmatprep.subr.bf16.mxu0 0
        %2433 = vmatpush1.bf16.xpose.msra.mxu0 0
        %2434 = vmatprep.subr.bf16.mxu0 0
        %2435 = vmatpush1.bf16.xpose.msra.mxu0 0
        %2436 = vmatprep.subr.bf16.mxu0 0
        %2437 = vmatpush1.bf16.xpose.msra.mxu0 0
        %2438 = vmatprep.subr.bf16.mxu0 0
        %2439 = vmatpush1.bf16.xpose.msra.mxu0 %v2422
        %2440 = vmatprep.subr.bf16.mxu0 0
        %2441 = vmatpush2.bf16.xpose.msra.mxu0 0
        %2442 = vmatprep.subr.bf16.mxu0 0
        %2443 = vmatpush2.bf16.xpose.msra.mxu0 0
        %2444 = vmatprep.subr.bf16.mxu0 0
        %2445 = vmatpush2.bf16.xpose.msra.mxu0 0
        %2446 = vmatprep.subr.bf16.mxu0 0
        %2447 = vmatpush2.bf16.xpose.msra.mxu0 0
        %2448 = vmatprep.subr.bf16.mxu0 0
        %2449 = vmatpush2.bf16.xpose.msra.mxu0 0
        %2450 = vmatprep.subr.bf16.mxu0 0
        %2451 = vmatpush2.bf16.xpose.msra.mxu0 0
        %2452 = vmatprep.subr.bf16.mxu0 0
        %2453 = vmatpush2.bf16.xpose.msra.mxu0 0
        %2454 = vmatprep.subr.bf16.mxu0 0
        %2455 = vmatpush2.bf16.xpose.msra.mxu0 0
        %2456 = vmatprep.mubr.bf16.mxu0 0
        %2457 = vmatmul.mubr.bf16.gmra.mxu0 %v2419
        %v2458 = vpop.f32.mrf.mxu0
        %v2459 = vadd.f32 %v1676, %v2458
        %v2460 = vpop.f32.mrf.mxu0
        %v2461 = vpop.f32.mrf.mxu0
        %v2462 = vadd.f32 %v1677, %v2461
        %v2463 = vpop.f32.mrf.mxu0
        %2464 = vdwg.mxu0
        %v2465 = vsel %vm1870, %v2408, -inf
        %2466 = vmax.xlane.f32.xlu0 %v2465
        %v2467 = vpop.xlane.xlu0 %2466
        %v2468 = vsel %vm1870, %v2411, -inf
        %2469 = vmax.xlane.f32.xlu0 %v2468
        %v2470 = vpop.xlane.xlu0 %2469
        %v2471 = vsel %vm1870, %v2459, -inf
        %2472 = vmax.xlane.f32.xlu0 %v2471
        %v2473 = vpop.xlane.xlu0 %2472
        %v2474 = vsel %vm1870, %v2462, -inf
        %2475 = vmax.xlane.f32.xlu0 %v2474
        %v2476 = vpop.xlane.xlu0 %2475
        %v2477 = vsub.f32 %v2408, %v2467
        %v2478 = vsub.f32 %v2411, %v2470
        %v2479 = vsub.f32 %v2459, %v2473
        %v2480 = vsub.f32 %v2462, %v2476
        %v2481 = vmul.f32 %v2477, 1.442695
        %v2482 = vpow.pop %v2481
        %v2483 = vmul.f32 %v2478, 1.442695
        %v2484 = vpow.pop %v2483
        %v2485 = vmul.f32 %v2479, 1.442695
        %v2486 = vpow.pop %v2485
        %v2487 = vmul.f32 %v2480, 1.442695
        %v2488 = vpow.pop %v2487
        %v2489 = vsel %vm1870, %v2482, 0.0
        %2490 = vadd.xlane.f32.xlu0 %v2489
        %v2491 = vpop.xlane.xlu0 %2490
        %v2492 = vsel %vm1870, %v2484, 0.0
        %2493 = vadd.xlane.f32.xlu0 %v2492
        %v2494 = vpop.xlane.xlu0 %2493
        %v2495 = vsel %vm1870, %v2486, 0.0
        %2496 = vadd.xlane.f32.xlu0 %v2495
        %v2497 = vpop.xlane.xlu0 %2496
        %v2498 = vsel %vm1870, %v2488, 0.0
        %2499 = vadd.xlane.f32.xlu0 %v2498
        %v2500 = vpop.xlane.xlu0 %2499
        %v2501 = vrcp.pop %v2491
        %v2502 = vrcp.pop %v2494
        %v2503 = vrcp.pop %v2497
        %v2504 = vrcp.pop %v2500
        %v2505 = vmul.f32 %v2482, %v2501
        %v2506 = vmul.f32 %v2484, %v2502
        %v2507 = vmul.f32 %v2486, %v2503
        %v2508 = vmul.f32 %v2488, %v2504
        %v2509 = vmul.f32 %v2505, 0.5
        %v2510 = vmul.f32 %v2506, 0.5
        %v2511 = vmul.f32 %v2507, 0.5
        %v2512 = vmul.f32 %v2508, 0.5
        %s2513 = scalar_lea.vmem %s1369, 32 [#allocation28]
        %2514 = vst.msk [vmem:[%s2513] sm:$0xff] %vm1870, %v2509
        %2515 = vst.msk [vmem:[%s2513 + $0x8] sm:$0xff] %vm1870, %v2510
        %2516 = vst.msk [vmem:[%s2513 + $0x40] sm:$0xff] %vm1870, %v2511
        %2517 = vst.msk [vmem:[%s2513 + $0x48] sm:$0xff] %vm1870, %v2512
        %v2518 = vpack.c.bf16 %v2506, %v2505
        %v2519 = vpack.c.bf16 %v2508, %v2507
        %2520 = vrot.lane.b32.xlu0 %v1865, 96
        %v2521 = vpop.permute.xlu0 %2520
        %v2524 = vsel %vm1870, %v2518, 0
        %2526 = vmatprep.subr.bf16.mxu0 0
        %2527 = vmatpush1.bf16.msra.mxu0 0
        %2528 = vmatprep.subr.bf16.mxu0 0
        %2529 = vmatpush1.bf16.msra.mxu0 0
        %2530 = vmatprep.subr.bf16.mxu0 0
        %2531 = vmatpush1.bf16.msra.mxu0 0
        %2532 = vmatprep.subr.bf16.mxu0 0
        %2533 = vmatpush1.bf16.msra.mxu0 0
        %2534 = vmatprep.subr.bf16.mxu0 0
        %2535 = vmatpush1.bf16.msra.mxu0 0
        %2536 = vmatprep.subr.bf16.mxu0 0
        %2537 = vmatpush1.bf16.msra.mxu0 0
        %2538 = vmatprep.subr.bf16.mxu0 0
        %2539 = vmatpush1.bf16.msra.mxu0 0
        %2540 = vmatprep.subr.bf16.mxu0 0
        %2541 = vmatpush1.bf16.msra.mxu0 %v2521
        %2542 = vmatprep.subr.bf16.mxu0 0
        %2543 = vmatpush2.bf16.msra.mxu0 0
        %2544 = vmatprep.subr.bf16.mxu0 0
        %2545 = vmatpush2.bf16.msra.mxu0 0
        %2546 = vmatprep.subr.bf16.mxu0 0
        %2547 = vmatpush2.bf16.msra.mxu0 0
        %2548 = vmatprep.subr.bf16.mxu0 0
        %2549 = vmatpush2.bf16.msra.mxu0 0
        %2550 = vmatprep.subr.bf16.mxu0 0
        %2551 = vmatpush2.bf16.msra.mxu0 0
        %2552 = vmatprep.subr.bf16.mxu0 0
        %2553 = vmatpush2.bf16.msra.mxu0 0
        %2554 = vmatprep.subr.bf16.mxu0 0
        %2555 = vmatpush2.bf16.msra.mxu0 0
        %2556 = vmatprep.subr.bf16.mxu0 0
        %2557 = vmatpush2.bf16.msra.mxu0 0
        %2558 = vmatprep.mubr.bf16.mxu0 0
        %2559 = vmatmul.mubr.bf16.gmra.mxu0 %v2524
        %v2560 = vpop.f32.mrf.mxu0
        %v2561 = vadd.f32 0.0, %v2560
        %v2562 = vpop.f32.mrf.mxu0
        %v2563 = vpop.f32.mrf.mxu0
        %v2564 = vadd.f32 0.0, %v2563
        %v2565 = vpop.f32.mrf.mxu0
        %2566 = vdwg.mxu0
        %2567 = vrot.lane.b32.xlu0 %v1866, 96
        %v2568 = vpop.permute.xlu0 %2567
        %v2571 = vsel %vm1870, %v2519, 0
        %2573 = vmatprep.subr.bf16.mxu0 0
        %2574 = vmatpush1.bf16.msra.mxu0 0
        %2575 = vmatprep.subr.bf16.mxu0 0
        %2576 = vmatpush1.bf16.msra.mxu0 0
        %2577 = vmatprep.subr.bf16.mxu0 0
        %2578 = vmatpush1.bf16.msra.mxu0 0
        %2579 = vmatprep.subr.bf16.mxu0 0
        %2580 = vmatpush1.bf16.msra.mxu0 0
        %2581 = vmatprep.subr.bf16.mxu0 0
        %2582 = vmatpush1.bf16.msra.mxu0 0
        %2583 = vmatprep.subr.bf16.mxu0 0
        %2584 = vmatpush1.bf16.msra.mxu0 0
        %2585 = vmatprep.subr.bf16.mxu0 0
        %2586 = vmatpush1.bf16.msra.mxu0 0
        %2587 = vmatprep.subr.bf16.mxu0 0
        %2588 = vmatpush1.bf16.msra.mxu0 %v2568
        %2589 = vmatprep.subr.bf16.mxu0 0
        %2590 = vmatpush2.bf16.msra.mxu0 0
        %2591 = vmatprep.subr.bf16.mxu0 0
        %2592 = vmatpush2.bf16.msra.mxu0 0
        %2593 = vmatprep.subr.bf16.mxu0 0
        %2594 = vmatpush2.bf16.msra.mxu0 0
        %2595 = vmatprep.subr.bf16.mxu0 0
        %2596 = vmatpush2.bf16.msra.mxu0 0
        %2597 = vmatprep.subr.bf16.mxu0 0
        %2598 = vmatpush2.bf16.msra.mxu0 0
        %2599 = vmatprep.subr.bf16.mxu0 0
        %2600 = vmatpush2.bf16.msra.mxu0 0
        %2601 = vmatprep.subr.bf16.mxu0 0
        %2602 = vmatpush2.bf16.msra.mxu0 0
        %2603 = vmatprep.subr.bf16.mxu0 0
        %2604 = vmatpush2.bf16.msra.mxu0 0
        %2605 = vmatprep.mubr.bf16.mxu0 0
        %2606 = vmatmul.mubr.bf16.gmra.mxu0 %v2571
        %v2607 = vpop.f32.mrf.mxu0
        %v2608 = vadd.f32 0.0, %v2607
        %v2609 = vpop.f32.mrf.mxu0
        %v2610 = vpop.f32.mrf.mxu0
        %v2611 = vadd.f32 0.0, %v2610
        %v2612 = vpop.f32.mrf.mxu0
        %2613 = vdwg.mxu0
        %2614 = vrot.lane.b32.xlu0 %v1863, 80
        %v2615 = vpop.permute.xlu0 %2614
        %2616 = vrot.lane.b32.xlu0 %v1863, 16
        %v2617 = vpop.permute.xlu0 %2616
        %v2619 = vsel %vm1870, %v2615, 0
        %v2622 = vsel %vm1870, %v2617, 0
        %2624 = vmatprep.subr.bf16.mxu0 0
        %2625 = vmatpush1.bf16.xpose.msra.mxu0 0
        %2626 = vmatprep.subr.bf16.mxu0 0
        %2627 = vmatpush1.bf16.xpose.msra.mxu0 0
        %2628 = vmatprep.subr.bf16.mxu0 0
        %2629 = vmatpush1.bf16.xpose.msra.mxu0 0
        %2630 = vmatprep.subr.bf16.mxu0 0
        %2631 = vmatpush1.bf16.xpose.msra.mxu0 0
        %2632 = vmatprep.subr.bf16.mxu0 0
        %2633 = vmatpush1.bf16.xpose.msra.mxu0 0
        %2634 = vmatprep.subr.bf16.mxu0 0
        %2635 = vmatpush1.bf16.xpose.msra.mxu0 0
        %2636 = vmatprep.subr.bf16.mxu0 0
        %2637 = vmatpush1.bf16.xpose.msra.mxu0 0
        %2638 = vmatprep.subr.bf16.mxu0 0
        %2639 = vmatpush1.bf16.xpose.msra.mxu0 %v2622
        %2640 = vmatprep.subr.bf16.mxu0 0
        %2641 = vmatpush2.bf16.xpose.msra.mxu0 0
        %2642 = vmatprep.subr.bf16.mxu0 0
        %2643 = vmatpush2.bf16.xpose.msra.mxu0 0
        %2644 = vmatprep.subr.bf16.mxu0 0
        %2645 = vmatpush2.bf16.xpose.msra.mxu0 0
        %2646 = vmatprep.subr.bf16.mxu0 0
        %2647 = vmatpush2.bf16.xpose.msra.mxu0 0
        %2648 = vmatprep.subr.bf16.mxu0 0
        %2649 = vmatpush2.bf16.xpose.msra.mxu0 0
        %2650 = vmatprep.subr.bf16.mxu0 0
        %2651 = vmatpush2.bf16.xpose.msra.mxu0 0
        %2652 = vmatprep.subr.bf16.mxu0 0
        %2653 = vmatpush2.bf16.xpose.msra.mxu0 0
        %2654 = vmatprep.subr.bf16.mxu0 0
        %2655 = vmatpush2.bf16.xpose.msra.mxu0 0
        %2656 = vmatprep.mubr.bf16.mxu0 0
        %2657 = vmatmul.mubr.bf16.gmra.mxu0 %v2619
        %v2658 = vpop.f32.mrf.mxu0
        %v2659 = vadd.f32 %v1676, %v2658
        %v2660 = vpop.f32.mrf.mxu0
        %v2661 = vpop.f32.mrf.mxu0
        %v2662 = vadd.f32 %v1677, %v2661
        %v2663 = vpop.f32.mrf.mxu0
        %2664 = vdwg.mxu0
        %2665 = vrot.lane.b32.xlu0 %v1864, 80
        %v2666 = vpop.permute.xlu0 %2665
        %2667 = vrot.lane.b32.xlu0 %v1864, 16
        %v2668 = vpop.permute.xlu0 %2667
        %v2670 = vsel %vm1870, %v2666, 0
        %v2673 = vsel %vm1870, %v2668, 0
        %2675 = vmatprep.subr.bf16.mxu0 0
        %2676 = vmatpush1.bf16.xpose.msra.mxu0 0
        %2677 = vmatprep.subr.bf16.mxu0 0
        %2678 = vmatpush1.bf16.xpose.msra.mxu0 0
        %2679 = vmatprep.subr.bf16.mxu0 0
        %2680 = vmatpush1.bf16.xpose.msra.mxu0 0
        %2681 = vmatprep.subr.bf16.mxu0 0
        %2682 = vmatpush1.bf16.xpose.msra.mxu0 0
        %2683 = vmatprep.subr.bf16.mxu0 0
        %2684 = vmatpush1.bf16.xpose.msra.mxu0 0
        %2685 = vmatprep.subr.bf16.mxu0 0
        %2686 = vmatpush1.bf16.xpose.msra.mxu0 0
        %2687 = vmatprep.subr.bf16.mxu0 0
        %2688 = vmatpush1.bf16.xpose.msra.mxu0 0
        %2689 = vmatprep.subr.bf16.mxu0 0
        %2690 = vmatpush1.bf16.xpose.msra.mxu0 %v2673
        %2691 = vmatprep.subr.bf16.mxu0 0
        %2692 = vmatpush2.bf16.xpose.msra.mxu0 0
        %2693 = vmatprep.subr.bf16.mxu0 0
        %2694 = vmatpush2.bf16.xpose.msra.mxu0 0
        %2695 = vmatprep.subr.bf16.mxu0 0
        %2696 = vmatpush2.bf16.xpose.msra.mxu0 0
        %2697 = vmatprep.subr.bf16.mxu0 0
        %2698 = vmatpush2.bf16.xpose.msra.mxu0 0
        %2699 = vmatprep.subr.bf16.mxu0 0
        %2700 = vmatpush2.bf16.xpose.msra.mxu0 0
        %2701 = vmatprep.subr.bf16.mxu0 0
        %2702 = vmatpush2.bf16.xpose.msra.mxu0 0
        %2703 = vmatprep.subr.bf16.mxu0 0
        %2704 = vmatpush2.bf16.xpose.msra.mxu0 0
        %2705 = vmatprep.subr.bf16.mxu0 0
        %2706 = vmatpush2.bf16.xpose.msra.mxu0 0
        %2707 = vmatprep.mubr.bf16.mxu0 0
        %2708 = vmatmul.mubr.bf16.gmra.mxu0 %v2670
        %v2709 = vpop.f32.mrf.mxu0
        %v2710 = vadd.f32 %v1676, %v2709
        %v2711 = vpop.f32.mrf.mxu0
        %v2712 = vpop.f32.mrf.mxu0
        %v2713 = vadd.f32 %v1677, %v2712
        %v2714 = vpop.f32.mrf.mxu0
        %2715 = vdwg.mxu0
        %v2716 = vsel %vm1870, %v2659, -inf
        %2717 = vmax.xlane.f32.xlu0 %v2716
        %v2718 = vpop.xlane.xlu0 %2717
        %v2719 = vsel %vm1870, %v2662, -inf
        %2720 = vmax.xlane.f32.xlu0 %v2719
        %v2721 = vpop.xlane.xlu0 %2720
        %v2722 = vsel %vm1870, %v2710, -inf
        %2723 = vmax.xlane.f32.xlu0 %v2722
        %v2724 = vpop.xlane.xlu0 %2723
        %v2725 = vsel %vm1870, %v2713, -inf
        %2726 = vmax.xlane.f32.xlu0 %v2725
        %v2727 = vpop.xlane.xlu0 %2726
        %v2728 = vsub.f32 %v2659, %v2718
        %v2729 = vsub.f32 %v2662, %v2721
        %v2730 = vsub.f32 %v2710, %v2724
        %v2731 = vsub.f32 %v2713, %v2727
        %v2732 = vmul.f32 %v2728, 1.442695
        %v2733 = vpow.pop %v2732
        %v2734 = vmul.f32 %v2729, 1.442695
        %v2735 = vpow.pop %v2734
        %v2736 = vmul.f32 %v2730, 1.442695
        %v2737 = vpow.pop %v2736
        %v2738 = vmul.f32 %v2731, 1.442695
        %v2739 = vpow.pop %v2738
        %v2740 = vsel %vm1870, %v2733, 0.0
        %2741 = vadd.xlane.f32.xlu0 %v2740
        %v2742 = vpop.xlane.xlu0 %2741
        %v2743 = vsel %vm1870, %v2735, 0.0
        %2744 = vadd.xlane.f32.xlu0 %v2743
        %v2745 = vpop.xlane.xlu0 %2744
        %v2746 = vsel %vm1870, %v2737, 0.0
        %2747 = vadd.xlane.f32.xlu0 %v2746
        %v2748 = vpop.xlane.xlu0 %2747
        %v2749 = vsel %vm1870, %v2739, 0.0
        %2750 = vadd.xlane.f32.xlu0 %v2749
        %v2751 = vpop.xlane.xlu0 %2750
        %v2752 = vrcp.pop %v2742
        %v2753 = vrcp.pop %v2745
        %v2754 = vrcp.pop %v2748
        %v2755 = vrcp.pop %v2751
        %v2756 = vmul.f32 %v2733, %v2752
        %v2757 = vmul.f32 %v2735, %v2753
        %v2758 = vmul.f32 %v2737, %v2754
        %v2759 = vmul.f32 %v2739, %v2755
        %v2760 = vmul.f32 %v2756, 0.5
        %v2761 = vmul.f32 %v2757, 0.5
        %v2762 = vmul.f32 %v2758, 0.5
        %v2763 = vmul.f32 %v2759, 0.5
        %s2764 = scalar_lea.vmem %s1369, 48 [#allocation28]
        %2765 = vst.msk [vmem:[%s2764] sm:$0xff] %vm1870, %v2760
        %2766 = vst.msk [vmem:[%s2764 + $0x8] sm:$0xff] %vm1870, %v2761
        %2767 = vst.msk [vmem:[%s2764 + $0x40] sm:$0xff] %vm1870, %v2762
        %2768 = vst.msk [vmem:[%s2764 + $0x48] sm:$0xff] %vm1870, %v2763
        %v2769 = vpack.c.bf16 %v2757, %v2756
        %v2770 = vpack.c.bf16 %v2759, %v2758
        %2771 = vrot.lane.b32.xlu0 %v1865, 80
        %v2772 = vpop.permute.xlu0 %2771
        %v2775 = vsel %vm1870, %v2769, 0
        %2777 = vmatprep.subr.bf16.mxu0 0
        %2778 = vmatpush1.bf16.msra.mxu0 0
        %2779 = vmatprep.subr.bf16.mxu0 0
        %2780 = vmatpush1.bf16.msra.mxu0 0
        %2781 = vmatprep.subr.bf16.mxu0 0
        %2782 = vmatpush1.bf16.msra.mxu0 0
        %2783 = vmatprep.subr.bf16.mxu0 0
        %2784 = vmatpush1.bf16.msra.mxu0 0
        %2785 = vmatprep.subr.bf16.mxu0 0
        %2786 = vmatpush1.bf16.msra.mxu0 0
        %2787 = vmatprep.subr.bf16.mxu0 0
        %2788 = vmatpush1.bf16.msra.mxu0 0
        %2789 = vmatprep.subr.bf16.mxu0 0
        %2790 = vmatpush1.bf16.msra.mxu0 0
        %2791 = vmatprep.subr.bf16.mxu0 0
        %2792 = vmatpush1.bf16.msra.mxu0 %v2772
        %2793 = vmatprep.subr.bf16.mxu0 0
        %2794 = vmatpush2.bf16.msra.mxu0 0
        %2795 = vmatprep.subr.bf16.mxu0 0
        %2796 = vmatpush2.bf16.msra.mxu0 0
        %2797 = vmatprep.subr.bf16.mxu0 0
        %2798 = vmatpush2.bf16.msra.mxu0 0
        %2799 = vmatprep.subr.bf16.mxu0 0
        %2800 = vmatpush2.bf16.msra.mxu0 0
        %2801 = vmatprep.subr.bf16.mxu0 0
        %2802 = vmatpush2.bf16.msra.mxu0 0
        %2803 = vmatprep.subr.bf16.mxu0 0
        %2804 = vmatpush2.bf16.msra.mxu0 0
        %2805 = vmatprep.subr.bf16.mxu0 0
        %2806 = vmatpush2.bf16.msra.mxu0 0
        %2807 = vmatprep.subr.bf16.mxu0 0
        %2808 = vmatpush2.bf16.msra.mxu0 0
        %2809 = vmatprep.mubr.bf16.mxu0 0
        %2810 = vmatmul.mubr.bf16.gmra.mxu0 %v2775
        %v2811 = vpop.f32.mrf.mxu0
        %v2812 = vadd.f32 0.0, %v2811
        %v2813 = vpop.f32.mrf.mxu0
        %v2814 = vpop.f32.mrf.mxu0
        %v2815 = vadd.f32 0.0, %v2814
        %v2816 = vpop.f32.mrf.mxu0
        %2817 = vdwg.mxu0
        %2818 = vrot.lane.b32.xlu0 %v1866, 80
        %v2819 = vpop.permute.xlu0 %2818
        %v2822 = vsel %vm1870, %v2770, 0
        %2824 = vmatprep.subr.bf16.mxu0 0
        %2825 = vmatpush1.bf16.msra.mxu0 0
        %2826 = vmatprep.subr.bf16.mxu0 0
        %2827 = vmatpush1.bf16.msra.mxu0 0
        %2828 = vmatprep.subr.bf16.mxu0 0
        %2829 = vmatpush1.bf16.msra.mxu0 0
        %2830 = vmatprep.subr.bf16.mxu0 0
        %2831 = vmatpush1.bf16.msra.mxu0 0
        %2832 = vmatprep.subr.bf16.mxu0 0
        %2833 = vmatpush1.bf16.msra.mxu0 0
        %2834 = vmatprep.subr.bf16.mxu0 0
        %2835 = vmatpush1.bf16.msra.mxu0 0
        %2836 = vmatprep.subr.bf16.mxu0 0
        %2837 = vmatpush1.bf16.msra.mxu0 0
        %2838 = vmatprep.subr.bf16.mxu0 0
        %2839 = vmatpush1.bf16.msra.mxu0 %v2819
        %2840 = vmatprep.subr.bf16.mxu0 0
        %2841 = vmatpush2.bf16.msra.mxu0 0
        %2842 = vmatprep.subr.bf16.mxu0 0
        %2843 = vmatpush2.bf16.msra.mxu0 0
        %2844 = vmatprep.subr.bf16.mxu0 0
        %2845 = vmatpush2.bf16.msra.mxu0 0
        %2846 = vmatprep.subr.bf16.mxu0 0
        %2847 = vmatpush2.bf16.msra.mxu0 0
        %2848 = vmatprep.subr.bf16.mxu0 0
        %2849 = vmatpush2.bf16.msra.mxu0 0
        %2850 = vmatprep.subr.bf16.mxu0 0
        %2851 = vmatpush2.bf16.msra.mxu0 0
        %2852 = vmatprep.subr.bf16.mxu0 0
        %2853 = vmatpush2.bf16.msra.mxu0 0
        %2854 = vmatprep.subr.bf16.mxu0 0
        %2855 = vmatpush2.bf16.msra.mxu0 0
        %2856 = vmatprep.mubr.bf16.mxu0 0
        %2857 = vmatmul.mubr.bf16.gmra.mxu0 %v2822
        %v2858 = vpop.f32.mrf.mxu0
        %v2859 = vadd.f32 0.0, %v2858
        %v2860 = vpop.f32.mrf.mxu0
        %v2861 = vpop.f32.mrf.mxu0
        %v2862 = vadd.f32 0.0, %v2861
        %v2863 = vpop.f32.mrf.mxu0
        %2864 = vdwg.mxu0
        %2869 = vrot.lane.b32.xlu0 %v2309, 16
        %v2870 = vpop.permute.xlu0 %2869
        %2871 = vrot.lane.b32.xlu0 %v2312, 16
        %v2872 = vpop.permute.xlu0 %2871
        %2873 = vrot.lane.b32.xlu0 %v2357, 16
        %v2874 = vpop.permute.xlu0 %2873
        %2875 = vrot.lane.b32.xlu0 %v2360, 16
        %v2876 = vpop.permute.xlu0 %2875
        %2885 = vrot.lane.b32.xlu0 %v2561, 32
        %v2886 = vpop.permute.xlu0 %2885
        %2887 = vrot.lane.b32.xlu0 %v2564, 32
        %v2888 = vpop.permute.xlu0 %2887
        %2889 = vrot.lane.b32.xlu0 %v2608, 32
        %v2890 = vpop.permute.xlu0 %2889
        %2891 = vrot.lane.b32.xlu0 %v2611, 32
        %v2892 = vpop.permute.xlu0 %2891
        %2901 = vrot.lane.b32.xlu0 %v2812, 48
        %v2902 = vpop.permute.xlu0 %2901
        %2903 = vrot.lane.b32.xlu0 %v2815, 48
        %v2904 = vpop.permute.xlu0 %2903
        %2905 = vrot.lane.b32.xlu0 %v2859, 48
        %v2906 = vpop.permute.xlu0 %2905
        %2907 = vrot.lane.b32.xlu0 %v2862, 48
        %v2908 = vpop.permute.xlu0 %2907
        %v2913 = vsel %vm1870, %v2060, %v2870
        %v2914 = vsel %vm1870, %v2063, %v2872
        %v2915 = vsel %vm1870, %v2104, %v2874
        %v2916 = vsel %vm1870, %v2107, %v2876
        %vm2917 = vcmask 261120
        %v2918 = vsel %vm2917, %v2913, %v2886
        %v2919 = vsel %vm2917, %v2914, %v2888
        %v2920 = vsel %vm2917, %v2915, %v2890
        %v2921 = vsel %vm2917, %v2916, %v2892
        %vm2922 = vcmask 392192
        %v2923 = vsel %vm2922, %v2918, %v2902
        %v2924 = vsel %vm2922, %v2919, %v2904
        %v2925 = vsel %vm2922, %v2920, %v2906
        %v2926 = vsel %vm2922, %v2921, %v2908
        %v2927 = vld [vmem:[%s37] sm:$0xf]
        %v2928 = vld [vmem:[%s37 + $0x4] sm:$0xf]
        %v2929 = vld [vmem:[%s37 + $0x8] sm:$0xf]
        %v2930 = vld [vmem:[%s37 + $0xc] sm:$0xf]
        %v2931 = vld [vmem:[%s37 + $0x10] sm:$0xf]
        %v2932 = vld [vmem:[%s37 + $0x14] sm:$0xf]
        %v2933 = vld [vmem:[%s37 + $0x18] sm:$0xf]
        %v2934 = vld [vmem:[%s37 + $0x1c] sm:$0xf]
        %v2935 = vpack.c.bf16 %v2924, %v2923
        %v2936 = vpack.c.bf16 %v2926, %v2925
        %v2945 = vunpack.c.l.b16 %v2927
        %v2946 = vunpack.c.l.b16 %v2928
        %v2947 = vunpack.c.l.b16 %v2929
        %v2948 = vunpack.c.l.b16 %v2930
        %v2949 = vunpack.c.l.b16 %v2931
        %v2950 = vunpack.c.l.b16 %v2932
        %v2951 = vunpack.c.l.b16 %v2933
        %v2952 = vunpack.c.l.b16 %v2934
        %v2953 = vpack.c.b16 %v2946, %v2945
        %v2954 = vpack.c.b16 %v2948, %v2947
        %v2955 = vpack.c.b16 %v2950, %v2949
        %v2956 = vpack.c.b16 %v2952, %v2951
        %v2962 = vsel %vm1678, %v2935, 0
        %v2965 = vsel %vm1678, %v2936, 0
        %2967 = vmatprep.subr.bf16.mxu0 0
        %2968 = vmatpush1.bf16.msra.mxu0 0
        %2969 = vmatprep.subr.bf16.mxu0 0
        %2970 = vmatpush1.bf16.msra.mxu0 0
        %2971 = vmatprep.subr.bf16.mxu0 0
        %2972 = vmatpush1.bf16.msra.mxu0 0
        %2973 = vmatprep.subr.bf16.mxu0 0
        %2974 = vmatpush1.bf16.msra.mxu0 0
        %2975 = vmatprep.subr.bf16.mxu0 0
        %2976 = vmatpush1.bf16.msra.mxu0 %v2956
        %2977 = vmatprep.subr.bf16.mxu0 0
        %2978 = vmatpush1.bf16.msra.mxu0 %v2955
        %2979 = vmatprep.subr.bf16.mxu0 0
        %2980 = vmatpush1.bf16.msra.mxu0 %v2954
        %2981 = vmatprep.subr.bf16.mxu0 0
        %2982 = vmatpush1.bf16.msra.mxu0 %v2953
        %2983 = vmatprep.subr.bf16.mxu0 0
        %2984 = vmatpush2.bf16.msra.mxu0 0
        %2985 = vmatprep.subr.bf16.mxu0 0
        %2986 = vmatpush2.bf16.msra.mxu0 0
        %2987 = vmatprep.subr.bf16.mxu0 0
        %2988 = vmatpush2.bf16.msra.mxu0 0
        %2989 = vmatprep.subr.bf16.mxu0 0
        %2990 = vmatpush2.bf16.msra.mxu0 0
        %2991 = vmatprep.subr.bf16.mxu0 0
        %2992 = vmatpush2.bf16.msra.mxu0 0
        %2993 = vmatprep.subr.bf16.mxu0 0
        %2994 = vmatpush2.bf16.msra.mxu0 0
        %2995 = vmatprep.subr.bf16.mxu0 0
        %2996 = vmatpush2.bf16.msra.mxu0 0
        %2997 = vmatprep.subr.bf16.mxu0 0
        %2998 = vmatpush2.bf16.msra.mxu0 0
        %2999 = vmatprep.mubr.bf16.mxu0 0
        %3000 = vmatmul.mubr.bf16.gmra.mxu0 %v2962
        %v3001 = vpop.f32.mrf.mxu0
        %v3002 = vadd.f32 %v1533, %v3001
        %v3003 = vpop.f32.mrf.mxu0
        %v3004 = vpop.f32.mrf.mxu0
        %v3005 = vadd.f32 %v1534, %v3004
        %v3006 = vpop.f32.mrf.mxu0
        %3007 = vmatprep.mubr.bf16.mxu0 0
        %3008 = vmatmul.mubr.bf16.gmra.mxu0 %v2965
        %v3009 = vpop.f32.mrf.mxu0
        %v3010 = vadd.f32 %v1535, %v3009
        %v3011 = vpop.f32.mrf.mxu0
        %v3012 = vpop.f32.mrf.mxu0
        %v3013 = vadd.f32 %v1536, %v3012
        %v3014 = vpop.f32.mrf.mxu0
        %3015 = vdwg.mxu0
        %v3016 = vsel %vm1678, %v3002, 0.0
        %3017 = vadd.xlane.f32.xlu0 %v3016
        %v3018 = vpop.xlane.xlu0 %3017
        %v3019 = vsel %vm1678, %v3005, 0.0
        %3020 = vadd.xlane.f32.xlu0 %v3019
        %v3021 = vpop.xlane.xlu0 %3020
        %v3022 = vsel %vm1678, %v3010, 0.0
        %3023 = vadd.xlane.f32.xlu0 %v3022
        %v3024 = vpop.xlane.xlu0 %3023
        %v3025 = vsel %vm1678, %v3013, 0.0
        %3026 = vadd.xlane.f32.xlu0 %v3025
        %v3027 = vpop.xlane.xlu0 %3026
        %v3028 = vmul.f32 %v3018, %v1691
        %v3029 = vmul.f32 %v3021, %v1691
        %v3030 = vmul.f32 %v3024, %v1691
        %v3031 = vmul.f32 %v3027, %v1691
        %v3032 = vsub.f32 %v3002, %v3028
        %v3033 = vsub.f32 %v3005, %v3029
        %v3034 = vsub.f32 %v3010, %v3030
        %v3035 = vsub.f32 %v3013, %v3031
        %v3036 = vmul.f32 %v3032, %v3032
        %v3037 = vmul.f32 %v3033, %v3033
        %v3038 = vmul.f32 %v3034, %v3034
        %v3039 = vmul.f32 %v3035, %v3035
        %v3040 = vsel %vm1678, %v3036, 0.0
        %3041 = vadd.xlane.f32.xlu0 %v3040
        %v3042 = vpop.xlane.xlu0 %3041
        %v3043 = vsel %vm1678, %v3037, 0.0
        %3044 = vadd.xlane.f32.xlu0 %v3043
        %v3045 = vpop.xlane.xlu0 %3044
        %v3046 = vsel %vm1678, %v3038, 0.0
        %3047 = vadd.xlane.f32.xlu0 %v3046
        %v3048 = vpop.xlane.xlu0 %3047
        %v3049 = vsel %vm1678, %v3039, 0.0
        %3050 = vadd.xlane.f32.xlu0 %v3049
        %v3051 = vpop.xlane.xlu0 %3050
        %v3052 = vmul.f32 %v3042, %v1691
        %v3053 = vmul.f32 %v3045, %v1691
        %v3054 = vmul.f32 %v3048, %v1691
        %v3055 = vmul.f32 %v3051, %v1691
        %v3056 = vadd.f32 %v3052, 1e-06
        %v3057 = vadd.f32 %v3053, 1e-06
        %v3058 = vadd.f32 %v3054, 1e-06
        %v3059 = vadd.f32 %v3055, 1e-06
        %v3060 = vrsqrt.pop %v3056
        %v3061 = vrsqrt.pop %v3057
        %v3062 = vrsqrt.pop %v3058
        %v3063 = vrsqrt.pop %v3059
        %v3064 = vmul.f32 %v3032, %v3060
        %v3065 = vmul.f32 %v3033, %v3061
        %v3066 = vmul.f32 %v3034, %v3062
        %v3067 = vmul.f32 %v3035, %v3063
        %v3068 = vld [vmem:[#allocation20] sm:$0x1]
        %v3070 = vlaneseq
        %v3071 = vshrl.u32 %v3070, 7
        %v3072 = vsub.s32 0, %v3071
        %v3073 = vrot.slane %v3068, %v3072
        %v3075 = vmul.f32 %v3064, %v3073
        %v3076 = vmul.f32 %v3065, %v3073
        %v3077 = vmul.f32 %v3066, %v3073
        %v3078 = vmul.f32 %v3067, %v3073
        %v3079 = vld [vmem:[%s41] sm:$0x1]
        %v3081 = vlaneseq
        %v3082 = vshrl.u32 %v3081, 7
        %v3083 = vsub.s32 0, %v3082
        %v3084 = vrot.slane %v3079, %v3083
        %v3086 = vadd.f32 %v3075, %v3084
        %v3087 = vadd.f32 %v3076, %v3084
        %v3088 = vadd.f32 %v3077, %v3084
        %v3089 = vadd.f32 %v3078, %v3084
        %v3090 = vld [vmem:[#allocation22] sm:$0xf]
        %v3091 = vld [vmem:[#allocation22 + $0x4] sm:$0xf]
        %v3092 = vld [vmem:[#allocation22 + $0x8] sm:$0xf]
        %v3093 = vld [vmem:[#allocation22 + $0xc] sm:$0xf]
        %v3094 = vld [vmem:[#allocation22 + $0x10] sm:$0xf]
        %v3095 = vld [vmem:[#allocation22 + $0x14] sm:$0xf]
        %v3096 = vld [vmem:[#allocation22 + $0x18] sm:$0xf]
        %v3097 = vld [vmem:[#allocation22 + $0x1c] sm:$0xf]
        %v3098 = vpack.c.bf16 %v3087, %v3086
        %v3099 = vpack.c.bf16 %v3089, %v3088
        %v3100 = vld [vmem:[%s45] sm:$0x1]
        %v3102 = vlaneseq
        %v3103 = vshrl.u32 %v3102, 7
        %v3104 = vsub.s32 0, %v3103
        %v3105 = vrot.slane %v3100, %v3104
        %v3115 = vunpack.c.l.b16 %v3090
        %v3116 = vunpack.c.l.b16 %v3091
        %v3117 = vunpack.c.l.b16 %v3092
        %v3118 = vunpack.c.l.b16 %v3093
        %v3119 = vunpack.c.l.b16 %v3094
        %v3120 = vunpack.c.l.b16 %v3095
        %v3121 = vunpack.c.l.b16 %v3096
        %v3122 = vunpack.c.l.b16 %v3097
        %v3123 = vpack.c.b16 %v3116, %v3115
        %v3124 = vpack.c.b16 %v3118, %v3117
        %v3125 = vpack.c.b16 %v3120, %v3119
        %v3126 = vpack.c.b16 %v3122, %v3121
        %v3132 = vsel %vm1678, %v3098, 0
        %v3135 = vsel %vm1678, %v3099, 0
        %3137 = vmatprep.subr.bf16.mxu0 0
        %3138 = vmatpush1.bf16.msra.mxu0 0
        %3139 = vmatprep.subr.bf16.mxu0 0
        %3140 = vmatpush1.bf16.msra.mxu0 0
        %3141 = vmatprep.subr.bf16.mxu0 0
        %3142 = vmatpush1.bf16.msra.mxu0 0
        %3143 = vmatprep.subr.bf16.mxu0 0
        %3144 = vmatpush1.bf16.msra.mxu0 0
        %3145 = vmatprep.subr.bf16.mxu0 0
        %3146 = vmatpush1.bf16.msra.mxu0 %v3126
        %3147 = vmatprep.subr.bf16.mxu0 0
        %3148 = vmatpush1.bf16.msra.mxu0 %v3125
        %3149 = vmatprep.subr.bf16.mxu0 0
        %3150 = vmatpush1.bf16.msra.mxu0 %v3124
        %3151 = vmatprep.subr.bf16.mxu0 0
        %3152 = vmatpush1.bf16.msra.mxu0 %v3123
        %3153 = vmatprep.subr.bf16.mxu0 0
        %3154 = vmatpush2.bf16.msra.mxu0 0
        %3155 = vmatprep.subr.bf16.mxu0 0
        %3156 = vmatpush2.bf16.msra.mxu0 0
        %3157 = vmatprep.subr.bf16.mxu0 0
        %3158 = vmatpush2.bf16.msra.mxu0 0
        %3159 = vmatprep.subr.bf16.mxu0 0
        %3160 = vmatpush2.bf16.msra.mxu0 0
        %3161 = vmatprep.subr.bf16.mxu0 0
        %3162 = vmatpush2.bf16.msra.mxu0 0
        %3163 = vmatprep.subr.bf16.mxu0 0
        %3164 = vmatpush2.bf16.msra.mxu0 0
        %3165 = vmatprep.subr.bf16.mxu0 0
        %3166 = vmatpush2.bf16.msra.mxu0 0
        %3167 = vmatprep.subr.bf16.mxu0 0
        %3168 = vmatpush2.bf16.msra.mxu0 0
        %3169 = vmatprep.mubr.bf16.mxu0 0
        %3170 = vmatmul.mubr.bf16.gmra.mxu0 %v3132
        %v3171 = vpop.f32.mrf.mxu0
        %v3172 = vadd.f32 %v3105, %v3171
        %v3173 = vpop.f32.mrf.mxu0
        %v3174 = vpop.f32.mrf.mxu0
        %v3175 = vadd.f32 %v3105, %v3174
        %v3176 = vpop.f32.mrf.mxu0
        %3177 = vmatprep.mubr.bf16.mxu0 0
        %3178 = vmatmul.mubr.bf16.gmra.mxu0 %v3135
        %v3179 = vpop.f32.mrf.mxu0
        %v3180 = vadd.f32 %v3105, %v3179
        %v3181 = vpop.f32.mrf.mxu0
        %v3182 = vpop.f32.mrf.mxu0
        %v3183 = vadd.f32 %v3105, %v3182
        %v3184 = vpop.f32.mrf.mxu0
        %3185 = vdwg.mxu0
        %v3186 = vmax.f32 %v3172, 0.0
        %v3187 = vmax.f32 %v3175, 0.0
        %v3188 = vmax.f32 %v3180, 0.0
        %v3189 = vmax.f32 %v3183, 0.0
        %v3190 = vld [vmem:[%s47] sm:$0xf]
        %v3191 = vld [vmem:[%s47 + $0x4] sm:$0xf]
        %v3192 = vld [vmem:[%s47 + $0x8] sm:$0xf]
        %v3193 = vld [vmem:[%s47 + $0xc] sm:$0xf]
        %v3194 = vld [vmem:[%s47 + $0x10] sm:$0xf]
        %v3195 = vld [vmem:[%s47 + $0x14] sm:$0xf]
        %v3196 = vld [vmem:[%s47 + $0x18] sm:$0xf]
        %v3197 = vld [vmem:[%s47 + $0x1c] sm:$0xf]
        %v3198 = vld [vmem:[%s47 + $0x20] sm:$0xf]
        %v3199 = vld [vmem:[%s47 + $0x24] sm:$0xf]
        %v3200 = vld [vmem:[%s47 + $0x28] sm:$0xf]
        %v3201 = vld [vmem:[%s47 + $0x2c] sm:$0xf]
        %v3202 = vld [vmem:[%s47 + $0x30] sm:$0xf]
        %v3203 = vld [vmem:[%s47 + $0x34] sm:$0xf]
        %v3204 = vld [vmem:[%s47 + $0x38] sm:$0xf]
        %v3205 = vld [vmem:[%s47 + $0x3c] sm:$0xf]
        %v3206 = vpack.c.bf16 %v3187, %v3186
        %v3207 = vpack.c.bf16 %v3189, %v3188
        %v3208 = vld [vmem:[%s49] sm:$0x1]
        %v3210 = vlaneseq
        %v3211 = vshrl.u32 %v3210, 7
        %v3212 = vsub.s32 0, %v3211
        %v3213 = vrot.slane %v3208, %v3212
        %v3231 = vunpack.c.l.b16 %v3190
        %v3232 = vunpack.c.l.b16 %v3191
        %v3233 = vunpack.c.l.b16 %v3192
        %v3234 = vunpack.c.l.b16 %v3193
        %v3235 = vunpack.c.l.b16 %v3194
        %v3236 = vunpack.c.l.b16 %v3195
        %v3237 = vunpack.c.l.b16 %v3196
        %v3238 = vunpack.c.l.b16 %v3197
        %v3239 = vunpack.c.l.b16 %v3198
        %v3240 = vunpack.c.l.b16 %v3199
        %v3241 = vunpack.c.l.b16 %v3200
        %v3242 = vunpack.c.l.b16 %v3201
        %v3243 = vunpack.c.l.b16 %v3202
        %v3244 = vunpack.c.l.b16 %v3203
        %v3245 = vunpack.c.l.b16 %v3204
        %v3246 = vunpack.c.l.b16 %v3205
        %v3247 = vpack.c.b16 %v3232, %v3231
        %v3248 = vpack.c.b16 %v3234, %v3233
        %v3249 = vpack.c.b16 %v3236, %v3235
        %v3250 = vpack.c.b16 %v3238, %v3237
        %v3251 = vpack.c.b16 %v3240, %v3239
        %v3252 = vpack.c.b16 %v3242, %v3241
        %v3253 = vpack.c.b16 %v3244, %v3243
        %v3254 = vpack.c.b16 %v3246, %v3245
        %3263 = vmatprep.subr.bf16.mxu0 0
        %3264 = vmatpush1.bf16.msra.mxu0 %v3254
        %3265 = vmatprep.subr.bf16.mxu0 0
        %3266 = vmatpush1.bf16.msra.mxu0 %v3253
        %3267 = vmatprep.subr.bf16.mxu0 0
        %3268 = vmatpush1.bf16.msra.mxu0 %v3252
        %3269 = vmatprep.subr.bf16.mxu0 0
        %3270 = vmatpush1.bf16.msra.mxu0 %v3251
        %3271 = vmatprep.subr.bf16.mxu0 0
        %3272 = vmatpush1.bf16.msra.mxu0 %v3250
        %3273 = vmatprep.subr.bf16.mxu0 0
        %3274 = vmatpush1.bf16.msra.mxu0 %v3249
        %3275 = vmatprep.subr.bf16.mxu0 0
        %3276 = vmatpush1.bf16.msra.mxu0 %v3248
        %3277 = vmatprep.subr.bf16.mxu0 0
        %3278 = vmatpush1.bf16.msra.mxu0 %v3247
        %3279 = vmatprep.subr.bf16.mxu0 0
        %3280 = vmatpush2.bf16.msra.mxu0 0
        %3281 = vmatprep.subr.bf16.mxu0 0
        %3282 = vmatpush2.bf16.msra.mxu0 0
        %3283 = vmatprep.subr.bf16.mxu0 0
        %3284 = vmatpush2.bf16.msra.mxu0 0
        %3285 = vmatprep.subr.bf16.mxu0 0
        %3286 = vmatpush2.bf16.msra.mxu0 0
        %3287 = vmatprep.subr.bf16.mxu0 0
        %3288 = vmatpush2.bf16.msra.mxu0 0
        %3289 = vmatprep.subr.bf16.mxu0 0
        %3290 = vmatpush2.bf16.msra.mxu0 0
        %3291 = vmatprep.subr.bf16.mxu0 0
        %3292 = vmatpush2.bf16.msra.mxu0 0
        %3293 = vmatprep.subr.bf16.mxu0 0
        %3294 = vmatpush2.bf16.msra.mxu0 0
        %3295 = vmatprep.mubr.bf16.mxu0 0
        %3296 = vmatmul.mubr.bf16.gmra.mxu0 %v3206
        %v3297 = vpop.f32.mrf.mxu0
        %v3298 = vadd.f32 %v3213, %v3297
        %v3299 = vpop.f32.mrf.mxu0
        %v3300 = vpop.f32.mrf.mxu0
        %v3301 = vadd.f32 %v3213, %v3300
        %v3302 = vpop.f32.mrf.mxu0
        %3303 = vmatprep.mubr.bf16.mxu0 0
        %3304 = vmatmul.mubr.bf16.gmra.mxu0 %v3207
        %v3305 = vpop.f32.mrf.mxu0
        %v3306 = vadd.f32 %v3213, %v3305
        %v3307 = vpop.f32.mrf.mxu0
        %v3308 = vpop.f32.mrf.mxu0
        %v3309 = vadd.f32 %v3213, %v3308
        %v3310 = vpop.f32.mrf.mxu0
        %3311 = vdwg.mxu0
        %v3312 = vadd.f32 %v3298, %v3002
        %v3313 = vadd.f32 %v3301, %v3005
        %v3314 = vadd.f32 %v3306, %v3010
        %v3315 = vadd.f32 %v3309, %v3013
        %v3316 = vld [vmem:[%s15] sm:$0xf]
        %v3317 = vld [vmem:[%s15 + $0x4] sm:$0xf]
        %v3318 = vld [vmem:[%s15 + $0x8] sm:$0xf]
        %v3319 = vld [vmem:[%s15 + $0xc] sm:$0xf]
        %v3320 = vld [vmem:[%s15 + $0x10] sm:$0xf]
        %v3321 = vld [vmem:[%s15 + $0x14] sm:$0xf]
        %v3322 = vld [vmem:[%s15 + $0x18] sm:$0xf]
        %v3323 = vld [vmem:[%s15 + $0x1c] sm:$0xf]
        %v3324 = vpack.c.bf16 %v3313, %v3312
        %v3325 = vpack.c.bf16 %v3315, %v3314
        %v3326 = vld [vmem:[#allocation8] sm:$0x1]
        %v3328 = vlaneseq
        %v3329 = vshrl.u32 %v3328, 7
        %v3330 = vsub.s32 0, %v3329
        %v3331 = vrot.slane %v3326, %v3330
        %v3341 = vunpack.c.l.b16 %v3316
        %v3342 = vunpack.c.l.b16 %v3317
        %v3343 = vunpack.c.l.b16 %v3318
        %v3344 = vunpack.c.l.b16 %v3319
        %v3345 = vunpack.c.l.b16 %v3320
        %v3346 = vunpack.c.l.b16 %v3321
        %v3347 = vunpack.c.l.b16 %v3322
        %v3348 = vunpack.c.l.b16 %v3323
        %v3349 = vpack.c.b16 %v3342, %v3341
        %v3350 = vpack.c.b16 %v3344, %v3343
        %v3351 = vpack.c.b16 %v3346, %v3345
        %v3352 = vpack.c.b16 %v3348, %v3347
        %v3358 = vsel %vm1678, %v3324, 0
        %v3361 = vsel %vm1678, %v3325, 0
        %3363 = vmatprep.subr.bf16.mxu0 0
        %3364 = vmatpush1.bf16.msra.mxu0 0
        %3365 = vmatprep.subr.bf16.mxu0 0
        %3366 = vmatpush1.bf16.msra.mxu0 0
        %3367 = vmatprep.subr.bf16.mxu0 0
        %3368 = vmatpush1.bf16.msra.mxu0 0
        %3369 = vmatprep.subr.bf16.mxu0 0
        %3370 = vmatpush1.bf16.msra.mxu0 0
        %3371 = vmatprep.subr.bf16.mxu0 0
        %3372 = vmatpush1.bf16.msra.mxu0 %v3352
        %3373 = vmatprep.subr.bf16.mxu0 0
        %3374 = vmatpush1.bf16.msra.mxu0 %v3351
        %3375 = vmatprep.subr.bf16.mxu0 0
        %3376 = vmatpush1.bf16.msra.mxu0 %v3350
        %3377 = vmatprep.subr.bf16.mxu0 0
        %3378 = vmatpush1.bf16.msra.mxu0 %v3349
        %3379 = vmatprep.subr.bf16.mxu0 0
        %3380 = vmatpush2.bf16.msra.mxu0 0
        %3381 = vmatprep.subr.bf16.mxu0 0
        %3382 = vmatpush2.bf16.msra.mxu0 0
        %3383 = vmatprep.subr.bf16.mxu0 0
        %3384 = vmatpush2.bf16.msra.mxu0 0
        %3385 = vmatprep.subr.bf16.mxu0 0
        %3386 = vmatpush2.bf16.msra.mxu0 0
        %3387 = vmatprep.subr.bf16.mxu0 0
        %3388 = vmatpush2.bf16.msra.mxu0 0
        %3389 = vmatprep.subr.bf16.mxu0 0
        %3390 = vmatpush2.bf16.msra.mxu0 0
        %3391 = vmatprep.subr.bf16.mxu0 0
        %3392 = vmatpush2.bf16.msra.mxu0 0
        %3393 = vmatprep.subr.bf16.mxu0 0
        %3394 = vmatpush2.bf16.msra.mxu0 0
        %3395 = vmatprep.mubr.bf16.mxu0 0
        %3396 = vmatmul.mubr.bf16.gmra.mxu0 %v3358
        %v3397 = vpop.f32.mrf.mxu0
        %v3398 = vadd.f32 %v3331, %v3397
        %v3399 = vpop.f32.mrf.mxu0
        %v3400 = vpop.f32.mrf.mxu0
        %v3401 = vadd.f32 %v3331, %v3400
        %v3402 = vpop.f32.mrf.mxu0
        %3403 = vmatprep.mubr.bf16.mxu0 0
        %3404 = vmatmul.mubr.bf16.gmra.mxu0 %v3361
        %v3405 = vpop.f32.mrf.mxu0
        %v3406 = vadd.f32 %v3331, %v3405
        %v3407 = vpop.f32.mrf.mxu0
        %v3408 = vpop.f32.mrf.mxu0
        %v3409 = vadd.f32 %v3331, %v3408
        %v3410 = vpop.f32.mrf.mxu0
        %3411 = vdwg.mxu0
        %v3412 = vld [vmem:[%s19] sm:$0xf]
        %v3413 = vld [vmem:[%s19 + $0x4] sm:$0xf]
        %v3414 = vld [vmem:[%s19 + $0x8] sm:$0xf]
        %v3415 = vld [vmem:[%s19 + $0xc] sm:$0xf]
        %v3416 = vld [vmem:[%s19 + $0x10] sm:$0xf]
        %v3417 = vld [vmem:[%s19 + $0x14] sm:$0xf]
        %v3418 = vld [vmem:[%s19 + $0x18] sm:$0xf]
        %v3419 = vld [vmem:[%s19 + $0x1c] sm:$0xf]
        %v3420 = vpack.c.bf16 %v1658, %v1655
        %v3421 = vpack.c.bf16 %v1666, %v1663
        %v3430 = vunpack.c.l.b16 %v3412
        %v3431 = vunpack.c.l.b16 %v3413
        %v3432 = vunpack.c.l.b16 %v3414
        %v3433 = vunpack.c.l.b16 %v3415
        %v3434 = vunpack.c.l.b16 %v3416
        %v3435 = vunpack.c.l.b16 %v3417
        %v3436 = vunpack.c.l.b16 %v3418
        %v3437 = vunpack.c.l.b16 %v3419
        %v3438 = vpack.c.b16 %v3431, %v3430
        %v3439 = vpack.c.b16 %v3433, %v3432
        %v3440 = vpack.c.b16 %v3435, %v3434
        %v3441 = vpack.c.b16 %v3437, %v3436
        %v3447 = vsel %vm1678, %v3420, 0
        %v3450 = vsel %vm1678, %v3421, 0
        %3452 = vmatprep.subr.bf16.mxu0 0
        %3453 = vmatpush1.bf16.msra.mxu0 0
        %3454 = vmatprep.subr.bf16.mxu0 0
        %3455 = vmatpush1.bf16.msra.mxu0 0
        %3456 = vmatprep.subr.bf16.mxu0 0
        %3457 = vmatpush1.bf16.msra.mxu0 0
        %3458 = vmatprep.subr.bf16.mxu0 0
        %3459 = vmatpush1.bf16.msra.mxu0 0
        %3460 = vmatprep.subr.bf16.mxu0 0
        %3461 = vmatpush1.bf16.msra.mxu0 %v3441
        %3462 = vmatprep.subr.bf16.mxu0 0
        %3463 = vmatpush1.bf16.msra.mxu0 %v3440
        %3464 = vmatprep.subr.bf16.mxu0 0
        %3465 = vmatpush1.bf16.msra.mxu0 %v3439
        %3466 = vmatprep.subr.bf16.mxu0 0
        %3467 = vmatpush1.bf16.msra.mxu0 %v3438
        %3468 = vmatprep.subr.bf16.mxu0 0
        %3469 = vmatpush2.bf16.msra.mxu0 0
        %3470 = vmatprep.subr.bf16.mxu0 0
        %3471 = vmatpush2.bf16.msra.mxu0 0
        %3472 = vmatprep.subr.bf16.mxu0 0
        %3473 = vmatpush2.bf16.msra.mxu0 0
        %3474 = vmatprep.subr.bf16.mxu0 0
        %3475 = vmatpush2.bf16.msra.mxu0 0
        %3476 = vmatprep.subr.bf16.mxu0 0
        %3477 = vmatpush2.bf16.msra.mxu0 0
        %3478 = vmatprep.subr.bf16.mxu0 0
        %3479 = vmatpush2.bf16.msra.mxu0 0
        %3480 = vmatprep.subr.bf16.mxu0 0
        %3481 = vmatpush2.bf16.msra.mxu0 0
        %3482 = vmatprep.subr.bf16.mxu0 0
        %3483 = vmatpush2.bf16.msra.mxu0 0
        %3484 = vmatprep.mubr.bf16.mxu0 0
        %3485 = vmatmul.mubr.bf16.gmra.mxu0 %v3447
        %v3486 = vpop.f32.mrf.mxu0
        %v3487 = vadd.f32 0.0, %v3486
        %v3488 = vpop.f32.mrf.mxu0
        %v3489 = vpop.f32.mrf.mxu0
        %v3490 = vadd.f32 0.0, %v3489
        %v3491 = vpop.f32.mrf.mxu0
        %3492 = vmatprep.mubr.bf16.mxu0 0
        %3493 = vmatmul.mubr.bf16.gmra.mxu0 %v3450
        %v3494 = vpop.f32.mrf.mxu0
        %v3495 = vadd.f32 0.0, %v3494
        %v3496 = vpop.f32.mrf.mxu0
        %v3497 = vpop.f32.mrf.mxu0
        %v3498 = vadd.f32 0.0, %v3497
        %v3499 = vpop.f32.mrf.mxu0
        %3500 = vdwg.mxu0
        %v3501 = vadd.f32 %v3398, %v3487
        %v3502 = vadd.f32 %v3401, %v3490
        %v3503 = vadd.f32 %v3406, %v3495
        %v3504 = vadd.f32 %v3409, %v3498
        %v3505 = vld [vmem:[#allocation10] sm:$0x1]
        %v3507 = vlaneseq
        %v3508 = vshrl.u32 %v3507, 7
        %v3509 = vsub.s32 0, %v3508
        %v3510 = vrot.slane %v3505, %v3509
        %v3512 = vadd.f32 %v3501, %v3510
        %v3513 = vadd.f32 %v3502, %v3510
        %v3514 = vadd.f32 %v3503, %v3510
        %v3515 = vadd.f32 %v3504, %v3510
        %3516 = vadd.xlane.f32.xlu0 %v3512
        %v3517 = vpop.xlane.xlu0 %3516
        %3518 = vadd.xlane.f32.xlu0 %v3513
        %v3519 = vpop.xlane.xlu0 %3518
        %3520 = vadd.xlane.f32.xlu0 %v3514
        %v3521 = vpop.xlane.xlu0 %3520
        %3522 = vadd.xlane.f32.xlu0 %v3515
        %v3523 = vpop.xlane.xlu0 %3522
        %v3524 = vrcp.pop 128.0
        %v3525 = vmul.f32 %v3517, %v3524
        %v3526 = vmul.f32 %v3519, %v3524
        %v3527 = vmul.f32 %v3521, %v3524
        %v3528 = vmul.f32 %v3523, %v3524
        %v3529 = vsub.f32 %v3512, %v3525
        %v3530 = vsub.f32 %v3513, %v3526
        %v3531 = vsub.f32 %v3514, %v3527
        %v3532 = vsub.f32 %v3515, %v3528
        %v3533 = vmul.f32 %v3529, %v3529
        %v3534 = vmul.f32 %v3530, %v3530
        %v3535 = vmul.f32 %v3531, %v3531
        %v3536 = vmul.f32 %v3532, %v3532
        %3537 = vadd.xlane.f32.xlu0 %v3533
        %v3538 = vpop.xlane.xlu0 %3537
        %3539 = vadd.xlane.f32.xlu0 %v3534
        %v3540 = vpop.xlane.xlu0 %3539
        %3541 = vadd.xlane.f32.xlu0 %v3535
        %v3542 = vpop.xlane.xlu0 %3541
        %3543 = vadd.xlane.f32.xlu0 %v3536
        %v3544 = vpop.xlane.xlu0 %3543
        %v3545 = vmul.f32 %v3538, %v3524
        %v3546 = vmul.f32 %v3540, %v3524
        %v3547 = vmul.f32 %v3542, %v3524
        %v3548 = vmul.f32 %v3544, %v3524
        %v3549 = vadd.f32 %v3545, 1e-05
        %v3550 = vadd.f32 %v3546, 1e-05
        %v3551 = vadd.f32 %v3547, 1e-05
        %v3552 = vadd.f32 %v3548, 1e-05
        %v3553 = vrsqrt.pop %v3549
        %v3554 = vrsqrt.pop %v3550
        %v3555 = vrsqrt.pop %v3551
        %v3556 = vrsqrt.pop %v3552
        %v3557 = vmul.f32 %v3529, %v3553
        %v3558 = vmul.f32 %v3530, %v3554
        %v3559 = vmul.f32 %v3531, %v3555
        %v3560 = vmul.f32 %v3532, %v3556
        %v3561 = vld [vmem:[%s51] sm:$0x1]
        %v3563 = vlaneseq
        %v3564 = vshrl.u32 %v3563, 7
        %v3565 = vsub.s32 0, %v3564
        %v3566 = vrot.slane %v3561, %v3565
        %v3568 = vmul.f32 %v3557, %v3566
        %v3569 = vmul.f32 %v3558, %v3566
        %v3570 = vmul.f32 %v3559, %v3566
        %v3571 = vmul.f32 %v3560, %v3566
        %v3572 = vld [vmem:[%s53] sm:$0x1]
        %v3574 = vlaneseq
        %v3575 = vshrl.u32 %v3574, 7
        %v3576 = vsub.s32 0, %v3575
        %v3577 = vrot.slane %v3572, %v3576
        %v3579 = vadd.f32 %v3568, %v3577
        %v3580 = vadd.f32 %v3569, %v3577
        %v3581 = vadd.f32 %v3570, %v3577
        %v3582 = vadd.f32 %v3571, %v3577
        %v3583 = vld [vmem:[%s55] sm:$0xff]
        %v3584 = vld [vmem:[%s55 + $0x8] sm:$0xff]
        %v3585 = vld [vmem:[%s55 + $0x10] sm:$0xff]
        %v3586 = vld [vmem:[%s55 + $0x18] sm:$0xff]
        %v3587 = vld [vmem:[%s55 + $0x20] sm:$0xff]
        %v3588 = vld [vmem:[%s55 + $0x28] sm:$0xff]
        %v3589 = vld [vmem:[%s55 + $0x30] sm:$0xff]
        %v3590 = vld [vmem:[%s55 + $0x38] sm:$0xff]
        %v3591 = vld [vmem:[%s55 + $0x40] sm:$0xff]
        %v3592 = vld [vmem:[%s55 + $0x48] sm:$0xff]
        %v3593 = vld [vmem:[%s55 + $0x50] sm:$0xff]
        %v3594 = vld [vmem:[%s55 + $0x58] sm:$0xff]
        %v3595 = vld [vmem:[%s55 + $0x60] sm:$0xff]
        %v3596 = vld [vmem:[%s55 + $0x68] sm:$0xff]
        %v3597 = vld [vmem:[%s55 + $0x70] sm:$0xff]
        %v3598 = vld [vmem:[%s55 + $0x78] sm:$0xff]
        %v3599 = vpack.c.bf16 %v3580, %v3579
        %v3600 = vpack.c.bf16 %v3582, %v3581
        %v3617 = vunpack.c.l.b16 %v3583
        %v3618 = vunpack.c.h.b16 %v3583
        %v3619 = vunpack.c.l.b16 %v3584
        %v3620 = vunpack.c.h.b16 %v3584
        %v3621 = vunpack.c.l.b16 %v3585
        %v3622 = vunpack.c.h.b16 %v3585
        %v3623 = vunpack.c.l.b16 %v3586
        %v3624 = vunpack.c.h.b16 %v3586
        %v3625 = vunpack.c.l.b16 %v3587
        %v3626 = vunpack.c.h.b16 %v3587
        %v3627 = vunpack.c.l.b16 %v3588
        %v3628 = vunpack.c.h.b16 %v3588
        %v3629 = vunpack.c.l.b16 %v3589
        %v3630 = vunpack.c.h.b16 %v3589
        %v3631 = vunpack.c.l.b16 %v3590
        %v3632 = vunpack.c.h.b16 %v3590
        %v3633 = vunpack.c.l.b16 %v3591
        %v3634 = vunpack.c.h.b16 %v3591
        %v3635 = vunpack.c.l.b16 %v3592
        %v3636 = vunpack.c.h.b16 %v3592
        %v3637 = vunpack.c.l.b16 %v3593
        %v3638 = vunpack.c.h.b16 %v3593
        %v3639 = vunpack.c.l.b16 %v3594
        %v3640 = vunpack.c.h.b16 %v3594
        %v3641 = vunpack.c.l.b16 %v3595
        %v3642 = vunpack.c.h.b16 %v3595
        %v3643 = vunpack.c.l.b16 %v3596
        %v3644 = vunpack.c.h.b16 %v3596
        %v3645 = vunpack.c.l.b16 %v3597
        %v3646 = vunpack.c.h.b16 %v3597
        %v3647 = vunpack.c.l.b16 %v3598
        %v3648 = vunpack.c.h.b16 %v3598
        %v3649 = vpack.c.b16 %v3619, %v3617
        %v3650 = vpack.c.b16 %v3620, %v3618
        %v3651 = vpack.c.b16 %v3623, %v3621
        %v3652 = vpack.c.b16 %v3624, %v3622
        %v3653 = vpack.c.b16 %v3627, %v3625
        %v3654 = vpack.c.b16 %v3628, %v3626
        %v3655 = vpack.c.b16 %v3631, %v3629
        %v3656 = vpack.c.b16 %v3632, %v3630
        %v3657 = vpack.c.b16 %v3635, %v3633
        %v3658 = vpack.c.b16 %v3636, %v3634
        %v3659 = vpack.c.b16 %v3639, %v3637
        %v3660 = vpack.c.b16 %v3640, %v3638
        %v3661 = vpack.c.b16 %v3643, %v3641
        %v3662 = vpack.c.b16 %v3644, %v3642
        %v3663 = vpack.c.b16 %v3647, %v3645
        %v3664 = vpack.c.b16 %v3648, %v3646
        %3681 = vmatprep.subr.bf16.mxu0 %v3664
        %3682 = vmatpush1.bf16.msra.mxu0 %v3663
        %3683 = vmatprep.subr.bf16.mxu0 %v3662
        %3684 = vmatpush1.bf16.msra.mxu0 %v3661
        %3685 = vmatprep.subr.bf16.mxu0 %v3660
        %3686 = vmatpush1.bf16.msra.mxu0 %v3659
        %3687 = vmatprep.subr.bf16.mxu0 %v3658
        %3688 = vmatpush1.bf16.msra.mxu0 %v3657
        %3689 = vmatprep.subr.bf16.mxu0 %v3656
        %3690 = vmatpush1.bf16.msra.mxu0 %v3655
        %3691 = vmatprep.subr.bf16.mxu0 %v3654
        %3692 = vmatpush1.bf16.msra.mxu0 %v3653
        %3693 = vmatprep.subr.bf16.mxu0 %v3652
        %3694 = vmatpush1.bf16.msra.mxu0 %v3651
        %3695 = vmatprep.subr.bf16.mxu0 %v3650
        %3696 = vmatpush1.bf16.msra.mxu0 %v3649
        %3697 = vmatprep.subr.bf16.mxu0 0
        %3698 = vmatpush2.bf16.msra.mxu0 0
        %3699 = vmatprep.subr.bf16.mxu0 0
        %3700 = vmatpush2.bf16.msra.mxu0 0
        %3701 = vmatprep.subr.bf16.mxu0 0
        %3702 = vmatpush2.bf16.msra.mxu0 0
        %3703 = vmatprep.subr.bf16.mxu0 0
        %3704 = vmatpush2.bf16.msra.mxu0 0
        %3705 = vmatprep.subr.bf16.mxu0 0
        %3706 = vmatpush2.bf16.msra.mxu0 0
        %3707 = vmatprep.subr.bf16.mxu0 0
        %3708 = vmatpush2.bf16.msra.mxu0 0
        %3709 = vmatprep.subr.bf16.mxu0 0
        %3710 = vmatpush2.bf16.msra.mxu0 0
        %3711 = vmatprep.subr.bf16.mxu0 0
        %3712 = vmatpush2.bf16.msra.mxu0 0
        %3713 = vmatprep.mubr.bf16.mxu0 0
        %3714 = vmatmul.mubr.bf16.gmra.mxu0 %v3599
        %v3715 = vpop.f32.mrf.mxu0
        %v3716 = vadd.f32 0.0, %v3715
        %v3717 = vpop.f32.mrf.mxu0
        %v3718 = vadd.f32 0.0, %v3717
        %v3719 = vpop.f32.mrf.mxu0
        %v3720 = vadd.f32 0.0, %v3719
        %v3721 = vpop.f32.mrf.mxu0
        %v3722 = vadd.f32 0.0, %v3721
        %3723 = vmatprep.mubr.bf16.mxu0 0
        %3724 = vmatmul.mubr.bf16.gmra.mxu0 %v3600
        %v3725 = vpop.f32.mrf.mxu0
        %v3726 = vadd.f32 0.0, %v3725
        %v3727 = vpop.f32.mrf.mxu0
        %v3728 = vadd.f32 0.0, %v3727
        %v3729 = vpop.f32.mrf.mxu0
        %v3730 = vadd.f32 0.0, %v3729
        %v3731 = vpop.f32.mrf.mxu0
        %v3732 = vadd.f32 0.0, %v3731
        %3733 = vdwg.mxu0
        %v3734 = vpack.c.bf16 %v3720, %v3716
        %v3735 = vpack.c.bf16 %v3730, %v3726
        %v3736 = vpack.c.bf16 %v3722, %v3718
        %v3737 = vpack.c.bf16 %v3732, %v3728
        %3739 = vrot.lane.b32.xlu0 %v3734, 64
        %v3740 = vpop.permute.xlu0 %3739
        %v3742 = vsel %vm1870, %v3734, 0
        %v3745 = vsel %vm1870, %v3740, 0
        %3747 = vmatprep.subr.bf16.mxu0 0
        %3748 = vmatpush1.bf16.xpose.msra.mxu0 0
        %3749 = vmatprep.subr.bf16.mxu0 0
        %3750 = vmatpush1.bf16.xpose.msra.mxu0 0
        %3751 = vmatprep.subr.bf16.mxu0 0
        %3752 = vmatpush1.bf16.xpose.msra.mxu0 0
        %3753 = vmatprep.subr.bf16.mxu0 0
        %3754 = vmatpush1.bf16.xpose.msra.mxu0 0
        %3755 = vmatprep.subr.bf16.mxu0 0
        %3756 = vmatpush1.bf16.xpose.msra.mxu0 0
        %3757 = vmatprep.subr.bf16.mxu0 0
        %3758 = vmatpush1.bf16.xpose.msra.mxu0 0
        %3759 = vmatprep.subr.bf16.mxu0 0
        %3760 = vmatpush1.bf16.xpose.msra.mxu0 0
        %3761 = vmatprep.subr.bf16.mxu0 0
        %3762 = vmatpush1.bf16.xpose.msra.mxu0 %v3745
        %3763 = vmatprep.subr.bf16.mxu0 0
        %3764 = vmatpush2.bf16.xpose.msra.mxu0 0
        %3765 = vmatprep.subr.bf16.mxu0 0
        %3766 = vmatpush2.bf16.xpose.msra.mxu0 0
        %3767 = vmatprep.subr.bf16.mxu0 0
        %3768 = vmatpush2.bf16.xpose.msra.mxu0 0
        %3769 = vmatprep.subr.bf16.mxu0 0
        %3770 = vmatpush2.bf16.xpose.msra.mxu0 0
        %3771 = vmatprep.subr.bf16.mxu0 0
        %3772 = vmatpush2.bf16.xpose.msra.mxu0 0
        %3773 = vmatprep.subr.bf16.mxu0 0
        %3774 = vmatpush2.bf16.xpose.msra.mxu0 0
        %3775 = vmatprep.subr.bf16.mxu0 0
        %3776 = vmatpush2.bf16.xpose.msra.mxu0 0
        %3777 = vmatprep.subr.bf16.mxu0 0
        %3778 = vmatpush2.bf16.xpose.msra.mxu0 0
        %3779 = vmatprep.mubr.bf16.mxu0 0
        %3780 = vmatmul.mubr.bf16.gmra.mxu0 %v3742
        %v3781 = vpop.f32.mrf.mxu0
        %v3782 = vadd.f32 %v1676, %v3781
        %v3783 = vpop.f32.mrf.mxu0
        %v3784 = vpop.f32.mrf.mxu0
        %v3785 = vadd.f32 %v1677, %v3784
        %v3786 = vpop.f32.mrf.mxu0
        %3787 = vdwg.mxu0
        %3789 = vrot.lane.b32.xlu0 %v3735, 64
        %v3790 = vpop.permute.xlu0 %3789
        %v3792 = vsel %vm1870, %v3735, 0
        %v3795 = vsel %vm1870, %v3790, 0
        %3797 = vmatprep.subr.bf16.mxu0 0
        %3798 = vmatpush1.bf16.xpose.msra.mxu0 0
        %3799 = vmatprep.subr.bf16.mxu0 0
        %3800 = vmatpush1.bf16.xpose.msra.mxu0 0
        %3801 = vmatprep.subr.bf16.mxu0 0
        %3802 = vmatpush1.bf16.xpose.msra.mxu0 0
        %3803 = vmatprep.subr.bf16.mxu0 0
        %3804 = vmatpush1.bf16.xpose.msra.mxu0 0
        %3805 = vmatprep.subr.bf16.mxu0 0
        %3806 = vmatpush1.bf16.xpose.msra.mxu0 0
        %3807 = vmatprep.subr.bf16.mxu0 0
        %3808 = vmatpush1.bf16.xpose.msra.mxu0 0
        %3809 = vmatprep.subr.bf16.mxu0 0
        %3810 = vmatpush1.bf16.xpose.msra.mxu0 0
        %3811 = vmatprep.subr.bf16.mxu0 0
        %3812 = vmatpush1.bf16.xpose.msra.mxu0 %v3795
        %3813 = vmatprep.subr.bf16.mxu0 0
        %3814 = vmatpush2.bf16.xpose.msra.mxu0 0
        %3815 = vmatprep.subr.bf16.mxu0 0
        %3816 = vmatpush2.bf16.xpose.msra.mxu0 0
        %3817 = vmatprep.subr.bf16.mxu0 0
        %3818 = vmatpush2.bf16.xpose.msra.mxu0 0
        %3819 = vmatprep.subr.bf16.mxu0 0
        %3820 = vmatpush2.bf16.xpose.msra.mxu0 0
        %3821 = vmatprep.subr.bf16.mxu0 0
        %3822 = vmatpush2.bf16.xpose.msra.mxu0 0
        %3823 = vmatprep.subr.bf16.mxu0 0
        %3824 = vmatpush2.bf16.xpose.msra.mxu0 0
        %3825 = vmatprep.subr.bf16.mxu0 0
        %3826 = vmatpush2.bf16.xpose.msra.mxu0 0
        %3827 = vmatprep.subr.bf16.mxu0 0
        %3828 = vmatpush2.bf16.xpose.msra.mxu0 0
        %3829 = vmatprep.mubr.bf16.mxu0 0
        %3830 = vmatmul.mubr.bf16.gmra.mxu0 %v3792
        %v3831 = vpop.f32.mrf.mxu0
        %v3832 = vadd.f32 %v1676, %v3831
        %v3833 = vpop.f32.mrf.mxu0
        %v3834 = vpop.f32.mrf.mxu0
        %v3835 = vadd.f32 %v1677, %v3834
        %v3836 = vpop.f32.mrf.mxu0
        %3837 = vdwg.mxu0
        %v3838 = vsel %vm1870, %v3782, -inf
        %3839 = vmax.xlane.f32.xlu0 %v3838
        %v3840 = vpop.xlane.xlu0 %3839
        %v3841 = vsel %vm1870, %v3785, -inf
        %3842 = vmax.xlane.f32.xlu0 %v3841
        %v3843 = vpop.xlane.xlu0 %3842
        %v3844 = vsel %vm1870, %v3832, -inf
        %3845 = vmax.xlane.f32.xlu0 %v3844
        %v3846 = vpop.xlane.xlu0 %3845
        %v3847 = vsel %vm1870, %v3835, -inf
        %3848 = vmax.xlane.f32.xlu0 %v3847
        %v3849 = vpop.xlane.xlu0 %3848
        %v3850 = vsub.f32 %v3782, %v3840
        %v3851 = vsub.f32 %v3785, %v3843
        %v3852 = vsub.f32 %v3832, %v3846
        %v3853 = vsub.f32 %v3835, %v3849
        %v3854 = vmul.f32 %v3850, 1.442695
        %v3855 = vpow.pop %v3854
        %v3856 = vmul.f32 %v3851, 1.442695
        %v3857 = vpow.pop %v3856
        %v3858 = vmul.f32 %v3852, 1.442695
        %v3859 = vpow.pop %v3858
        %v3860 = vmul.f32 %v3853, 1.442695
        %v3861 = vpow.pop %v3860
        %v3862 = vsel %vm1870, %v3855, 0.0
        %3863 = vadd.xlane.f32.xlu0 %v3862
        %v3864 = vpop.xlane.xlu0 %3863
        %v3865 = vsel %vm1870, %v3857, 0.0
        %3866 = vadd.xlane.f32.xlu0 %v3865
        %v3867 = vpop.xlane.xlu0 %3866
        %v3868 = vsel %vm1870, %v3859, 0.0
        %3869 = vadd.xlane.f32.xlu0 %v3868
        %v3870 = vpop.xlane.xlu0 %3869
        %v3871 = vsel %vm1870, %v3861, 0.0
        %3872 = vadd.xlane.f32.xlu0 %v3871
        %v3873 = vpop.xlane.xlu0 %3872
        %v3874 = vrcp.pop %v3864
        %v3875 = vrcp.pop %v3867
        %v3876 = vrcp.pop %v3870
        %v3877 = vrcp.pop %v3873
        %v3878 = vmul.f32 %v3855, %v3874
        %v3879 = vmul.f32 %v3857, %v3875
        %v3880 = vmul.f32 %v3859, %v3876
        %v3881 = vmul.f32 %v3861, %v3877
        %v3882 = vld [vmem:[%s1369] sm:$0xff]
        %v3883 = vld [vmem:[%s1369 + $0x8] sm:$0xff]
        %v3884 = vld [vmem:[%s1369 + $0x40] sm:$0xff]
        %v3885 = vld [vmem:[%s1369 + $0x48] sm:$0xff]
        %v3886 = vmul.f32 %v3878, 0.5
        %v3887 = vmul.f32 %v3879, 0.5
        %v3888 = vmul.f32 %v3880, 0.5
        %v3889 = vmul.f32 %v3881, 0.5
        %v3890 = vadd.f32 %v3882, %v3886
        %v3891 = vadd.f32 %v3883, %v3887
        %v3892 = vadd.f32 %v3884, %v3888
        %v3893 = vadd.f32 %v3885, %v3889
        %3894 = vst.msk [vmem:[%s1369] sm:$0xff] %vm1870, %v3890
        %3895 = vst.msk [vmem:[%s1369 + $0x8] sm:$0xff] %vm1870, %v3891
        %3896 = vst.msk [vmem:[%s1369 + $0x40] sm:$0xff] %vm1870, %v3892
        %3897 = vst.msk [vmem:[%s1369 + $0x48] sm:$0xff] %vm1870, %v3893
        %v3898 = vpack.c.bf16 %v3879, %v3878
        %v3899 = vpack.c.bf16 %v3881, %v3880
        %v3901 = vsel %vm1870, %v3898, 0
        %3903 = vmatprep.subr.bf16.mxu0 0
        %3904 = vmatpush1.bf16.msra.mxu0 0
        %3905 = vmatprep.subr.bf16.mxu0 0
        %3906 = vmatpush1.bf16.msra.mxu0 0
        %3907 = vmatprep.subr.bf16.mxu0 0
        %3908 = vmatpush1.bf16.msra.mxu0 0
        %3909 = vmatprep.subr.bf16.mxu0 0
        %3910 = vmatpush1.bf16.msra.mxu0 0
        %3911 = vmatprep.subr.bf16.mxu0 0
        %3912 = vmatpush1.bf16.msra.mxu0 0
        %3913 = vmatprep.subr.bf16.mxu0 0
        %3914 = vmatpush1.bf16.msra.mxu0 0
        %3915 = vmatprep.subr.bf16.mxu0 0
        %3916 = vmatpush1.bf16.msra.mxu0 0
        %3917 = vmatprep.subr.bf16.mxu0 0
        %3918 = vmatpush1.bf16.msra.mxu0 %v3736
        %3919 = vmatprep.subr.bf16.mxu0 0
        %3920 = vmatpush2.bf16.msra.mxu0 0
        %3921 = vmatprep.subr.bf16.mxu0 0
        %3922 = vmatpush2.bf16.msra.mxu0 0
        %3923 = vmatprep.subr.bf16.mxu0 0
        %3924 = vmatpush2.bf16.msra.mxu0 0
        %3925 = vmatprep.subr.bf16.mxu0 0
        %3926 = vmatpush2.bf16.msra.mxu0 0
        %3927 = vmatprep.subr.bf16.mxu0 0
        %3928 = vmatpush2.bf16.msra.mxu0 0
        %3929 = vmatprep.subr.bf16.mxu0 0
        %3930 = vmatpush2.bf16.msra.mxu0 0
        %3931 = vmatprep.subr.bf16.mxu0 0
        %3932 = vmatpush2.bf16.msra.mxu0 0
        %3933 = vmatprep.subr.bf16.mxu0 0
        %3934 = vmatpush2.bf16.msra.mxu0 0
        %3935 = vmatprep.mubr.bf16.mxu0 0
        %3936 = vmatmul.mubr.bf16.gmra.mxu0 %v3901
        %v3937 = vpop.f32.mrf.mxu0
        %v3938 = vadd.f32 0.0, %v3937
        %v3939 = vpop.f32.mrf.mxu0
        %v3940 = vpop.f32.mrf.mxu0
        %v3941 = vadd.f32 0.0, %v3940
        %v3942 = vpop.f32.mrf.mxu0
        %3943 = vdwg.mxu0
        %v3945 = vsel %vm1870, %v3899, 0
        %3947 = vmatprep.subr.bf16.mxu0 0
        %3948 = vmatpush1.bf16.msra.mxu0 0
        %3949 = vmatprep.subr.bf16.mxu0 0
        %3950 = vmatpush1.bf16.msra.mxu0 0
        %3951 = vmatprep.subr.bf16.mxu0 0
        %3952 = vmatpush1.bf16.msra.mxu0 0
        %3953 = vmatprep.subr.bf16.mxu0 0
        %3954 = vmatpush1.bf16.msra.mxu0 0
        %3955 = vmatprep.subr.bf16.mxu0 0
        %3956 = vmatpush1.bf16.msra.mxu0 0
        %3957 = vmatprep.subr.bf16.mxu0 0
        %3958 = vmatpush1.bf16.msra.mxu0 0
        %3959 = vmatprep.subr.bf16.mxu0 0
        %3960 = vmatpush1.bf16.msra.mxu0 0
        %3961 = vmatprep.subr.bf16.mxu0 0
        %3962 = vmatpush1.bf16.msra.mxu0 %v3737
        %3963 = vmatprep.subr.bf16.mxu0 0
        %3964 = vmatpush2.bf16.msra.mxu0 0
        %3965 = vmatprep.subr.bf16.mxu0 0
        %3966 = vmatpush2.bf16.msra.mxu0 0
        %3967 = vmatprep.subr.bf16.mxu0 0
        %3968 = vmatpush2.bf16.msra.mxu0 0
        %3969 = vmatprep.subr.bf16.mxu0 0
        %3970 = vmatpush2.bf16.msra.mxu0 0
        %3971 = vmatprep.subr.bf16.mxu0 0
        %3972 = vmatpush2.bf16.msra.mxu0 0
        %3973 = vmatprep.subr.bf16.mxu0 0
        %3974 = vmatpush2.bf16.msra.mxu0 0
        %3975 = vmatprep.subr.bf16.mxu0 0
        %3976 = vmatpush2.bf16.msra.mxu0 0
        %3977 = vmatprep.subr.bf16.mxu0 0
        %3978 = vmatpush2.bf16.msra.mxu0 0
        %3979 = vmatprep.mubr.bf16.mxu0 0
        %3980 = vmatmul.mubr.bf16.gmra.mxu0 %v3945
        %v3981 = vpop.f32.mrf.mxu0
        %v3982 = vadd.f32 0.0, %v3981
        %v3983 = vpop.f32.mrf.mxu0
        %v3984 = vpop.f32.mrf.mxu0
        %v3985 = vadd.f32 0.0, %v3984
        %v3986 = vpop.f32.mrf.mxu0
        %3987 = vdwg.mxu0
        %3988 = vrot.lane.b32.xlu0 %v3734, 112
        %v3989 = vpop.permute.xlu0 %3988
        %3990 = vrot.lane.b32.xlu0 %v3734, 48
        %v3991 = vpop.permute.xlu0 %3990
        %v3993 = vsel %vm1870, %v3989, 0
        %v3996 = vsel %vm1870, %v3991, 0
        %3998 = vmatprep.subr.bf16.mxu0 0
        %3999 = vmatpush1.bf16.xpose.msra.mxu0 0
        %4000 = vmatprep.subr.bf16.mxu0 0
        %4001 = vmatpush1.bf16.xpose.msra.mxu0 0
        %4002 = vmatprep.subr.bf16.mxu0 0
        %4003 = vmatpush1.bf16.xpose.msra.mxu0 0
        %4004 = vmatprep.subr.bf16.mxu0 0
        %4005 = vmatpush1.bf16.xpose.msra.mxu0 0
        %4006 = vmatprep.subr.bf16.mxu0 0
        %4007 = vmatpush1.bf16.xpose.msra.mxu0 0
        %4008 = vmatprep.subr.bf16.mxu0 0
        %4009 = vmatpush1.bf16.xpose.msra.mxu0 0
        %4010 = vmatprep.subr.bf16.mxu0 0
        %4011 = vmatpush1.bf16.xpose.msra.mxu0 0
        %4012 = vmatprep.subr.bf16.mxu0 0
        %4013 = vmatpush1.bf16.xpose.msra.mxu0 %v3996
        %4014 = vmatprep.subr.bf16.mxu0 0
        %4015 = vmatpush2.bf16.xpose.msra.mxu0 0
        %4016 = vmatprep.subr.bf16.mxu0 0
        %4017 = vmatpush2.bf16.xpose.msra.mxu0 0
        %4018 = vmatprep.subr.bf16.mxu0 0
        %4019 = vmatpush2.bf16.xpose.msra.mxu0 0
        %4020 = vmatprep.subr.bf16.mxu0 0
        %4021 = vmatpush2.bf16.xpose.msra.mxu0 0
        %4022 = vmatprep.subr.bf16.mxu0 0
        %4023 = vmatpush2.bf16.xpose.msra.mxu0 0
        %4024 = vmatprep.subr.bf16.mxu0 0
        %4025 = vmatpush2.bf16.xpose.msra.mxu0 0
        %4026 = vmatprep.subr.bf16.mxu0 0
        %4027 = vmatpush2.bf16.xpose.msra.mxu0 0
        %4028 = vmatprep.subr.bf16.mxu0 0
        %4029 = vmatpush2.bf16.xpose.msra.mxu0 0
        %4030 = vmatprep.mubr.bf16.mxu0 0
        %4031 = vmatmul.mubr.bf16.gmra.mxu0 %v3993
        %v4032 = vpop.f32.mrf.mxu0
        %v4033 = vadd.f32 %v1676, %v4032
        %v4034 = vpop.f32.mrf.mxu0
        %v4035 = vpop.f32.mrf.mxu0
        %v4036 = vadd.f32 %v1677, %v4035
        %v4037 = vpop.f32.mrf.mxu0
        %4038 = vdwg.mxu0
        %4039 = vrot.lane.b32.xlu0 %v3735, 112
        %v4040 = vpop.permute.xlu0 %4039
        %4041 = vrot.lane.b32.xlu0 %v3735, 48
        %v4042 = vpop.permute.xlu0 %4041
        %v4044 = vsel %vm1870, %v4040, 0
        %v4047 = vsel %vm1870, %v4042, 0
        %4049 = vmatprep.subr.bf16.mxu0 0
        %4050 = vmatpush1.bf16.xpose.msra.mxu0 0
        %4051 = vmatprep.subr.bf16.mxu0 0
        %4052 = vmatpush1.bf16.xpose.msra.mxu0 0
        %4053 = vmatprep.subr.bf16.mxu0 0
        %4054 = vmatpush1.bf16.xpose.msra.mxu0 0
        %4055 = vmatprep.subr.bf16.mxu0 0
        %4056 = vmatpush1.bf16.xpose.msra.mxu0 0
        %4057 = vmatprep.subr.bf16.mxu0 0
        %4058 = vmatpush1.bf16.xpose.msra.mxu0 0
        %4059 = vmatprep.subr.bf16.mxu0 0
        %4060 = vmatpush1.bf16.xpose.msra.mxu0 0
        %4061 = vmatprep.subr.bf16.mxu0 0
        %4062 = vmatpush1.bf16.xpose.msra.mxu0 0
        %4063 = vmatprep.subr.bf16.mxu0 0
        %4064 = vmatpush1.bf16.xpose.msra.mxu0 %v4047
        %4065 = vmatprep.subr.bf16.mxu0 0
        %4066 = vmatpush2.bf16.xpose.msra.mxu0 0
        %4067 = vmatprep.subr.bf16.mxu0 0
        %4068 = vmatpush2.bf16.xpose.msra.mxu0 0
        %4069 = vmatprep.subr.bf16.mxu0 0
        %4070 = vmatpush2.bf16.xpose.msra.mxu0 0
        %4071 = vmatprep.subr.bf16.mxu0 0
        %4072 = vmatpush2.bf16.xpose.msra.mxu0 0
        %4073 = vmatprep.subr.bf16.mxu0 0
        %4074 = vmatpush2.bf16.xpose.msra.mxu0 0
        %4075 = vmatprep.subr.bf16.mxu0 0
        %4076 = vmatpush2.bf16.xpose.msra.mxu0 0
        %4077 = vmatprep.subr.bf16.mxu0 0
        %4078 = vmatpush2.bf16.xpose.msra.mxu0 0
        %4079 = vmatprep.subr.bf16.mxu0 0
        %4080 = vmatpush2.bf16.xpose.msra.mxu0 0
        %4081 = vmatprep.mubr.bf16.mxu0 0
        %4082 = vmatmul.mubr.bf16.gmra.mxu0 %v4044
        %v4083 = vpop.f32.mrf.mxu0
        %v4084 = vadd.f32 %v1676, %v4083
        %v4085 = vpop.f32.mrf.mxu0
        %v4086 = vpop.f32.mrf.mxu0
        %v4087 = vadd.f32 %v1677, %v4086
        %v4088 = vpop.f32.mrf.mxu0
        %4089 = vdwg.mxu0
        %v4090 = vsel %vm1870, %v4033, -inf
        %4091 = vmax.xlane.f32.xlu0 %v4090
        %v4092 = vpop.xlane.xlu0 %4091
        %v4093 = vsel %vm1870, %v4036, -inf
        %4094 = vmax.xlane.f32.xlu0 %v4093
        %v4095 = vpop.xlane.xlu0 %4094
        %v4096 = vsel %vm1870, %v4084, -inf
        %4097 = vmax.xlane.f32.xlu0 %v4096
        %v4098 = vpop.xlane.xlu0 %4097
        %v4099 = vsel %vm1870, %v4087, -inf
        %4100 = vmax.xlane.f32.xlu0 %v4099
        %v4101 = vpop.xlane.xlu0 %4100
        %v4102 = vsub.f32 %v4033, %v4092
        %v4103 = vsub.f32 %v4036, %v4095
        %v4104 = vsub.f32 %v4084, %v4098
        %v4105 = vsub.f32 %v4087, %v4101
        %v4106 = vmul.f32 %v4102, 1.442695
        %v4107 = vpow.pop %v4106
        %v4108 = vmul.f32 %v4103, 1.442695
        %v4109 = vpow.pop %v4108
        %v4110 = vmul.f32 %v4104, 1.442695
        %v4111 = vpow.pop %v4110
        %v4112 = vmul.f32 %v4105, 1.442695
        %v4113 = vpow.pop %v4112
        %v4114 = vsel %vm1870, %v4107, 0.0
        %4115 = vadd.xlane.f32.xlu0 %v4114
        %v4116 = vpop.xlane.xlu0 %4115
        %v4117 = vsel %vm1870, %v4109, 0.0
        %4118 = vadd.xlane.f32.xlu0 %v4117
        %v4119 = vpop.xlane.xlu0 %4118
        %v4120 = vsel %vm1870, %v4111, 0.0
        %4121 = vadd.xlane.f32.xlu0 %v4120
        %v4122 = vpop.xlane.xlu0 %4121
        %v4123 = vsel %vm1870, %v4113, 0.0
        %4124 = vadd.xlane.f32.xlu0 %v4123
        %v4125 = vpop.xlane.xlu0 %4124
        %v4126 = vrcp.pop %v4116
        %v4127 = vrcp.pop %v4119
        %v4128 = vrcp.pop %v4122
        %v4129 = vrcp.pop %v4125
        %v4130 = vmul.f32 %v4107, %v4126
        %v4131 = vmul.f32 %v4109, %v4127
        %v4132 = vmul.f32 %v4111, %v4128
        %v4133 = vmul.f32 %v4113, %v4129
        %v4134 = vld [vmem:[%s2260] sm:$0xff]
        %v4135 = vld [vmem:[%s2260 + $0x8] sm:$0xff]
        %v4136 = vld [vmem:[%s2260 + $0x40] sm:$0xff]
        %v4137 = vld [vmem:[%s2260 + $0x48] sm:$0xff]
        %v4138 = vmul.f32 %v4130, 0.5
        %v4139 = vmul.f32 %v4131, 0.5
        %v4140 = vmul.f32 %v4132, 0.5
        %v4141 = vmul.f32 %v4133, 0.5
        %v4142 = vadd.f32 %v4134, %v4138
        %v4143 = vadd.f32 %v4135, %v4139
        %v4144 = vadd.f32 %v4136, %v4140
        %v4145 = vadd.f32 %v4137, %v4141
        %4146 = vst.msk [vmem:[%s2260] sm:$0xff] %vm1870, %v4142
        %4147 = vst.msk [vmem:[%s2260 + $0x8] sm:$0xff] %vm1870, %v4143
        %4148 = vst.msk [vmem:[%s2260 + $0x40] sm:$0xff] %vm1870, %v4144
        %4149 = vst.msk [vmem:[%s2260 + $0x48] sm:$0xff] %vm1870, %v4145
        %v4150 = vpack.c.bf16 %v4131, %v4130
        %v4151 = vpack.c.bf16 %v4133, %v4132
        %4153 = vrot.lane.b32.xlu0 %v3736, 112
        %v4154 = vpop.permute.xlu0 %4153
        %v4157 = vsel %vm1870, %v4150, 0
        %4159 = vmatprep.subr.bf16.mxu0 0
        %4160 = vmatpush1.bf16.msra.mxu0 0
        %4161 = vmatprep.subr.bf16.mxu0 0
        %4162 = vmatpush1.bf16.msra.mxu0 0
        %4163 = vmatprep.subr.bf16.mxu0 0
        %4164 = vmatpush1.bf16.msra.mxu0 0
        %4165 = vmatprep.subr.bf16.mxu0 0
        %4166 = vmatpush1.bf16.msra.mxu0 0
        %4167 = vmatprep.subr.bf16.mxu0 0
        %4168 = vmatpush1.bf16.msra.mxu0 0
        %4169 = vmatprep.subr.bf16.mxu0 0
        %4170 = vmatpush1.bf16.msra.mxu0 0
        %4171 = vmatprep.subr.bf16.mxu0 0
        %4172 = vmatpush1.bf16.msra.mxu0 0
        %4173 = vmatprep.subr.bf16.mxu0 0
        %4174 = vmatpush1.bf16.msra.mxu0 %v4154
        %4175 = vmatprep.subr.bf16.mxu0 0
        %4176 = vmatpush2.bf16.msra.mxu0 0
        %4177 = vmatprep.subr.bf16.mxu0 0
        %4178 = vmatpush2.bf16.msra.mxu0 0
        %4179 = vmatprep.subr.bf16.mxu0 0
        %4180 = vmatpush2.bf16.msra.mxu0 0
        %4181 = vmatprep.subr.bf16.mxu0 0
        %4182 = vmatpush2.bf16.msra.mxu0 0
        %4183 = vmatprep.subr.bf16.mxu0 0
        %4184 = vmatpush2.bf16.msra.mxu0 0
        %4185 = vmatprep.subr.bf16.mxu0 0
        %4186 = vmatpush2.bf16.msra.mxu0 0
        %4187 = vmatprep.subr.bf16.mxu0 0
        %4188 = vmatpush2.bf16.msra.mxu0 0
        %4189 = vmatprep.subr.bf16.mxu0 0
        %4190 = vmatpush2.bf16.msra.mxu0 0
        %4191 = vmatprep.mubr.bf16.mxu0 0
        %4192 = vmatmul.mubr.bf16.gmra.mxu0 %v4157
        %v4193 = vpop.f32.mrf.mxu0
        %v4194 = vadd.f32 0.0, %v4193
        %v4195 = vpop.f32.mrf.mxu0
        %v4196 = vpop.f32.mrf.mxu0
        %v4197 = vadd.f32 0.0, %v4196
        %v4198 = vpop.f32.mrf.mxu0
        %4199 = vdwg.mxu0
        %4201 = vrot.lane.b32.xlu0 %v3737, 112
        %v4202 = vpop.permute.xlu0 %4201
        %v4205 = vsel %vm1870, %v4151, 0
        %4207 = vmatprep.subr.bf16.mxu0 0
        %4208 = vmatpush1.bf16.msra.mxu0 0
        %4209 = vmatprep.subr.bf16.mxu0 0
        %4210 = vmatpush1.bf16.msra.mxu0 0
        %4211 = vmatprep.subr.bf16.mxu0 0
        %4212 = vmatpush1.bf16.msra.mxu0 0
        %4213 = vmatprep.subr.bf16.mxu0 0
        %4214 = vmatpush1.bf16.msra.mxu0 0
        %4215 = vmatprep.subr.bf16.mxu0 0
        %4216 = vmatpush1.bf16.msra.mxu0 0
        %4217 = vmatprep.subr.bf16.mxu0 0
        %4218 = vmatpush1.bf16.msra.mxu0 0
        %4219 = vmatprep.subr.bf16.mxu0 0
        %4220 = vmatpush1.bf16.msra.mxu0 0
        %4221 = vmatprep.subr.bf16.mxu0 0
        %4222 = vmatpush1.bf16.msra.mxu0 %v4202
        %4223 = vmatprep.subr.bf16.mxu0 0
        %4224 = vmatpush2.bf16.msra.mxu0 0
        %4225 = vmatprep.subr.bf16.mxu0 0
        %4226 = vmatpush2.bf16.msra.mxu0 0
        %4227 = vmatprep.subr.bf16.mxu0 0
        %4228 = vmatpush2.bf16.msra.mxu0 0
        %4229 = vmatprep.subr.bf16.mxu0 0
        %4230 = vmatpush2.bf16.msra.mxu0 0
        %4231 = vmatprep.subr.bf16.mxu0 0
        %4232 = vmatpush2.bf16.msra.mxu0 0
        %4233 = vmatprep.subr.bf16.mxu0 0
        %4234 = vmatpush2.bf16.msra.mxu0 0
        %4235 = vmatprep.subr.bf16.mxu0 0
        %4236 = vmatpush2.bf16.msra.mxu0 0
        %4237 = vmatprep.subr.bf16.mxu0 0
        %4238 = vmatpush2.bf16.msra.mxu0 0
        %4239 = vmatprep.mubr.bf16.mxu0 0
        %4240 = vmatmul.mubr.bf16.gmra.mxu0 %v4205
        %v4241 = vpop.f32.mrf.mxu0
        %v4242 = vadd.f32 0.0, %v4241
        %v4243 = vpop.f32.mrf.mxu0
        %v4244 = vpop.f32.mrf.mxu0
        %v4245 = vadd.f32 0.0, %v4244
        %v4246 = vpop.f32.mrf.mxu0
        %4247 = vdwg.mxu0
        %4248 = vrot.lane.b32.xlu0 %v3734, 96
        %v4249 = vpop.permute.xlu0 %4248
        %4250 = vrot.lane.b32.xlu0 %v3734, 32
        %v4251 = vpop.permute.xlu0 %4250
        %v4253 = vsel %vm1870, %v4249, 0
        %v4256 = vsel %vm1870, %v4251, 0
        %4258 = vmatprep.subr.bf16.mxu0 0
        %4259 = vmatpush1.bf16.xpose.msra.mxu0 0
        %4260 = vmatprep.subr.bf16.mxu0 0
        %4261 = vmatpush1.bf16.xpose.msra.mxu0 0
        %4262 = vmatprep.subr.bf16.mxu0 0
        %4263 = vmatpush1.bf16.xpose.msra.mxu0 0
        %4264 = vmatprep.subr.bf16.mxu0 0
        %4265 = vmatpush1.bf16.xpose.msra.mxu0 0
        %4266 = vmatprep.subr.bf16.mxu0 0
        %4267 = vmatpush1.bf16.xpose.msra.mxu0 0
        %4268 = vmatprep.subr.bf16.mxu0 0
        %4269 = vmatpush1.bf16.xpose.msra.mxu0 0
        %4270 = vmatprep.subr.bf16.mxu0 0
        %4271 = vmatpush1.bf16.xpose.msra.mxu0 0
        %4272 = vmatprep.subr.bf16.mxu0 0
        %4273 = vmatpush1.bf16.xpose.msra.mxu0 %v4256
        %4274 = vmatprep.subr.bf16.mxu0 0
        %4275 = vmatpush2.bf16.xpose.msra.mxu0 0
        %4276 = vmatprep.subr.bf16.mxu0 0
        %4277 = vmatpush2.bf16.xpose.msra.mxu0 0
        %4278 = vmatprep.subr.bf16.mxu0 0
        %4279 = vmatpush2.bf16.xpose.msra.mxu0 0
        %4280 = vmatprep.subr.bf16.mxu0 0
        %4281 = vmatpush2.bf16.xpose.msra.mxu0 0
        %4282 = vmatprep.subr.bf16.mxu0 0
        %4283 = vmatpush2.bf16.xpose.msra.mxu0 0
        %4284 = vmatprep.subr.bf16.mxu0 0
        %4285 = vmatpush2.bf16.xpose.msra.mxu0 0
        %4286 = vmatprep.subr.bf16.mxu0 0
        %4287 = vmatpush2.bf16.xpose.msra.mxu0 0
        %4288 = vmatprep.subr.bf16.mxu0 0
        %4289 = vmatpush2.bf16.xpose.msra.mxu0 0
        %4290 = vmatprep.mubr.bf16.mxu0 0
        %4291 = vmatmul.mubr.bf16.gmra.mxu0 %v4253
        %v4292 = vpop.f32.mrf.mxu0
        %v4293 = vadd.f32 %v1676, %v4292
        %v4294 = vpop.f32.mrf.mxu0
        %v4295 = vpop.f32.mrf.mxu0
        %v4296 = vadd.f32 %v1677, %v4295
        %v4297 = vpop.f32.mrf.mxu0
        %4298 = vdwg.mxu0
        %4299 = vrot.lane.b32.xlu0 %v3735, 96
        %v4300 = vpop.permute.xlu0 %4299
        %4301 = vrot.lane.b32.xlu0 %v3735, 32
        %v4302 = vpop.permute.xlu0 %4301
        %v4304 = vsel %vm1870, %v4300, 0
        %v4307 = vsel %vm1870, %v4302, 0
        %4309 = vmatprep.subr.bf16.mxu0 0
        %4310 = vmatpush1.bf16.xpose.msra.mxu0 0
        %4311 = vmatprep.subr.bf16.mxu0 0
        %4312 = vmatpush1.bf16.xpose.msra.mxu0 0
        %4313 = vmatprep.subr.bf16.mxu0 0
        %4314 = vmatpush1.bf16.xpose.msra.mxu0 0
        %4315 = vmatprep.subr.bf16.mxu0 0
        %4316 = vmatpush1.bf16.xpose.msra.mxu0 0
        %4317 = vmatprep.subr.bf16.mxu0 0
        %4318 = vmatpush1.bf16.xpose.msra.mxu0 0
        %4319 = vmatprep.subr.bf16.mxu0 0
        %4320 = vmatpush1.bf16.xpose.msra.mxu0 0
        %4321 = vmatprep.subr.bf16.mxu0 0
        %4322 = vmatpush1.bf16.xpose.msra.mxu0 0
        %4323 = vmatprep.subr.bf16.mxu0 0
        %4324 = vmatpush1.bf16.xpose.msra.mxu0 %v4307
        %4325 = vmatprep.subr.bf16.mxu0 0
        %4326 = vmatpush2.bf16.xpose.msra.mxu0 0
        %4327 = vmatprep.subr.bf16.mxu0 0
        %4328 = vmatpush2.bf16.xpose.msra.mxu0 0
        %4329 = vmatprep.subr.bf16.mxu0 0
        %4330 = vmatpush2.bf16.xpose.msra.mxu0 0
        %4331 = vmatprep.subr.bf16.mxu0 0
        %4332 = vmatpush2.bf16.xpose.msra.mxu0 0
        %4333 = vmatprep.subr.bf16.mxu0 0
        %4334 = vmatpush2.bf16.xpose.msra.mxu0 0
        %4335 = vmatprep.subr.bf16.mxu0 0
        %4336 = vmatpush2.bf16.xpose.msra.mxu0 0
        %4337 = vmatprep.subr.bf16.mxu0 0
        %4338 = vmatpush2.bf16.xpose.msra.mxu0 0
        %4339 = vmatprep.subr.bf16.mxu0 0
        %4340 = vmatpush2.bf16.xpose.msra.mxu0 0
        %4341 = vmatprep.mubr.bf16.mxu0 0
        %4342 = vmatmul.mubr.bf16.gmra.mxu0 %v4304
        %v4343 = vpop.f32.mrf.mxu0
        %v4344 = vadd.f32 %v1676, %v4343
        %v4345 = vpop.f32.mrf.mxu0
        %v4346 = vpop.f32.mrf.mxu0
        %v4347 = vadd.f32 %v1677, %v4346
        %v4348 = vpop.f32.mrf.mxu0
        %4349 = vdwg.mxu0
        %v4350 = vsel %vm1870, %v4293, -inf
        %4351 = vmax.xlane.f32.xlu0 %v4350
        %v4352 = vpop.xlane.xlu0 %4351
        %v4353 = vsel %vm1870, %v4296, -inf
        %4354 = vmax.xlane.f32.xlu0 %v4353
        %v4355 = vpop.xlane.xlu0 %4354
        %v4356 = vsel %vm1870, %v4344, -inf
        %4357 = vmax.xlane.f32.xlu0 %v4356
        %v4358 = vpop.xlane.xlu0 %4357
        %v4359 = vsel %vm1870, %v4347, -inf
        %4360 = vmax.xlane.f32.xlu0 %v4359
        %v4361 = vpop.xlane.xlu0 %4360
        %v4362 = vsub.f32 %v4293, %v4352
        %v4363 = vsub.f32 %v4296, %v4355
        %v4364 = vsub.f32 %v4344, %v4358
        %v4365 = vsub.f32 %v4347, %v4361
        %v4366 = vmul.f32 %v4362, 1.442695
        %v4367 = vpow.pop %v4366
        %v4368 = vmul.f32 %v4363, 1.442695
        %v4369 = vpow.pop %v4368
        %v4370 = vmul.f32 %v4364, 1.442695
        %v4371 = vpow.pop %v4370
        %v4372 = vmul.f32 %v4365, 1.442695
        %v4373 = vpow.pop %v4372
        %v4374 = vsel %vm1870, %v4367, 0.0
        %4375 = vadd.xlane.f32.xlu0 %v4374
        %v4376 = vpop.xlane.xlu0 %4375
        %v4377 = vsel %vm1870, %v4369, 0.0
        %4378 = vadd.xlane.f32.xlu0 %v4377
        %v4379 = vpop.xlane.xlu0 %4378
        %v4380 = vsel %vm1870, %v4371, 0.0
        %4381 = vadd.xlane.f32.xlu0 %v4380
        %v4382 = vpop.xlane.xlu0 %4381
        %v4383 = vsel %vm1870, %v4373, 0.0
        %4384 = vadd.xlane.f32.xlu0 %v4383
        %v4385 = vpop.xlane.xlu0 %4384
        %v4386 = vrcp.pop %v4376
        %v4387 = vrcp.pop %v4379
        %v4388 = vrcp.pop %v4382
        %v4389 = vrcp.pop %v4385
        %v4390 = vmul.f32 %v4367, %v4386
        %v4391 = vmul.f32 %v4369, %v4387
        %v4392 = vmul.f32 %v4371, %v4388
        %v4393 = vmul.f32 %v4373, %v4389
        %v4394 = vld [vmem:[%s2513] sm:$0xff]
        %v4395 = vld [vmem:[%s2513 + $0x8] sm:$0xff]
        %v4396 = vld [vmem:[%s2513 + $0x40] sm:$0xff]
        %v4397 = vld [vmem:[%s2513 + $0x48] sm:$0xff]
        %v4398 = vmul.f32 %v4390, 0.5
        %v4399 = vmul.f32 %v4391, 0.5
        %v4400 = vmul.f32 %v4392, 0.5
        %v4401 = vmul.f32 %v4393, 0.5
        %v4402 = vadd.f32 %v4394, %v4398
        %v4403 = vadd.f32 %v4395, %v4399
        %v4404 = vadd.f32 %v4396, %v4400
        %v4405 = vadd.f32 %v4397, %v4401
        %4406 = vst.msk [vmem:[%s2513] sm:$0xff] %vm1870, %v4402
        %4407 = vst.msk [vmem:[%s2513 + $0x8] sm:$0xff] %vm1870, %v4403
        %4408 = vst.msk [vmem:[%s2513 + $0x40] sm:$0xff] %vm1870, %v4404
        %4409 = vst.msk [vmem:[%s2513 + $0x48] sm:$0xff] %vm1870, %v4405
        %v4410 = vpack.c.bf16 %v4391, %v4390
        %v4411 = vpack.c.bf16 %v4393, %v4392
        %4412 = vrot.lane.b32.xlu0 %v3736, 96
        %v4413 = vpop.permute.xlu0 %4412
        %v4416 = vsel %vm1870, %v4410, 0
        %4418 = vmatprep.subr.bf16.mxu0 0
        %4419 = vmatpush1.bf16.msra.mxu0 0
        %4420 = vmatprep.subr.bf16.mxu0 0
        %4421 = vmatpush1.bf16.msra.mxu0 0
        %4422 = vmatprep.subr.bf16.mxu0 0
        %4423 = vmatpush1.bf16.msra.mxu0 0
        %4424 = vmatprep.subr.bf16.mxu0 0
        %4425 = vmatpush1.bf16.msra.mxu0 0
        %4426 = vmatprep.subr.bf16.mxu0 0
        %4427 = vmatpush1.bf16.msra.mxu0 0
        %4428 = vmatprep.subr.bf16.mxu0 0
        %4429 = vmatpush1.bf16.msra.mxu0 0
        %4430 = vmatprep.subr.bf16.mxu0 0
        %4431 = vmatpush1.bf16.msra.mxu0 0
        %4432 = vmatprep.subr.bf16.mxu0 0
        %4433 = vmatpush1.bf16.msra.mxu0 %v4413
        %4434 = vmatprep.subr.bf16.mxu0 0
        %4435 = vmatpush2.bf16.msra.mxu0 0
        %4436 = vmatprep.subr.bf16.mxu0 0
        %4437 = vmatpush2.bf16.msra.mxu0 0
        %4438 = vmatprep.subr.bf16.mxu0 0
        %4439 = vmatpush2.bf16.msra.mxu0 0
        %4440 = vmatprep.subr.bf16.mxu0 0
        %4441 = vmatpush2.bf16.msra.mxu0 0
        %4442 = vmatprep.subr.bf16.mxu0 0
        %4443 = vmatpush2.bf16.msra.mxu0 0
        %4444 = vmatprep.subr.bf16.mxu0 0
        %4445 = vmatpush2.bf16.msra.mxu0 0
        %4446 = vmatprep.subr.bf16.mxu0 0
        %4447 = vmatpush2.bf16.msra.mxu0 0
        %4448 = vmatprep.subr.bf16.mxu0 0
        %4449 = vmatpush2.bf16.msra.mxu0 0
        %4450 = vmatprep.mubr.bf16.mxu0 0
        %4451 = vmatmul.mubr.bf16.gmra.mxu0 %v4416
        %v4452 = vpop.f32.mrf.mxu0
        %v4453 = vadd.f32 0.0, %v4452
        %v4454 = vpop.f32.mrf.mxu0
        %v4455 = vpop.f32.mrf.mxu0
        %v4456 = vadd.f32 0.0, %v4455
        %v4457 = vpop.f32.mrf.mxu0
        %4458 = vdwg.mxu0
        %4459 = vrot.lane.b32.xlu0 %v3737, 96
        %v4460 = vpop.permute.xlu0 %4459
        %v4463 = vsel %vm1870, %v4411, 0
        %4465 = vmatprep.subr.bf16.mxu0 0
        %4466 = vmatpush1.bf16.msra.mxu0 0
        %4467 = vmatprep.subr.bf16.mxu0 0
        %4468 = vmatpush1.bf16.msra.mxu0 0
        %4469 = vmatprep.subr.bf16.mxu0 0
        %4470 = vmatpush1.bf16.msra.mxu0 0
        %4471 = vmatprep.subr.bf16.mxu0 0
        %4472 = vmatpush1.bf16.msra.mxu0 0
        %4473 = vmatprep.subr.bf16.mxu0 0
        %4474 = vmatpush1.bf16.msra.mxu0 0
        %4475 = vmatprep.subr.bf16.mxu0 0
        %4476 = vmatpush1.bf16.msra.mxu0 0
        %4477 = vmatprep.subr.bf16.mxu0 0
        %4478 = vmatpush1.bf16.msra.mxu0 0
        %4479 = vmatprep.subr.bf16.mxu0 0
        %4480 = vmatpush1.bf16.msra.mxu0 %v4460
        %4481 = vmatprep.subr.bf16.mxu0 0
        %4482 = vmatpush2.bf16.msra.mxu0 0
        %4483 = vmatprep.subr.bf16.mxu0 0
        %4484 = vmatpush2.bf16.msra.mxu0 0
        %4485 = vmatprep.subr.bf16.mxu0 0
        %4486 = vmatpush2.bf16.msra.mxu0 0
        %4487 = vmatprep.subr.bf16.mxu0 0
        %4488 = vmatpush2.bf16.msra.mxu0 0
        %4489 = vmatprep.subr.bf16.mxu0 0
        %4490 = vmatpush2.bf16.msra.mxu0 0
        %4491 = vmatprep.subr.bf16.mxu0 0
        %4492 = vmatpush2.bf16.msra.mxu0 0
        %4493 = vmatprep.subr.bf16.mxu0 0
        %4494 = vmatpush2.bf16.msra.mxu0 0
        %4495 = vmatprep.subr.bf16.mxu0 0
        %4496 = vmatpush2.bf16.msra.mxu0 0
        %4497 = vmatprep.mubr.bf16.mxu0 0
        %4498 = vmatmul.mubr.bf16.gmra.mxu0 %v4463
        %v4499 = vpop.f32.mrf.mxu0
        %v4500 = vadd.f32 0.0, %v4499
        %v4501 = vpop.f32.mrf.mxu0
        %v4502 = vpop.f32.mrf.mxu0
        %v4503 = vadd.f32 0.0, %v4502
        %v4504 = vpop.f32.mrf.mxu0
        %4505 = vdwg.mxu0
        %4506 = vrot.lane.b32.xlu0 %v3734, 80
        %v4507 = vpop.permute.xlu0 %4506
        %4508 = vrot.lane.b32.xlu0 %v3734, 16
        %v4509 = vpop.permute.xlu0 %4508
        %v4511 = vsel %vm1870, %v4507, 0
        %v4514 = vsel %vm1870, %v4509, 0
        %4516 = vmatprep.subr.bf16.mxu0 0
        %4517 = vmatpush1.bf16.xpose.msra.mxu0 0
        %4518 = vmatprep.subr.bf16.mxu0 0
        %4519 = vmatpush1.bf16.xpose.msra.mxu0 0
        %4520 = vmatprep.subr.bf16.mxu0 0
        %4521 = vmatpush1.bf16.xpose.msra.mxu0 0
        %4522 = vmatprep.subr.bf16.mxu0 0
        %4523 = vmatpush1.bf16.xpose.msra.mxu0 0
        %4524 = vmatprep.subr.bf16.mxu0 0
        %4525 = vmatpush1.bf16.xpose.msra.mxu0 0
        %4526 = vmatprep.subr.bf16.mxu0 0
        %4527 = vmatpush1.bf16.xpose.msra.mxu0 0
        %4528 = vmatprep.subr.bf16.mxu0 0
        %4529 = vmatpush1.bf16.xpose.msra.mxu0 0
        %4530 = vmatprep.subr.bf16.mxu0 0
        %4531 = vmatpush1.bf16.xpose.msra.mxu0 %v4514
        %4532 = vmatprep.subr.bf16.mxu0 0
        %4533 = vmatpush2.bf16.xpose.msra.mxu0 0
        %4534 = vmatprep.subr.bf16.mxu0 0
        %4535 = vmatpush2.bf16.xpose.msra.mxu0 0
        %4536 = vmatprep.subr.bf16.mxu0 0
        %4537 = vmatpush2.bf16.xpose.msra.mxu0 0
        %4538 = vmatprep.subr.bf16.mxu0 0
        %4539 = vmatpush2.bf16.xpose.msra.mxu0 0
        %4540 = vmatprep.subr.bf16.mxu0 0
        %4541 = vmatpush2.bf16.xpose.msra.mxu0 0
        %4542 = vmatprep.subr.bf16.mxu0 0
        %4543 = vmatpush2.bf16.xpose.msra.mxu0 0
        %4544 = vmatprep.subr.bf16.mxu0 0
        %4545 = vmatpush2.bf16.xpose.msra.mxu0 0
        %4546 = vmatprep.subr.bf16.mxu0 0
        %4547 = vmatpush2.bf16.xpose.msra.mxu0 0
        %4548 = vmatprep.mubr.bf16.mxu0 0
        %4549 = vmatmul.mubr.bf16.gmra.mxu0 %v4511
        %v4550 = vpop.f32.mrf.mxu0
        %v4551 = vadd.f32 %v1676, %v4550
        %v4552 = vpop.f32.mrf.mxu0
        %v4553 = vpop.f32.mrf.mxu0
        %v4554 = vadd.f32 %v1677, %v4553
        %v4555 = vpop.f32.mrf.mxu0
        %4556 = vdwg.mxu0
        %4557 = vrot.lane.b32.xlu0 %v3735, 80
        %v4558 = vpop.permute.xlu0 %4557
        %4559 = vrot.lane.b32.xlu0 %v3735, 16
        %v4560 = vpop.permute.xlu0 %4559
        %v4562 = vsel %vm1870, %v4558, 0
        %v4565 = vsel %vm1870, %v4560, 0
        %4567 = vmatprep.subr.bf16.mxu0 0
        %4568 = vmatpush1.bf16.xpose.msra.mxu0 0
        %4569 = vmatprep.subr.bf16.mxu0 0
        %4570 = vmatpush1.bf16.xpose.msra.mxu0 0
        %4571 = vmatprep.subr.bf16.mxu0 0
        %4572 = vmatpush1.bf16.xpose.msra.mxu0 0
        %4573 = vmatprep.subr.bf16.mxu0 0
        %4574 = vmatpush1.bf16.xpose.msra.mxu0 0
        %4575 = vmatprep.subr.bf16.mxu0 0
        %4576 = vmatpush1.bf16.xpose.msra.mxu0 0
        %4577 = vmatprep.subr.bf16.mxu0 0
        %4578 = vmatpush1.bf16.xpose.msra.mxu0 0
        %4579 = vmatprep.subr.bf16.mxu0 0
        %4580 = vmatpush1.bf16.xpose.msra.mxu0 0
        %4581 = vmatprep.subr.bf16.mxu0 0
        %4582 = vmatpush1.bf16.xpose.msra.mxu0 %v4565
        %4583 = vmatprep.subr.bf16.mxu0 0
        %4584 = vmatpush2.bf16.xpose.msra.mxu0 0
        %4585 = vmatprep.subr.bf16.mxu0 0
        %4586 = vmatpush2.bf16.xpose.msra.mxu0 0
        %4587 = vmatprep.subr.bf16.mxu0 0
        %4588 = vmatpush2.bf16.xpose.msra.mxu0 0
        %4589 = vmatprep.subr.bf16.mxu0 0
        %4590 = vmatpush2.bf16.xpose.msra.mxu0 0
        %4591 = vmatprep.subr.bf16.mxu0 0
        %4592 = vmatpush2.bf16.xpose.msra.mxu0 0
        %4593 = vmatprep.subr.bf16.mxu0 0
        %4594 = vmatpush2.bf16.xpose.msra.mxu0 0
        %4595 = vmatprep.subr.bf16.mxu0 0
        %4596 = vmatpush2.bf16.xpose.msra.mxu0 0
        %4597 = vmatprep.subr.bf16.mxu0 0
        %4598 = vmatpush2.bf16.xpose.msra.mxu0 0
        %4599 = vmatprep.mubr.bf16.mxu0 0
        %4600 = vmatmul.mubr.bf16.gmra.mxu0 %v4562
        %v4601 = vpop.f32.mrf.mxu0
        %v4602 = vadd.f32 %v1676, %v4601
        %v4603 = vpop.f32.mrf.mxu0
        %v4604 = vpop.f32.mrf.mxu0
        %v4605 = vadd.f32 %v1677, %v4604
        %v4606 = vpop.f32.mrf.mxu0
        %4607 = vdwg.mxu0
        %v4608 = vsel %vm1870, %v4551, -inf
        %4609 = vmax.xlane.f32.xlu0 %v4608
        %v4610 = vpop.xlane.xlu0 %4609
        %v4611 = vsel %vm1870, %v4554, -inf
        %4612 = vmax.xlane.f32.xlu0 %v4611
        %v4613 = vpop.xlane.xlu0 %4612
        %v4614 = vsel %vm1870, %v4602, -inf
        %4615 = vmax.xlane.f32.xlu0 %v4614
        %v4616 = vpop.xlane.xlu0 %4615
        %v4617 = vsel %vm1870, %v4605, -inf
        %4618 = vmax.xlane.f32.xlu0 %v4617
        %v4619 = vpop.xlane.xlu0 %4618
        %v4620 = vsub.f32 %v4551, %v4610
        %v4621 = vsub.f32 %v4554, %v4613
        %v4622 = vsub.f32 %v4602, %v4616
        %v4623 = vsub.f32 %v4605, %v4619
        %v4624 = vmul.f32 %v4620, 1.442695
        %v4625 = vpow.pop %v4624
        %v4626 = vmul.f32 %v4621, 1.442695
        %v4627 = vpow.pop %v4626
        %v4628 = vmul.f32 %v4622, 1.442695
        %v4629 = vpow.pop %v4628
        %v4630 = vmul.f32 %v4623, 1.442695
        %v4631 = vpow.pop %v4630
        %v4632 = vsel %vm1870, %v4625, 0.0
        %4633 = vadd.xlane.f32.xlu0 %v4632
        %v4634 = vpop.xlane.xlu0 %4633
        %v4635 = vsel %vm1870, %v4627, 0.0
        %4636 = vadd.xlane.f32.xlu0 %v4635
        %v4637 = vpop.xlane.xlu0 %4636
        %v4638 = vsel %vm1870, %v4629, 0.0
        %4639 = vadd.xlane.f32.xlu0 %v4638
        %v4640 = vpop.xlane.xlu0 %4639
        %v4641 = vsel %vm1870, %v4631, 0.0
        %4642 = vadd.xlane.f32.xlu0 %v4641
        %v4643 = vpop.xlane.xlu0 %4642
        %v4644 = vrcp.pop %v4634
        %v4645 = vrcp.pop %v4637
        %v4646 = vrcp.pop %v4640
        %v4647 = vrcp.pop %v4643
        %v4648 = vmul.f32 %v4625, %v4644
        %v4649 = vmul.f32 %v4627, %v4645
        %v4650 = vmul.f32 %v4629, %v4646
        %v4651 = vmul.f32 %v4631, %v4647
        %v4652 = vld [vmem:[%s2764] sm:$0xff]
        %v4653 = vld [vmem:[%s2764 + $0x8] sm:$0xff]
        %v4654 = vld [vmem:[%s2764 + $0x40] sm:$0xff]
        %v4655 = vld [vmem:[%s2764 + $0x48] sm:$0xff]
        %v4656 = vmul.f32 %v4648, 0.5
        %v4657 = vmul.f32 %v4649, 0.5
        %v4658 = vmul.f32 %v4650, 0.5
        %v4659 = vmul.f32 %v4651, 0.5
        %v4660 = vadd.f32 %v4652, %v4656
        %v4661 = vadd.f32 %v4653, %v4657
        %v4662 = vadd.f32 %v4654, %v4658
        %v4663 = vadd.f32 %v4655, %v4659
        %4664 = vst.msk [vmem:[%s2764] sm:$0xff] %vm1870, %v4660
        %4665 = vst.msk [vmem:[%s2764 + $0x8] sm:$0xff] %vm1870, %v4661
        %4666 = vst.msk [vmem:[%s2764 + $0x40] sm:$0xff] %vm1870, %v4662
        %4667 = vst.msk [vmem:[%s2764 + $0x48] sm:$0xff] %vm1870, %v4663
        %v4668 = vpack.c.bf16 %v4649, %v4648
        %v4669 = vpack.c.bf16 %v4651, %v4650
        %4670 = vrot.lane.b32.xlu0 %v3736, 80
        %v4671 = vpop.permute.xlu0 %4670
        %v4674 = vsel %vm1870, %v4668, 0
        %4676 = vmatprep.subr.bf16.mxu0 0
        %4677 = vmatpush1.bf16.msra.mxu0 0
        %4678 = vmatprep.subr.bf16.mxu0 0
        %4679 = vmatpush1.bf16.msra.mxu0 0
        %4680 = vmatprep.subr.bf16.mxu0 0
        %4681 = vmatpush1.bf16.msra.mxu0 0
        %4682 = vmatprep.subr.bf16.mxu0 0
        %4683 = vmatpush1.bf16.msra.mxu0 0
        %4684 = vmatprep.subr.bf16.mxu0 0
        %4685 = vmatpush1.bf16.msra.mxu0 0
        %4686 = vmatprep.subr.bf16.mxu0 0
        %4687 = vmatpush1.bf16.msra.mxu0 0
        %4688 = vmatprep.subr.bf16.mxu0 0
        %4689 = vmatpush1.bf16.msra.mxu0 0
        %4690 = vmatprep.subr.bf16.mxu0 0
        %4691 = vmatpush1.bf16.msra.mxu0 %v4671
        %4692 = vmatprep.subr.bf16.mxu0 0
        %4693 = vmatpush2.bf16.msra.mxu0 0
        %4694 = vmatprep.subr.bf16.mxu0 0
        %4695 = vmatpush2.bf16.msra.mxu0 0
        %4696 = vmatprep.subr.bf16.mxu0 0
        %4697 = vmatpush2.bf16.msra.mxu0 0
        %4698 = vmatprep.subr.bf16.mxu0 0
        %4699 = vmatpush2.bf16.msra.mxu0 0
        %4700 = vmatprep.subr.bf16.mxu0 0
        %4701 = vmatpush2.bf16.msra.mxu0 0
        %4702 = vmatprep.subr.bf16.mxu0 0
        %4703 = vmatpush2.bf16.msra.mxu0 0
        %4704 = vmatprep.subr.bf16.mxu0 0
        %4705 = vmatpush2.bf16.msra.mxu0 0
        %4706 = vmatprep.subr.bf16.mxu0 0
        %4707 = vmatpush2.bf16.msra.mxu0 0
        %4708 = vmatprep.mubr.bf16.mxu0 0
        %4709 = vmatmul.mubr.bf16.gmra.mxu0 %v4674
        %v4710 = vpop.f32.mrf.mxu0
        %v4711 = vadd.f32 0.0, %v4710
        %v4712 = vpop.f32.mrf.mxu0
        %v4713 = vpop.f32.mrf.mxu0
        %v4714 = vadd.f32 0.0, %v4713
        %v4715 = vpop.f32.mrf.mxu0
        %4716 = vdwg.mxu0
        %4717 = vrot.lane.b32.xlu0 %v3737, 80
        %v4718 = vpop.permute.xlu0 %4717
        %v4721 = vsel %vm1870, %v4669, 0
        %4723 = vmatprep.subr.bf16.mxu0 0
        %4724 = vmatpush1.bf16.msra.mxu0 0
        %4725 = vmatprep.subr.bf16.mxu0 0
        %4726 = vmatpush1.bf16.msra.mxu0 0
        %4727 = vmatprep.subr.bf16.mxu0 0
        %4728 = vmatpush1.bf16.msra.mxu0 0
        %4729 = vmatprep.subr.bf16.mxu0 0
        %4730 = vmatpush1.bf16.msra.mxu0 0
        %4731 = vmatprep.subr.bf16.mxu0 0
        %4732 = vmatpush1.bf16.msra.mxu0 0
        %4733 = vmatprep.subr.bf16.mxu0 0
        %4734 = vmatpush1.bf16.msra.mxu0 0
        %4735 = vmatprep.subr.bf16.mxu0 0
        %4736 = vmatpush1.bf16.msra.mxu0 0
        %4737 = vmatprep.subr.bf16.mxu0 0
        %4738 = vmatpush1.bf16.msra.mxu0 %v4718
        %4739 = vmatprep.subr.bf16.mxu0 0
        %4740 = vmatpush2.bf16.msra.mxu0 0
        %4741 = vmatprep.subr.bf16.mxu0 0
        %4742 = vmatpush2.bf16.msra.mxu0 0
        %4743 = vmatprep.subr.bf16.mxu0 0
        %4744 = vmatpush2.bf16.msra.mxu0 0
        %4745 = vmatprep.subr.bf16.mxu0 0
        %4746 = vmatpush2.bf16.msra.mxu0 0
        %4747 = vmatprep.subr.bf16.mxu0 0
        %4748 = vmatpush2.bf16.msra.mxu0 0
        %4749 = vmatprep.subr.bf16.mxu0 0
        %4750 = vmatpush2.bf16.msra.mxu0 0
        %4751 = vmatprep.subr.bf16.mxu0 0
        %4752 = vmatpush2.bf16.msra.mxu0 0
        %4753 = vmatprep.subr.bf16.mxu0 0
        %4754 = vmatpush2.bf16.msra.mxu0 0
        %4755 = vmatprep.mubr.bf16.mxu0 0
        %4756 = vmatmul.mubr.bf16.gmra.mxu0 %v4721
        %v4757 = vpop.f32.mrf.mxu0
        %v4758 = vadd.f32 0.0, %v4757
        %v4759 = vpop.f32.mrf.mxu0
        %v4760 = vpop.f32.mrf.mxu0
        %v4761 = vadd.f32 0.0, %v4760
        %v4762 = vpop.f32.mrf.mxu0
        %4763 = vdwg.mxu0
        %4768 = vrot.lane.b32.xlu0 %v4194, 16
        %v4769 = vpop.permute.xlu0 %4768
        %4770 = vrot.lane.b32.xlu0 %v4197, 16
        %v4771 = vpop.permute.xlu0 %4770
        %4772 = vrot.lane.b32.xlu0 %v4242, 16
        %v4773 = vpop.permute.xlu0 %4772
        %4774 = vrot.lane.b32.xlu0 %v4245, 16
        %v4775 = vpop.permute.xlu0 %4774
        %4784 = vrot.lane.b32.xlu0 %v4453, 32
        %v4785 = vpop.permute.xlu0 %4784
        %4786 = vrot.lane.b32.xlu0 %v4456, 32
        %v4787 = vpop.permute.xlu0 %4786
        %4788 = vrot.lane.b32.xlu0 %v4500, 32
        %v4789 = vpop.permute.xlu0 %4788
        %4790 = vrot.lane.b32.xlu0 %v4503, 32
        %v4791 = vpop.permute.xlu0 %4790
        %4800 = vrot.lane.b32.xlu0 %v4711, 48
        %v4801 = vpop.permute.xlu0 %4800
        %4802 = vrot.lane.b32.xlu0 %v4714, 48
        %v4803 = vpop.permute.xlu0 %4802
        %4804 = vrot.lane.b32.xlu0 %v4758, 48
        %v4805 = vpop.permute.xlu0 %4804
        %4806 = vrot.lane.b32.xlu0 %v4761, 48
        %v4807 = vpop.permute.xlu0 %4806
        %v4812 = vsel %vm1870, %v3938, %v4769
        %v4813 = vsel %vm1870, %v3941, %v4771
        %v4814 = vsel %vm1870, %v3982, %v4773
        %v4815 = vsel %vm1870, %v3985, %v4775
        %v4816 = vsel %vm2917, %v4812, %v4785
        %v4817 = vsel %vm2917, %v4813, %v4787
        %v4818 = vsel %vm2917, %v4814, %v4789
        %v4819 = vsel %vm2917, %v4815, %v4791
        %v4820 = vsel %vm2922, %v4816, %v4801
        %v4821 = vsel %vm2922, %v4817, %v4803
        %v4822 = vsel %vm2922, %v4818, %v4805
        %v4823 = vsel %vm2922, %v4819, %v4807
        %v4824 = vld [vmem:[#allocation23] sm:$0xf]
        %v4825 = vld [vmem:[#allocation23 + $0x4] sm:$0xf]
        %v4826 = vld [vmem:[#allocation23 + $0x8] sm:$0xf]
        %v4827 = vld [vmem:[#allocation23 + $0xc] sm:$0xf]
        %v4828 = vld [vmem:[#allocation23 + $0x10] sm:$0xf]
        %v4829 = vld [vmem:[#allocation23 + $0x14] sm:$0xf]
        %v4830 = vld [vmem:[#allocation23 + $0x18] sm:$0xf]
        %v4831 = vld [vmem:[#allocation23 + $0x1c] sm:$0xf]
        %v4832 = vpack.c.bf16 %v4821, %v4820
        %v4833 = vpack.c.bf16 %v4823, %v4822
        %v4842 = vunpack.c.l.b16 %v4824
        %v4843 = vunpack.c.l.b16 %v4825
        %v4844 = vunpack.c.l.b16 %v4826
        %v4845 = vunpack.c.l.b16 %v4827
        %v4846 = vunpack.c.l.b16 %v4828
        %v4847 = vunpack.c.l.b16 %v4829
        %v4848 = vunpack.c.l.b16 %v4830
        %v4849 = vunpack.c.l.b16 %v4831
        %v4850 = vpack.c.b16 %v4843, %v4842
        %v4851 = vpack.c.b16 %v4845, %v4844
        %v4852 = vpack.c.b16 %v4847, %v4846
        %v4853 = vpack.c.b16 %v4849, %v4848
        %v4859 = vsel %vm1678, %v4832, 0
        %v4862 = vsel %vm1678, %v4833, 0
        %4864 = vmatprep.subr.bf16.mxu0 0
        %4865 = vmatpush1.bf16.msra.mxu0 0
        %4866 = vmatprep.subr.bf16.mxu0 0
        %4867 = vmatpush1.bf16.msra.mxu0 0
        %4868 = vmatprep.subr.bf16.mxu0 0
        %4869 = vmatpush1.bf16.msra.mxu0 0
        %4870 = vmatprep.subr.bf16.mxu0 0
        %4871 = vmatpush1.bf16.msra.mxu0 0
        %4872 = vmatprep.subr.bf16.mxu0 0
        %4873 = vmatpush1.bf16.msra.mxu0 %v4853
        %4874 = vmatprep.subr.bf16.mxu0 0
        %4875 = vmatpush1.bf16.msra.mxu0 %v4852
        %4876 = vmatprep.subr.bf16.mxu0 0
        %4877 = vmatpush1.bf16.msra.mxu0 %v4851
        %4878 = vmatprep.subr.bf16.mxu0 0
        %4879 = vmatpush1.bf16.msra.mxu0 %v4850
        %4880 = vmatprep.subr.bf16.mxu0 0
        %4881 = vmatpush2.bf16.msra.mxu0 0
        %4882 = vmatprep.subr.bf16.mxu0 0
        %4883 = vmatpush2.bf16.msra.mxu0 0
        %4884 = vmatprep.subr.bf16.mxu0 0
        %4885 = vmatpush2.bf16.msra.mxu0 0
        %4886 = vmatprep.subr.bf16.mxu0 0
        %4887 = vmatpush2.bf16.msra.mxu0 0
        %4888 = vmatprep.subr.bf16.mxu0 0
        %4889 = vmatpush2.bf16.msra.mxu0 0
        %4890 = vmatprep.subr.bf16.mxu0 0
        %4891 = vmatpush2.bf16.msra.mxu0 0
        %4892 = vmatprep.subr.bf16.mxu0 0
        %4893 = vmatpush2.bf16.msra.mxu0 0
        %4894 = vmatprep.subr.bf16.mxu0 0
        %4895 = vmatpush2.bf16.msra.mxu0 0
        %4896 = vmatprep.mubr.bf16.mxu0 0
        %4897 = vmatmul.mubr.bf16.gmra.mxu0 %v4859
        %v4898 = vpop.f32.mrf.mxu0
        %v4899 = vadd.f32 %v3512, %v4898
        %v4900 = vpop.f32.mrf.mxu0
        %v4901 = vpop.f32.mrf.mxu0
        %v4902 = vadd.f32 %v3513, %v4901
        %v4903 = vpop.f32.mrf.mxu0
        %4904 = vmatprep.mubr.bf16.mxu0 0
        %4905 = vmatmul.mubr.bf16.gmra.mxu0 %v4862
        %v4906 = vpop.f32.mrf.mxu0
        %v4907 = vadd.f32 %v3514, %v4906
        %v4908 = vpop.f32.mrf.mxu0
        %v4909 = vpop.f32.mrf.mxu0
        %v4910 = vadd.f32 %v3515, %v4909
        %v4911 = vpop.f32.mrf.mxu0
        %4912 = vdwg.mxu0
        %4913 = vadd.xlane.f32.xlu0 %v4899
        %v4914 = vpop.xlane.xlu0 %4913
        %4915 = vadd.xlane.f32.xlu0 %v4902
        %v4916 = vpop.xlane.xlu0 %4915
        %4917 = vadd.xlane.f32.xlu0 %v4907
        %v4918 = vpop.xlane.xlu0 %4917
        %4919 = vadd.xlane.f32.xlu0 %v4910
        %v4920 = vpop.xlane.xlu0 %4919
        %v4921 = vmul.f32 %v4914, %v3524
        %v4922 = vmul.f32 %v4916, %v3524
        %v4923 = vmul.f32 %v4918, %v3524
        %v4924 = vmul.f32 %v4920, %v3524
        %v4925 = vsub.f32 %v4899, %v4921
        %v4926 = vsub.f32 %v4902, %v4922
        %v4927 = vsub.f32 %v4907, %v4923
        %v4928 = vsub.f32 %v4910, %v4924
        %v4929 = vmul.f32 %v4925, %v4925
        %v4930 = vmul.f32 %v4926, %v4926
        %v4931 = vmul.f32 %v4927, %v4927
        %v4932 = vmul.f32 %v4928, %v4928
        %4933 = vadd.xlane.f32.xlu0 %v4929
        %v4934 = vpop.xlane.xlu0 %4933
        %4935 = vadd.xlane.f32.xlu0 %v4930
        %v4936 = vpop.xlane.xlu0 %4935
        %4937 = vadd.xlane.f32.xlu0 %v4931
        %v4938 = vpop.xlane.xlu0 %4937
        %4939 = vadd.xlane.f32.xlu0 %v4932
        %v4940 = vpop.xlane.xlu0 %4939
        %v4941 = vmul.f32 %v4934, %v3524
        %v4942 = vmul.f32 %v4936, %v3524
        %v4943 = vmul.f32 %v4938, %v3524
        %v4944 = vmul.f32 %v4940, %v3524
        %v4945 = vadd.f32 %v4941, 1e-06
        %v4946 = vadd.f32 %v4942, 1e-06
        %v4947 = vadd.f32 %v4943, 1e-06
        %v4948 = vadd.f32 %v4944, 1e-06
        %v4949 = vrsqrt.pop %v4945
        %v4950 = vrsqrt.pop %v4946
        %v4951 = vrsqrt.pop %v4947
        %v4952 = vrsqrt.pop %v4948
        %v4953 = vmul.f32 %v4925, %v4949
        %v4954 = vmul.f32 %v4926, %v4950
        %v4955 = vmul.f32 %v4927, %v4951
        %v4956 = vmul.f32 %v4928, %v4952
        %v4957 = vld [vmem:[%s59] sm:$0x1]
        %v4959 = vlaneseq
        %v4960 = vshrl.u32 %v4959, 7
        %v4961 = vsub.s32 0, %v4960
        %v4962 = vrot.slane %v4957, %v4961
        %v4964 = vmul.f32 %v4953, %v4962
        %v4965 = vmul.f32 %v4954, %v4962
        %v4966 = vmul.f32 %v4955, %v4962
        %v4967 = vmul.f32 %v4956, %v4962
        %v4968 = vld [vmem:[%s61] sm:$0x1]
        %v4970 = vlaneseq
        %v4971 = vshrl.u32 %v4970, 7
        %v4972 = vsub.s32 0, %v4971
        %v4973 = vrot.slane %v4968, %v4972
        %v4975 = vadd.f32 %v4964, %v4973
        %v4976 = vadd.f32 %v4965, %v4973
        %v4977 = vadd.f32 %v4966, %v4973
        %v4978 = vadd.f32 %v4967, %v4973
        %v4979 = vld [vmem:[%s63] sm:$0xf]
        %v4980 = vld [vmem:[%s63 + $0x4] sm:$0xf]
        %v4981 = vld [vmem:[%s63 + $0x8] sm:$0xf]
        %v4982 = vld [vmem:[%s63 + $0xc] sm:$0xf]
        %v4983 = vld [vmem:[%s63 + $0x10] sm:$0xf]
        %v4984 = vld [vmem:[%s63 + $0x14] sm:$0xf]
        %v4985 = vld [vmem:[%s63 + $0x18] sm:$0xf]
        %v4986 = vld [vmem:[%s63 + $0x1c] sm:$0xf]
        %v4987 = vld [vmem:[%s63 + $0x20] sm:$0xf]
        %v4988 = vld [vmem:[%s63 + $0x24] sm:$0xf]
        %v4989 = vld [vmem:[%s63 + $0x28] sm:$0xf]
        %v4990 = vld [vmem:[%s63 + $0x2c] sm:$0xf]
        %v4991 = vld [vmem:[%s63 + $0x30] sm:$0xf]
        %v4992 = vld [vmem:[%s63 + $0x34] sm:$0xf]
        %v4993 = vld [vmem:[%s63 + $0x38] sm:$0xf]
        %v4994 = vld [vmem:[%s63 + $0x3c] sm:$0xf]
        %v4995 = vpack.c.bf16 %v4976, %v4975
        %v4996 = vpack.c.bf16 %v4978, %v4977
        %v4997 = vld [vmem:[%s65] sm:$0x1]
        %v4999 = vlaneseq
        %v5000 = vshrl.u32 %v4999, 7
        %v5001 = vsub.s32 0, %v5000
        %v5002 = vrot.slane %v4997, %v5001
        %v5020 = vunpack.c.l.b16 %v4979
        %v5021 = vunpack.c.l.b16 %v4980
        %v5022 = vunpack.c.l.b16 %v4981
        %v5023 = vunpack.c.l.b16 %v4982
        %v5024 = vunpack.c.l.b16 %v4983
        %v5025 = vunpack.c.l.b16 %v4984
        %v5026 = vunpack.c.l.b16 %v4985
        %v5027 = vunpack.c.l.b16 %v4986
        %v5028 = vunpack.c.l.b16 %v4987
        %v5029 = vunpack.c.l.b16 %v4988
        %v5030 = vunpack.c.l.b16 %v4989
        %v5031 = vunpack.c.l.b16 %v4990
        %v5032 = vunpack.c.l.b16 %v4991
        %v5033 = vunpack.c.l.b16 %v4992
        %v5034 = vunpack.c.l.b16 %v4993
        %v5035 = vunpack.c.l.b16 %v4994
        %v5036 = vpack.c.b16 %v5021, %v5020
        %v5037 = vpack.c.b16 %v5023, %v5022
        %v5038 = vpack.c.b16 %v5025, %v5024
        %v5039 = vpack.c.b16 %v5027, %v5026
        %v5040 = vpack.c.b16 %v5029, %v5028
        %v5041 = vpack.c.b16 %v5031, %v5030
        %v5042 = vpack.c.b16 %v5033, %v5032
        %v5043 = vpack.c.b16 %v5035, %v5034
        %5052 = vmatprep.subr.bf16.mxu0 0
        %5053 = vmatpush1.bf16.msra.mxu0 %v5043
        %5054 = vmatprep.subr.bf16.mxu0 0
        %5055 = vmatpush1.bf16.msra.mxu0 %v5042
        %5056 = vmatprep.subr.bf16.mxu0 0
        %5057 = vmatpush1.bf16.msra.mxu0 %v5041
        %5058 = vmatprep.subr.bf16.mxu0 0
        %5059 = vmatpush1.bf16.msra.mxu0 %v5040
        %5060 = vmatprep.subr.bf16.mxu0 0
        %5061 = vmatpush1.bf16.msra.mxu0 %v5039
        %5062 = vmatprep.subr.bf16.mxu0 0
        %5063 = vmatpush1.bf16.msra.mxu0 %v5038
        %5064 = vmatprep.subr.bf16.mxu0 0
        %5065 = vmatpush1.bf16.msra.mxu0 %v5037
        %5066 = vmatprep.subr.bf16.mxu0 0
        %5067 = vmatpush1.bf16.msra.mxu0 %v5036
        %5068 = vmatprep.subr.bf16.mxu0 0
        %5069 = vmatpush2.bf16.msra.mxu0 0
        %5070 = vmatprep.subr.bf16.mxu0 0
        %5071 = vmatpush2.bf16.msra.mxu0 0
        %5072 = vmatprep.subr.bf16.mxu0 0
        %5073 = vmatpush2.bf16.msra.mxu0 0
        %5074 = vmatprep.subr.bf16.mxu0 0
        %5075 = vmatpush2.bf16.msra.mxu0 0
        %5076 = vmatprep.subr.bf16.mxu0 0
        %5077 = vmatpush2.bf16.msra.mxu0 0
        %5078 = vmatprep.subr.bf16.mxu0 0
        %5079 = vmatpush2.bf16.msra.mxu0 0
        %5080 = vmatprep.subr.bf16.mxu0 0
        %5081 = vmatpush2.bf16.msra.mxu0 0
        %5082 = vmatprep.subr.bf16.mxu0 0
        %5083 = vmatpush2.bf16.msra.mxu0 0
        %5084 = vmatprep.mubr.bf16.mxu0 0
        %5085 = vmatmul.mubr.bf16.gmra.mxu0 %v4995
        %v5086 = vpop.f32.mrf.mxu0
        %v5087 = vadd.f32 %v5002, %v5086
        %v5088 = vpop.f32.mrf.mxu0
        %v5089 = vpop.f32.mrf.mxu0
        %v5090 = vadd.f32 %v5002, %v5089
        %v5091 = vpop.f32.mrf.mxu0
        %5092 = vmatprep.mubr.bf16.mxu0 0
        %5093 = vmatmul.mubr.bf16.gmra.mxu0 %v4996
        %v5094 = vpop.f32.mrf.mxu0
        %v5095 = vadd.f32 %v5002, %v5094
        %v5096 = vpop.f32.mrf.mxu0
        %v5097 = vpop.f32.mrf.mxu0
        %v5098 = vadd.f32 %v5002, %v5097
        %v5099 = vpop.f32.mrf.mxu0
        %5100 = vdwg.mxu0
        %v5101 = vmax.f32 %v5087, 0.0
        %v5102 = vmax.f32 %v5090, 0.0
        %v5103 = vmax.f32 %v5095, 0.0
        %v5104 = vmax.f32 %v5098, 0.0
        %v5105 = vld [vmem:[%s67] sm:$0xf]
        %v5106 = vld [vmem:[%s67 + $0x4] sm:$0xf]
        %v5107 = vld [vmem:[%s67 + $0x8] sm:$0xf]
        %v5108 = vld [vmem:[%s67 + $0xc] sm:$0xf]
        %v5109 = vld [vmem:[%s67 + $0x10] sm:$0xf]
        %v5110 = vld [vmem:[%s67 + $0x14] sm:$0xf]
        %v5111 = vld [vmem:[%s67 + $0x18] sm:$0xf]
        %v5112 = vld [vmem:[%s67 + $0x1c] sm:$0xf]
        %v5113 = vld [vmem:[%s67 + $0x20] sm:$0xf]
        %v5114 = vld [vmem:[%s67 + $0x24] sm:$0xf]
        %v5115 = vld [vmem:[%s67 + $0x28] sm:$0xf]
        %v5116 = vld [vmem:[%s67 + $0x2c] sm:$0xf]
        %v5117 = vld [vmem:[%s67 + $0x30] sm:$0xf]
        %v5118 = vld [vmem:[%s67 + $0x34] sm:$0xf]
        %v5119 = vld [vmem:[%s67 + $0x38] sm:$0xf]
        %v5120 = vld [vmem:[%s67 + $0x3c] sm:$0xf]
        %v5121 = vpack.c.bf16 %v5102, %v5101
        %v5122 = vpack.c.bf16 %v5104, %v5103
        %v5123 = vld [vmem:[%s69] sm:$0x1]
        %v5125 = vlaneseq
        %v5126 = vshrl.u32 %v5125, 7
        %v5127 = vsub.s32 0, %v5126
        %v5128 = vrot.slane %v5123, %v5127
        %v5146 = vunpack.c.l.b16 %v5105
        %v5147 = vunpack.c.l.b16 %v5106
        %v5148 = vunpack.c.l.b16 %v5107
        %v5149 = vunpack.c.l.b16 %v5108
        %v5150 = vunpack.c.l.b16 %v5109
        %v5151 = vunpack.c.l.b16 %v5110
        %v5152 = vunpack.c.l.b16 %v5111
        %v5153 = vunpack.c.l.b16 %v5112
        %v5154 = vunpack.c.l.b16 %v5113
        %v5155 = vunpack.c.l.b16 %v5114
        %v5156 = vunpack.c.l.b16 %v5115
        %v5157 = vunpack.c.l.b16 %v5116
        %v5158 = vunpack.c.l.b16 %v5117
        %v5159 = vunpack.c.l.b16 %v5118
        %v5160 = vunpack.c.l.b16 %v5119
        %v5161 = vunpack.c.l.b16 %v5120
        %v5162 = vpack.c.b16 %v5147, %v5146
        %v5163 = vpack.c.b16 %v5149, %v5148
        %v5164 = vpack.c.b16 %v5151, %v5150
        %v5165 = vpack.c.b16 %v5153, %v5152
        %v5166 = vpack.c.b16 %v5155, %v5154
        %v5167 = vpack.c.b16 %v5157, %v5156
        %v5168 = vpack.c.b16 %v5159, %v5158
        %v5169 = vpack.c.b16 %v5161, %v5160
        %5178 = vmatprep.subr.bf16.mxu0 0
        %5179 = vmatpush1.bf16.msra.mxu0 %v5169
        %5180 = vmatprep.subr.bf16.mxu0 0
        %5181 = vmatpush1.bf16.msra.mxu0 %v5168
        %5182 = vmatprep.subr.bf16.mxu0 0
        %5183 = vmatpush1.bf16.msra.mxu0 %v5167
        %5184 = vmatprep.subr.bf16.mxu0 0
        %5185 = vmatpush1.bf16.msra.mxu0 %v5166
        %5186 = vmatprep.subr.bf16.mxu0 0
        %5187 = vmatpush1.bf16.msra.mxu0 %v5165
        %5188 = vmatprep.subr.bf16.mxu0 0
        %5189 = vmatpush1.bf16.msra.mxu0 %v5164
        %5190 = vmatprep.subr.bf16.mxu0 0
        %5191 = vmatpush1.bf16.msra.mxu0 %v5163
        %5192 = vmatprep.subr.bf16.mxu0 0
        %5193 = vmatpush1.bf16.msra.mxu0 %v5162
        %5194 = vmatprep.subr.bf16.mxu0 0
        %5195 = vmatpush2.bf16.msra.mxu0 0
        %5196 = vmatprep.subr.bf16.mxu0 0
        %5197 = vmatpush2.bf16.msra.mxu0 0
        %5198 = vmatprep.subr.bf16.mxu0 0
        %5199 = vmatpush2.bf16.msra.mxu0 0
        %5200 = vmatprep.subr.bf16.mxu0 0
        %5201 = vmatpush2.bf16.msra.mxu0 0
        %5202 = vmatprep.subr.bf16.mxu0 0
        %5203 = vmatpush2.bf16.msra.mxu0 0
        %5204 = vmatprep.subr.bf16.mxu0 0
        %5205 = vmatpush2.bf16.msra.mxu0 0
        %5206 = vmatprep.subr.bf16.mxu0 0
        %5207 = vmatpush2.bf16.msra.mxu0 0
        %5208 = vmatprep.subr.bf16.mxu0 0
        %5209 = vmatpush2.bf16.msra.mxu0 0
        %5210 = vmatprep.mubr.bf16.mxu0 0
        %5211 = vmatmul.mubr.bf16.gmra.mxu0 %v5121
        %v5212 = vpop.f32.mrf.mxu0
        %v5213 = vadd.f32 %v5128, %v5212
        %v5214 = vpop.f32.mrf.mxu0
        %v5215 = vpop.f32.mrf.mxu0
        %v5216 = vadd.f32 %v5128, %v5215
        %v5217 = vpop.f32.mrf.mxu0
        %5218 = vmatprep.mubr.bf16.mxu0 0
        %5219 = vmatmul.mubr.bf16.gmra.mxu0 %v5122
        %v5220 = vpop.f32.mrf.mxu0
        %v5221 = vadd.f32 %v5128, %v5220
        %v5222 = vpop.f32.mrf.mxu0
        %v5223 = vpop.f32.mrf.mxu0
        %v5224 = vadd.f32 %v5128, %v5223
        %v5225 = vpop.f32.mrf.mxu0
        %5226 = vdwg.mxu0
        %v5227 = vadd.f32 %v5213, %v4899
        %v5228 = vadd.f32 %v5216, %v4902
        %v5229 = vadd.f32 %v5221, %v4907
        %v5230 = vadd.f32 %v5224, %v4910
        %v5231 = vxor.u32 %v5227, 2147483648
        %v5232 = vxor.u32 %v5228, 2147483648
        %v5233 = vxor.u32 %v5229, 2147483648
        %v5234 = vxor.u32 %v5230, 2147483648
        %v5235 = vmul.f32 %v5231, 1.442695
        %v5236 = vpow.pop %v5235
        %v5237 = vmul.f32 %v5232, 1.442695
        %v5238 = vpow.pop %v5237
        %v5239 = vmul.f32 %v5233, 1.442695
        %v5240 = vpow.pop %v5239
        %v5241 = vmul.f32 %v5234, 1.442695
        %v5242 = vpow.pop %v5241
        %v5243 = vadd.f32 %v5236, 1.0
        %v5244 = vadd.f32 %v5238, 1.0
        %v5245 = vadd.f32 %v5240, 1.0
        %v5246 = vadd.f32 %v5242, 1.0
        %v5247 = vrcp.pop %v5243
        %v5248 = vmul.f32 1.0, %v5247
        %v5249 = vrcp.pop %v5244
        %v5250 = vmul.f32 1.0, %v5249
        %v5251 = vrcp.pop %v5245
        %v5252 = vmul.f32 1.0, %v5251
        %v5253 = vrcp.pop %v5246
        %v5254 = vmul.f32 1.0, %v5253
        %v5255 = vtanh.pop %v5227
        %v5256 = vtanh.pop %v5228
        %v5257 = vtanh.pop %v5229
        %v5258 = vtanh.pop %v5230
        %5263 = vrot.lane.b32.xlu0 %v5255, 64
        %v5264 = vpop.permute.xlu0 %5263
        %5265 = vrot.lane.b32.xlu0 %v5256, 64
        %v5266 = vpop.permute.xlu0 %5265
        %5267 = vrot.lane.b32.xlu0 %v5257, 64
        %v5268 = vpop.permute.xlu0 %5267
        %5269 = vrot.lane.b32.xlu0 %v5258, 64
        %v5270 = vpop.permute.xlu0 %5269
        %v5275 = vmul.f32 %v5248, %v5264
        %v5276 = vmul.f32 %v5250, %v5266
        %v5277 = vmul.f32 %v5252, %v5268
        %v5278 = vmul.f32 %v5254, %v5270
        %v5279 = vld [vmem:[#allocation11] sm:$0xf]
        %v5280 = vld [vmem:[#allocation11 + $0x4] sm:$0xf]
        %v5281 = vld [vmem:[#allocation11 + $0x8] sm:$0xf]
        %v5282 = vld [vmem:[#allocation11 + $0xc] sm:$0xf]
        %v5283 = vld [vmem:[#allocation11 + $0x10] sm:$0xf]
        %v5284 = vld [vmem:[#allocation11 + $0x14] sm:$0xf]
        %v5285 = vld [vmem:[#allocation11 + $0x18] sm:$0xf]
        %v5286 = vld [vmem:[#allocation11 + $0x1c] sm:$0xf]
        %v5287 = vpack.c.bf16 %v5276, %v5275
        %v5288 = vpack.c.bf16 %v5278, %v5277
        %v5289 = vld [vmem:[#allocation13] sm:$0x1]
        %v5291 = vlaneseq
        %v5292 = vshrl.u32 %v5291, 7
        %v5293 = vsub.s32 0, %v5292
        %v5294 = vrot.slane %v5289, %v5293
        %v5304 = vunpack.c.l.b16 %v5279
        %v5305 = vunpack.c.l.b16 %v5280
        %v5306 = vunpack.c.l.b16 %v5281
        %v5307 = vunpack.c.l.b16 %v5282
        %v5308 = vunpack.c.l.b16 %v5283
        %v5309 = vunpack.c.l.b16 %v5284
        %v5310 = vunpack.c.l.b16 %v5285
        %v5311 = vunpack.c.l.b16 %v5286
        %v5312 = vpack.c.b16 %v5305, %v5304
        %v5313 = vpack.c.b16 %v5307, %v5306
        %v5314 = vpack.c.b16 %v5309, %v5308
        %v5315 = vpack.c.b16 %v5311, %v5310
        %v5321 = vsel %vm1678, %v5287, 0
        %v5324 = vsel %vm1678, %v5288, 0
        %5326 = vmatprep.subr.bf16.mxu0 0
        %5327 = vmatpush1.bf16.msra.mxu0 0
        %5328 = vmatprep.subr.bf16.mxu0 0
        %5329 = vmatpush1.bf16.msra.mxu0 0
        %5330 = vmatprep.subr.bf16.mxu0 0
        %5331 = vmatpush1.bf16.msra.mxu0 0
        %5332 = vmatprep.subr.bf16.mxu0 0
        %5333 = vmatpush1.bf16.msra.mxu0 0
        %5334 = vmatprep.subr.bf16.mxu0 0
        %5335 = vmatpush1.bf16.msra.mxu0 %v5315
        %5336 = vmatprep.subr.bf16.mxu0 0
        %5337 = vmatpush1.bf16.msra.mxu0 %v5314
        %5338 = vmatprep.subr.bf16.mxu0 0
        %5339 = vmatpush1.bf16.msra.mxu0 %v5313
        %5340 = vmatprep.subr.bf16.mxu0 0
        %5341 = vmatpush1.bf16.msra.mxu0 %v5312
        %5342 = vmatprep.subr.bf16.mxu0 0
        %5343 = vmatpush2.bf16.msra.mxu0 0
        %5344 = vmatprep.subr.bf16.mxu0 0
        %5345 = vmatpush2.bf16.msra.mxu0 0
        %5346 = vmatprep.subr.bf16.mxu0 0
        %5347 = vmatpush2.bf16.msra.mxu0 0
        %5348 = vmatprep.subr.bf16.mxu0 0
        %5349 = vmatpush2.bf16.msra.mxu0 0
        %5350 = vmatprep.subr.bf16.mxu0 0
        %5351 = vmatpush2.bf16.msra.mxu0 0
        %5352 = vmatprep.subr.bf16.mxu0 0
        %5353 = vmatpush2.bf16.msra.mxu0 0
        %5354 = vmatprep.subr.bf16.mxu0 0
        %5355 = vmatpush2.bf16.msra.mxu0 0
        %5356 = vmatprep.subr.bf16.mxu0 0
        %5357 = vmatpush2.bf16.msra.mxu0 0
        %5358 = vmatprep.mubr.bf16.mxu0 0
        %5359 = vmatmul.mubr.bf16.gmra.mxu0 %v5321
        %v5360 = vpop.f32.mrf.mxu0
        %v5361 = vadd.f32 %v5294, %v5360
        %v5362 = vpop.f32.mrf.mxu0
        %v5363 = vpop.f32.mrf.mxu0
        %v5364 = vadd.f32 %v5294, %v5363
        %v5365 = vpop.f32.mrf.mxu0
        %5366 = vmatprep.mubr.bf16.mxu0 0
        %5367 = vmatmul.mubr.bf16.gmra.mxu0 %v5324
        %v5368 = vpop.f32.mrf.mxu0
        %v5369 = vadd.f32 %v5294, %v5368
        %v5370 = vpop.f32.mrf.mxu0
        %v5371 = vpop.f32.mrf.mxu0
        %v5372 = vadd.f32 %v5294, %v5371
        %v5373 = vpop.f32.mrf.mxu0
        %5374 = vdwg.mxu0
        %v5375 = vld [vmem:[#allocation14] sm:$0xf]
        %v5376 = vld [vmem:[#allocation14 + $0x4] sm:$0xf]
        %v5377 = vld [vmem:[#allocation14 + $0x8] sm:$0xf]
        %v5378 = vld [vmem:[#allocation14 + $0xc] sm:$0xf]
        %v5379 = vld [vmem:[#allocation14 + $0x10] sm:$0xf]
        %v5380 = vld [vmem:[#allocation14 + $0x14] sm:$0xf]
        %v5381 = vld [vmem:[#allocation14 + $0x18] sm:$0xf]
        %v5382 = vld [vmem:[#allocation14 + $0x1c] sm:$0xf]
        %v5383 = vld [vmem:[#allocation16] sm:$0x1]
        %v5385 = vlaneseq
        %v5386 = vshrl.u32 %v5385, 7
        %v5387 = vsub.s32 0, %v5386
        %v5388 = vrot.slane %v5383, %v5387
        %v5398 = vunpack.c.l.b16 %v5375
        %v5399 = vunpack.c.l.b16 %v5376
        %v5400 = vunpack.c.l.b16 %v5377
        %v5401 = vunpack.c.l.b16 %v5378
        %v5402 = vunpack.c.l.b16 %v5379
        %v5403 = vunpack.c.l.b16 %v5380
        %v5404 = vunpack.c.l.b16 %v5381
        %v5405 = vunpack.c.l.b16 %v5382
        %v5406 = vpack.c.b16 %v5399, %v5398
        %v5407 = vpack.c.b16 %v5401, %v5400
        %v5408 = vpack.c.b16 %v5403, %v5402
        %v5409 = vpack.c.b16 %v5405, %v5404
        %5414 = vmatprep.subr.bf16.mxu0 0
        %5415 = vmatpush1.bf16.msra.mxu0 0
        %5416 = vmatprep.subr.bf16.mxu0 0
        %5417 = vmatpush1.bf16.msra.mxu0 0
        %5418 = vmatprep.subr.bf16.mxu0 0
        %5419 = vmatpush1.bf16.msra.mxu0 0
        %5420 = vmatprep.subr.bf16.mxu0 0
        %5421 = vmatpush1.bf16.msra.mxu0 0
        %5422 = vmatprep.subr.bf16.mxu0 0
        %5423 = vmatpush1.bf16.msra.mxu0 %v5409
        %5424 = vmatprep.subr.bf16.mxu0 0
        %5425 = vmatpush1.bf16.msra.mxu0 %v5408
        %5426 = vmatprep.subr.bf16.mxu0 0
        %5427 = vmatpush1.bf16.msra.mxu0 %v5407
        %5428 = vmatprep.subr.bf16.mxu0 0
        %5429 = vmatpush1.bf16.msra.mxu0 %v5406
        %5430 = vmatprep.subr.bf16.mxu0 0
        %5431 = vmatpush2.bf16.msra.mxu0 0
        %5432 = vmatprep.subr.bf16.mxu0 0
        %5433 = vmatpush2.bf16.msra.mxu0 0
        %5434 = vmatprep.subr.bf16.mxu0 0
        %5435 = vmatpush2.bf16.msra.mxu0 0
        %5436 = vmatprep.subr.bf16.mxu0 0
        %5437 = vmatpush2.bf16.msra.mxu0 0
        %5438 = vmatprep.subr.bf16.mxu0 0
        %5439 = vmatpush2.bf16.msra.mxu0 0
        %5440 = vmatprep.subr.bf16.mxu0 0
        %5441 = vmatpush2.bf16.msra.mxu0 0
        %5442 = vmatprep.subr.bf16.mxu0 0
        %5443 = vmatpush2.bf16.msra.mxu0 0
        %5444 = vmatprep.subr.bf16.mxu0 0
        %5445 = vmatpush2.bf16.msra.mxu0 0
        %5446 = vmatprep.mubr.bf16.mxu0 0
        %5447 = vmatmul.mubr.bf16.gmra.mxu0 %v5321
        %v5448 = vpop.f32.mrf.mxu0
        %v5449 = vadd.f32 %v5388, %v5448
        %v5450 = vpop.f32.mrf.mxu0
        %v5451 = vpop.f32.mrf.mxu0
        %v5452 = vadd.f32 %v5388, %v5451
        %v5453 = vpop.f32.mrf.mxu0
        %5454 = vmatprep.mubr.bf16.mxu0 0
        %5455 = vmatmul.mubr.bf16.gmra.mxu0 %v5324
        %v5456 = vpop.f32.mrf.mxu0
        %v5457 = vadd.f32 %v5388, %v5456
        %v5458 = vpop.f32.mrf.mxu0
        %v5459 = vpop.f32.mrf.mxu0
        %v5460 = vadd.f32 %v5388, %v5459
        %v5461 = vpop.f32.mrf.mxu0
        %5462 = vdwg.mxu0
        %v5463 = vadd.f32 %v1389, %v5361
        %v5464 = vadd.f32 %v1390, %v5364
        %v5465 = vadd.f32 %v1391, %v5369
        %v5466 = vadd.f32 %v1392, %v5372
        %v5467 = vmul.f32 %v5463, 0.70710677
        %v5468 = vmul.f32 %v5464, 0.70710677
        %v5469 = vmul.f32 %v5465, 0.70710677
        %v5470 = vmul.f32 %v5466, 0.70710677
        %5471 = vst [vmem:[%s1355] sm:$0xff] %v5467
        %5472 = vst [vmem:[%s1355 + $0x8] sm:$0xff] %v5468
        %5473 = vst [vmem:[%s1355 + $0x10] sm:$0xff] %v5469
        %5474 = vst [vmem:[%s1355 + $0x18] sm:$0xff] %v5470
        %5475 = vst [vmem:[%s1362] sm:$0xff] %v5449
        %5476 = vst [vmem:[%s1362 + $0x8] sm:$0xff] %v5452
        %5477 = vst [vmem:[%s1362 + $0x10] sm:$0xff] %v5457
        %5478 = vst [vmem:[%s1362 + $0x18] sm:$0xff] %v5460
        %s5479 = sand.u32 %s861, 1
        %s5480 = scalar_lea.sflag [#allocation4], %s5479
        %s5481 = sand.u32 %s861, 1
        %s5482 = smul.addr %s5481, 32
        %s5483 = scalar_lea.vmem [#allocation25], %s5482
        %s5484 = sand.u32 %s103, 1
        %s5485 = scalar_lea.sflag [#allocation27], %s5484
        %s5486 = sand.u32 %s887, 1
        %s5487 = smul.addr %s5486, 32
        %s5488 = scalar_lea.vmem [#allocation26], %s5487
        %s5489 = sand.u32 %s103, 1
        %s5490 = scalar_lea.sflag [#allocation27], %s5489
        %s5491 = sand.u32 %s913, 1
        %s5492 = smul.addr %s5491, 128
        %s5493 = scalar_lea.vmem [#allocation28], %s5492
        // Predicated region
        $region217: #{tpu_custom_call.1} parent=159 // pred_check
          %p5494 = pneg %p871
        $region218: #{tpu_custom_call.1} parent=159 // pred_check_branch
          %5496 = sbr.rel (%p5494) target = $region220
        $region219: #{tpu_custom_call.1} parent=159 // pred_region
          %s5497 = smul.u32 2, %s103
          %s5499 = ssub.s32 512, 512
          %5500 = vsyncadd %s5480, %s5499
          %s5501 = smul.addr %s5497, 2
          %s5502 = smul.addr %s5501, 128
          %s5503 = scalar_lea.hbm %s71, %s5502
          %s5504 = sshll.u32 %s5483, 4
          %s5505 = int_to_ptr.vmem [resolvable:$true] %s5504
          %5510 = dma.vmem_to_hbm [thread:$0]  %s5505, 512, %s5503, %s5480, 128, 128, 8
        $region220: #{tpu_custom_call.1} parent=159 // pred_fallthru
          _
        // Predicated region
        $region221: #{tpu_custom_call.1} parent=159 // pred_check
          %p5511 = pneg %p897
        $region222: #{tpu_custom_call.1} parent=159 // pred_check_branch
          %5513 = sbr.rel (%p5511) target = $region224
        $region223: #{tpu_custom_call.1} parent=159 // pred_region
          %s5514 = smul.u32 2, %s103
          %s5516 = ssub.s32 512, 512
          %5517 = vsyncadd %s5485, %s5516
          %s5518 = smul.addr %s5514, 2
          %s5519 = smul.addr %s5518, 128
          %s5520 = scalar_lea.hbm %s73, %s5519
          %s5521 = sshll.u32 %s5488, 4
          %s5522 = int_to_ptr.vmem [resolvable:$true] %s5521
          %5527 = dma.vmem_to_hbm [thread:$0]  %s5522, 512, %s5520, %s5485, 128, 128, 8
        $region224: #{tpu_custom_call.1} parent=159 // pred_fallthru
          _
        // Predicated region
        $region225: #{tpu_custom_call.1} parent=159 // pred_check
          %p5528 = pneg %p923
        $region226: #{tpu_custom_call.1} parent=159 // pred_check_branch
          %5530 = sbr.rel (%p5528) target = $region228
        $region227: #{tpu_custom_call.1} parent=159 // pred_region
          %s5531 = smul.u32 2, %s103
          %s5533 = ssub.s32 2048, 2048
          %5534 = vsyncadd %s5490, %s5533
          %s5535 = smul.addr %s5531, 8
          %s5536 = smul.addr %s5535, 128
          %s5537 = scalar_lea.hbm %s75, %s5536
          %s5538 = sshll.u32 %s5493, 4
          %s5539 = int_to_ptr.vmem [resolvable:$true] %s5538
          %5544 = dma.vmem_to_hbm [thread:$0]  %s5539, 2048, %s5537, %s5490, 128, 128, 8
        $region228: #{tpu_custom_call.1} parent=159 // pred_fallthru
          _
      $region160: #{tpu_custom_call.1} parent=5 // pred_fallthru
        _
      %p5545 = scmp.le.s32.totalorder 2, %s98
      // Predicated region
      $region229: #{tpu_custom_call.1} parent=5 // pred_check
        %p5546 = pneg %p5545
      $region230: #{tpu_custom_call.1} parent=5 // pred_check_branch
        %5548 = sbr.rel (%p5546) target = $region232
      $region231: #{tpu_custom_call.1} parent=5 // pred_region
        %s5549 = ssub.s32 %s98, 2
        // Predicated region
        $region233: #{tpu_custom_call.1} parent=231 // pred_check
          %p5550 = pneg %p877
        $region234: #{tpu_custom_call.1} parent=231 // pred_check_branch
          %5552 = sbr.rel (%p5550) target = $region236
        $region235: #{tpu_custom_call.1} parent=231 // pred_region
          %s5553 = sand.u32 %s862, 1
          %s5554 = scalar_lea.sflag [#allocation4], %s5553
          %s5555 = sand.u32 %s862, 1
          %s5556 = smul.addr %s5555, 32
          %s5557 = scalar_lea.vmem [#allocation25], %s5556
          %5558 = dma.done %s5554, 512
        $region236: #{tpu_custom_call.1} parent=231 // pred_fallthru
          _
        // Predicated region
        $region237: #{tpu_custom_call.1} parent=231 // pred_check
          %p5559 = pneg %p903
        $region238: #{tpu_custom_call.1} parent=231 // pred_check_branch
          %5561 = sbr.rel (%p5559) target = $region240
        $region239: #{tpu_custom_call.1} parent=231 // pred_region
          %s5562 = sand.u32 %s104, 1
          %s5563 = scalar_lea.sflag [#allocation27], %s5562
          %s5564 = sand.u32 %s888, 1
          %s5565 = smul.addr %s5564, 32
          %s5566 = scalar_lea.vmem [#allocation26], %s5565
          %5567 = dma.done %s5563, 512
        $region240: #{tpu_custom_call.1} parent=231 // pred_fallthru
          _
        // Predicated region
        $region241: #{tpu_custom_call.1} parent=231 // pred_check
          %p5568 = pneg %p929
        $region242: #{tpu_custom_call.1} parent=231 // pred_check_branch
          %5570 = sbr.rel (%p5568) target = $region244
        $region243: #{tpu_custom_call.1} parent=231 // pred_region
          %s5571 = sand.u32 %s104, 1
          %s5572 = scalar_lea.sflag [#allocation27], %s5571
          %s5573 = sand.u32 %s914, 1
          %s5574 = smul.addr %s5573, 128
          %s5575 = scalar_lea.vmem [#allocation28], %s5574
          %5576 = dma.done %s5572, 2048
        $region244: #{tpu_custom_call.1} parent=231 // pred_fallthru
          _
      $region232: #{tpu_custom_call.1} parent=5 // pred_fallthru
        _
    $region6: #{tpu_custom_call.1} parent=1 // loop_footer
      %s102 = sadd.s32 1, %s98
    $region7: #{tpu_custom_call.1} parent=1 // loop_footer_branch
      %97 = sbr.rel target = $region3
    $region8: #{tpu_custom_call.1} parent=1 // loop_exit
      _
    %5577 = vsyncpa [#allocation3], 1
    %s5578 = scalar_lea.sflag [#allocation3], 1
    %5579 = vsyncpa %s5578, 1
    %5580 = vsyncpa [#allocation6], 1
    %5581 = vsyncpa [#allocation9], 1
    %5582 = vsyncpa [#allocation12], 1
    %5583 = vsyncpa [#allocation15], 1
    %5584 = vsyncpa [#allocation18], 1
    %5585 = vsyncpa [#allocation21], 1
    %5586 = vsyncpa [#allocation24], 1
    %5587 = vsyncpa [#allocation4], 1
    %s5588 = scalar_lea.sflag [#allocation4], 1
    %5589 = vsyncpa %s5588, 1
    %5590 = vsyncpa [#allocation27], 1
    %s5591 = scalar_lea.sflag [#allocation27], 1
    %5592 = vsyncpa %s5591, 1

</llo_original>
